<compile_context>
chip_gen: v7x
topology: tpu7x:2x2x1
jax: 0.10.0
libtpu: 0.0.40
codegen_flags: <defaults>
</compile_context>

<pallas_src>
import functools

import jax
import jax.numpy as jnp
from jax import lax
from jax.experimental import pallas as pl
from jax.experimental.pallas import tpu as pltpu

BN_EPS = 1e-5
LANE = 128


def _round_up(x, m):
    return ((x + m - 1) // m) * m


def _pick_tile(size, candidates):
    for c in candidates:
        if size % c == 0:
            return c
    return size


# ------------------------------ matmul kernel -------------------------------

def _matmul_kernel(a_ref, b_ref, o_ref, acc_ref):
    @pl.when(pl.program_id(2) == 0)
    def _():
        acc_ref[...] = jnp.zeros_like(acc_ref)

    acc_ref[...] += jnp.dot(a_ref[...], b_ref[...],
                            preferred_element_type=jnp.float32)

    @pl.when(pl.program_id(2) == pl.num_programs(2) - 1)
    def _():
        o_ref[...] = acc_ref[...]


def pallas_matmul(a, b):
    """(M, K) bf16 @ (K, N) bf16 -> (M, N) f32 on the MXU (K-tiled)."""
    M, K = a.shape
    K2, N = b.shape
    assert K == K2 and N % LANE == 0, (a.shape, b.shape)

    Mp = _round_up(M, 16)
    if Mp != M:
        a = jnp.pad(a, ((0, Mp - M), (0, 0)))
    tm = _pick_tile(Mp, (512, 256, 128, 64, 32, 16))
    tn = _pick_tile(N, (512, 256, 128))
    tk = _pick_tile(K, (512, 256, 128))

    out = pl.pallas_call(
        _matmul_kernel,
        out_shape=jax.ShapeDtypeStruct((Mp, N), jnp.float32),
        grid=(Mp // tm, N // tn, K // tk),
        in_specs=[
            pl.BlockSpec((tm, tk), lambda i, j, k: (i, k)),
            pl.BlockSpec((tk, tn), lambda i, j, k: (k, j)),
        ],
        out_specs=pl.BlockSpec((tm, tn), lambda i, j, k: (i, j)),
        scratch_shapes=[pltpu.VMEM((tm, tn), jnp.float32)],
        compiler_params=pltpu.CompilerParams(
            dimension_semantics=("parallel", "parallel", "arbitrary")),
    )(a, b)
    return out[:M] if Mp != M else out


# ---------------------------- elementwise kernels ----------------------------

def _scale_shift_relu_kernel(x_ref, s_ref, t_ref, o_ref):
    y = jnp.maximum(x_ref[...] * s_ref[...] + t_ref[...], 0.0)
    o_ref[...] = y.astype(o_ref.dtype)


def _bias_tanh_kernel(x_ref, b_ref, o_ref):
    o_ref[...] = jnp.tanh(x_ref[...] + b_ref[...]).astype(o_ref.dtype)


def _lane_dense(x, vecs):
    """View (M, C) with a lane-dense (multiple-of-128) minor axis; tile the
    per-channel vectors to match.  When C < 128, C must divide 128."""
    M, C = x.shape
    if C % LANE == 0:
        return x, [v.reshape(1, C).astype(jnp.float32) for v in vecs]
    assert LANE % C == 0 and (M * C) % LANE == 0, (M, C)
    rep = LANE // C
    x2 = x.reshape((M * C) // LANE, LANE)        # free: row-major reinterpret
    vecs2 = [jnp.tile(v, rep).reshape(1, LANE).astype(jnp.float32) for v in vecs]
    return x2, vecs2


def _pallas_elementwise(kernel, x, vecs, out_dtype):
    """Row-tiled, lane-dense elementwise kernel over x:(M, C) with per-channel
    vector operands (broadcast along rows)."""
    M, C = x.shape
    x2, vecs2 = _lane_dense(x, vecs)
    R, L = x2.shape
    Rp = _round_up(R, 16)
    if Rp != R:
        x2 = jnp.pad(x2, ((0, Rp - R), (0, 0)))
    tr = _pick_tile(Rp, (1024, 512, 256, 128, 64, 32, 16))
    while tr > 16 and tr * L * 4 > (4 << 20):    # keep blocks comfortably in VMEM
        tr //= 2

    out = pl.pallas_call(
        kernel,
        out_shape=jax.ShapeDtypeStruct((Rp, L), out_dtype),
        grid=(Rp // tr,),
        in_specs=[pl.BlockSpec((tr, L), lambda i: (i, 0))]
                 + [pl.BlockSpec((1, L), lambda i: (0, 0)) for _ in vecs2],
        out_specs=pl.BlockSpec((tr, L), lambda i: (i, 0)),
        compiler_params=pltpu.CompilerParams(
            dimension_semantics=("parallel",)),
    )(x2, *vecs2)
    if Rp != R:
        out = out[:R]
    return out.reshape(M, C)


def batchnorm_relu(y_flat, gamma, beta):
    """Training-mode BatchNorm2d (batch statistics, biased variance) + ReLU.
    y_flat: (N*H*W, C) f32.  Returns bf16 (ready to be the next matmul LHS)."""
    mean = jnp.mean(y_flat, axis=0)
    var = jnp.maximum(jnp.mean(jnp.square(y_flat), axis=0) - jnp.square(mean), 0.0)
    scale = gamma * lax.rsqrt(var + BN_EPS)
    shift = beta - mean * scale
    return _pallas_elementwise(_scale_shift_relu_kernel, y_flat,
                               [scale, shift], jnp.bfloat16)


# ------------------- stride-2 ConvTranspose2d overlap-add --------------------

def _overlap_add_stride2(y6):
    """y6: (N, H, W, 4, 4, C) per-input-pixel contribution blocks of a k=4,
    stride=2, pad=1 ConvTranspose2d.  Returns the assembled (N, 2H, 2W, C).

    Output row 2a   = tap kh=1 @ ih=a  +  tap kh=3 @ ih=a-1
    Output row 2a+1 = tap kh=2 @ ih=a  +  tap kh=0 @ ih=a+1   (same for cols).
    Out-of-range contributions are exactly the ones clipped by padding=1."""
    n, h, w, _, _, c = y6.shape
    t = [y6[:, :, :, kh] for kh in range(4)]               # (N, H, W, 4, C)
    z_even = t[1] + jnp.pad(t[3], ((0, 0), (1, 0), (0, 0), (0, 0), (0, 0)))[:, :h]
    z_odd = t[2] + jnp.pad(t[0], ((0, 0), (0, 1), (0, 0), (0, 0), (0, 0)))[:, 1:]
    z = jnp.stack([z_even, z_odd], axis=2)                 # (N, H, 2, W, 4, C)
    u = [z[:, :, :, :, kw] for kw in range(4)]             # (N, H, 2, W, C)
    o_even = u[1] + jnp.pad(u[3], ((0, 0), (0, 0), (0, 0), (1, 0), (0, 0)))[:, :, :, :w]
    o_odd = u[2] + jnp.pad(u[0], ((0, 0), (0, 0), (0, 0), (0, 1), (0, 0)))[:, :, :, 1:]
    o = jnp.stack([o_even, o_odd], axis=4)                 # (N, H, 2, W, 2, C)
    return o.reshape(n, 2 * h, 2 * w, c)


# ------------------------------ generator ------------------------------------

def init_generator_params(key, d=16):
    # DCGAN-style synthetic init: N(0, 0.02) weights; BN gamma=1, beta=0.
    specs = [(100, d * 8), (d * 8, d * 4), (d * 4, d * 2), (d * 2, d), (d, 3)]
    params = {}
    for i, (cin, cout) in enumerate(specs, start=1):
        key, kw, kb = jax.random.split(key, 3)
        params[f"w{i}"] = 0.02 * jax.random.normal(kw, (cin, cout, 4, 4),
                                                   jnp.float32)
        params[f"b{i}"] = 0.02 * jax.random.normal(kb, (cout,), jnp.float32)
        if i < 5:
            params[f"gamma{i}"] = jnp.ones((cout,), jnp.float32)
            params[f"beta{i}"] = jnp.zeros((cout,), jnp.float32)
    return params


def prepare_params(params):
    """One-time weight prep: transpose/pad/cast each ConvTranspose2d weight to
    a bf16 (Cin, 16*Coutp) matmul operand with column layout [(kh,kw), co].
    Note: b1..b4 are intentionally unused (a pre-BN per-channel constant is
    exactly cancelled by the train-mode batch-mean subtraction)."""
    prep = {}
    w1 = params["w1"]                                       # (100, 8d, 4, 4)
    c1 = int(w1.shape[1])
    b1 = jnp.transpose(w1, (0, 2, 3, 1)).reshape(int(w1.shape[0]), 16 * c1)
    prep["B1"] = jnp.pad(b1, ((0, LANE - int(w1.shape[0])), (0, 0))
                         ).astype(jnp.bfloat16)             # K: 100 -> 128
    prep["c1"] = c1
    for i in range(2, 6):
        w = params[f"w{i}"]                                 # (Cin, Cout, 4, 4)
        cin, cout = int(w.shape[0]), int(w.shape[1])
        cp = _round_up(cout, 8)                             # 16*cp lane aligned
        wt = jnp.transpose(w, (0, 2, 3, 1))                 # (Cin, kh, kw, Cout)
        wt = jnp.pad(wt, ((0, 0), (0, 0), (0, 0), (0, cp - cout)))
        prep[f"B{i}"] = wt.reshape(cin, 16 * cp).astype(jnp.bfloat16)
        prep[f"cout{i}"] = cout
        prep[f"cp{i}"] = cp
    for i in range(1, 5):
        prep[f"gamma{i}"] = params[f"gamma{i}"]
        prep[f"beta{i}"] = params[f"beta{i}"]
    prep["b5p"] = jnp.pad(params["b5"], (0, prep["cp5"] - prep["cout5"]))
    return prep


def generator_forward(prep, x_nchw):
    n = x_nchw.shape[0]

    # ---- deconv1 (k=4, stride=1, pad=0) on a 1x1 input: a pure matmul ------
    x = x_nchw.reshape(n, 100).astype(jnp.float32)
    a = jnp.pad(x, ((0, 0), (0, LANE - 100))).astype(jnp.bfloat16)
    c1 = prep["c1"]
    y = pallas_matmul(a, prep["B1"])                        # (N, 16*C1) f32
    y = y.reshape(n * 16, c1)                               # NHWC-flat (N*4*4, C1)
    act = batchnorm_relu(y, prep["gamma1"], prep["beta1"])  # bf16
    h = w = 4

    # ---- deconv2-4: stride-2 scatter matmul + overlap-add + BN + ReLU ------
    for i in range(2, 5):
        cout, cp = prep[f"cout{i}"], prep[f"cp{i}"]
        yb = pallas_matmul(act, prep[f"B{i}"])              # (N*H*W, 16*cp) f32
        yb = yb.reshape(n, h, w, 4, 4, cp)
        y = _overlap_add_stride2(yb)                        # (N, 2H, 2W, cp)
        h, w = 2 * h, 2 * w
        y = y.reshape(n * h * w, cp)[:, :cout]              # cp == cout here
        act = batchnorm_relu(y, prep[f"gamma{i}"], prep[f"beta{i}"])

    # ---- deconv5 + bias + tanh ---------------------------------------------
    cout, cp = prep["cout5"], prep["cp5"]
    yb = pallas_matmul(act, prep["B5"])                     # (N*H*W, 16*cp) f32
    yb = yb.reshape(n, h, w, 4, 4, cp)
    y = _overlap_add_stride2(yb)                            # (N, 2H, 2W, cp)
    h, w = 2 * h, 2 * w
    y = _pallas_elementwise(_bias_tanh_kernel, y.reshape(n * h * w, cp),
                            [prep["b5p"]], jnp.float32)
    y = y.reshape(n, h, w, cp)[..., :cout]                  # drop padded channels
    return jnp.transpose(y, (0, 3, 1, 2))                   # NHWC -> NCHW


if __name__ == "__main__":
    d = 16            # PyTorch default is d=128; scaled down for a small test
    batch = 2
    key = jax.random.PRNGKey(0)
    kp, kx = jax.random.split(key)
    params = init_generator_params(kp, d=d)
    prep = prepare_params(params)
    x = jax.random.normal(kx, (batch, 100, 1, 1), jnp.float32)

    fwd = jax.jit(functools.partial(generator_forward, prep))
    out = jax.block_until_ready(fwd(x))

    assert out.shape == (batch, 3, 64, 64), out.shape
    assert bool(jnp.all(jnp.isfinite(out)))
    assert bool(jnp.all(jnp.abs(out) <= 1.0))               # tanh range
    print("KERNEL_OK")
</pallas_src>

<mosaic_0001>
module attributes {stable_mosaic.version = 11 : i64} {
  func.func @_matmul_kernel(%arg0: i32, %arg1: i32, %arg2: i32, %arg3: memref<16x128xbf16, #tpu.memory_space<vmem>>, %arg4: memref<128x512xbf16, #tpu.memory_space<vmem>>, %arg5: memref<16x512xf32, #tpu.memory_space<vmem>>, %arg6: memref<16x512xf32, #tpu.memory_space<vmem>>) attributes {dimension_semantics = [#tpu.dimension_semantics<parallel>, #tpu.dimension_semantics<parallel>, #tpu.dimension_semantics<arbitrary>], iteration_bounds = array<i64: 1, 4, 1>, scalar_prefetch = 0 : i64, scratch_operands = 1 : i64, tpu.core_type = #tpu.core_type<tc>, window_params = [{transform_indices = @transform_0, window_bounds = array<i64: 16, 128>}, {transform_indices = @transform_1, window_bounds = array<i64: 128, 512>}, {transform_indices = @transform_2, window_bounds = array<i64: 16, 512>}]} {
    %c0_i32 = arith.constant 0 : i32
    %0 = arith.cmpi eq, %arg2, %c0_i32 : i32
    %1 = arith.extui %0 : i1 to i32
    %c0_i32_0 = arith.constant 0 : i32
    %2 = arith.cmpi ne, %1, %c0_i32_0 : i32
    scf.if %2 {
      %cst_10 = arith.constant 0.000000e+00 : f32
      %12 = vector.broadcast %cst_10 : f32 to vector<16x512xf32>
      %c0_11 = arith.constant 0 : index
      %c0_12 = arith.constant 0 : index
      %13 = vector.load %arg6[%c0_11, %c0_12] : memref<16x512xf32, #tpu.memory_space<vmem>>, vector<16x512xf32>
      tpu.vector_store %arg6[%c0_11, %c0_12], %12 {strides = array<i32>} : memref<16x512xf32, #tpu.memory_space<vmem>>, vector<16x512xf32>,
    } else {
    }
    %c0 = arith.constant 0 : index
    %c0_1 = arith.constant 0 : index
    %3 = vector.load %arg6[%c0, %c0_1] : memref<16x512xf32, #tpu.memory_space<vmem>>, vector<16x512xf32>
    %c0_2 = arith.constant 0 : index
    %c0_3 = arith.constant 0 : index
    %4 = vector.load %arg3[%c0_2, %c0_3] : memref<16x128xbf16, #tpu.memory_space<vmem>>, vector<16x128xbf16>
    %c0_4 = arith.constant 0 : index
    %c0_5 = arith.constant 0 : index
    %5 = vector.load %arg4[%c0_4, %c0_5] : memref<128x512xbf16, #tpu.memory_space<vmem>>, vector<128x512xbf16>
    %cst = arith.constant dense<0.000000e+00> : vector<16x512xf32>
    %6 = tpu.matmul %4, %5, %cst {dimension_numbers = #tpu.dot_dimension_numbers<[1], [0], [0], [1], [0, 0, 1, 1], [], []>} : vector<16x128xbf16>, vector<128x512xbf16>, vector<16x512xf32> -> vector<16x512xf32>
    %7 = arith.addf %3, %6 : vector<16x512xf32>
    %c0_6 = arith.constant 0 : index
    %c0_7 = arith.constant 0 : index
    %8 = vector.load %arg6[%c0_6, %c0_7] : memref<16x512xf32, #tpu.memory_space<vmem>>, vector<16x512xf32>
    tpu.vector_store %arg6[%c0_6, %c0_7], %7 {strides = array<i32>} : memref<16x512xf32, #tpu.memory_space<vmem>>, vector<16x512xf32>,
    %c0_i32_8 = arith.constant 0 : i32
    %9 = arith.cmpi eq, %arg2, %c0_i32_8 : i32
    %10 = arith.extui %9 : i1 to i32
    %c0_i32_9 = arith.constant 0 : i32
    %11 = arith.cmpi ne, %10, %c0_i32_9 : i32
    scf.if %11 {
      %c0_10 = arith.constant 0 : index
      %c0_11 = arith.constant 0 : index
      %12 = vector.load %arg6[%c0_10, %c0_11] : memref<16x512xf32, #tpu.memory_space<vmem>>, vector<16x512xf32>
      %c0_12 = arith.constant 0 : index
      %c0_13 = arith.constant 0 : index
      %13 = vector.load %arg5[%c0_12, %c0_13] : memref<16x512xf32, #tpu.memory_space<vmem>>, vector<16x512xf32>
      tpu.vector_store %arg5[%c0_12, %c0_13], %12 {strides = array<i32>} : memref<16x512xf32, #tpu.memory_space<vmem>>, vector<16x512xf32>,
    } else {
    }
    return
  }
  func.func @transform_0(%arg0: i32, %arg1: i32, %arg2: i32) -> (i32, i32) {
    %c0_i32 = arith.constant 0 : i32
    return %arg0, %arg2 : i32, i32
  }
  func.func @transform_1(%arg0: i32, %arg1: i32, %arg2: i32) -> (i32, i32) {
    %c0_i32 = arith.constant 0 : i32
    return %arg2, %arg1 : i32, i32
  }
  func.func @transform_2(%arg0: i32, %arg1: i32, %arg2: i32) -> (i32, i32) {
    %c0_i32 = arith.constant 0 : i32
    return %arg0, %arg1 : i32, i32
  }
}

module attributes {stable_mosaic.version = 11 : i64} {
  func.func @_scale_shift_relu_kernel(%arg0: i32, %arg1: memref<32x128xf32, #tpu.memory_space<vmem>>, %arg2: memref<1x128xf32, #tpu.memory_space<vmem>>, %arg3: memref<1x128xf32, #tpu.memory_space<vmem>>, %arg4: memref<32x128xbf16, #tpu.memory_space<vmem>>) attributes {dimension_semantics = [#tpu.dimension_semantics<parallel>], iteration_bounds = array<i64: 1>, scalar_prefetch = 0 : i64, scratch_operands = 0 : i64, tpu.core_type = #tpu.core_type<tc>, window_params = [{transform_indices = @transform_0, window_bounds = array<i64: 32, 128>}, {pipeline_mode = #tpu.pipeline_mode<synchronous>, transform_indices = @transform_1, window_bounds = array<i64: 1, 128>}, {pipeline_mode = #tpu.pipeline_mode<synchronous>, transform_indices = @transform_2, window_bounds = array<i64: 1, 128>}, {transform_indices = @transform_3, window_bounds = array<i64: 32, 128>}]} {
    %c0 = arith.constant 0 : index
    %c0_0 = arith.constant 0 : index
    %0 = vector.load %arg1[%c0, %c0_0] : memref<32x128xf32, #tpu.memory_space<vmem>>, vector<32x128xf32>
    %c0_1 = arith.constant 0 : index
    %c0_2 = arith.constant 0 : index
    %1 = vector.load %arg2[%c0_1, %c0_2] : memref<1x128xf32, #tpu.memory_space<vmem>>, vector<1x128xf32>
    %2 = vector.broadcast %1 : vector<1x128xf32> to vector<32x128xf32>
    %3 = arith.mulf %0, %2 : vector<32x128xf32>
    %c0_3 = arith.constant 0 : index
    %c0_4 = arith.constant 0 : index
    %4 = vector.load %arg3[%c0_3, %c0_4] : memref<1x128xf32, #tpu.memory_space<vmem>>, vector<1x128xf32>
    %5 = vector.broadcast %4 : vector<1x128xf32> to vector<32x128xf32>
    %6 = arith.addf %3, %5 : vector<32x128xf32>
    %cst = arith.constant 0.000000e+00 : f32
    %7 = vector.broadcast %cst : f32 to vector<32x128xf32>
    %8 = arith.maximumf %6, %7 : vector<32x128xf32>
    %9 = arith.truncf %8 : vector<32x128xf32> to vector<32x128xbf16>
    %c0_5 = arith.constant 0 : index
    %c0_6 = arith.constant 0 : index
    %10 = vector.load %arg4[%c0_5, %c0_6] : memref<32x128xbf16, #tpu.memory_space<vmem>>, vector<32x128xbf16>
    tpu.vector_store %arg4[%c0_5, %c0_6], %9 {strides = array<i32>} : memref<32x128xbf16, #tpu.memory_space<vmem>>, vector<32x128xbf16>,
    return
  }
  func.func @transform_0(%arg0: i32) -> (i32, i32) {
    %c0_i32 = arith.constant 0 : i32
    %c0_i32_0 = arith.constant 0 : i32
    return %arg0, %c0_i32 : i32, i32
  }
  func.func @transform_1(%arg0: i32) -> (i32, i32) {
    %c0_i32 = arith.constant 0 : i32
    %c0_i32_0 = arith.constant 0 : i32
    %c0_i32_1 = arith.constant 0 : i32
    return %c0_i32, %c0_i32_0 : i32, i32
  }
  func.func @transform_2(%arg0: i32) -> (i32, i32) {
    %c0_i32 = arith.constant 0 : i32
    %c0_i32_0 = arith.constant 0 : i32
    %c0_i32_1 = arith.constant 0 : i32
    return %c0_i32, %c0_i32_0 : i32, i32
  }
  func.func @transform_3(%arg0: i32) -> (i32, i32) {
    %c0_i32 = arith.constant 0 : i32
    %c0_i32_0 = arith.constant 0 : i32
    return %arg0, %c0_i32 : i32, i32
  }
}

module attributes {stable_mosaic.version = 11 : i64} {
  func.func @_matmul_kernel(%arg0: i32, %arg1: i32, %arg2: i32, %arg3: memref<32x128xbf16, #tpu.memory_space<vmem>>, %arg4: memref<128x512xbf16, #tpu.memory_space<vmem>>, %arg5: memref<32x512xf32, #tpu.memory_space<vmem>>, %arg6: memref<32x512xf32, #tpu.memory_space<vmem>>) attributes {dimension_semantics = [#tpu.dimension_semantics<parallel>, #tpu.dimension_semantics<parallel>, #tpu.dimension_semantics<arbitrary>], iteration_bounds = array<i64: 1, 2, 1>, scalar_prefetch = 0 : i64, scratch_operands = 1 : i64, tpu.core_type = #tpu.core_type<tc>, window_params = [{transform_indices = @transform_0, window_bounds = array<i64: 32, 128>}, {transform_indices = @transform_1, window_bounds = array<i64: 128, 512>}, {transform_indices = @transform_2, window_bounds = array<i64: 32, 512>}]} {
    %c0_i32 = arith.constant 0 : i32
    %0 = arith.cmpi eq, %arg2, %c0_i32 : i32
    %1 = arith.extui %0 : i1 to i32
    %c0_i32_0 = arith.constant 0 : i32
    %2 = arith.cmpi ne, %1, %c0_i32_0 : i32
    scf.if %2 {
      %cst_10 = arith.constant 0.000000e+00 : f32
      %12 = vector.broadcast %cst_10 : f32 to vector<32x512xf32>
      %c0_11 = arith.constant 0 : index
      %c0_12 = arith.constant 0 : index
      %13 = vector.load %arg6[%c0_11, %c0_12] : memref<32x512xf32, #tpu.memory_space<vmem>>, vector<32x512xf32>
      tpu.vector_store %arg6[%c0_11, %c0_12], %12 {strides = array<i32>} : memref<32x512xf32, #tpu.memory_space<vmem>>, vector<32x512xf32>,
    } else {
    }
    %c0 = arith.constant 0 : index
    %c0_1 = arith.constant 0 : index
    %3 = vector.load %arg6[%c0, %c0_1] : memref<32x512xf32, #tpu.memory_space<vmem>>, vector<32x512xf32>
    %c0_2 = arith.constant 0 : index
    %c0_3 = arith.constant 0 : index
    %4 = vector.load %arg3[%c0_2, %c0_3] : memref<32x128xbf16, #tpu.memory_space<vmem>>, vector<32x128xbf16>
    %c0_4 = arith.constant 0 : index
    %c0_5 = arith.constant 0 : index
    %5 = vector.load %arg4[%c0_4, %c0_5] : memref<128x512xbf16, #tpu.memory_space<vmem>>, vector<128x512xbf16>
    %cst = arith.constant dense<0.000000e+00> : vector<32x512xf32>
    %6 = tpu.matmul %4, %5, %cst {dimension_numbers = #tpu.dot_dimension_numbers<[1], [0], [0], [1], [0, 0, 1, 1], [], []>} : vector<32x128xbf16>, vector<128x512xbf16>, vector<32x512xf32> -> vector<32x512xf32>
    %7 = arith.addf %3, %6 : vector<32x512xf32>
    %c0_6 = arith.constant 0 : index
    %c0_7 = arith.constant 0 : index
    %8 = vector.load %arg6[%c0_6, %c0_7] : memref<32x512xf32, #tpu.memory_space<vmem>>, vector<32x512xf32>
    tpu.vector_store %arg6[%c0_6, %c0_7], %7 {strides = array<i32>} : memref<32x512xf32, #tpu.memory_space<vmem>>, vector<32x512xf32>,
    %c0_i32_8 = arith.constant 0 : i32
    %9 = arith.cmpi eq, %arg2, %c0_i32_8 : i32
    %10 = arith.extui %9 : i1 to i32
    %c0_i32_9 = arith.constant 0 : i32
    %11 = arith.cmpi ne, %10, %c0_i32_9 : i32
    scf.if %11 {
      %c0_10 = arith.constant 0 : index
      %c0_11 = arith.constant 0 : index
      %12 = vector.load %arg6[%c0_10, %c0_11] : memref<32x512xf32, #tpu.memory_space<vmem>>, vector<32x512xf32>
      %c0_12 = arith.constant 0 : index
      %c0_13 = arith.constant 0 : index
      %13 = vector.load %arg5[%c0_12, %c0_13] : memref<32x512xf32, #tpu.memory_space<vmem>>, vector<32x512xf32>
      tpu.vector_store %arg5[%c0_12, %c0_13], %12 {strides = array<i32>} : memref<32x512xf32, #tpu.memory_space<vmem>>, vector<32x512xf32>,
    } else {
    }
    return
  }
  func.func @transform_0(%arg0: i32, %arg1: i32, %arg2: i32) -> (i32, i32) {
    %c0_i32 = arith.constant 0 : i32
    return %arg0, %arg2 : i32, i32
  }
  func.func @transform_1(%arg0: i32, %arg1: i32, %arg2: i32) -> (i32, i32) {
    %c0_i32 = arith.constant 0 : i32
    return %arg2, %arg1 : i32, i32
  }
  func.func @transform_2(%arg0: i32, %arg1: i32, %arg2: i32) -> (i32, i32) {
    %c0_i32 = arith.constant 0 : i32
    return %arg0, %arg1 : i32, i32
  }
}

module attributes {stable_mosaic.version = 11 : i64} {
  func.func @_scale_shift_relu_kernel(%arg0: i32, %arg1: memref<64x128xf32, #tpu.memory_space<vmem>>, %arg2: memref<1x128xf32, #tpu.memory_space<vmem>>, %arg3: memref<1x128xf32, #tpu.memory_space<vmem>>, %arg4: memref<64x128xbf16, #tpu.memory_space<vmem>>) attributes {dimension_semantics = [#tpu.dimension_semantics<parallel>], iteration_bounds = array<i64: 1>, scalar_prefetch = 0 : i64, scratch_operands = 0 : i64, tpu.core_type = #tpu.core_type<tc>, window_params = [{transform_indices = @transform_0, window_bounds = array<i64: 64, 128>}, {pipeline_mode = #tpu.pipeline_mode<synchronous>, transform_indices = @transform_1, window_bounds = array<i64: 1, 128>}, {pipeline_mode = #tpu.pipeline_mode<synchronous>, transform_indices = @transform_2, window_bounds = array<i64: 1, 128>}, {transform_indices = @transform_3, window_bounds = array<i64: 64, 128>}]} {
    %c0 = arith.constant 0 : index
    %c0_0 = arith.constant 0 : index
    %0 = vector.load %arg1[%c0, %c0_0] : memref<64x128xf32, #tpu.memory_space<vmem>>, vector<64x128xf32>
    %c0_1 = arith.constant 0 : index
    %c0_2 = arith.constant 0 : index
    %1 = vector.load %arg2[%c0_1, %c0_2] : memref<1x128xf32, #tpu.memory_space<vmem>>, vector<1x128xf32>
    %2 = vector.broadcast %1 : vector<1x128xf32> to vector<64x128xf32>
    %3 = arith.mulf %0, %2 : vector<64x128xf32>
    %c0_3 = arith.constant 0 : index
    %c0_4 = arith.constant 0 : index
    %4 = vector.load %arg3[%c0_3, %c0_4] : memref<1x128xf32, #tpu.memory_space<vmem>>, vector<1x128xf32>
    %5 = vector.broadcast %4 : vector<1x128xf32> to vector<64x128xf32>
    %6 = arith.addf %3, %5 : vector<64x128xf32>
    %cst = arith.constant 0.000000e+00 : f32
    %7 = vector.broadcast %cst : f32 to vector<64x128xf32>
    %8 = arith.maximumf %6, %7 : vector<64x128xf32>
    %9 = arith.truncf %8 : vector<64x128xf32> to vector<64x128xbf16>
    %c0_5 = arith.constant 0 : index
    %c0_6 = arith.constant 0 : index
    %10 = vector.load %arg4[%c0_5, %c0_6] : memref<64x128xbf16, #tpu.memory_space<vmem>>, vector<64x128xbf16>
    tpu.vector_store %arg4[%c0_5, %c0_6], %9 {strides = array<i32>} : memref<64x128xbf16, #tpu.memory_space<vmem>>, vector<64x128xbf16>,
    return
  }
  func.func @transform_0(%arg0: i32) -> (i32, i32) {
    %c0_i32 = arith.constant 0 : i32
    %c0_i32_0 = arith.constant 0 : i32
    return %arg0, %c0_i32 : i32, i32
  }
  func.func @transform_1(%arg0: i32) -> (i32, i32) {
    %c0_i32 = arith.constant 0 : i32
    %c0_i32_0 = arith.constant 0 : i32
    %c0_i32_1 = arith.constant 0 : i32
    return %c0_i32, %c0_i32_0 : i32, i32
  }
  func.func @transform_2(%arg0: i32) -> (i32, i32) {
    %c0_i32 = arith.constant 0 : i32
    %c0_i32_0 = arith.constant 0 : i32
    %c0_i32_1 = arith.constant 0 : i32
    return %c0_i32, %c0_i32_0 : i32, i32
  }
  func.func @transform_3(%arg0: i32) -> (i32, i32) {
    %c0_i32 = arith.constant 0 : i32
    %c0_i32_0 = arith.constant 0 : i32
    return %arg0, %c0_i32 : i32, i32
  }
}

module attributes {stable_mosaic.version = 11 : i64} {
  func.func @_matmul_kernel(%arg0: i32, %arg1: i32, %arg2: i32, %arg3: memref<128x64xbf16, #tpu.memory_space<vmem>>, %arg4: memref<64x512xbf16, #tpu.memory_space<vmem>>, %arg5: memref<128x512xf32, #tpu.memory_space<vmem>>, %arg6: memref<128x512xf32, #tpu.memory_space<vmem>>) attributes {dimension_semantics = [#tpu.dimension_semantics<parallel>, #tpu.dimension_semantics<parallel>, #tpu.dimension_semantics<arbitrary>], iteration_bounds = array<i64: 1, 1, 1>, scalar_prefetch = 0 : i64, scratch_operands = 1 : i64, tpu.core_type = #tpu.core_type<tc>, window_params = [{transform_indices = @transform_0, window_bounds = array<i64: 128, 64>}, {transform_indices = @transform_1, window_bounds = array<i64: 64, 512>}, {transform_indices = @transform_2, window_bounds = array<i64: 128, 512>}]} {
    %c0_i32 = arith.constant 0 : i32
    %0 = arith.cmpi eq, %arg2, %c0_i32 : i32
    %1 = arith.extui %0 : i1 to i32
    %c0_i32_0 = arith.constant 0 : i32
    %2 = arith.cmpi ne, %1, %c0_i32_0 : i32
    scf.if %2 {
      %cst_10 = arith.constant 0.000000e+00 : f32
      %12 = vector.broadcast %cst_10 : f32 to vector<128x512xf32>
      %c0_11 = arith.constant 0 : index
      %c0_12 = arith.constant 0 : index
      %13 = vector.load %arg6[%c0_11, %c0_12] : memref<128x512xf32, #tpu.memory_space<vmem>>, vector<128x512xf32>
      tpu.vector_store %arg6[%c0_11, %c0_12], %12 {strides = array<i32>} : memref<128x512xf32, #tpu.memory_space<vmem>>, vector<128x512xf32>,
    } else {
    }
    %c0 = arith.constant 0 : index
    %c0_1 = arith.constant 0 : index
    %3 = vector.load %arg6[%c0, %c0_1] : memref<128x512xf32, #tpu.memory_space<vmem>>, vector<128x512xf32>
    %c0_2 = arith.constant 0 : index
    %c0_3 = arith.constant 0 : index
    %4 = vector.load %arg3[%c0_2, %c0_3] : memref<128x64xbf16, #tpu.memory_space<vmem>>, vector<128x64xbf16>
    %c0_4 = arith.constant 0 : index
    %c0_5 = arith.constant 0 : index
    %5 = vector.load %arg4[%c0_4, %c0_5] : memref<64x512xbf16, #tpu.memory_space<vmem>>, vector<64x512xbf16>
    %cst = arith.constant dense<0.000000e+00> : vector<128x512xf32>
    %6 = tpu.matmul %4, %5, %cst {dimension_numbers = #tpu.dot_dimension_numbers<[1], [0], [0], [1], [0, 0, 1, 1], [], []>} : vector<128x64xbf16>, vector<64x512xbf16>, vector<128x512xf32> -> vector<128x512xf32>
    %7 = arith.addf %3, %6 : vector<128x512xf32>
    %c0_6 = arith.constant 0 : index
    %c0_7 = arith.constant 0 : index
    %8 = vector.load %arg6[%c0_6, %c0_7] : memref<128x512xf32, #tpu.memory_space<vmem>>, vector<128x512xf32>
    tpu.vector_store %arg6[%c0_6, %c0_7], %7 {strides = array<i32>} : memref<128x512xf32, #tpu.memory_space<vmem>>, vector<128x512xf32>,
    %c0_i32_8 = arith.constant 0 : i32
    %9 = arith.cmpi eq, %arg2, %c0_i32_8 : i32
    %10 = arith.extui %9 : i1 to i32
    %c0_i32_9 = arith.constant 0 : i32
    %11 = arith.cmpi ne, %10, %c0_i32_9 : i32
    scf.if %11 {
      %c0_10 = arith.constant 0 : index
      %c0_11 = arith.constant 0 : index
      %12 = vector.load %arg6[%c0_10, %c0_11] : memref<128x512xf32, #tpu.memory_space<vmem>>, vector<128x512xf32>
      %c0_12 = arith.constant 0 : index
      %c0_13 = arith.constant 0 : index
      %13 = vector.load %arg5[%c0_12, %c0_13] : memref<128x512xf32, #tpu.memory_space<vmem>>, vector<128x512xf32>
      tpu.vector_store %arg5[%c0_12, %c0_13], %12 {strides = array<i32>} : memref<128x512xf32, #tpu.memory_space<vmem>>, vector<128x512xf32>,
    } else {
    }
    return
  }
  func.func @transform_0(%arg0: i32, %arg1: i32, %arg2: i32) -> (i32, i32) {
    %c0_i32 = arith.constant 0 : i32
    return %arg0, %arg2 : i32, i32
  }
  func.func @transform_1(%arg0: i32, %arg1: i32, %arg2: i32) -> (i32, i32) {
    %c0_i32 = arith.constant 0 : i32
    return %arg2, %arg1 : i32, i32
  }
  func.func @transform_2(%arg0: i32, %arg1: i32, %arg2: i32) -> (i32, i32) {
    %c0_i32 = arith.constant 0 : i32
    return %arg0, %arg1 : i32, i32
  }
}

module attributes {stable_mosaic.version = 11 : i64} {
  func.func @_scale_shift_relu_kernel(%arg0: i32, %arg1: memref<128x128xf32, #tpu.memory_space<vmem>>, %arg2: memref<1x128xf32, #tpu.memory_space<vmem>>, %arg3: memref<1x128xf32, #tpu.memory_space<vmem>>, %arg4: memref<128x128xbf16, #tpu.memory_space<vmem>>) attributes {dimension_semantics = [#tpu.dimension_semantics<parallel>], iteration_bounds = array<i64: 1>, scalar_prefetch = 0 : i64, scratch_operands = 0 : i64, tpu.core_type = #tpu.core_type<tc>, window_params = [{transform_indices = @transform_0, window_bounds = array<i64: 128, 128>}, {pipeline_mode = #tpu.pipeline_mode<synchronous>, transform_indices = @transform_1, window_bounds = array<i64: 1, 128>}, {pipeline_mode = #tpu.pipeline_mode<synchronous>, transform_indices = @transform_2, window_bounds = array<i64: 1, 128>}, {transform_indices = @transform_3, window_bounds = array<i64: 128, 128>}]} {
    %c0 = arith.constant 0 : index
    %c0_0 = arith.constant 0 : index
    %0 = vector.load %arg1[%c0, %c0_0] : memref<128x128xf32, #tpu.memory_space<vmem>>, vector<128x128xf32>
    %c0_1 = arith.constant 0 : index
    %c0_2 = arith.constant 0 : index
    %1 = vector.load %arg2[%c0_1, %c0_2] : memref<1x128xf32, #tpu.memory_space<vmem>>, vector<1x128xf32>
    %2 = vector.broadcast %1 : vector<1x128xf32> to vector<128x128xf32>
    %3 = arith.mulf %0, %2 : vector<128x128xf32>
    %c0_3 = arith.constant 0 : index
    %c0_4 = arith.constant 0 : index
    %4 = vector.load %arg3[%c0_3, %c0_4] : memref<1x128xf32, #tpu.memory_space<vmem>>, vector<1x128xf32>
    %5 = vector.broadcast %4 : vector<1x128xf32> to vector<128x128xf32>
    %6 = arith.addf %3, %5 : vector<128x128xf32>
    %cst = arith.constant 0.000000e+00 : f32
    %7 = vector.broadcast %cst : f32 to vector<128x128xf32>
    %8 = arith.maximumf %6, %7 : vector<128x128xf32>
    %9 = arith.truncf %8 : vector<128x128xf32> to vector<128x128xbf16>
    %c0_5 = arith.constant 0 : index
    %c0_6 = arith.constant 0 : index
    %10 = vector.load %arg4[%c0_5, %c0_6] : memref<128x128xbf16, #tpu.memory_space<vmem>>, vector<128x128xbf16>
    tpu.vector_store %arg4[%c0_5, %c0_6], %9 {strides = array<i32>} : memref<128x128xbf16, #tpu.memory_space<vmem>>, vector<128x128xbf16>,
    return
  }
  func.func @transform_0(%arg0: i32) -> (i32, i32) {
    %c0_i32 = arith.constant 0 : i32
    %c0_i32_0 = arith.constant 0 : i32
    return %arg0, %c0_i32 : i32, i32
  }
  func.func @transform_1(%arg0: i32) -> (i32, i32) {
    %c0_i32 = arith.constant 0 : i32
    %c0_i32_0 = arith.constant 0 : i32
    %c0_i32_1 = arith.constant 0 : i32
    return %c0_i32, %c0_i32_0 : i32, i32
  }
  func.func @transform_2(%arg0: i32) -> (i32, i32) {
    %c0_i32 = arith.constant 0 : i32
    %c0_i32_0 = arith.constant 0 : i32
    %c0_i32_1 = arith.constant 0 : i32
    return %c0_i32, %c0_i32_0 : i32, i32
  }
  func.func @transform_3(%arg0: i32) -> (i32, i32) {
    %c0_i32 = arith.constant 0 : i32
    %c0_i32_0 = arith.constant 0 : i32
    return %arg0, %c0_i32 : i32, i32
  }
}

module attributes {stable_mosaic.version = 11 : i64} {
  func.func @_matmul_kernel(%arg0: i32, %arg1: i32, %arg2: i32, %arg3: memref<512x32xbf16, #tpu.memory_space<vmem>>, %arg4: memref<32x256xbf16, #tpu.memory_space<vmem>>, %arg5: memref<512x256xf32, #tpu.memory_space<vmem>>, %arg6: memref<512x256xf32, #tpu.memory_space<vmem>>) attributes {dimension_semantics = [#tpu.dimension_semantics<parallel>, #tpu.dimension_semantics<parallel>, #tpu.dimension_semantics<arbitrary>], iteration_bounds = array<i64: 1, 1, 1>, scalar_prefetch = 0 : i64, scratch_operands = 1 : i64, tpu.core_type = #tpu.core_type<tc>, window_params = [{transform_indices = @transform_0, window_bounds = array<i64: 512, 32>}, {transform_indices = @transform_1, window_bounds = array<i64: 32, 256>}, {transform_indices = @transform_2, window_bounds = array<i64: 512, 256>}]} {
    %c0_i32 = arith.constant 0 : i32
    %0 = arith.cmpi eq, %arg2, %c0_i32 : i32
    %1 = arith.extui %0 : i1 to i32
    %c0_i32_0 = arith.constant 0 : i32
    %2 = arith.cmpi ne, %1, %c0_i32_0 : i32
    scf.if %2 {
      %cst_10 = arith.constant 0.000000e+00 : f32
      %12 = vector.broadcast %cst_10 : f32 to vector<512x256xf32>
      %c0_11 = arith.constant 0 : index
      %c0_12 = arith.constant 0 : index
      %13 = vector.load %arg6[%c0_11, %c0_12] : memref<512x256xf32, #tpu.memory_space<vmem>>, vector<512x256xf32>
      tpu.vector_store %arg6[%c0_11, %c0_12], %12 {strides = array<i32>} : memref<512x256xf32, #tpu.memory_space<vmem>>, vector<512x256xf32>,
    } else {
    }
    %c0 = arith.constant 0 : index
    %c0_1 = arith.constant 0 : index
    %3 = vector.load %arg6[%c0, %c0_1] : memref<512x256xf32, #tpu.memory_space<vmem>>, vector<512x256xf32>
    %c0_2 = arith.constant 0 : index
    %c0_3 = arith.constant 0 : index
    %4 = vector.load %arg3[%c0_2, %c0_3] : memref<512x32xbf16, #tpu.memory_space<vmem>>, vector<512x32xbf16>
    %c0_4 = arith.constant 0 : index
    %c0_5 = arith.constant 0 : index
    %5 = vector.load %arg4[%c0_4, %c0_5] : memref<32x256xbf16, #tpu.memory_space<vmem>>, vector<32x256xbf16>
    %cst = arith.constant dense<0.000000e+00> : vector<512x256xf32>
    %6 = tpu.matmul %4, %5, %cst {dimension_numbers = #tpu.dot_dimension_numbers<[1], [0], [0], [1], [0, 0, 1, 1], [], []>} : vector<512x32xbf16>, vector<32x256xbf16>, vector<512x256xf32> -> vector<512x256xf32>
    %7 = arith.addf %3, %6 : vector<512x256xf32>
    %c0_6 = arith.constant 0 : index
    %c0_7 = arith.constant 0 : index
    %8 = vector.load %arg6[%c0_6, %c0_7] : memref<512x256xf32, #tpu.memory_space<vmem>>, vector<512x256xf32>
    tpu.vector_store %arg6[%c0_6, %c0_7], %7 {strides = array<i32>} : memref<512x256xf32, #tpu.memory_space<vmem>>, vector<512x256xf32>,
    %c0_i32_8 = arith.constant 0 : i32
    %9 = arith.cmpi eq, %arg2, %c0_i32_8 : i32
    %10 = arith.extui %9 : i1 to i32
    %c0_i32_9 = arith.constant 0 : i32
    %11 = arith.cmpi ne, %10, %c0_i32_9 : i32
    scf.if %11 {
      %c0_10 = arith.constant 0 : index
      %c0_11 = arith.constant 0 : index
      %12 = vector.load %arg6[%c0_10, %c0_11] : memref<512x256xf32, #tpu.memory_space<vmem>>, vector<512x256xf32>
      %c0_12 = arith.constant 0 : index
      %c0_13 = arith.constant 0 : index
      %13 = vector.load %arg5[%c0_12, %c0_13] : memref<512x256xf32, #tpu.memory_space<vmem>>, vector<512x256xf32>
      tpu.vector_store %arg5[%c0_12, %c0_13], %12 {strides = array<i32>} : memref<512x256xf32, #tpu.memory_space<vmem>>, vector<512x256xf32>,
    } else {
    }
    return
  }
  func.func @transform_0(%arg0: i32, %arg1: i32, %arg2: i32) -> (i32, i32) {
    %c0_i32 = arith.constant 0 : i32
    return %arg0, %arg2 : i32, i32
  }
  func.func @transform_1(%arg0: i32, %arg1: i32, %arg2: i32) -> (i32, i32) {
    %c0_i32 = arith.constant 0 : i32
    return %arg2, %arg1 : i32, i32
  }
  func.func @transform_2(%arg0: i32, %arg1: i32, %arg2: i32) -> (i32, i32) {
    %c0_i32 = arith.constant 0 : i32
    return %arg0, %arg1 : i32, i32
  }
}

module attributes {stable_mosaic.version = 11 : i64} {
  func.func @_scale_shift_relu_kernel(%arg0: i32, %arg1: memref<256x128xf32, #tpu.memory_space<vmem>>, %arg2: memref<1x128xf32, #tpu.memory_space<vmem>>, %arg3: memref<1x128xf32, #tpu.memory_space<vmem>>, %arg4: memref<256x128xbf16, #tpu.memory_space<vmem>>) attributes {dimension_semantics = [#tpu.dimension_semantics<parallel>], iteration_bounds = array<i64: 1>, scalar_prefetch = 0 : i64, scratch_operands = 0 : i64, tpu.core_type = #tpu.core_type<tc>, window_params = [{transform_indices = @transform_0, window_bounds = array<i64: 256, 128>}, {pipeline_mode = #tpu.pipeline_mode<synchronous>, transform_indices = @transform_1, window_bounds = array<i64: 1, 128>}, {pipeline_mode = #tpu.pipeline_mode<synchronous>, transform_indices = @transform_2, window_bounds = array<i64: 1, 128>}, {transform_indices = @transform_3, window_bounds = array<i64: 256, 128>}]} {
    %c0 = arith.constant 0 : index
    %c0_0 = arith.constant 0 : index
    %0 = vector.load %arg1[%c0, %c0_0] : memref<256x128xf32, #tpu.memory_space<vmem>>, vector<256x128xf32>
    %c0_1 = arith.constant 0 : index
    %c0_2 = arith.constant 0 : index
    %1 = vector.load %arg2[%c0_1, %c0_2] : memref<1x128xf32, #tpu.memory_space<vmem>>, vector<1x128xf32>
    %2 = vector.broadcast %1 : vector<1x128xf32> to vector<256x128xf32>
    %3 = arith.mulf %0, %2 : vector<256x128xf32>
    %c0_3 = arith.constant 0 : index
    %c0_4 = arith.constant 0 : index
    %4 = vector.load %arg3[%c0_3, %c0_4] : memref<1x128xf32, #tpu.memory_space<vmem>>, vector<1x128xf32>
    %5 = vector.broadcast %4 : vector<1x128xf32> to vector<256x128xf32>
    %6 = arith.addf %3, %5 : vector<256x128xf32>
    %cst = arith.constant 0.000000e+00 : f32
    %7 = vector.broadcast %cst : f32 to vector<256x128xf32>
    %8 = arith.maximumf %6, %7 : vector<256x128xf32>
    %9 = arith.truncf %8 : vector<256x128xf32> to vector<256x128xbf16>
    %c0_5 = arith.constant 0 : index
    %c0_6 = arith.constant 0 : index
    %10 = vector.load %arg4[%c0_5, %c0_6] : memref<256x128xbf16, #tpu.memory_space<vmem>>, vector<256x128xbf16>
    tpu.vector_store %arg4[%c0_5, %c0_6], %9 {strides = array<i32>} : memref<256x128xbf16, #tpu.memory_space<vmem>>, vector<256x128xbf16>,
    return
  }
  func.func @transform_0(%arg0: i32) -> (i32, i32) {
    %c0_i32 = arith.constant 0 : i32
    %c0_i32_0 = arith.constant 0 : i32
    return %arg0, %c0_i32 : i32, i32
  }
  func.func @transform_1(%arg0: i32) -> (i32, i32) {
    %c0_i32 = arith.constant 0 : i32
    %c0_i32_0 = arith.constant 0 : i32
    %c0_i32_1 = arith.constant 0 : i32
    return %c0_i32, %c0_i32_0 : i32, i32
  }
  func.func @transform_2(%arg0: i32) -> (i32, i32) {
    %c0_i32 = arith.constant 0 : i32
    %c0_i32_0 = arith.constant 0 : i32
    %c0_i32_1 = arith.constant 0 : i32
    return %c0_i32, %c0_i32_0 : i32, i32
  }
  func.func @transform_3(%arg0: i32) -> (i32, i32) {
    %c0_i32 = arith.constant 0 : i32
    %c0_i32_0 = arith.constant 0 : i32
    return %arg0, %c0_i32 : i32, i32
  }
}

module attributes {stable_mosaic.version = 11 : i64} {
  func.func @_matmul_kernel(%arg0: i32, %arg1: i32, %arg2: i32, %arg3: memref<512x16xbf16, #tpu.memory_space<vmem>>, %arg4: memref<16x128xbf16, #tpu.memory_space<vmem>>, %arg5: memref<512x128xf32, #tpu.memory_space<vmem>>, %arg6: memref<512x128xf32, #tpu.memory_space<vmem>>) attributes {dimension_semantics = [#tpu.dimension_semantics<parallel>, #tpu.dimension_semantics<parallel>, #tpu.dimension_semantics<arbitrary>], iteration_bounds = array<i64: 4, 1, 1>, scalar_prefetch = 0 : i64, scratch_operands = 1 : i64, tpu.core_type = #tpu.core_type<tc>, window_params = [{transform_indices = @transform_0, window_bounds = array<i64: 512, 16>}, {transform_indices = @transform_1, window_bounds = array<i64: 16, 128>}, {transform_indices = @transform_2, window_bounds = array<i64: 512, 128>}]} {
    %c0_i32 = arith.constant 0 : i32
    %0 = arith.cmpi eq, %arg2, %c0_i32 : i32
    %1 = arith.extui %0 : i1 to i32
    %c0_i32_0 = arith.constant 0 : i32
    %2 = arith.cmpi ne, %1, %c0_i32_0 : i32
    scf.if %2 {
      %cst_10 = arith.constant 0.000000e+00 : f32
      %12 = vector.broadcast %cst_10 : f32 to vector<512x128xf32>
      %c0_11 = arith.constant 0 : index
      %c0_12 = arith.constant 0 : index
      %13 = vector.load %arg6[%c0_11, %c0_12] : memref<512x128xf32, #tpu.memory_space<vmem>>, vector<512x128xf32>
      tpu.vector_store %arg6[%c0_11, %c0_12], %12 {strides = array<i32>} : memref<512x128xf32, #tpu.memory_space<vmem>>, vector<512x128xf32>,
    } else {
    }
    %c0 = arith.constant 0 : index
    %c0_1 = arith.constant 0 : index
    %3 = vector.load %arg6[%c0, %c0_1] : memref<512x128xf32, #tpu.memory_space<vmem>>, vector<512x128xf32>
    %c0_2 = arith.constant 0 : index
    %c0_3 = arith.constant 0 : index
    %4 = vector.load %arg3[%c0_2, %c0_3] : memref<512x16xbf16, #tpu.memory_space<vmem>>, vector<512x16xbf16>
    %c0_4 = arith.constant 0 : index
    %c0_5 = arith.constant 0 : index
    %5 = vector.load %arg4[%c0_4, %c0_5] : memref<16x128xbf16, #tpu.memory_space<vmem>>, vector<16x128xbf16>
    %cst = arith.constant dense<0.000000e+00> : vector<512x128xf32>
    %6 = tpu.matmul %4, %5, %cst {dimension_numbers = #tpu.dot_dimension_numbers<[1], [0], [0], [1], [0, 0, 1, 1], [], []>} : vector<512x16xbf16>, vector<16x128xbf16>, vector<512x128xf32> -> vector<512x128xf32>
    %7 = arith.addf %3, %6 : vector<512x128xf32>
    %c0_6 = arith.constant 0 : index
    %c0_7 = arith.constant 0 : index
    %8 = vector.load %arg6[%c0_6, %c0_7] : memref<512x128xf32, #tpu.memory_space<vmem>>, vector<512x128xf32>
    tpu.vector_store %arg6[%c0_6, %c0_7], %7 {strides = array<i32>} : memref<512x128xf32, #tpu.memory_space<vmem>>, vector<512x128xf32>,
    %c0_i32_8 = arith.constant 0 : i32
    %9 = arith.cmpi eq, %arg2, %c0_i32_8 : i32
    %10 = arith.extui %9 : i1 to i32
    %c0_i32_9 = arith.constant 0 : i32
    %11 = arith.cmpi ne, %10, %c0_i32_9 : i32
    scf.if %11 {
      %c0_10 = arith.constant 0 : index
      %c0_11 = arith.constant 0 : index
      %12 = vector.load %arg6[%c0_10, %c0_11] : memref<512x128xf32, #tpu.memory_space<vmem>>, vector<512x128xf32>
      %c0_12 = arith.constant 0 : index
      %c0_13 = arith.constant 0 : index
      %13 = vector.load %arg5[%c0_12, %c0_13] : memref<512x128xf32, #tpu.memory_space<vmem>>, vector<512x128xf32>
      tpu.vector_store %arg5[%c0_12, %c0_13], %12 {strides = array<i32>} : memref<512x128xf32, #tpu.memory_space<vmem>>, vector<512x128xf32>,
    } else {
    }
    return
  }
  func.func @transform_0(%arg0: i32, %arg1: i32, %arg2: i32) -> (i32, i32) {
    %c0_i32 = arith.constant 0 : i32
    return %arg0, %arg2 : i32, i32
  }
  func.func @transform_1(%arg0: i32, %arg1: i32, %arg2: i32) -> (i32, i32) {
    %c0_i32 = arith.constant 0 : i32
    return %arg2, %arg1 : i32, i32
  }
  func.func @transform_2(%arg0: i32, %arg1: i32, %arg2: i32) -> (i32, i32) {
    %c0_i32 = arith.constant 0 : i32
    return %arg0, %arg1 : i32, i32
  }
}

module attributes {stable_mosaic.version = 11 : i64} {
  func.func @_bias_tanh_kernel(%arg0: i32, %arg1: memref<512x128xf32, #tpu.memory_space<vmem>>, %arg2: memref<1x128xf32, #tpu.memory_space<vmem>>, %arg3: memref<512x128xf32, #tpu.memory_space<vmem>>) attributes {dimension_semantics = [#tpu.dimension_semantics<parallel>], iteration_bounds = array<i64: 1>, scalar_prefetch = 0 : i64, scratch_operands = 0 : i64, tpu.core_type = #tpu.core_type<tc>, window_params = [{transform_indices = @transform_0, window_bounds = array<i64: 512, 128>}, {pipeline_mode = #tpu.pipeline_mode<synchronous>, transform_indices = @transform_1, window_bounds = array<i64: 1, 128>}, {transform_indices = @transform_2, window_bounds = array<i64: 512, 128>}]} {
    %c0 = arith.constant 0 : index
    %c0_0 = arith.constant 0 : index
    %0 = vector.load %arg1[%c0, %c0_0] : memref<512x128xf32, #tpu.memory_space<vmem>>, vector<512x128xf32>
    %c0_1 = arith.constant 0 : index
    %c0_2 = arith.constant 0 : index
    %1 = vector.load %arg2[%c0_1, %c0_2] : memref<1x128xf32, #tpu.memory_space<vmem>>, vector<1x128xf32>
    %2 = vector.broadcast %1 : vector<1x128xf32> to vector<512x128xf32>
    %3 = arith.addf %0, %2 : vector<512x128xf32>
    %4 = math.tanh %3 : vector<512x128xf32>
    %c0_3 = arith.constant 0 : index
    %c0_4 = arith.constant 0 : index
    %5 = vector.load %arg3[%c0_3, %c0_4] : memref<512x128xf32, #tpu.memory_space<vmem>>, vector<512x128xf32>
    tpu.vector_store %arg3[%c0_3, %c0_4], %4 {strides = array<i32>} : memref<512x128xf32, #tpu.memory_space<vmem>>, vector<512x128xf32>,
    return
  }
  func.func @transform_0(%arg0: i32) -> (i32, i32) {
    %c0_i32 = arith.constant 0 : i32
    %c0_i32_0 = arith.constant 0 : i32
    return %arg0, %c0_i32 : i32, i32
  }
  func.func @transform_1(%arg0: i32) -> (i32, i32) {
    %c0_i32 = arith.constant 0 : i32
    %c0_i32_0 = arith.constant 0 : i32
    %c0_i32_1 = arith.constant 0 : i32
    return %c0_i32, %c0_i32_0 : i32, i32
  }
  func.func @transform_2(%arg0: i32) -> (i32, i32) {
    %c0_i32 = arith.constant 0 : i32
    %c0_i32_0 = arith.constant 0 : i32
    return %arg0, %c0_i32 : i32, i32
  }
}

</mosaic_0001>

<llo_original>
// kernel: generator_forward.10
$region0: #{generator_forward.10}
  #allocation0 [shape = 'u32[]', space=smem, size = 0x4, offset = 0x4, fixed_abs, tag = 'smem constant byte address 0x4 - core index']
  #allocation1 [shape = 'u32[144,128]{1,0:T(1,128)}', space=vmem, size = 0x12000, scoped, tag = 'internal scratch']
  #allocation2 [shape = 'f32[16,512]{1,0:T(8,128)}', space=vmem, size = 0x8000, scoped, tag = 'scratch operand']
  %s0 = inlined_call_operand.vmem [shape: bf16[16,128], index: 0, kind: input, shape index: {}]
  %s1 = inlined_call_operand.vmem [shape: bf16[128,2048], index: 1, kind: input, shape index: {}]
  %s2 = inlined_call_operand.vmem [shape: f32[16,2048], index: 2, kind: output, shape index: {}]
  %s3 = sld [smem:[#allocation0]]
  $region91: #{generator_forward.10} parent=0
    _
  %s5 = ssub.s32 1, %s3
  %s6 = scalar_select 0, %s5, %s3
  $region1: #{generator_forward.10} parent=0
    #allocation3 [shape = 'u8[262144]{0}', space=vmem, size = 0x40000, scoped, tag = 'input window, operand 1']
    #allocation4 [shape = 'u8[65536]{0}', space=vmem, size = 0x10000, scoped, tag = 'output window, operand 0']
    loop: start=0, step=1, limit=6
    $region2: #{generator_forward.10} parent=1 // loop_pre_header
      _
    $region3: #{generator_forward.10} parent=1 // loop_header
      %s8 = sphi 0, %s12
      %p9 = scmp.ge.s32.totalorder %s8, 6
      %s15 = sphi 0, %s34
      %s16 = sphi 0, %s30
      %s17 = sphi 0, %s26
      %s18 = sphi 0, %s15
      %s19 = sphi 0, %s16
      %s20 = sphi 0, %s17
      %s21 = sphi 0, %s18
      %s22 = sphi 0, %s19
      %s23 = sphi 0, %s20
      %s39 = sphi 0, %s41
      %s42 = sphi 0, %s39
      %s43 = sphi 0, %s42
      %s59 = sphi 0, %s43
      %s67 = sphi 0, %s69
      %s70 = sphi 0, %s67
      %s71 = sphi 0, %s70
      %s87 = sphi 0, %s71
      %s95 = sphi 0, %s97
      %s98 = sphi 0, %s95
      %s99 = sphi 0, %s98
      %s115 = sphi 0, %s99
    $region4: #{generator_forward.10} parent=1 // loop_header_branch
      %11 = sbr.rel (%p9) target = $region8
    $region5: #{generator_forward.10} parent=1 // loop_body
      %s13 = ssub.s32 %s8, 1
      %s14 = ssub.s32 %s8, 2
      %s24 = sadd.s32 1, %s17
      %p25 = scmp.ge.s32.totalorder %s24, 1
      %s26 = scalar_select %p25, 0, %s24
      %s27 = sadd.s32 1, %s16
      %s28 = scalar_select %p25, %s27, %s16
      %p29 = scmp.ge.s32.totalorder %s28, 4
      %s30 = scalar_select %p29, 0, %s28
      %s31 = sadd.s32 1, %s15
      %s32 = scalar_select %p29, %s31, %s15
      %p33 = scmp.ge.s32.totalorder %s32, 1
      %s34 = scalar_select %p33, 0, %s32
      %s35 = ssub.s32 %s15, %s34
      %s36 = ssub.s32 %s17, %s26
      %s37 = sor.u32 %s35, %s36
      %p38 = scmp.eq.s32.totalorder %s37, 0
      %s40 = sadd.s32 %s39, 1
      %s41 = scalar_select %p38, %s39, %s40
      %p44 = pneg %p38
      %p45 = scmp.eq.s32.totalorder %s8, 3
      %p46 = por %p44, %p45
      %p47 = scmp.ne.s32.totalorder %s39, %s42
      %p48 = scmp.eq.s32.totalorder %s8, 0
      %p49 = por %p47, %p48
      %p50 = scmp.ne.s32.totalorder %s39, %s42
      %p51 = scmp.eq.s32.totalorder %s13, 3
      %p52 = por %p50, %p51
      %p53 = scmp.ne.s32.totalorder %s42, %s43
      %p54 = scmp.eq.s32.totalorder %s13, 0
      %p55 = por %p53, %p54
      %p56 = scmp.ne.s32.totalorder %s42, %s43
      %p57 = scmp.eq.s32.totalorder %s14, 3
      %p58 = por %p56, %p57
      %p60 = scmp.ne.s32.totalorder %s43, %s59
      %p61 = scmp.eq.s32.totalorder %s14, 0
      %p62 = por %p60, %p61
      %s63 = ssub.s32 %s17, %s26
      %s64 = ssub.s32 %s16, %s30
      %s65 = sor.u32 %s63, %s64
      %p66 = scmp.eq.s32.totalorder %s65, 0
      %s68 = sadd.s32 %s67, 1
      %s69 = scalar_select %p66, %s67, %s68
      %p72 = pneg %p66
      %p73 = scmp.eq.s32.totalorder %s8, 3
      %p74 = por %p72, %p73
      %p75 = scmp.ne.s32.totalorder %s67, %s70
      %p76 = scmp.eq.s32.totalorder %s8, 0
      %p77 = por %p75, %p76
      %p78 = scmp.ne.s32.totalorder %s67, %s70
      %p79 = scmp.eq.s32.totalorder %s13, 3
      %p80 = por %p78, %p79
      %p81 = scmp.ne.s32.totalorder %s70, %s71
      %p82 = scmp.eq.s32.totalorder %s13, 0
      %p83 = por %p81, %p82
      %p84 = scmp.ne.s32.totalorder %s70, %s71
      %p85 = scmp.eq.s32.totalorder %s14, 3
      %p86 = por %p84, %p85
      %p88 = scmp.ne.s32.totalorder %s71, %s87
      %p89 = scmp.eq.s32.totalorder %s14, 0
      %p90 = por %p88, %p89
      %s91 = ssub.s32 %s15, %s34
      %s92 = ssub.s32 %s16, %s30
      %s93 = sor.u32 %s91, %s92
      %p94 = scmp.eq.s32.totalorder %s93, 0
      %s96 = sadd.s32 %s95, 1
      %s97 = scalar_select %p94, %s95, %s96
      %p100 = pneg %p94
      %p101 = scmp.eq.s32.totalorder %s8, 3
      %p102 = por %p100, %p101
      %p103 = scmp.ne.s32.totalorder %s95, %s98
      %p104 = scmp.eq.s32.totalorder %s8, 0
      %p105 = por %p103, %p104
      %p106 = scmp.ne.s32.totalorder %s95, %s98
      %p107 = scmp.eq.s32.totalorder %s13, 3
      %p108 = por %p106, %p107
      %p109 = scmp.ne.s32.totalorder %s98, %s99
      %p110 = scmp.eq.s32.totalorder %s13, 0
      %p111 = por %p109, %p110
      %p112 = scmp.ne.s32.totalorder %s98, %s99
      %p113 = scmp.eq.s32.totalorder %s14, 3
      %p114 = por %p112, %p113
      %p116 = scmp.ne.s32.totalorder %s99, %s115
      %p117 = scmp.eq.s32.totalorder %s14, 0
      %p118 = por %p116, %p117
      %p119 = scmp.le.s32.totalorder 1, %s8
      %p120 = scmp.lt.s32.totalorder %s8, 5
      %p121 = pnand %p119, %p120
      %p122 = pneg %p121
      // Predicated region
      $region9: #{generator_forward.10} parent=5 // pred_check
        _
      $region10: #{generator_forward.10} parent=5 // pred_check_branch
        %124 = sbr.rel (%p121) target = $region12
      $region11: #{generator_forward.10} parent=5 // pred_region
        %s125 = ssub.s32 %s8, 1
        // Predicated region
        $region13: #{generator_forward.10} parent=11 // pred_check
          %p126 = pneg %p55
        $region14: #{generator_forward.10} parent=11 // pred_check_branch
          %128 = sbr.rel (%p126) target = $region16
        $region15: #{generator_forward.10} parent=11 // pred_region
          %s129 = smul.u32 2, %s18
          %p130 = scmp.lt.s32.totalorder %s129, 1
          %s131 = scalar_select %p130, %s129, 1
          %p132 = scmp.lt.s32.totalorder %s20, 0
          %s133 = scalar_select %p132, %s20, 0
          %s134 = sadd.s32 %s133, %s131
          %s135 = smul.addr %s134, 4
          %s136 = scalar_lea.vmem %s0, %s135
          %s137 = smul.u32 2, %s18
        $region16: #{generator_forward.10} parent=11 // pred_fallthru
          _
      $region12: #{generator_forward.10} parent=5 // pred_fallthru
        _
      %p138 = scmp.lt.s32.totalorder %s8, 4
      // Predicated region
      $region17: #{generator_forward.10} parent=5 // pred_check
        %p139 = pneg %p138
      $region18: #{generator_forward.10} parent=5 // pred_check_branch
        %141 = sbr.rel (%p139) target = $region20
      $region19: #{generator_forward.10} parent=5 // pred_region
        // Predicated region
        $region21: #{generator_forward.10} parent=19 // pred_check
          %p142 = pneg %p77
        $region22: #{generator_forward.10} parent=19 // pred_check_branch
          %144 = sbr.rel (%p142) target = $region24
        $region23: #{generator_forward.10} parent=19 // pred_region
          %s145 = sand.u32 %s67, 1
          %s146 = sand.u32 %s67, 1
          %s147 = smul.addr %s146, 256
          %s148 = scalar_lea.vmem [#allocation3], %s147
          %s149 = smul.u32 16, %s17
          %s150 = smul.u32 4, %s16
          %s151 = smul.addr %s149, 16
          %s152 = sadd.s32 %s150, %s151
          %s153 = smul.addr %s152, 4
          %s154 = scalar_lea.vmem %s1, %s153
          // Predicated region
          $region25: #{generator_forward.10} parent=23 // pred_check
            _
          $region26: #{generator_forward.10} parent=23 // pred_check_branch
            %156 = sbr.rel (0) target = $region28
          $region27: #{generator_forward.10} parent=23 // pred_region
            // Predicated region
            $region29: #{generator_forward.10} parent=27 // pred_check
              _
            $region30: #{generator_forward.10} parent=27 // pred_check_branch
              %158 = sbr.rel (0) target = $region32
            $region31: #{generator_forward.10} parent=27 // pred_region
              loop: start=0, step=1, limit=1
              $region33: #{generator_forward.10} parent=31 // loop_pre_header
                _
              $region34: #{generator_forward.10} parent=31 // loop_header
                %s160 = sphi 0, %s164
                %p161 = scmp.ge.s32.totalorder %s160, 1
                %s165 = sphi %s154, %s154
                %s166 = sphi %s148, %s148
              $region35: #{generator_forward.10} parent=31 // loop_header_branch
                %163 = sbr.rel (%p161) target = $region39
              $region36: #{generator_forward.10} parent=31 // loop_body
                %v167 = vld [vmem:[%s165] sm:$0xff]
                %168 = vst [vmem:[%s166] sm:$0xff] %v167
                %v169 = vld [vmem:[%s165 + $0x8] sm:$0xff]
                %170 = vst [vmem:[%s166 + $0x8] sm:$0xff] %v169
                %v171 = vld [vmem:[%s165 + $0x40] sm:$0xff]
                %172 = vst [vmem:[%s166 + $0x10] sm:$0xff] %v171
                %v173 = vld [vmem:[%s165 + $0x48] sm:$0xff]
                %174 = vst [vmem:[%s166 + $0x18] sm:$0xff] %v173
                %v175 = vld [vmem:[%s165 + $0x80] sm:$0xff]
                %176 = vst [vmem:[%s166 + $0x20] sm:$0xff] %v175
                %v177 = vld [vmem:[%s165 + $0x88] sm:$0xff]
                %178 = vst [vmem:[%s166 + $0x28] sm:$0xff] %v177
                %v179 = vld [vmem:[%s165 + $0xc0] sm:$0xff]
                %180 = vst [vmem:[%s166 + $0x30] sm:$0xff] %v179
                %v181 = vld [vmem:[%s165 + $0xc8] sm:$0xff]
                %182 = vst [vmem:[%s166 + $0x38] sm:$0xff] %v181
                %v183 = vld [vmem:[%s165 + $0x100] sm:$0xff]
                %184 = vst [vmem:[%s166 + $0x40] sm:$0xff] %v183
                %v185 = vld [vmem:[%s165 + $0x108] sm:$0xff]
                %186 = vst [vmem:[%s166 + $0x48] sm:$0xff] %v185
                %v187 = vld [vmem:[%s165 + $0x140] sm:$0xff]
                %188 = vst [vmem:[%s166 + $0x50] sm:$0xff] %v187
                %v189 = vld [vmem:[%s165 + $0x148] sm:$0xff]
                %190 = vst [vmem:[%s166 + $0x58] sm:$0xff] %v189
                %v191 = vld [vmem:[%s165 + $0x180] sm:$0xff]
                %192 = vst [vmem:[%s166 + $0x60] sm:$0xff] %v191
                %v193 = vld [vmem:[%s165 + $0x188] sm:$0xff]
                %194 = vst [vmem:[%s166 + $0x68] sm:$0xff] %v193
                %v195 = vld [vmem:[%s165 + $0x1c0] sm:$0xff]
                %196 = vst [vmem:[%s166 + $0x70] sm:$0xff] %v195
                %v197 = vld [vmem:[%s165 + $0x1c8] sm:$0xff]
                %198 = vst [vmem:[%s166 + $0x78] sm:$0xff] %v197
                %v199 = vld [vmem:[%s165 + $0x200] sm:$0xff]
                %200 = vst [vmem:[%s166 + $0x80] sm:$0xff] %v199
                %v201 = vld [vmem:[%s165 + $0x208] sm:$0xff]
                %202 = vst [vmem:[%s166 + $0x88] sm:$0xff] %v201
                %v203 = vld [vmem:[%s165 + $0x240] sm:$0xff]
                %204 = vst [vmem:[%s166 + $0x90] sm:$0xff] %v203
                %v205 = vld [vmem:[%s165 + $0x248] sm:$0xff]
                %206 = vst [vmem:[%s166 + $0x98] sm:$0xff] %v205
                %v207 = vld [vmem:[%s165 + $0x280] sm:$0xff]
                %208 = vst [vmem:[%s166 + $0xa0] sm:$0xff] %v207
                %v209 = vld [vmem:[%s165 + $0x288] sm:$0xff]
                %210 = vst [vmem:[%s166 + $0xa8] sm:$0xff] %v209
                %v211 = vld [vmem:[%s165 + $0x2c0] sm:$0xff]
                %212 = vst [vmem:[%s166 + $0xb0] sm:$0xff] %v211
                %v213 = vld [vmem:[%s165 + $0x2c8] sm:$0xff]
                %214 = vst [vmem:[%s166 + $0xb8] sm:$0xff] %v213
                %v215 = vld [vmem:[%s165 + $0x300] sm:$0xff]
                %216 = vst [vmem:[%s166 + $0xc0] sm:$0xff] %v215
                %v217 = vld [vmem:[%s165 + $0x308] sm:$0xff]
                %218 = vst [vmem:[%s166 + $0xc8] sm:$0xff] %v217
                %v219 = vld [vmem:[%s165 + $0x340] sm:$0xff]
                %220 = vst [vmem:[%s166 + $0xd0] sm:$0xff] %v219
                %v221 = vld [vmem:[%s165 + $0x348] sm:$0xff]
                %222 = vst [vmem:[%s166 + $0xd8] sm:$0xff] %v221
                %v223 = vld [vmem:[%s165 + $0x380] sm:$0xff]
                %224 = vst [vmem:[%s166 + $0xe0] sm:$0xff] %v223
                %v225 = vld [vmem:[%s165 + $0x388] sm:$0xff]
                %226 = vst [vmem:[%s166 + $0xe8] sm:$0xff] %v225
                %v227 = vld [vmem:[%s165 + $0x3c0] sm:$0xff]
                %228 = vst [vmem:[%s166 + $0xf0] sm:$0xff] %v227
                %v229 = vld [vmem:[%s165 + $0x3c8] sm:$0xff]
                %230 = vst [vmem:[%s166 + $0xf8] sm:$0xff] %v229
              $region37: #{generator_forward.10} parent=31 // loop_footer
                %s164 = sadd.s32 1, %s160
              $region38: #{generator_forward.10} parent=31 // loop_footer_branch
                %159 = sbr.rel target = $region34
              $region39: #{generator_forward.10} parent=31 // loop_exit
                _
            $region32: #{generator_forward.10} parent=27 // pred_fallthru
              _
            // Predicated region
            $region40: #{generator_forward.10} parent=27 // pred_check
              _
            $region41: #{generator_forward.10} parent=27 // pred_check_branch
              %232 = sbr.rel target = $region43
            $region42: #{generator_forward.10} parent=27 // pred_region
              _
            $region43: #{generator_forward.10} parent=27 // pred_fallthru
              _
          $region28: #{generator_forward.10} parent=23 // pred_fallthru
            _
          %233 = vnop
        $region24: #{generator_forward.10} parent=19 // pred_fallthru
          _
      $region20: #{generator_forward.10} parent=5 // pred_fallthru
        _
      %p234 = scmp.le.s32.totalorder 1, %s8
      %p235 = scmp.lt.s32.totalorder %s8, 5
      %p236 = pnand %p234, %p235
      %p237 = pneg %p236
      // Predicated region
      $region44: #{generator_forward.10} parent=5 // pred_check
        _
      $region45: #{generator_forward.10} parent=5 // pred_check_branch
        %239 = sbr.rel (%p236) target = $region47
      $region46: #{generator_forward.10} parent=5 // pred_region
        %s240 = ssub.s32 %s8, 1
        %s241 = sand.u32 %s70, 1
        %s242 = sand.u32 %s70, 1
        %s243 = smul.addr %s242, 256
        %s244 = scalar_lea.vmem [#allocation3], %s243
        // Predicated region
        $region48: #{generator_forward.10} parent=46 // pred_check
          %p245 = pneg %p83
        $region49: #{generator_forward.10} parent=46 // pred_check_branch
          %247 = sbr.rel (%p245) target = $region51
        $region50: #{generator_forward.10} parent=46 // pred_region
          _
        $region51: #{generator_forward.10} parent=46 // pred_fallthru
          _
        %s248 = smul.u32 2, %s18
        %p249 = scmp.lt.s32.totalorder %s248, 1
        %s250 = scalar_select %p249, %s248, 1
        %p251 = scmp.lt.s32.totalorder %s20, 0
        %s252 = scalar_select %p251, %s20, 0
        %s253 = sadd.s32 %s252, %s250
        %s254 = smul.addr %s253, 4
        %s255 = scalar_lea.vmem %s0, %s254
        %p256 = pneg %p55
        %p257 = pneg %p52
        %s258 = sand.u32 %s70, 1
        %s259 = sand.u32 %s70, 1
        %s260 = smul.addr %s259, 256
        %s261 = scalar_lea.vmem [#allocation3], %s260
        %p262 = pneg %p83
        %p263 = pneg %p80
        %p264 = pneg %p111
        %p265 = pneg %p108
        %s266 = sand.u32 %s98, 1
        %s267 = sand.u32 %s98, 1
        %s268 = smul.addr %s267, 64
        %s269 = scalar_lea.vmem [#allocation4], %s268
        %s270 = smul.u32 2, %s18
        %p271 = scmp.lt.s32.totalorder %s270, 1
        %s272 = scalar_select %p271, %s270, 1
        %p273 = scmp.lt.s32.totalorder %s20, 0
        %s274 = scalar_select %p273, %s20, 0
        %s275 = sadd.s32 %s274, %s272
        %s276 = smul.addr %s275, 4
        %s277 = scalar_lea.vmem %s0, %s276
        %s278 = smul.u32 2, %s18
        %s279 = smul.u32 16, %s20
        %s280 = smul.u32 4, %s19
        %s281 = smul.u32 2, %s18
        %s282 = smul.u32 4, %s19
        %p284 = scmp.eq.s32.totalorder %s20, 0
        // Predicated region
        $region52: #{generator_forward.10} parent=46 // pred_check
          %p285 = pneg %p284
        $region53: #{generator_forward.10} parent=46 // pred_check_branch
          %287 = sbr.rel (%p285) target = $region55
        $region54: #{generator_forward.10} parent=46 // pred_region
          %288 = vst [vmem:[#allocation2] sm:$0xff] 0.0
          %289 = vst [vmem:[#allocation2 + $0x8] sm:$0xff] 0.0
          %290 = vst [vmem:[#allocation2 + $0x10] sm:$0xff] 0.0
          %291 = vst [vmem:[#allocation2 + $0x18] sm:$0xff] 0.0
          %292 = vst [vmem:[#allocation2 + $0x20] sm:$0xff] 0.0
          %293 = vst [vmem:[#allocation2 + $0x28] sm:$0xff] 0.0
          %294 = vst [vmem:[#allocation2 + $0x30] sm:$0xff] 0.0
          %295 = vst [vmem:[#allocation2 + $0x38] sm:$0xff] 0.0
        $region55: #{generator_forward.10} parent=46 // pred_fallthru
          _
        %v296 = vld [vmem:[#allocation2] sm:$0xff]
        %v297 = vld [vmem:[#allocation2 + $0x8] sm:$0xff]
        %v298 = vld [vmem:[#allocation2 + $0x10] sm:$0xff]
        %v299 = vld [vmem:[#allocation2 + $0x18] sm:$0xff]
        %v300 = vld [vmem:[#allocation2 + $0x20] sm:$0xff]
        %v301 = vld [vmem:[#allocation2 + $0x28] sm:$0xff]
        %v302 = vld [vmem:[#allocation2 + $0x30] sm:$0xff]
        %v303 = vld [vmem:[#allocation2 + $0x38] sm:$0xff]
        %v304 = vld [vmem:[%s277] sm:$0xf]
        %v305 = vld [vmem:[%s277 + $0x4] sm:$0xf]
        %v306 = vld [vmem:[%s244] sm:$0xff]
        %v307 = vld [vmem:[%s244 + $0x8] sm:$0xff]
        %v308 = vld [vmem:[%s244 + $0x10] sm:$0xff]
        %v309 = vld [vmem:[%s244 + $0x18] sm:$0xff]
        %v310 = vld [vmem:[%s244 + $0x20] sm:$0xff]
        %v311 = vld [vmem:[%s244 + $0x28] sm:$0xff]
        %v312 = vld [vmem:[%s244 + $0x30] sm:$0xff]
        %v313 = vld [vmem:[%s244 + $0x38] sm:$0xff]
        %v314 = vld [vmem:[%s244 + $0x40] sm:$0xff]
        %v315 = vld [vmem:[%s244 + $0x48] sm:$0xff]
        %v316 = vld [vmem:[%s244 + $0x50] sm:$0xff]
        %v317 = vld [vmem:[%s244 + $0x58] sm:$0xff]
        %v318 = vld [vmem:[%s244 + $0x60] sm:$0xff]
        %v319 = vld [vmem:[%s244 + $0x68] sm:$0xff]
        %v320 = vld [vmem:[%s244 + $0x70] sm:$0xff]
        %v321 = vld [vmem:[%s244 + $0x78] sm:$0xff]
        %v322 = vld [vmem:[%s244 + $0x80] sm:$0xff]
        %v323 = vld [vmem:[%s244 + $0x88] sm:$0xff]
        %v324 = vld [vmem:[%s244 + $0x90] sm:$0xff]
        %v325 = vld [vmem:[%s244 + $0x98] sm:$0xff]
        %v326 = vld [vmem:[%s244 + $0xa0] sm:$0xff]
        %v327 = vld [vmem:[%s244 + $0xa8] sm:$0xff]
        %v328 = vld [vmem:[%s244 + $0xb0] sm:$0xff]
        %v329 = vld [vmem:[%s244 + $0xb8] sm:$0xff]
        %v330 = vld [vmem:[%s244 + $0xc0] sm:$0xff]
        %v331 = vld [vmem:[%s244 + $0xc8] sm:$0xff]
        %v332 = vld [vmem:[%s244 + $0xd0] sm:$0xff]
        %v333 = vld [vmem:[%s244 + $0xd8] sm:$0xff]
        %v334 = vld [vmem:[%s244 + $0xe0] sm:$0xff]
        %v335 = vld [vmem:[%s244 + $0xe8] sm:$0xff]
        %v336 = vld [vmem:[%s244 + $0xf0] sm:$0xff]
        %v337 = vld [vmem:[%s244 + $0xf8] sm:$0xff]
        %v340 = vunpack.c.l.b16 %v304
        %v341 = vunpack.c.l.b16 %v305
        %v342 = vpack.c.b16 %v341, %v340
        %v376 = vunpack.c.l.b16 %v306
        %v377 = vunpack.c.h.b16 %v306
        %v378 = vunpack.c.l.b16 %v307
        %v379 = vunpack.c.h.b16 %v307
        %v380 = vunpack.c.l.b16 %v308
        %v381 = vunpack.c.h.b16 %v308
        %v382 = vunpack.c.l.b16 %v309
        %v383 = vunpack.c.h.b16 %v309
        %v384 = vunpack.c.l.b16 %v310
        %v385 = vunpack.c.h.b16 %v310
        %v386 = vunpack.c.l.b16 %v311
        %v387 = vunpack.c.h.b16 %v311
        %v388 = vunpack.c.l.b16 %v312
        %v389 = vunpack.c.h.b16 %v312
        %v390 = vunpack.c.l.b16 %v313
        %v391 = vunpack.c.h.b16 %v313
        %v392 = vunpack.c.l.b16 %v314
        %v393 = vunpack.c.h.b16 %v314
        %v394 = vunpack.c.l.b16 %v315
        %v395 = vunpack.c.h.b16 %v315
        %v396 = vunpack.c.l.b16 %v316
        %v397 = vunpack.c.h.b16 %v316
        %v398 = vunpack.c.l.b16 %v317
        %v399 = vunpack.c.h.b16 %v317
        %v400 = vunpack.c.l.b16 %v318
        %v401 = vunpack.c.h.b16 %v318
        %v402 = vunpack.c.l.b16 %v319
        %v403 = vunpack.c.h.b16 %v319
        %v404 = vunpack.c.l.b16 %v320
        %v405 = vunpack.c.h.b16 %v320
        %v406 = vunpack.c.l.b16 %v321
        %v407 = vunpack.c.h.b16 %v321
        %v408 = vunpack.c.l.b16 %v322
        %v409 = vunpack.c.h.b16 %v322
        %v410 = vunpack.c.l.b16 %v323
        %v411 = vunpack.c.h.b16 %v323
        %v412 = vunpack.c.l.b16 %v324
        %v413 = vunpack.c.h.b16 %v324
        %v414 = vunpack.c.l.b16 %v325
        %v415 = vunpack.c.h.b16 %v325
        %v416 = vunpack.c.l.b16 %v326
        %v417 = vunpack.c.h.b16 %v326
        %v418 = vunpack.c.l.b16 %v327
        %v419 = vunpack.c.h.b16 %v327
        %v420 = vunpack.c.l.b16 %v328
        %v421 = vunpack.c.h.b16 %v328
        %v422 = vunpack.c.l.b16 %v329
        %v423 = vunpack.c.h.b16 %v329
        %v424 = vunpack.c.l.b16 %v330
        %v425 = vunpack.c.h.b16 %v330
        %v426 = vunpack.c.l.b16 %v331
        %v427 = vunpack.c.h.b16 %v331
        %v428 = vunpack.c.l.b16 %v332
        %v429 = vunpack.c.h.b16 %v332
        %v430 = vunpack.c.l.b16 %v333
        %v431 = vunpack.c.h.b16 %v333
        %v432 = vunpack.c.l.b16 %v334
        %v433 = vunpack.c.h.b16 %v334
        %v434 = vunpack.c.l.b16 %v335
        %v435 = vunpack.c.h.b16 %v335
        %v436 = vunpack.c.l.b16 %v336
        %v437 = vunpack.c.h.b16 %v336
        %v438 = vunpack.c.l.b16 %v337
        %v439 = vunpack.c.h.b16 %v337
        %v440 = vpack.c.b16 %v380, %v376
        %v441 = vpack.c.b16 %v381, %v377
        %v442 = vpack.c.b16 %v382, %v378
        %v443 = vpack.c.b16 %v383, %v379
        %v444 = vpack.c.b16 %v388, %v384
        %v445 = vpack.c.b16 %v389, %v385
        %v446 = vpack.c.b16 %v390, %v386
        %v447 = vpack.c.b16 %v391, %v387
        %v448 = vpack.c.b16 %v396, %v392
        %v449 = vpack.c.b16 %v397, %v393
        %v450 = vpack.c.b16 %v398, %v394
        %v451 = vpack.c.b16 %v399, %v395
        %v452 = vpack.c.b16 %v404, %v400
        %v453 = vpack.c.b16 %v405, %v401
        %v454 = vpack.c.b16 %v406, %v402
        %v455 = vpack.c.b16 %v407, %v403
        %v456 = vpack.c.b16 %v412, %v408
        %v457 = vpack.c.b16 %v413, %v409
        %v458 = vpack.c.b16 %v414, %v410
        %v459 = vpack.c.b16 %v415, %v411
        %v460 = vpack.c.b16 %v420, %v416
        %v461 = vpack.c.b16 %v421, %v417
        %v462 = vpack.c.b16 %v422, %v418
        %v463 = vpack.c.b16 %v423, %v419
        %v464 = vpack.c.b16 %v428, %v424
        %v465 = vpack.c.b16 %v429, %v425
        %v466 = vpack.c.b16 %v430, %v426
        %v467 = vpack.c.b16 %v431, %v427
        %v468 = vpack.c.b16 %v436, %v432
        %v469 = vpack.c.b16 %v437, %v433
        %v470 = vpack.c.b16 %v438, %v434
        %v471 = vpack.c.b16 %v439, %v435
        %504 = vmatprep.subr.bf16.mxu0 %v441
        %505 = vmatpush1.bf16.msra.mxu0 %v440
        %506 = vmatprep.subr.bf16.mxu0 %v445
        %507 = vmatpush1.bf16.msra.mxu0 %v444
        %508 = vmatprep.subr.bf16.mxu0 %v449
        %509 = vmatpush1.bf16.msra.mxu0 %v448
        %510 = vmatprep.subr.bf16.mxu0 %v453
        %511 = vmatpush1.bf16.msra.mxu0 %v452
        %512 = vmatprep.subr.bf16.mxu0 %v457
        %513 = vmatpush1.bf16.msra.mxu0 %v456
        %514 = vmatprep.subr.bf16.mxu0 %v461
        %515 = vmatpush1.bf16.msra.mxu0 %v460
        %516 = vmatprep.subr.bf16.mxu0 %v465
        %517 = vmatpush1.bf16.msra.mxu0 %v464
        %518 = vmatprep.subr.bf16.mxu0 %v469
        %519 = vmatpush1.bf16.msra.mxu0 %v468
        %520 = vmatprep.subr.bf16.mxu0 0
        %521 = vmatpush1.bf16.msra.mxu0 0
        %522 = vmatprep.subr.bf16.mxu0 0
        %523 = vmatpush1.bf16.msra.mxu0 0
        %524 = vmatprep.subr.bf16.mxu0 0
        %525 = vmatpush1.bf16.msra.mxu0 0
        %526 = vmatprep.subr.bf16.mxu0 0
        %527 = vmatpush1.bf16.msra.mxu0 0
        %528 = vmatprep.subr.bf16.mxu0 0
        %529 = vmatpush1.bf16.msra.mxu0 0
        %530 = vmatprep.subr.bf16.mxu0 0
        %531 = vmatpush1.bf16.msra.mxu0 0
        %532 = vmatprep.subr.bf16.mxu0 0
        %533 = vmatpush1.bf16.msra.mxu0 0
        %534 = vmatprep.subr.bf16.mxu0 0
        %535 = vmatpush1.bf16.msra.mxu0 0
        %536 = vmatprep.mubr.bf16.mxu0 0
        %537 = vmatmul.mubr.bf16.gmra.mrb[0].mxu0 %v342
        %v538 = vpop.f32.mrb[0].mxu0
        %v539 = vadd.f32 0.0, %v538
        %v540 = vpop.f32.mrb[0].mxu0
        %v541 = vadd.f32 0.0, %v540
        %v542 = vpop.f32.mrb[0].mxu0
        %v543 = vadd.f32 0.0, %v542
        %v544 = vpop.f32.mrb[0].mxu0
        %v545 = vadd.f32 0.0, %v544
        %546 = vdwg.mxu0
        %547 = vmatprep.subr.bf16.mxu0 %v443
        %548 = vmatpush1.bf16.msra.mxu0 %v442
        %549 = vmatprep.subr.bf16.mxu0 %v447
        %550 = vmatpush1.bf16.msra.mxu0 %v446
        %551 = vmatprep.subr.bf16.mxu0 %v451
        %552 = vmatpush1.bf16.msra.mxu0 %v450
        %553 = vmatprep.subr.bf16.mxu0 %v455
        %554 = vmatpush1.bf16.msra.mxu0 %v454
        %555 = vmatprep.subr.bf16.mxu0 %v459
        %556 = vmatpush1.bf16.msra.mxu0 %v458
        %557 = vmatprep.subr.bf16.mxu0 %v463
        %558 = vmatpush1.bf16.msra.mxu0 %v462
        %559 = vmatprep.subr.bf16.mxu0 %v467
        %560 = vmatpush1.bf16.msra.mxu0 %v466
        %561 = vmatprep.subr.bf16.mxu0 %v471
        %562 = vmatpush1.bf16.msra.mxu0 %v470
        %563 = vmatprep.subr.bf16.mxu0 0
        %564 = vmatpush1.bf16.msra.mxu0 0
        %565 = vmatprep.subr.bf16.mxu0 0
        %566 = vmatpush1.bf16.msra.mxu0 0
        %567 = vmatprep.subr.bf16.mxu0 0
        %568 = vmatpush1.bf16.msra.mxu0 0
        %569 = vmatprep.subr.bf16.mxu0 0
        %570 = vmatpush1.bf16.msra.mxu0 0
        %571 = vmatprep.subr.bf16.mxu0 0
        %572 = vmatpush1.bf16.msra.mxu0 0
        %573 = vmatprep.subr.bf16.mxu0 0
        %574 = vmatpush1.bf16.msra.mxu0 0
        %575 = vmatprep.subr.bf16.mxu0 0
        %576 = vmatpush1.bf16.msra.mxu0 0
        %577 = vmatprep.subr.bf16.mxu0 0
        %578 = vmatpush1.bf16.msra.mxu0 0
        %579 = vmatprep.mubr.bf16.mxu0 0
        %580 = vmatmul.mubr.bf16.gmra.mrb[0].mxu0 %v342
        %v581 = vpop.f32.mrb[0].mxu0
        %v582 = vadd.f32 0.0, %v581
        %v583 = vpop.f32.mrb[0].mxu0
        %v584 = vadd.f32 0.0, %v583
        %v585 = vpop.f32.mrb[0].mxu0
        %v586 = vadd.f32 0.0, %v585
        %v587 = vpop.f32.mrb[0].mxu0
        %v588 = vadd.f32 0.0, %v587
        %589 = vdwg.mxu0
        %v590 = vadd.f32 %v296, %v539
        %v591 = vadd.f32 %v297, %v541
        %v592 = vadd.f32 %v298, %v582
        %v593 = vadd.f32 %v299, %v584
        %v594 = vadd.f32 %v300, %v543
        %v595 = vadd.f32 %v301, %v545
        %v596 = vadd.f32 %v302, %v586
        %v597 = vadd.f32 %v303, %v588
        %598 = vst [vmem:[#allocation2] sm:$0xff] %v590
        %599 = vst [vmem:[#allocation2 + $0x8] sm:$0xff] %v591
        %600 = vst [vmem:[#allocation2 + $0x10] sm:$0xff] %v592
        %601 = vst [vmem:[#allocation2 + $0x18] sm:$0xff] %v593
        %602 = vst [vmem:[#allocation2 + $0x20] sm:$0xff] %v594
        %603 = vst [vmem:[#allocation2 + $0x28] sm:$0xff] %v595
        %604 = vst [vmem:[#allocation2 + $0x30] sm:$0xff] %v596
        %605 = vst [vmem:[#allocation2 + $0x38] sm:$0xff] %v597
        // Predicated region
        $region56: #{generator_forward.10} parent=46 // pred_check
          %p606 = pneg %p284
        $region57: #{generator_forward.10} parent=46 // pred_check_branch
          %608 = sbr.rel (%p606) target = $region59
        $region58: #{generator_forward.10} parent=46 // pred_region
          %v609 = vld [vmem:[#allocation2] sm:$0xff]
          %v610 = vld [vmem:[#allocation2 + $0x8] sm:$0xff]
          %v611 = vld [vmem:[#allocation2 + $0x10] sm:$0xff]
          %v612 = vld [vmem:[#allocation2 + $0x18] sm:$0xff]
          %v613 = vld [vmem:[#allocation2 + $0x20] sm:$0xff]
          %v614 = vld [vmem:[#allocation2 + $0x28] sm:$0xff]
          %v615 = vld [vmem:[#allocation2 + $0x30] sm:$0xff]
          %v616 = vld [vmem:[#allocation2 + $0x38] sm:$0xff]
          %617 = vst [vmem:[%s269] sm:$0xff] %v609
          %618 = vst [vmem:[%s269 + $0x8] sm:$0xff] %v610
          %619 = vst [vmem:[%s269 + $0x10] sm:$0xff] %v611
          %620 = vst [vmem:[%s269 + $0x18] sm:$0xff] %v612
          %621 = vst [vmem:[%s269 + $0x20] sm:$0xff] %v613
          %622 = vst [vmem:[%s269 + $0x28] sm:$0xff] %v614
          %623 = vst [vmem:[%s269 + $0x30] sm:$0xff] %v615
          %624 = vst [vmem:[%s269 + $0x38] sm:$0xff] %v616
        $region59: #{generator_forward.10} parent=46 // pred_fallthru
          _
        %s625 = sand.u32 %s98, 1
        %s626 = sand.u32 %s98, 1
        %s627 = smul.addr %s626, 64
        %s628 = scalar_lea.vmem [#allocation4], %s627
        // Predicated region
        $region60: #{generator_forward.10} parent=46 // pred_check
          %p629 = pneg %p108
        $region61: #{generator_forward.10} parent=46 // pred_check_branch
          %631 = sbr.rel (%p629) target = $region63
        $region62: #{generator_forward.10} parent=46 // pred_region
          %s632 = smul.u32 2, %s18
          %s633 = smul.u32 4, %s19
          %s634 = smul.addr %s632, 16
          %s635 = sadd.s32 %s633, %s634
          %s636 = smul.addr %s635, 8
          %s637 = scalar_lea.vmem %s2, %s636
          // Predicated region
          $region64: #{generator_forward.10} parent=62 // pred_check
            _
          $region65: #{generator_forward.10} parent=62 // pred_check_branch
            %639 = sbr.rel (0) target = $region67
          $region66: #{generator_forward.10} parent=62 // pred_region
            // Predicated region
            $region68: #{generator_forward.10} parent=66 // pred_check
              _
            $region69: #{generator_forward.10} parent=66 // pred_check_branch
              %641 = sbr.rel (0) target = $region71
            $region70: #{generator_forward.10} parent=66 // pred_region
              loop: start=0, step=1, limit=1
              $region72: #{generator_forward.10} parent=70 // loop_pre_header
                _
              $region73: #{generator_forward.10} parent=70 // loop_header
                %s643 = sphi 0, %s647
                %p644 = scmp.ge.s32.totalorder %s643, 1
                %s648 = sphi %s628, %s628
                %s649 = sphi %s637, %s637
              $region74: #{generator_forward.10} parent=70 // loop_header_branch
                %646 = sbr.rel (%p644) target = $region78
              $region75: #{generator_forward.10} parent=70 // loop_body
                %v650 = vld [vmem:[%s648] sm:$0xff]
                %651 = vst [vmem:[%s649] sm:$0xff] %v650
                %v652 = vld [vmem:[%s648 + $0x8] sm:$0xff]
                %653 = vst [vmem:[%s649 + $0x8] sm:$0xff] %v652
                %v654 = vld [vmem:[%s648 + $0x10] sm:$0xff]
                %655 = vst [vmem:[%s649 + $0x10] sm:$0xff] %v654
                %v656 = vld [vmem:[%s648 + $0x18] sm:$0xff]
                %657 = vst [vmem:[%s649 + $0x18] sm:$0xff] %v656
                %v658 = vld [vmem:[%s648 + $0x20] sm:$0xff]
                %659 = vst [vmem:[%s649 + $0x80] sm:$0xff] %v658
                %v660 = vld [vmem:[%s648 + $0x28] sm:$0xff]
                %661 = vst [vmem:[%s649 + $0x88] sm:$0xff] %v660
                %v662 = vld [vmem:[%s648 + $0x30] sm:$0xff]
                %663 = vst [vmem:[%s649 + $0x90] sm:$0xff] %v662
                %v664 = vld [vmem:[%s648 + $0x38] sm:$0xff]
                %665 = vst [vmem:[%s649 + $0x98] sm:$0xff] %v664
              $region76: #{generator_forward.10} parent=70 // loop_footer
                %s647 = sadd.s32 1, %s643
              $region77: #{generator_forward.10} parent=70 // loop_footer_branch
                %642 = sbr.rel target = $region73
              $region78: #{generator_forward.10} parent=70 // loop_exit
                _
            $region71: #{generator_forward.10} parent=66 // pred_fallthru
              _
            // Predicated region
            $region79: #{generator_forward.10} parent=66 // pred_check
              _
            $region80: #{generator_forward.10} parent=66 // pred_check_branch
              %667 = sbr.rel target = $region82
            $region81: #{generator_forward.10} parent=66 // pred_region
              _
            $region82: #{generator_forward.10} parent=66 // pred_fallthru
              _
          $region67: #{generator_forward.10} parent=62 // pred_fallthru
            _
          %668 = vnop
        $region63: #{generator_forward.10} parent=46 // pred_fallthru
          _
      $region47: #{generator_forward.10} parent=5 // pred_fallthru
        _
      %p669 = scmp.le.s32.totalorder 2, %s8
      // Predicated region
      $region83: #{generator_forward.10} parent=5 // pred_check
        %p670 = pneg %p669
      $region84: #{generator_forward.10} parent=5 // pred_check_branch
        %672 = sbr.rel (%p670) target = $region86
      $region85: #{generator_forward.10} parent=5 // pred_region
        %s673 = ssub.s32 %s8, 2
        // Predicated region
        $region87: #{generator_forward.10} parent=85 // pred_check
          %p674 = pneg %p114
        $region88: #{generator_forward.10} parent=85 // pred_check_branch
          %676 = sbr.rel (%p674) target = $region90
        $region89: #{generator_forward.10} parent=85 // pred_region
          %s677 = sand.u32 %s99, 1
          %s678 = sand.u32 %s99, 1
          %s679 = smul.addr %s678, 64
          %s680 = scalar_lea.vmem [#allocation4], %s679
        $region90: #{generator_forward.10} parent=85 // pred_fallthru
          _
      $region86: #{generator_forward.10} parent=5 // pred_fallthru
        _
    $region6: #{generator_forward.10} parent=1 // loop_footer
      %s12 = sadd.s32 1, %s8
    $region7: #{generator_forward.10} parent=1 // loop_footer_branch
      %7 = sbr.rel target = $region3
    $region8: #{generator_forward.10} parent=1 // loop_exit
      _

// kernel: generator_forward.11
$region0: #{generator_forward.11}
  #allocation0 [shape = 'u32[]', space=smem, size = 0x4, offset = 0x4, fixed_abs, tag = 'smem constant byte address 0x4 - core index']
  #allocation1 [shape = 'u32[144,128]{1,0:T(1,128)}', space=vmem, size = 0x12000, scoped, tag = 'internal scratch']
  %s0 = inlined_call_operand.vmem [shape: f32[32,128], index: 0, kind: input, shape index: {}]
  %s1 = inlined_call_operand.vmem [shape: f32[1,128], index: 1, kind: input, shape index: {}]
  %s2 = inlined_call_operand.vmem [shape: f32[1,128], index: 2, kind: input, shape index: {}]
  %s3 = inlined_call_operand.vmem [shape: bf16[32,128], index: 3, kind: output, shape index: {}]
  %s4 = sld [smem:[#allocation0]]
  $region22: #{generator_forward.11} parent=0
    _
  %s6 = ssub.s32 1, %s4
  %s7 = scalar_select 0, %s6, %s4
  // Predicated region
  $region2: #{generator_forward.11} parent=0 // pred_check
    _
  $region3: #{generator_forward.11} parent=0 // pred_check_branch
    %9 = sbr.rel (0) target = $region5
  $region4: #{generator_forward.11} parent=0 // pred_region
    _
  $region5: #{generator_forward.11} parent=0 // pred_fallthru
    _
  // Predicated region
  $region6: #{generator_forward.11} parent=0 // pred_check
    _
  $region7: #{generator_forward.11} parent=0 // pred_check_branch
    %11 = sbr.rel (0) target = $region9
  $region8: #{generator_forward.11} parent=0 // pred_region
    _
  $region9: #{generator_forward.11} parent=0 // pred_fallthru
    _
  // Predicated region
  $region10: #{generator_forward.11} parent=0 // pred_check
    _
  $region11: #{generator_forward.11} parent=0 // pred_check_branch
    %13 = sbr.rel (0) target = $region13
  $region12: #{generator_forward.11} parent=0 // pred_region
    _
  $region13: #{generator_forward.11} parent=0 // pred_fallthru
    _
  %v14 = vld [vmem:[%s0] sm:$0xff]
  %v15 = vld [vmem:[%s0 + $0x8] sm:$0xff]
  %v16 = vld [vmem:[%s0 + $0x10] sm:$0xff]
  %v17 = vld [vmem:[%s0 + $0x18] sm:$0xff]
  %v18 = vld [vmem:[%s1] sm:$0x1]
  %v20 = vlaneseq
  %v21 = vshrl.u32 %v20, 7
  %v22 = vsub.s32 0, %v21
  %v23 = vrot.slane %v18, %v22
  %v25 = vmul.f32 %v14, %v23
  %v26 = vmul.f32 %v15, %v23
  %v27 = vmul.f32 %v16, %v23
  %v28 = vmul.f32 %v17, %v23
  %v29 = vld [vmem:[%s2] sm:$0x1]
  %v31 = vlaneseq
  %v32 = vshrl.u32 %v31, 7
  %v33 = vsub.s32 0, %v32
  %v34 = vrot.slane %v29, %v33
  %v36 = vadd.f32 %v25, %v34
  %v37 = vadd.f32 %v26, %v34
  %v38 = vadd.f32 %v27, %v34
  %v39 = vadd.f32 %v28, %v34
  %v40 = vmax.f32 %v36, 0.0
  %v41 = vmax.f32 %v37, 0.0
  %v42 = vmax.f32 %v38, 0.0
  %v43 = vmax.f32 %v39, 0.0
  %v44 = vpack.c.bf16 %v41, %v40
  %v45 = vpack.c.bf16 %v43, %v42
  %v48 = vunpack.c.l.b16 %v44
  %v49 = vunpack.c.h.b16 %v44
  %v50 = vunpack.c.l.b16 %v45
  %v51 = vunpack.c.h.b16 %v45
  %v52 = vpack.c.b16 %v48, %v48
  %v53 = vpack.c.b16 %v49, %v49
  %v54 = vpack.c.b16 %v50, %v50
  %v55 = vpack.c.b16 %v51, %v51
  %60 = vst [vmem:[%s3] sm:$0xf] %v52
  %61 = vst [vmem:[%s3 + $0x4] sm:$0xf] %v53
  %62 = vst [vmem:[%s3 + $0x8] sm:$0xf] %v54
  %63 = vst [vmem:[%s3 + $0xc] sm:$0xf] %v55
  // Predicated region
  $region14: #{generator_forward.11} parent=0 // pred_check
    _
  $region15: #{generator_forward.11} parent=0 // pred_check_branch
    %65 = sbr.rel (0) target = $region17
  $region16: #{generator_forward.11} parent=0 // pred_region
    _
  $region17: #{generator_forward.11} parent=0 // pred_fallthru
    _
  // Predicated region
  $region18: #{generator_forward.11} parent=0 // pred_check
    _
  $region19: #{generator_forward.11} parent=0 // pred_check_branch
    %67 = sbr.rel (0) target = $region21
  $region20: #{generator_forward.11} parent=0 // pred_region
    _
  $region21: #{generator_forward.11} parent=0 // pred_fallthru
    _

// kernel: generator_forward.12
$region0: #{generator_forward.12}
  #allocation0 [shape = 'u32[]', space=smem, size = 0x4, offset = 0x4, fixed_abs, tag = 'smem constant byte address 0x4 - core index']
  #allocation1 [shape = 'u32[144,128]{1,0:T(1,128)}', space=vmem, size = 0x12000, scoped, tag = 'internal scratch']
  #allocation2 [shape = 'f32[32,512]{1,0:T(8,128)}', space=vmem, size = 0x10000, scoped, tag = 'scratch operand']
  %s0 = inlined_call_operand.vmem [shape: bf16[32,128], index: 0, kind: input, shape index: {}]
  %s1 = inlined_call_operand.vmem [shape: bf16[128,1024], index: 1, kind: input, shape index: {}]
  %s2 = inlined_call_operand.vmem [shape: f32[32,1024], index: 2, kind: output, shape index: {}]
  %s3 = sld [smem:[#allocation0]]
  $region91: #{generator_forward.12} parent=0
    _
  %s5 = ssub.s32 1, %s3
  %s6 = scalar_select 0, %s5, %s3
  $region1: #{generator_forward.12} parent=0
    #allocation3 [shape = 'u8[262144]{0}', space=vmem, size = 0x40000, scoped, tag = 'input window, operand 1']
    #allocation4 [shape = 'u8[131072]{0}', space=vmem, size = 0x20000, scoped, tag = 'output window, operand 0']
    loop: start=0, step=1, limit=4
    $region2: #{generator_forward.12} parent=1 // loop_pre_header
      _
    $region3: #{generator_forward.12} parent=1 // loop_header
      %s8 = sphi 0, %s12
      %p9 = scmp.ge.s32.totalorder %s8, 4
      %s15 = sphi 0, %s34
      %s16 = sphi 0, %s30
      %s17 = sphi 0, %s26
      %s18 = sphi 0, %s15
      %s19 = sphi 0, %s16
      %s20 = sphi 0, %s17
      %s21 = sphi 0, %s18
      %s22 = sphi 0, %s19
      %s23 = sphi 0, %s20
      %s39 = sphi 0, %s41
      %s42 = sphi 0, %s39
      %s43 = sphi 0, %s42
      %s59 = sphi 0, %s43
      %s67 = sphi 0, %s69
      %s70 = sphi 0, %s67
      %s71 = sphi 0, %s70
      %s87 = sphi 0, %s71
      %s95 = sphi 0, %s97
      %s98 = sphi 0, %s95
      %s99 = sphi 0, %s98
      %s115 = sphi 0, %s99
    $region4: #{generator_forward.12} parent=1 // loop_header_branch
      %11 = sbr.rel (%p9) target = $region8
    $region5: #{generator_forward.12} parent=1 // loop_body
      %s13 = ssub.s32 %s8, 1
      %s14 = ssub.s32 %s8, 2
      %s24 = sadd.s32 1, %s17
      %p25 = scmp.ge.s32.totalorder %s24, 1
      %s26 = scalar_select %p25, 0, %s24
      %s27 = sadd.s32 1, %s16
      %s28 = scalar_select %p25, %s27, %s16
      %p29 = scmp.ge.s32.totalorder %s28, 2
      %s30 = scalar_select %p29, 0, %s28
      %s31 = sadd.s32 1, %s15
      %s32 = scalar_select %p29, %s31, %s15
      %p33 = scmp.ge.s32.totalorder %s32, 1
      %s34 = scalar_select %p33, 0, %s32
      %s35 = ssub.s32 %s15, %s34
      %s36 = ssub.s32 %s17, %s26
      %s37 = sor.u32 %s35, %s36
      %p38 = scmp.eq.s32.totalorder %s37, 0
      %s40 = sadd.s32 %s39, 1
      %s41 = scalar_select %p38, %s39, %s40
      %p44 = pneg %p38
      %p45 = scmp.eq.s32.totalorder %s8, 1
      %p46 = por %p44, %p45
      %p47 = scmp.ne.s32.totalorder %s39, %s42
      %p48 = scmp.eq.s32.totalorder %s8, 0
      %p49 = por %p47, %p48
      %p50 = scmp.ne.s32.totalorder %s39, %s42
      %p51 = scmp.eq.s32.totalorder %s13, 1
      %p52 = por %p50, %p51
      %p53 = scmp.ne.s32.totalorder %s42, %s43
      %p54 = scmp.eq.s32.totalorder %s13, 0
      %p55 = por %p53, %p54
      %p56 = scmp.ne.s32.totalorder %s42, %s43
      %p57 = scmp.eq.s32.totalorder %s14, 1
      %p58 = por %p56, %p57
      %p60 = scmp.ne.s32.totalorder %s43, %s59
      %p61 = scmp.eq.s32.totalorder %s14, 0
      %p62 = por %p60, %p61
      %s63 = ssub.s32 %s17, %s26
      %s64 = ssub.s32 %s16, %s30
      %s65 = sor.u32 %s63, %s64
      %p66 = scmp.eq.s32.totalorder %s65, 0
      %s68 = sadd.s32 %s67, 1
      %s69 = scalar_select %p66, %s67, %s68
      %p72 = pneg %p66
      %p73 = scmp.eq.s32.totalorder %s8, 1
      %p74 = por %p72, %p73
      %p75 = scmp.ne.s32.totalorder %s67, %s70
      %p76 = scmp.eq.s32.totalorder %s8, 0
      %p77 = por %p75, %p76
      %p78 = scmp.ne.s32.totalorder %s67, %s70
      %p79 = scmp.eq.s32.totalorder %s13, 1
      %p80 = por %p78, %p79
      %p81 = scmp.ne.s32.totalorder %s70, %s71
      %p82 = scmp.eq.s32.totalorder %s13, 0
      %p83 = por %p81, %p82
      %p84 = scmp.ne.s32.totalorder %s70, %s71
      %p85 = scmp.eq.s32.totalorder %s14, 1
      %p86 = por %p84, %p85
      %p88 = scmp.ne.s32.totalorder %s71, %s87
      %p89 = scmp.eq.s32.totalorder %s14, 0
      %p90 = por %p88, %p89
      %s91 = ssub.s32 %s15, %s34
      %s92 = ssub.s32 %s16, %s30
      %s93 = sor.u32 %s91, %s92
      %p94 = scmp.eq.s32.totalorder %s93, 0
      %s96 = sadd.s32 %s95, 1
      %s97 = scalar_select %p94, %s95, %s96
      %p100 = pneg %p94
      %p101 = scmp.eq.s32.totalorder %s8, 1
      %p102 = por %p100, %p101
      %p103 = scmp.ne.s32.totalorder %s95, %s98
      %p104 = scmp.eq.s32.totalorder %s8, 0
      %p105 = por %p103, %p104
      %p106 = scmp.ne.s32.totalorder %s95, %s98
      %p107 = scmp.eq.s32.totalorder %s13, 1
      %p108 = por %p106, %p107
      %p109 = scmp.ne.s32.totalorder %s98, %s99
      %p110 = scmp.eq.s32.totalorder %s13, 0
      %p111 = por %p109, %p110
      %p112 = scmp.ne.s32.totalorder %s98, %s99
      %p113 = scmp.eq.s32.totalorder %s14, 1
      %p114 = por %p112, %p113
      %p116 = scmp.ne.s32.totalorder %s99, %s115
      %p117 = scmp.eq.s32.totalorder %s14, 0
      %p118 = por %p116, %p117
      %p119 = scmp.le.s32.totalorder 1, %s8
      %p120 = scmp.lt.s32.totalorder %s8, 3
      %p121 = pnand %p119, %p120
      %p122 = pneg %p121
      // Predicated region
      $region9: #{generator_forward.12} parent=5 // pred_check
        _
      $region10: #{generator_forward.12} parent=5 // pred_check_branch
        %124 = sbr.rel (%p121) target = $region12
      $region11: #{generator_forward.12} parent=5 // pred_region
        %s125 = ssub.s32 %s8, 1
        // Predicated region
        $region13: #{generator_forward.12} parent=11 // pred_check
          %p126 = pneg %p55
        $region14: #{generator_forward.12} parent=11 // pred_check_branch
          %128 = sbr.rel (%p126) target = $region16
        $region15: #{generator_forward.12} parent=11 // pred_region
          %s129 = smul.u32 4, %s18
          %p130 = scmp.lt.s32.totalorder %s129, 3
          %s131 = scalar_select %p130, %s129, 3
          %p132 = scmp.lt.s32.totalorder %s20, 0
          %s133 = scalar_select %p132, %s20, 0
          %s134 = sadd.s32 %s133, %s131
          %s135 = smul.addr %s134, 4
          %s136 = scalar_lea.vmem %s0, %s135
          %s137 = smul.u32 4, %s18
        $region16: #{generator_forward.12} parent=11 // pred_fallthru
          _
      $region12: #{generator_forward.12} parent=5 // pred_fallthru
        _
      %p138 = scmp.lt.s32.totalorder %s8, 2
      // Predicated region
      $region17: #{generator_forward.12} parent=5 // pred_check
        %p139 = pneg %p138
      $region18: #{generator_forward.12} parent=5 // pred_check_branch
        %141 = sbr.rel (%p139) target = $region20
      $region19: #{generator_forward.12} parent=5 // pred_region
        // Predicated region
        $region21: #{generator_forward.12} parent=19 // pred_check
          %p142 = pneg %p77
        $region22: #{generator_forward.12} parent=19 // pred_check_branch
          %144 = sbr.rel (%p142) target = $region24
        $region23: #{generator_forward.12} parent=19 // pred_region
          %s145 = sand.u32 %s67, 1
          %s146 = sand.u32 %s67, 1
          %s147 = smul.addr %s146, 256
          %s148 = scalar_lea.vmem [#allocation3], %s147
          %s149 = smul.u32 16, %s17
          %s150 = smul.u32 4, %s16
          %s151 = smul.addr %s149, 8
          %s152 = sadd.s32 %s150, %s151
          %s153 = smul.addr %s152, 4
          %s154 = scalar_lea.vmem %s1, %s153
          // Predicated region
          $region25: #{generator_forward.12} parent=23 // pred_check
            _
          $region26: #{generator_forward.12} parent=23 // pred_check_branch
            %156 = sbr.rel (0) target = $region28
          $region27: #{generator_forward.12} parent=23 // pred_region
            // Predicated region
            $region29: #{generator_forward.12} parent=27 // pred_check
              _
            $region30: #{generator_forward.12} parent=27 // pred_check_branch
              %158 = sbr.rel (0) target = $region32
            $region31: #{generator_forward.12} parent=27 // pred_region
              loop: start=0, step=1, limit=1
              $region33: #{generator_forward.12} parent=31 // loop_pre_header
                _
              $region34: #{generator_forward.12} parent=31 // loop_header
                %s160 = sphi 0, %s164
                %p161 = scmp.ge.s32.totalorder %s160, 1
                %s165 = sphi %s154, %s154
                %s166 = sphi %s148, %s148
              $region35: #{generator_forward.12} parent=31 // loop_header_branch
                %163 = sbr.rel (%p161) target = $region39
              $region36: #{generator_forward.12} parent=31 // loop_body
                %v167 = vld [vmem:[%s165] sm:$0xff]
                %168 = vst [vmem:[%s166] sm:$0xff] %v167
                %v169 = vld [vmem:[%s165 + $0x8] sm:$0xff]
                %170 = vst [vmem:[%s166 + $0x8] sm:$0xff] %v169
                %v171 = vld [vmem:[%s165 + $0x20] sm:$0xff]
                %172 = vst [vmem:[%s166 + $0x10] sm:$0xff] %v171
                %v173 = vld [vmem:[%s165 + $0x28] sm:$0xff]
                %174 = vst [vmem:[%s166 + $0x18] sm:$0xff] %v173
                %v175 = vld [vmem:[%s165 + $0x40] sm:$0xff]
                %176 = vst [vmem:[%s166 + $0x20] sm:$0xff] %v175
                %v177 = vld [vmem:[%s165 + $0x48] sm:$0xff]
                %178 = vst [vmem:[%s166 + $0x28] sm:$0xff] %v177
                %v179 = vld [vmem:[%s165 + $0x60] sm:$0xff]
                %180 = vst [vmem:[%s166 + $0x30] sm:$0xff] %v179
                %v181 = vld [vmem:[%s165 + $0x68] sm:$0xff]
                %182 = vst [vmem:[%s166 + $0x38] sm:$0xff] %v181
                %v183 = vld [vmem:[%s165 + $0x80] sm:$0xff]
                %184 = vst [vmem:[%s166 + $0x40] sm:$0xff] %v183
                %v185 = vld [vmem:[%s165 + $0x88] sm:$0xff]
                %186 = vst [vmem:[%s166 + $0x48] sm:$0xff] %v185
                %v187 = vld [vmem:[%s165 + $0xa0] sm:$0xff]
                %188 = vst [vmem:[%s166 + $0x50] sm:$0xff] %v187
                %v189 = vld [vmem:[%s165 + $0xa8] sm:$0xff]
                %190 = vst [vmem:[%s166 + $0x58] sm:$0xff] %v189
                %v191 = vld [vmem:[%s165 + $0xc0] sm:$0xff]
                %192 = vst [vmem:[%s166 + $0x60] sm:$0xff] %v191
                %v193 = vld [vmem:[%s165 + $0xc8] sm:$0xff]
                %194 = vst [vmem:[%s166 + $0x68] sm:$0xff] %v193
                %v195 = vld [vmem:[%s165 + $0xe0] sm:$0xff]
                %196 = vst [vmem:[%s166 + $0x70] sm:$0xff] %v195
                %v197 = vld [vmem:[%s165 + $0xe8] sm:$0xff]
                %198 = vst [vmem:[%s166 + $0x78] sm:$0xff] %v197
                %v199 = vld [vmem:[%s165 + $0x100] sm:$0xff]
                %200 = vst [vmem:[%s166 + $0x80] sm:$0xff] %v199
                %v201 = vld [vmem:[%s165 + $0x108] sm:$0xff]
                %202 = vst [vmem:[%s166 + $0x88] sm:$0xff] %v201
                %v203 = vld [vmem:[%s165 + $0x120] sm:$0xff]
                %204 = vst [vmem:[%s166 + $0x90] sm:$0xff] %v203
                %v205 = vld [vmem:[%s165 + $0x128] sm:$0xff]
                %206 = vst [vmem:[%s166 + $0x98] sm:$0xff] %v205
                %v207 = vld [vmem:[%s165 + $0x140] sm:$0xff]
                %208 = vst [vmem:[%s166 + $0xa0] sm:$0xff] %v207
                %v209 = vld [vmem:[%s165 + $0x148] sm:$0xff]
                %210 = vst [vmem:[%s166 + $0xa8] sm:$0xff] %v209
                %v211 = vld [vmem:[%s165 + $0x160] sm:$0xff]
                %212 = vst [vmem:[%s166 + $0xb0] sm:$0xff] %v211
                %v213 = vld [vmem:[%s165 + $0x168] sm:$0xff]
                %214 = vst [vmem:[%s166 + $0xb8] sm:$0xff] %v213
                %v215 = vld [vmem:[%s165 + $0x180] sm:$0xff]
                %216 = vst [vmem:[%s166 + $0xc0] sm:$0xff] %v215
                %v217 = vld [vmem:[%s165 + $0x188] sm:$0xff]
                %218 = vst [vmem:[%s166 + $0xc8] sm:$0xff] %v217
                %v219 = vld [vmem:[%s165 + $0x1a0] sm:$0xff]
                %220 = vst [vmem:[%s166 + $0xd0] sm:$0xff] %v219
                %v221 = vld [vmem:[%s165 + $0x1a8] sm:$0xff]
                %222 = vst [vmem:[%s166 + $0xd8] sm:$0xff] %v221
                %v223 = vld [vmem:[%s165 + $0x1c0] sm:$0xff]
                %224 = vst [vmem:[%s166 + $0xe0] sm:$0xff] %v223
                %v225 = vld [vmem:[%s165 + $0x1c8] sm:$0xff]
                %226 = vst [vmem:[%s166 + $0xe8] sm:$0xff] %v225
                %v227 = vld [vmem:[%s165 + $0x1e0] sm:$0xff]
                %228 = vst [vmem:[%s166 + $0xf0] sm:$0xff] %v227
                %v229 = vld [vmem:[%s165 + $0x1e8] sm:$0xff]
                %230 = vst [vmem:[%s166 + $0xf8] sm:$0xff] %v229
              $region37: #{generator_forward.12} parent=31 // loop_footer
                %s164 = sadd.s32 1, %s160
              $region38: #{generator_forward.12} parent=31 // loop_footer_branch
                %159 = sbr.rel target = $region34
              $region39: #{generator_forward.12} parent=31 // loop_exit
                _
            $region32: #{generator_forward.12} parent=27 // pred_fallthru
              _
            // Predicated region
            $region40: #{generator_forward.12} parent=27 // pred_check
              _
            $region41: #{generator_forward.12} parent=27 // pred_check_branch
              %232 = sbr.rel target = $region43
            $region42: #{generator_forward.12} parent=27 // pred_region
              _
            $region43: #{generator_forward.12} parent=27 // pred_fallthru
              _
          $region28: #{generator_forward.12} parent=23 // pred_fallthru
            _
          %233 = vnop
        $region24: #{generator_forward.12} parent=19 // pred_fallthru
          _
      $region20: #{generator_forward.12} parent=5 // pred_fallthru
        _
      %p234 = scmp.le.s32.totalorder 1, %s8
      %p235 = scmp.lt.s32.totalorder %s8, 3
      %p236 = pnand %p234, %p235
      %p237 = pneg %p236
      // Predicated region
      $region44: #{generator_forward.12} parent=5 // pred_check
        _
      $region45: #{generator_forward.12} parent=5 // pred_check_branch
        %239 = sbr.rel (%p236) target = $region47
      $region46: #{generator_forward.12} parent=5 // pred_region
        %s240 = ssub.s32 %s8, 1
        %s241 = sand.u32 %s70, 1
        %s242 = sand.u32 %s70, 1
        %s243 = smul.addr %s242, 256
        %s244 = scalar_lea.vmem [#allocation3], %s243
        // Predicated region
        $region48: #{generator_forward.12} parent=46 // pred_check
          %p245 = pneg %p83
        $region49: #{generator_forward.12} parent=46 // pred_check_branch
          %247 = sbr.rel (%p245) target = $region51
        $region50: #{generator_forward.12} parent=46 // pred_region
          _
        $region51: #{generator_forward.12} parent=46 // pred_fallthru
          _
        %s248 = smul.u32 4, %s18
        %p249 = scmp.lt.s32.totalorder %s248, 3
        %s250 = scalar_select %p249, %s248, 3
        %p251 = scmp.lt.s32.totalorder %s20, 0
        %s252 = scalar_select %p251, %s20, 0
        %s253 = sadd.s32 %s252, %s250
        %s254 = smul.addr %s253, 4
        %s255 = scalar_lea.vmem %s0, %s254
        %p256 = pneg %p55
        %p257 = pneg %p52
        %s258 = sand.u32 %s70, 1
        %s259 = sand.u32 %s70, 1
        %s260 = smul.addr %s259, 256
        %s261 = scalar_lea.vmem [#allocation3], %s260
        %p262 = pneg %p83
        %p263 = pneg %p80
        %p264 = pneg %p111
        %p265 = pneg %p108
        %s266 = sand.u32 %s98, 1
        %s267 = sand.u32 %s98, 1
        %s268 = smul.addr %s267, 128
        %s269 = scalar_lea.vmem [#allocation4], %s268
        %s270 = smul.u32 4, %s18
        %p271 = scmp.lt.s32.totalorder %s270, 3
        %s272 = scalar_select %p271, %s270, 3
        %p273 = scmp.lt.s32.totalorder %s20, 0
        %s274 = scalar_select %p273, %s20, 0
        %s275 = sadd.s32 %s274, %s272
        %s276 = smul.addr %s275, 4
        %s277 = scalar_lea.vmem %s0, %s276
        %s278 = smul.u32 4, %s18
        %s279 = smul.u32 16, %s20
        %s280 = smul.u32 4, %s19
        %s281 = smul.u32 4, %s18
        %s282 = smul.u32 4, %s19
        %p284 = scmp.eq.s32.totalorder %s20, 0
        // Predicated region
        $region52: #{generator_forward.12} parent=46 // pred_check
          %p285 = pneg %p284
        $region53: #{generator_forward.12} parent=46 // pred_check_branch
          %287 = sbr.rel (%p285) target = $region55
        $region54: #{generator_forward.12} parent=46 // pred_region
          %288 = vst [vmem:[#allocation2] sm:$0xff] 0.0
          %289 = vst [vmem:[#allocation2 + $0x8] sm:$0xff] 0.0
          %290 = vst [vmem:[#allocation2 + $0x10] sm:$0xff] 0.0
          %291 = vst [vmem:[#allocation2 + $0x18] sm:$0xff] 0.0
          %292 = vst [vmem:[#allocation2 + $0x20] sm:$0xff] 0.0
          %293 = vst [vmem:[#allocation2 + $0x28] sm:$0xff] 0.0
          %294 = vst [vmem:[#allocation2 + $0x30] sm:$0xff] 0.0
          %295 = vst [vmem:[#allocation2 + $0x38] sm:$0xff] 0.0
          %296 = vst [vmem:[#allocation2 + $0x40] sm:$0xff] 0.0
          %297 = vst [vmem:[#allocation2 + $0x48] sm:$0xff] 0.0
          %298 = vst [vmem:[#allocation2 + $0x50] sm:$0xff] 0.0
          %299 = vst [vmem:[#allocation2 + $0x58] sm:$0xff] 0.0
          %300 = vst [vmem:[#allocation2 + $0x60] sm:$0xff] 0.0
          %301 = vst [vmem:[#allocation2 + $0x68] sm:$0xff] 0.0
          %302 = vst [vmem:[#allocation2 + $0x70] sm:$0xff] 0.0
          %303 = vst [vmem:[#allocation2 + $0x78] sm:$0xff] 0.0
        $region55: #{generator_forward.12} parent=46 // pred_fallthru
          _
        %v304 = vld [vmem:[#allocation2] sm:$0xff]
        %v305 = vld [vmem:[#allocation2 + $0x8] sm:$0xff]
        %v306 = vld [vmem:[#allocation2 + $0x10] sm:$0xff]
        %v307 = vld [vmem:[#allocation2 + $0x18] sm:$0xff]
        %v308 = vld [vmem:[#allocation2 + $0x20] sm:$0xff]
        %v309 = vld [vmem:[#allocation2 + $0x28] sm:$0xff]
        %v310 = vld [vmem:[#allocation2 + $0x30] sm:$0xff]
        %v311 = vld [vmem:[#allocation2 + $0x38] sm:$0xff]
        %v312 = vld [vmem:[#allocation2 + $0x40] sm:$0xff]
        %v313 = vld [vmem:[#allocation2 + $0x48] sm:$0xff]
        %v314 = vld [vmem:[#allocation2 + $0x50] sm:$0xff]
        %v315 = vld [vmem:[#allocation2 + $0x58] sm:$0xff]
        %v316 = vld [vmem:[#allocation2 + $0x60] sm:$0xff]
        %v317 = vld [vmem:[#allocation2 + $0x68] sm:$0xff]
        %v318 = vld [vmem:[#allocation2 + $0x70] sm:$0xff]
        %v319 = vld [vmem:[#allocation2 + $0x78] sm:$0xff]
        %v320 = vld [vmem:[%s277] sm:$0xf]
        %v321 = vld [vmem:[%s277 + $0x4] sm:$0xf]
        %v322 = vld [vmem:[%s277 + $0x8] sm:$0xf]
        %v323 = vld [vmem:[%s277 + $0xc] sm:$0xf]
        %v324 = vld [vmem:[%s244] sm:$0xff]
        %v325 = vld [vmem:[%s244 + $0x8] sm:$0xff]
        %v326 = vld [vmem:[%s244 + $0x10] sm:$0xff]
        %v327 = vld [vmem:[%s244 + $0x18] sm:$0xff]
        %v328 = vld [vmem:[%s244 + $0x20] sm:$0xff]
        %v329 = vld [vmem:[%s244 + $0x28] sm:$0xff]
        %v330 = vld [vmem:[%s244 + $0x30] sm:$0xff]
        %v331 = vld [vmem:[%s244 + $0x38] sm:$0xff]
        %v332 = vld [vmem:[%s244 + $0x40] sm:$0xff]
        %v333 = vld [vmem:[%s244 + $0x48] sm:$0xff]
        %v334 = vld [vmem:[%s244 + $0x50] sm:$0xff]
        %v335 = vld [vmem:[%s244 + $0x58] sm:$0xff]
        %v336 = vld [vmem:[%s244 + $0x60] sm:$0xff]
        %v337 = vld [vmem:[%s244 + $0x68] sm:$0xff]
        %v338 = vld [vmem:[%s244 + $0x70] sm:$0xff]
        %v339 = vld [vmem:[%s244 + $0x78] sm:$0xff]
        %v340 = vld [vmem:[%s244 + $0x80] sm:$0xff]
        %v341 = vld [vmem:[%s244 + $0x88] sm:$0xff]
        %v342 = vld [vmem:[%s244 + $0x90] sm:$0xff]
        %v343 = vld [vmem:[%s244 + $0x98] sm:$0xff]
        %v344 = vld [vmem:[%s244 + $0xa0] sm:$0xff]
        %v345 = vld [vmem:[%s244 + $0xa8] sm:$0xff]
        %v346 = vld [vmem:[%s244 + $0xb0] sm:$0xff]
        %v347 = vld [vmem:[%s244 + $0xb8] sm:$0xff]
        %v348 = vld [vmem:[%s244 + $0xc0] sm:$0xff]
        %v349 = vld [vmem:[%s244 + $0xc8] sm:$0xff]
        %v350 = vld [vmem:[%s244 + $0xd0] sm:$0xff]
        %v351 = vld [vmem:[%s244 + $0xd8] sm:$0xff]
        %v352 = vld [vmem:[%s244 + $0xe0] sm:$0xff]
        %v353 = vld [vmem:[%s244 + $0xe8] sm:$0xff]
        %v354 = vld [vmem:[%s244 + $0xf0] sm:$0xff]
        %v355 = vld [vmem:[%s244 + $0xf8] sm:$0xff]
        %v360 = vunpack.c.l.b16 %v320
        %v361 = vunpack.c.l.b16 %v321
        %v362 = vunpack.c.l.b16 %v322
        %v363 = vunpack.c.l.b16 %v323
        %v364 = vpack.c.b16 %v361, %v360
        %v365 = vpack.c.b16 %v363, %v362
        %v400 = vunpack.c.l.b16 %v324
        %v401 = vunpack.c.h.b16 %v324
        %v402 = vunpack.c.l.b16 %v325
        %v403 = vunpack.c.h.b16 %v325
        %v404 = vunpack.c.l.b16 %v326
        %v405 = vunpack.c.h.b16 %v326
        %v406 = vunpack.c.l.b16 %v327
        %v407 = vunpack.c.h.b16 %v327
        %v408 = vunpack.c.l.b16 %v328
        %v409 = vunpack.c.h.b16 %v328
        %v410 = vunpack.c.l.b16 %v329
        %v411 = vunpack.c.h.b16 %v329
        %v412 = vunpack.c.l.b16 %v330
        %v413 = vunpack.c.h.b16 %v330
        %v414 = vunpack.c.l.b16 %v331
        %v415 = vunpack.c.h.b16 %v331
        %v416 = vunpack.c.l.b16 %v332
        %v417 = vunpack.c.h.b16 %v332
        %v418 = vunpack.c.l.b16 %v333
        %v419 = vunpack.c.h.b16 %v333
        %v420 = vunpack.c.l.b16 %v334
        %v421 = vunpack.c.h.b16 %v334
        %v422 = vunpack.c.l.b16 %v335
        %v423 = vunpack.c.h.b16 %v335
        %v424 = vunpack.c.l.b16 %v336
        %v425 = vunpack.c.h.b16 %v336
        %v426 = vunpack.c.l.b16 %v337
        %v427 = vunpack.c.h.b16 %v337
        %v428 = vunpack.c.l.b16 %v338
        %v429 = vunpack.c.h.b16 %v338
        %v430 = vunpack.c.l.b16 %v339
        %v431 = vunpack.c.h.b16 %v339
        %v432 = vunpack.c.l.b16 %v340
        %v433 = vunpack.c.h.b16 %v340
        %v434 = vunpack.c.l.b16 %v341
        %v435 = vunpack.c.h.b16 %v341
        %v436 = vunpack.c.l.b16 %v342
        %v437 = vunpack.c.h.b16 %v342
        %v438 = vunpack.c.l.b16 %v343
        %v439 = vunpack.c.h.b16 %v343
        %v440 = vunpack.c.l.b16 %v344
        %v441 = vunpack.c.h.b16 %v344
        %v442 = vunpack.c.l.b16 %v345
        %v443 = vunpack.c.h.b16 %v345
        %v444 = vunpack.c.l.b16 %v346
        %v445 = vunpack.c.h.b16 %v346
        %v446 = vunpack.c.l.b16 %v347
        %v447 = vunpack.c.h.b16 %v347
        %v448 = vunpack.c.l.b16 %v348
        %v449 = vunpack.c.h.b16 %v348
        %v450 = vunpack.c.l.b16 %v349
        %v451 = vunpack.c.h.b16 %v349
        %v452 = vunpack.c.l.b16 %v350
        %v453 = vunpack.c.h.b16 %v350
        %v454 = vunpack.c.l.b16 %v351
        %v455 = vunpack.c.h.b16 %v351
        %v456 = vunpack.c.l.b16 %v352
        %v457 = vunpack.c.h.b16 %v352
        %v458 = vunpack.c.l.b16 %v353
        %v459 = vunpack.c.h.b16 %v353
        %v460 = vunpack.c.l.b16 %v354
        %v461 = vunpack.c.h.b16 %v354
        %v462 = vunpack.c.l.b16 %v355
        %v463 = vunpack.c.h.b16 %v355
        %v464 = vpack.c.b16 %v404, %v400
        %v465 = vpack.c.b16 %v405, %v401
        %v466 = vpack.c.b16 %v406, %v402
        %v467 = vpack.c.b16 %v407, %v403
        %v468 = vpack.c.b16 %v412, %v408
        %v469 = vpack.c.b16 %v413, %v409
        %v470 = vpack.c.b16 %v414, %v410
        %v471 = vpack.c.b16 %v415, %v411
        %v472 = vpack.c.b16 %v420, %v416
        %v473 = vpack.c.b16 %v421, %v417
        %v474 = vpack.c.b16 %v422, %v418
        %v475 = vpack.c.b16 %v423, %v419
        %v476 = vpack.c.b16 %v428, %v424
        %v477 = vpack.c.b16 %v429, %v425
        %v478 = vpack.c.b16 %v430, %v426
        %v479 = vpack.c.b16 %v431, %v427
        %v480 = vpack.c.b16 %v436, %v432
        %v481 = vpack.c.b16 %v437, %v433
        %v482 = vpack.c.b16 %v438, %v434
        %v483 = vpack.c.b16 %v439, %v435
        %v484 = vpack.c.b16 %v444, %v440
        %v485 = vpack.c.b16 %v445, %v441
        %v486 = vpack.c.b16 %v446, %v442
        %v487 = vpack.c.b16 %v447, %v443
        %v488 = vpack.c.b16 %v452, %v448
        %v489 = vpack.c.b16 %v453, %v449
        %v490 = vpack.c.b16 %v454, %v450
        %v491 = vpack.c.b16 %v455, %v451
        %v492 = vpack.c.b16 %v460, %v456
        %v493 = vpack.c.b16 %v461, %v457
        %v494 = vpack.c.b16 %v462, %v458
        %v495 = vpack.c.b16 %v463, %v459
        %528 = vmatprep.subr.bf16.mxu0 %v465
        %529 = vmatpush1.bf16.msra.mxu0 %v464
        %530 = vmatprep.subr.bf16.mxu0 %v469
        %531 = vmatpush1.bf16.msra.mxu0 %v468
        %532 = vmatprep.subr.bf16.mxu0 %v473
        %533 = vmatpush1.bf16.msra.mxu0 %v472
        %534 = vmatprep.subr.bf16.mxu0 %v477
        %535 = vmatpush1.bf16.msra.mxu0 %v476
        %536 = vmatprep.subr.bf16.mxu0 %v481
        %537 = vmatpush1.bf16.msra.mxu0 %v480
        %538 = vmatprep.subr.bf16.mxu0 %v485
        %539 = vmatpush1.bf16.msra.mxu0 %v484
        %540 = vmatprep.subr.bf16.mxu0 %v489
        %541 = vmatpush1.bf16.msra.mxu0 %v488
        %542 = vmatprep.subr.bf16.mxu0 %v493
        %543 = vmatpush1.bf16.msra.mxu0 %v492
        %544 = vmatprep.subr.bf16.mxu0 0
        %545 = vmatpush1.bf16.msra.mxu0 0
        %546 = vmatprep.subr.bf16.mxu0 0
        %547 = vmatpush1.bf16.msra.mxu0 0
        %548 = vmatprep.subr.bf16.mxu0 0
        %549 = vmatpush1.bf16.msra.mxu0 0
        %550 = vmatprep.subr.bf16.mxu0 0
        %551 = vmatpush1.bf16.msra.mxu0 0
        %552 = vmatprep.subr.bf16.mxu0 0
        %553 = vmatpush1.bf16.msra.mxu0 0
        %554 = vmatprep.subr.bf16.mxu0 0
        %555 = vmatpush1.bf16.msra.mxu0 0
        %556 = vmatprep.subr.bf16.mxu0 0
        %557 = vmatpush1.bf16.msra.mxu0 0
        %558 = vmatprep.subr.bf16.mxu0 0
        %559 = vmatpush1.bf16.msra.mxu0 0
        %560 = vmatprep.mubr.bf16.mxu0 0
        %561 = vmatmul.mubr.bf16.gmra.mrb[0].mxu0 %v364
        %v562 = vpop.f32.mrb[0].mxu0
        %v563 = vadd.f32 0.0, %v562
        %v564 = vpop.f32.mrb[0].mxu0
        %v565 = vadd.f32 0.0, %v564
        %v566 = vpop.f32.mrb[0].mxu0
        %v567 = vadd.f32 0.0, %v566
        %v568 = vpop.f32.mrb[0].mxu0
        %v569 = vadd.f32 0.0, %v568
        %570 = vmatprep.mubr.bf16.mxu0 0
        %571 = vmatmul.mubr.bf16.gmra.mrb[0].mxu0 %v365
        %v572 = vpop.f32.mrb[0].mxu0
        %v573 = vadd.f32 0.0, %v572
        %v574 = vpop.f32.mrb[0].mxu0
        %v575 = vadd.f32 0.0, %v574
        %v576 = vpop.f32.mrb[0].mxu0
        %v577 = vadd.f32 0.0, %v576
        %v578 = vpop.f32.mrb[0].mxu0
        %v579 = vadd.f32 0.0, %v578
        %580 = vdwg.mxu0
        %581 = vmatprep.subr.bf16.mxu0 %v467
        %582 = vmatpush1.bf16.msra.mxu0 %v466
        %583 = vmatprep.subr.bf16.mxu0 %v471
        %584 = vmatpush1.bf16.msra.mxu0 %v470
        %585 = vmatprep.subr.bf16.mxu0 %v475
        %586 = vmatpush1.bf16.msra.mxu0 %v474
        %587 = vmatprep.subr.bf16.mxu0 %v479
        %588 = vmatpush1.bf16.msra.mxu0 %v478
        %589 = vmatprep.subr.bf16.mxu0 %v483
        %590 = vmatpush1.bf16.msra.mxu0 %v482
        %591 = vmatprep.subr.bf16.mxu0 %v487
        %592 = vmatpush1.bf16.msra.mxu0 %v486
        %593 = vmatprep.subr.bf16.mxu0 %v491
        %594 = vmatpush1.bf16.msra.mxu0 %v490
        %595 = vmatprep.subr.bf16.mxu0 %v495
        %596 = vmatpush1.bf16.msra.mxu0 %v494
        %597 = vmatprep.subr.bf16.mxu0 0
        %598 = vmatpush1.bf16.msra.mxu0 0
        %599 = vmatprep.subr.bf16.mxu0 0
        %600 = vmatpush1.bf16.msra.mxu0 0
        %601 = vmatprep.subr.bf16.mxu0 0
        %602 = vmatpush1.bf16.msra.mxu0 0
        %603 = vmatprep.subr.bf16.mxu0 0
        %604 = vmatpush1.bf16.msra.mxu0 0
        %605 = vmatprep.subr.bf16.mxu0 0
        %606 = vmatpush1.bf16.msra.mxu0 0
        %607 = vmatprep.subr.bf16.mxu0 0
        %608 = vmatpush1.bf16.msra.mxu0 0
        %609 = vmatprep.subr.bf16.mxu0 0
        %610 = vmatpush1.bf16.msra.mxu0 0
        %611 = vmatprep.subr.bf16.mxu0 0
        %612 = vmatpush1.bf16.msra.mxu0 0
        %613 = vmatprep.mubr.bf16.mxu0 0
        %614 = vmatmul.mubr.bf16.gmra.mrb[0].mxu0 %v364
        %v615 = vpop.f32.mrb[0].mxu0
        %v616 = vadd.f32 0.0, %v615
        %v617 = vpop.f32.mrb[0].mxu0
        %v618 = vadd.f32 0.0, %v617
        %v619 = vpop.f32.mrb[0].mxu0
        %v620 = vadd.f32 0.0, %v619
        %v621 = vpop.f32.mrb[0].mxu0
        %v622 = vadd.f32 0.0, %v621
        %623 = vmatprep.mubr.bf16.mxu0 0
        %624 = vmatmul.mubr.bf16.gmra.mrb[0].mxu0 %v365
        %v625 = vpop.f32.mrb[0].mxu0
        %v626 = vadd.f32 0.0, %v625
        %v627 = vpop.f32.mrb[0].mxu0
        %v628 = vadd.f32 0.0, %v627
        %v629 = vpop.f32.mrb[0].mxu0
        %v630 = vadd.f32 0.0, %v629
        %v631 = vpop.f32.mrb[0].mxu0
        %v632 = vadd.f32 0.0, %v631
        %633 = vdwg.mxu0
        %v634 = vadd.f32 %v304, %v563
        %v635 = vadd.f32 %v305, %v565
        %v636 = vadd.f32 %v306, %v616
        %v637 = vadd.f32 %v307, %v618
        %v638 = vadd.f32 %v308, %v567
        %v639 = vadd.f32 %v309, %v569
        %v640 = vadd.f32 %v310, %v620
        %v641 = vadd.f32 %v311, %v622
        %v642 = vadd.f32 %v312, %v573
        %v643 = vadd.f32 %v313, %v575
        %v644 = vadd.f32 %v314, %v626
        %v645 = vadd.f32 %v315, %v628
        %v646 = vadd.f32 %v316, %v577
        %v647 = vadd.f32 %v317, %v579
        %v648 = vadd.f32 %v318, %v630
        %v649 = vadd.f32 %v319, %v632
        %650 = vst [vmem:[#allocation2] sm:$0xff] %v634
        %651 = vst [vmem:[#allocation2 + $0x8] sm:$0xff] %v635
        %652 = vst [vmem:[#allocation2 + $0x10] sm:$0xff] %v636
        %653 = vst [vmem:[#allocation2 + $0x18] sm:$0xff] %v637
        %654 = vst [vmem:[#allocation2 + $0x20] sm:$0xff] %v638
        %655 = vst [vmem:[#allocation2 + $0x28] sm:$0xff] %v639
        %656 = vst [vmem:[#allocation2 + $0x30] sm:$0xff] %v640
        %657 = vst [vmem:[#allocation2 + $0x38] sm:$0xff] %v641
        %658 = vst [vmem:[#allocation2 + $0x40] sm:$0xff] %v642
        %659 = vst [vmem:[#allocation2 + $0x48] sm:$0xff] %v643
        %660 = vst [vmem:[#allocation2 + $0x50] sm:$0xff] %v644
        %661 = vst [vmem:[#allocation2 + $0x58] sm:$0xff] %v645
        %662 = vst [vmem:[#allocation2 + $0x60] sm:$0xff] %v646
        %663 = vst [vmem:[#allocation2 + $0x68] sm:$0xff] %v647
        %664 = vst [vmem:[#allocation2 + $0x70] sm:$0xff] %v648
        %665 = vst [vmem:[#allocation2 + $0x78] sm:$0xff] %v649
        // Predicated region
        $region56: #{generator_forward.12} parent=46 // pred_check
          %p666 = pneg %p284
        $region57: #{generator_forward.12} parent=46 // pred_check_branch
          %668 = sbr.rel (%p666) target = $region59
        $region58: #{generator_forward.12} parent=46 // pred_region
          %v669 = vld [vmem:[#allocation2] sm:$0xff]
          %v670 = vld [vmem:[#allocation2 + $0x8] sm:$0xff]
          %v671 = vld [vmem:[#allocation2 + $0x10] sm:$0xff]
          %v672 = vld [vmem:[#allocation2 + $0x18] sm:$0xff]
          %v673 = vld [vmem:[#allocation2 + $0x20] sm:$0xff]
          %v674 = vld [vmem:[#allocation2 + $0x28] sm:$0xff]
          %v675 = vld [vmem:[#allocation2 + $0x30] sm:$0xff]
          %v676 = vld [vmem:[#allocation2 + $0x38] sm:$0xff]
          %v677 = vld [vmem:[#allocation2 + $0x40] sm:$0xff]
          %v678 = vld [vmem:[#allocation2 + $0x48] sm:$0xff]
          %v679 = vld [vmem:[#allocation2 + $0x50] sm:$0xff]
          %v680 = vld [vmem:[#allocation2 + $0x58] sm:$0xff]
          %v681 = vld [vmem:[#allocation2 + $0x60] sm:$0xff]
          %v682 = vld [vmem:[#allocation2 + $0x68] sm:$0xff]
          %v683 = vld [vmem:[#allocation2 + $0x70] sm:$0xff]
          %v684 = vld [vmem:[#allocation2 + $0x78] sm:$0xff]
          %685 = vst [vmem:[%s269] sm:$0xff] %v669
          %686 = vst [vmem:[%s269 + $0x8] sm:$0xff] %v670
          %687 = vst [vmem:[%s269 + $0x10] sm:$0xff] %v671
          %688 = vst [vmem:[%s269 + $0x18] sm:$0xff] %v672
          %689 = vst [vmem:[%s269 + $0x20] sm:$0xff] %v673
          %690 = vst [vmem:[%s269 + $0x28] sm:$0xff] %v674
          %691 = vst [vmem:[%s269 + $0x30] sm:$0xff] %v675
          %692 = vst [vmem:[%s269 + $0x38] sm:$0xff] %v676
          %693 = vst [vmem:[%s269 + $0x40] sm:$0xff] %v677
          %694 = vst [vmem:[%s269 + $0x48] sm:$0xff] %v678
          %695 = vst [vmem:[%s269 + $0x50] sm:$0xff] %v679
          %696 = vst [vmem:[%s269 + $0x58] sm:$0xff] %v680
          %697 = vst [vmem:[%s269 + $0x60] sm:$0xff] %v681
          %698 = vst [vmem:[%s269 + $0x68] sm:$0xff] %v682
          %699 = vst [vmem:[%s269 + $0x70] sm:$0xff] %v683
          %700 = vst [vmem:[%s269 + $0x78] sm:$0xff] %v684
        $region59: #{generator_forward.12} parent=46 // pred_fallthru
          _
        %s701 = sand.u32 %s98, 1
        %s702 = sand.u32 %s98, 1
        %s703 = smul.addr %s702, 128
        %s704 = scalar_lea.vmem [#allocation4], %s703
        // Predicated region
        $region60: #{generator_forward.12} parent=46 // pred_check
          %p705 = pneg %p108
        $region61: #{generator_forward.12} parent=46 // pred_check_branch
          %707 = sbr.rel (%p705) target = $region63
        $region62: #{generator_forward.12} parent=46 // pred_region
          %s708 = smul.u32 4, %s18
          %s709 = smul.u32 4, %s19
          %s710 = smul.addr %s708, 8
          %s711 = sadd.s32 %s709, %s710
          %s712 = smul.addr %s711, 8
          %s713 = scalar_lea.vmem %s2, %s712
          // Predicated region
          $region64: #{generator_forward.12} parent=62 // pred_check
            _
          $region65: #{generator_forward.12} parent=62 // pred_check_branch
            %715 = sbr.rel (0) target = $region67
          $region66: #{generator_forward.12} parent=62 // pred_region
            // Predicated region
            $region68: #{generator_forward.12} parent=66 // pred_check
              _
            $region69: #{generator_forward.12} parent=66 // pred_check_branch
              %717 = sbr.rel (0) target = $region71
            $region70: #{generator_forward.12} parent=66 // pred_region
              loop: start=0, step=1, limit=1
              $region72: #{generator_forward.12} parent=70 // loop_pre_header
                _
              $region73: #{generator_forward.12} parent=70 // loop_header
                %s719 = sphi 0, %s723
                %p720 = scmp.ge.s32.totalorder %s719, 1
                %s724 = sphi %s704, %s704
                %s725 = sphi %s713, %s713
              $region74: #{generator_forward.12} parent=70 // loop_header_branch
                %722 = sbr.rel (%p720) target = $region78
              $region75: #{generator_forward.12} parent=70 // loop_body
                %v726 = vld [vmem:[%s724] sm:$0xff]
                %727 = vst [vmem:[%s725] sm:$0xff] %v726
                %v728 = vld [vmem:[%s724 + $0x8] sm:$0xff]
                %729 = vst [vmem:[%s725 + $0x8] sm:$0xff] %v728
                %v730 = vld [vmem:[%s724 + $0x10] sm:$0xff]
                %731 = vst [vmem:[%s725 + $0x10] sm:$0xff] %v730
                %v732 = vld [vmem:[%s724 + $0x18] sm:$0xff]
                %733 = vst [vmem:[%s725 + $0x18] sm:$0xff] %v732
                %v734 = vld [vmem:[%s724 + $0x20] sm:$0xff]
                %735 = vst [vmem:[%s725 + $0x40] sm:$0xff] %v734
                %v736 = vld [vmem:[%s724 + $0x28] sm:$0xff]
                %737 = vst [vmem:[%s725 + $0x48] sm:$0xff] %v736
                %v738 = vld [vmem:[%s724 + $0x30] sm:$0xff]
                %739 = vst [vmem:[%s725 + $0x50] sm:$0xff] %v738
                %v740 = vld [vmem:[%s724 + $0x38] sm:$0xff]
                %741 = vst [vmem:[%s725 + $0x58] sm:$0xff] %v740
                %v742 = vld [vmem:[%s724 + $0x40] sm:$0xff]
                %743 = vst [vmem:[%s725 + $0x80] sm:$0xff] %v742
                %v744 = vld [vmem:[%s724 + $0x48] sm:$0xff]
                %745 = vst [vmem:[%s725 + $0x88] sm:$0xff] %v744
                %v746 = vld [vmem:[%s724 + $0x50] sm:$0xff]
                %747 = vst [vmem:[%s725 + $0x90] sm:$0xff] %v746
                %v748 = vld [vmem:[%s724 + $0x58] sm:$0xff]
                %749 = vst [vmem:[%s725 + $0x98] sm:$0xff] %v748
                %v750 = vld [vmem:[%s724 + $0x60] sm:$0xff]
                %751 = vst [vmem:[%s725 + $0xc0] sm:$0xff] %v750
                %v752 = vld [vmem:[%s724 + $0x68] sm:$0xff]
                %753 = vst [vmem:[%s725 + $0xc8] sm:$0xff] %v752
                %v754 = vld [vmem:[%s724 + $0x70] sm:$0xff]
                %755 = vst [vmem:[%s725 + $0xd0] sm:$0xff] %v754
                %v756 = vld [vmem:[%s724 + $0x78] sm:$0xff]
                %757 = vst [vmem:[%s725 + $0xd8] sm:$0xff] %v756
              $region76: #{generator_forward.12} parent=70 // loop_footer
                %s723 = sadd.s32 1, %s719
              $region77: #{generator_forward.12} parent=70 // loop_footer_branch
                %718 = sbr.rel target = $region73
              $region78: #{generator_forward.12} parent=70 // loop_exit
                _
            $region71: #{generator_forward.12} parent=66 // pred_fallthru
              _
            // Predicated region
            $region79: #{generator_forward.12} parent=66 // pred_check
              _
            $region80: #{generator_forward.12} parent=66 // pred_check_branch
              %759 = sbr.rel target = $region82
            $region81: #{generator_forward.12} parent=66 // pred_region
              _
            $region82: #{generator_forward.12} parent=66 // pred_fallthru
              _
          $region67: #{generator_forward.12} parent=62 // pred_fallthru
            _
          %760 = vnop
        $region63: #{generator_forward.12} parent=46 // pred_fallthru
          _
      $region47: #{generator_forward.12} parent=5 // pred_fallthru
        _
      %p761 = scmp.le.s32.totalorder 2, %s8
      // Predicated region
      $region83: #{generator_forward.12} parent=5 // pred_check
        %p762 = pneg %p761
      $region84: #{generator_forward.12} parent=5 // pred_check_branch
        %764 = sbr.rel (%p762) target = $region86
      $region85: #{generator_forward.12} parent=5 // pred_region
        %s765 = ssub.s32 %s8, 2
        // Predicated region
        $region87: #{generator_forward.12} parent=85 // pred_check
          %p766 = pneg %p114
        $region88: #{generator_forward.12} parent=85 // pred_check_branch
          %768 = sbr.rel (%p766) target = $region90
        $region89: #{generator_forward.12} parent=85 // pred_region
          %s769 = sand.u32 %s99, 1
          %s770 = sand.u32 %s99, 1
          %s771 = smul.addr %s770, 128
          %s772 = scalar_lea.vmem [#allocation4], %s771
        $region90: #{generator_forward.12} parent=85 // pred_fallthru
          _
      $region86: #{generator_forward.12} parent=5 // pred_fallthru
        _
    $region6: #{generator_forward.12} parent=1 // loop_footer
      %s12 = sadd.s32 1, %s8
    $region7: #{generator_forward.12} parent=1 // loop_footer_branch
      %7 = sbr.rel target = $region3
    $region8: #{generator_forward.12} parent=1 // loop_exit
      _

// kernel: tile.37
$region0: #{tile.37}
  #allocation0 [shape = 's32[1]{0}', space=sflag, size = 0x4, scoped, tag = 'scoped memory for tile.37']
  %s0 = inlined_call_operand.vmem [shape: f32[64], index: 0, kind: input, shape index: {}]
  %s1 = inlined_call_operand.vmem [shape: f32[2,64], index: 1, kind: output, shape index: {}]
  // Predicated region
  $region2: #{tile.37} parent=0 // pred_check
    _
  $region3: #{tile.37} parent=0 // pred_check_branch
    %3 = sbr.rel (0) target = $region5
  $region4: #{tile.37} parent=0 // pred_region
    _
  $region5: #{tile.37} parent=0 // pred_fallthru
    _
  %v4 = vld [vmem:[%s0] ss:$0 sm:$0xff]
  %5 = vst [vmem:[%s1] sm:$0x3] %v4

// kernel: tile.38
$region0: #{tile.38}
  %s0 = inlined_call_operand.vmem [shape: f32[2,64], index: 0, kind: input, shape index: {}]
  %s1 = inlined_call_operand.vmem [shape: f32[1,128], index: 1, kind: output, shape index: {}]
  $region1: #{tile.38} parent=0
    #allocation0 [shape = 'u8[4096]{0}', space=vmem, size = 0x1000, scoped, tag = 'scoped mem for output reshape']
    #allocation1 [shape = 'u8[4096]{0}', space=vmem, size = 0x1000, scoped, tag = 'scoped mem for input reshape']
    %s3 = sshllo.u32 0, 2
    %v4 = vld [vmem:[%s0] sm:%s3]
    %5 = vst [vmem:[#allocation1] sm:%s3] %v4
    %v6 = vld [vmem:[#allocation1] sm:$0x1]
    %vm7 = vcmask 523264
    %8 = vst.msk [vmem:[#allocation0] sm:$0x1] %vm7, %v6
    %s9 = scalar_lea.vmem [#allocation1], 1
    %v10 = vld [vmem:[%s9] sm:$0x1]
    %11 = vrot.lane.b32.xlu0 %v10, 64
    %v12 = vpop.permute.xlu0 %11
    %vm13 = vcmask 1048064
    %14 = vst.msk [vmem:[#allocation0] sm:$0x1] %vm13, %v12
    %s16 = sshllo.u32 0, 1
    %v18 = vld [vmem:[#allocation0] sm:%s16]
    %s19 = sshllo.u32 0, 1
    %20 = vst [vmem:[%s1] sm:%s19] %v18

// kernel: generator_forward.13
$region0: #{generator_forward.13}
  #allocation0 [shape = 'u32[]', space=smem, size = 0x4, offset = 0x4, fixed_abs, tag = 'smem constant byte address 0x4 - core index']
  #allocation1 [shape = 'u32[144,128]{1,0:T(1,128)}', space=vmem, size = 0x12000, scoped, tag = 'internal scratch']
  %s0 = inlined_call_operand.vmem [shape: f32[64,128], index: 0, kind: input, shape index: {}]
  %s1 = inlined_call_operand.vmem [shape: f32[1,128], index: 1, kind: input, shape index: {}]
  %s2 = inlined_call_operand.vmem [shape: f32[1,128], index: 2, kind: input, shape index: {}]
  %s3 = inlined_call_operand.vmem [shape: bf16[64,128], index: 3, kind: output, shape index: {}]
  %s4 = sld [smem:[#allocation0]]
  $region22: #{generator_forward.13} parent=0
    _
  %s6 = ssub.s32 1, %s4
  %s7 = scalar_select 0, %s6, %s4
  // Predicated region
  $region2: #{generator_forward.13} parent=0 // pred_check
    _
  $region3: #{generator_forward.13} parent=0 // pred_check_branch
    %9 = sbr.rel (0) target = $region5
  $region4: #{generator_forward.13} parent=0 // pred_region
    _
  $region5: #{generator_forward.13} parent=0 // pred_fallthru
    _
  // Predicated region
  $region6: #{generator_forward.13} parent=0 // pred_check
    _
  $region7: #{generator_forward.13} parent=0 // pred_check_branch
    %11 = sbr.rel (0) target = $region9
  $region8: #{generator_forward.13} parent=0 // pred_region
    _
  $region9: #{generator_forward.13} parent=0 // pred_fallthru
    _
  // Predicated region
  $region10: #{generator_forward.13} parent=0 // pred_check
    _
  $region11: #{generator_forward.13} parent=0 // pred_check_branch
    %13 = sbr.rel (0) target = $region13
  $region12: #{generator_forward.13} parent=0 // pred_region
    _
  $region13: #{generator_forward.13} parent=0 // pred_fallthru
    _
  %v14 = vld [vmem:[%s0] sm:$0xff]
  %v15 = vld [vmem:[%s0 + $0x8] sm:$0xff]
  %v16 = vld [vmem:[%s0 + $0x10] sm:$0xff]
  %v17 = vld [vmem:[%s0 + $0x18] sm:$0xff]
  %v18 = vld [vmem:[%s0 + $0x20] sm:$0xff]
  %v19 = vld [vmem:[%s0 + $0x28] sm:$0xff]
  %v20 = vld [vmem:[%s0 + $0x30] sm:$0xff]
  %v21 = vld [vmem:[%s0 + $0x38] sm:$0xff]
  %v22 = vld [vmem:[%s1] sm:$0x1]
  %v24 = vlaneseq
  %v25 = vshrl.u32 %v24, 7
  %v26 = vsub.s32 0, %v25
  %v27 = vrot.slane %v22, %v26
  %v29 = vmul.f32 %v14, %v27
  %v30 = vmul.f32 %v15, %v27
  %v31 = vmul.f32 %v16, %v27
  %v32 = vmul.f32 %v17, %v27
  %v33 = vmul.f32 %v18, %v27
  %v34 = vmul.f32 %v19, %v27
  %v35 = vmul.f32 %v20, %v27
  %v36 = vmul.f32 %v21, %v27
  %v37 = vld [vmem:[%s2] sm:$0x1]
  %v39 = vlaneseq
  %v40 = vshrl.u32 %v39, 7
  %v41 = vsub.s32 0, %v40
  %v42 = vrot.slane %v37, %v41
  %v44 = vadd.f32 %v29, %v42
  %v45 = vadd.f32 %v30, %v42
  %v46 = vadd.f32 %v31, %v42
  %v47 = vadd.f32 %v32, %v42
  %v48 = vadd.f32 %v33, %v42
  %v49 = vadd.f32 %v34, %v42
  %v50 = vadd.f32 %v35, %v42
  %v51 = vadd.f32 %v36, %v42
  %v52 = vmax.f32 %v44, 0.0
  %v53 = vmax.f32 %v45, 0.0
  %v54 = vmax.f32 %v46, 0.0
  %v55 = vmax.f32 %v47, 0.0
  %v56 = vmax.f32 %v48, 0.0
  %v57 = vmax.f32 %v49, 0.0
  %v58 = vmax.f32 %v50, 0.0
  %v59 = vmax.f32 %v51, 0.0
  %v60 = vpack.c.bf16 %v53, %v52
  %v61 = vpack.c.bf16 %v55, %v54
  %v62 = vpack.c.bf16 %v57, %v56
  %v63 = vpack.c.bf16 %v59, %v58
  %v68 = vunpack.c.l.b16 %v60
  %v69 = vunpack.c.h.b16 %v60
  %v70 = vunpack.c.l.b16 %v61
  %v71 = vunpack.c.h.b16 %v61
  %v72 = vunpack.c.l.b16 %v62
  %v73 = vunpack.c.h.b16 %v62
  %v74 = vunpack.c.l.b16 %v63
  %v75 = vunpack.c.h.b16 %v63
  %v76 = vpack.c.b16 %v68, %v68
  %v77 = vpack.c.b16 %v69, %v69
  %v78 = vpack.c.b16 %v70, %v70
  %v79 = vpack.c.b16 %v71, %v71
  %v80 = vpack.c.b16 %v72, %v72
  %v81 = vpack.c.b16 %v73, %v73
  %v82 = vpack.c.b16 %v74, %v74
  %v83 = vpack.c.b16 %v75, %v75
  %92 = vst [vmem:[%s3] sm:$0xf] %v76
  %93 = vst [vmem:[%s3 + $0x4] sm:$0xf] %v77
  %94 = vst [vmem:[%s3 + $0x8] sm:$0xf] %v78
  %95 = vst [vmem:[%s3 + $0xc] sm:$0xf] %v79
  %96 = vst [vmem:[%s3 + $0x10] sm:$0xf] %v80
  %97 = vst [vmem:[%s3 + $0x14] sm:$0xf] %v81
  %98 = vst [vmem:[%s3 + $0x18] sm:$0xf] %v82
  %99 = vst [vmem:[%s3 + $0x1c] sm:$0xf] %v83
  // Predicated region
  $region14: #{generator_forward.13} parent=0 // pred_check
    _
  $region15: #{generator_forward.13} parent=0 // pred_check_branch
    %101 = sbr.rel (0) target = $region17
  $region16: #{generator_forward.13} parent=0 // pred_region
    _
  $region17: #{generator_forward.13} parent=0 // pred_fallthru
    _
  // Predicated region
  $region18: #{generator_forward.13} parent=0 // pred_check
    _
  $region19: #{generator_forward.13} parent=0 // pred_check_branch
    %103 = sbr.rel (0) target = $region21
  $region20: #{generator_forward.13} parent=0 // pred_region
    _
  $region21: #{generator_forward.13} parent=0 // pred_fallthru
    _

// kernel: generator_forward.14
$region0: #{generator_forward.14}
  #allocation0 [shape = 'u32[]', space=smem, size = 0x4, offset = 0x4, fixed_abs, tag = 'smem constant byte address 0x4 - core index']
  #allocation1 [shape = 'u32[144,128]{1,0:T(1,128)}', space=vmem, size = 0x12000, scoped, tag = 'internal scratch']
  #allocation2 [shape = 'f32[128,512]{1,0:T(8,128)}', space=vmem, size = 0x40000, scoped, tag = 'scratch operand']
  %s0 = inlined_call_operand.vmem [shape: bf16[128,64], index: 0, kind: input, shape index: {}]
  %s1 = inlined_call_operand.vmem [shape: bf16[64,512], index: 1, kind: input, shape index: {}]
  %s2 = inlined_call_operand.vmem [shape: f32[128,512], index: 2, kind: output, shape index: {}]
  %s3 = sld [smem:[#allocation0]]
  $region26: #{generator_forward.14} parent=0
    _
  %s5 = ssub.s32 1, %s3
  %s6 = scalar_select 0, %s5, %s3
  // Predicated region
  $region2: #{generator_forward.14} parent=0 // pred_check
    _
  $region3: #{generator_forward.14} parent=0 // pred_check_branch
    %8 = sbr.rel (0) target = $region5
  $region4: #{generator_forward.14} parent=0 // pred_region
    _
  $region5: #{generator_forward.14} parent=0 // pred_fallthru
    _
  // Predicated region
  $region6: #{generator_forward.14} parent=0 // pred_check
    _
  $region7: #{generator_forward.14} parent=0 // pred_check_branch
    %10 = sbr.rel (0) target = $region9
  $region8: #{generator_forward.14} parent=0 // pred_region
    _
  $region9: #{generator_forward.14} parent=0 // pred_fallthru
    _
  %p12 = scmp.eq.s32.totalorder 0, 0
  // Predicated region
  $region10: #{generator_forward.14} parent=0 // pred_check
    %p13 = pneg %p12
  $region11: #{generator_forward.14} parent=0 // pred_check_branch
    %15 = sbr.rel (%p13) target = $region13
  $region12: #{generator_forward.14} parent=0 // pred_region
    %16 = vst [vmem:[#allocation2] sm:$0xff] 0.0
    %17 = vst [vmem:[#allocation2 + $0x8] sm:$0xff] 0.0
    %18 = vst [vmem:[#allocation2 + $0x10] sm:$0xff] 0.0
    %19 = vst [vmem:[#allocation2 + $0x18] sm:$0xff] 0.0
    %20 = vst [vmem:[#allocation2 + $0x20] sm:$0xff] 0.0
    %21 = vst [vmem:[#allocation2 + $0x28] sm:$0xff] 0.0
    %22 = vst [vmem:[#allocation2 + $0x30] sm:$0xff] 0.0
    %23 = vst [vmem:[#allocation2 + $0x38] sm:$0xff] 0.0
    %24 = vst [vmem:[#allocation2 + $0x40] sm:$0xff] 0.0
    %25 = vst [vmem:[#allocation2 + $0x48] sm:$0xff] 0.0
    %26 = vst [vmem:[#allocation2 + $0x50] sm:$0xff] 0.0
    %27 = vst [vmem:[#allocation2 + $0x58] sm:$0xff] 0.0
    %28 = vst [vmem:[#allocation2 + $0x60] sm:$0xff] 0.0
    %29 = vst [vmem:[#allocation2 + $0x68] sm:$0xff] 0.0
    %30 = vst [vmem:[#allocation2 + $0x70] sm:$0xff] 0.0
    %31 = vst [vmem:[#allocation2 + $0x78] sm:$0xff] 0.0
    %32 = vst [vmem:[#allocation2 + $0x80] sm:$0xff] 0.0
    %33 = vst [vmem:[#allocation2 + $0x88] sm:$0xff] 0.0
    %34 = vst [vmem:[#allocation2 + $0x90] sm:$0xff] 0.0
    %35 = vst [vmem:[#allocation2 + $0x98] sm:$0xff] 0.0
    %36 = vst [vmem:[#allocation2 + $0xa0] sm:$0xff] 0.0
    %37 = vst [vmem:[#allocation2 + $0xa8] sm:$0xff] 0.0
    %38 = vst [vmem:[#allocation2 + $0xb0] sm:$0xff] 0.0
    %39 = vst [vmem:[#allocation2 + $0xb8] sm:$0xff] 0.0
    %40 = vst [vmem:[#allocation2 + $0xc0] sm:$0xff] 0.0
    %41 = vst [vmem:[#allocation2 + $0xc8] sm:$0xff] 0.0
    %42 = vst [vmem:[#allocation2 + $0xd0] sm:$0xff] 0.0
    %43 = vst [vmem:[#allocation2 + $0xd8] sm:$0xff] 0.0
    %44 = vst [vmem:[#allocation2 + $0xe0] sm:$0xff] 0.0
    %45 = vst [vmem:[#allocation2 + $0xe8] sm:$0xff] 0.0
    %46 = vst [vmem:[#allocation2 + $0xf0] sm:$0xff] 0.0
    %47 = vst [vmem:[#allocation2 + $0xf8] sm:$0xff] 0.0
    %48 = vst [vmem:[#allocation2 + $0x100] sm:$0xff] 0.0
    %49 = vst [vmem:[#allocation2 + $0x108] sm:$0xff] 0.0
    %50 = vst [vmem:[#allocation2 + $0x110] sm:$0xff] 0.0
    %51 = vst [vmem:[#allocation2 + $0x118] sm:$0xff] 0.0
    %52 = vst [vmem:[#allocation2 + $0x120] sm:$0xff] 0.0
    %53 = vst [vmem:[#allocation2 + $0x128] sm:$0xff] 0.0
    %54 = vst [vmem:[#allocation2 + $0x130] sm:$0xff] 0.0
    %55 = vst [vmem:[#allocation2 + $0x138] sm:$0xff] 0.0
    %56 = vst [vmem:[#allocation2 + $0x140] sm:$0xff] 0.0
    %57 = vst [vmem:[#allocation2 + $0x148] sm:$0xff] 0.0
    %58 = vst [vmem:[#allocation2 + $0x150] sm:$0xff] 0.0
    %59 = vst [vmem:[#allocation2 + $0x158] sm:$0xff] 0.0
    %60 = vst [vmem:[#allocation2 + $0x160] sm:$0xff] 0.0
    %61 = vst [vmem:[#allocation2 + $0x168] sm:$0xff] 0.0
    %62 = vst [vmem:[#allocation2 + $0x170] sm:$0xff] 0.0
    %63 = vst [vmem:[#allocation2 + $0x178] sm:$0xff] 0.0
    %64 = vst [vmem:[#allocation2 + $0x180] sm:$0xff] 0.0
    %65 = vst [vmem:[#allocation2 + $0x188] sm:$0xff] 0.0
    %66 = vst [vmem:[#allocation2 + $0x190] sm:$0xff] 0.0
    %67 = vst [vmem:[#allocation2 + $0x198] sm:$0xff] 0.0
    %68 = vst [vmem:[#allocation2 + $0x1a0] sm:$0xff] 0.0
    %69 = vst [vmem:[#allocation2 + $0x1a8] sm:$0xff] 0.0
    %70 = vst [vmem:[#allocation2 + $0x1b0] sm:$0xff] 0.0
    %71 = vst [vmem:[#allocation2 + $0x1b8] sm:$0xff] 0.0
    %72 = vst [vmem:[#allocation2 + $0x1c0] sm:$0xff] 0.0
    %73 = vst [vmem:[#allocation2 + $0x1c8] sm:$0xff] 0.0
    %74 = vst [vmem:[#allocation2 + $0x1d0] sm:$0xff] 0.0
    %75 = vst [vmem:[#allocation2 + $0x1d8] sm:$0xff] 0.0
    %76 = vst [vmem:[#allocation2 + $0x1e0] sm:$0xff] 0.0
    %77 = vst [vmem:[#allocation2 + $0x1e8] sm:$0xff] 0.0
    %78 = vst [vmem:[#allocation2 + $0x1f0] sm:$0xff] 0.0
    %79 = vst [vmem:[#allocation2 + $0x1f8] sm:$0xff] 0.0
  $region13: #{generator_forward.14} parent=0 // pred_fallthru
    _
  %v80 = vld [vmem:[#allocation2] sm:$0xff]
  %v81 = vld [vmem:[#allocation2 + $0x8] sm:$0xff]
  %v82 = vld [vmem:[#allocation2 + $0x10] sm:$0xff]
  %v83 = vld [vmem:[#allocation2 + $0x18] sm:$0xff]
  %v84 = vld [vmem:[#allocation2 + $0x20] sm:$0xff]
  %v85 = vld [vmem:[#allocation2 + $0x28] sm:$0xff]
  %v86 = vld [vmem:[#allocation2 + $0x30] sm:$0xff]
  %v87 = vld [vmem:[#allocation2 + $0x38] sm:$0xff]
  %v88 = vld [vmem:[#allocation2 + $0x40] sm:$0xff]
  %v89 = vld [vmem:[#allocation2 + $0x48] sm:$0xff]
  %v90 = vld [vmem:[#allocation2 + $0x50] sm:$0xff]
  %v91 = vld [vmem:[#allocation2 + $0x58] sm:$0xff]
  %v92 = vld [vmem:[#allocation2 + $0x60] sm:$0xff]
  %v93 = vld [vmem:[#allocation2 + $0x68] sm:$0xff]
  %v94 = vld [vmem:[#allocation2 + $0x70] sm:$0xff]
  %v95 = vld [vmem:[#allocation2 + $0x78] sm:$0xff]
  %v96 = vld [vmem:[#allocation2 + $0x80] sm:$0xff]
  %v97 = vld [vmem:[#allocation2 + $0x88] sm:$0xff]
  %v98 = vld [vmem:[#allocation2 + $0x90] sm:$0xff]
  %v99 = vld [vmem:[#allocation2 + $0x98] sm:$0xff]
  %v100 = vld [vmem:[#allocation2 + $0xa0] sm:$0xff]
  %v101 = vld [vmem:[#allocation2 + $0xa8] sm:$0xff]
  %v102 = vld [vmem:[#allocation2 + $0xb0] sm:$0xff]
  %v103 = vld [vmem:[#allocation2 + $0xb8] sm:$0xff]
  %v104 = vld [vmem:[#allocation2 + $0xc0] sm:$0xff]
  %v105 = vld [vmem:[#allocation2 + $0xc8] sm:$0xff]
  %v106 = vld [vmem:[#allocation2 + $0xd0] sm:$0xff]
  %v107 = vld [vmem:[#allocation2 + $0xd8] sm:$0xff]
  %v108 = vld [vmem:[#allocation2 + $0xe0] sm:$0xff]
  %v109 = vld [vmem:[#allocation2 + $0xe8] sm:$0xff]
  %v110 = vld [vmem:[#allocation2 + $0xf0] sm:$0xff]
  %v111 = vld [vmem:[#allocation2 + $0xf8] sm:$0xff]
  %v112 = vld [vmem:[#allocation2 + $0x100] sm:$0xff]
  %v113 = vld [vmem:[#allocation2 + $0x108] sm:$0xff]
  %v114 = vld [vmem:[#allocation2 + $0x110] sm:$0xff]
  %v115 = vld [vmem:[#allocation2 + $0x118] sm:$0xff]
  %v116 = vld [vmem:[#allocation2 + $0x120] sm:$0xff]
  %v117 = vld [vmem:[#allocation2 + $0x128] sm:$0xff]
  %v118 = vld [vmem:[#allocation2 + $0x130] sm:$0xff]
  %v119 = vld [vmem:[#allocation2 + $0x138] sm:$0xff]
  %v120 = vld [vmem:[#allocation2 + $0x140] sm:$0xff]
  %v121 = vld [vmem:[#allocation2 + $0x148] sm:$0xff]
  %v122 = vld [vmem:[#allocation2 + $0x150] sm:$0xff]
  %v123 = vld [vmem:[#allocation2 + $0x158] sm:$0xff]
  %v124 = vld [vmem:[#allocation2 + $0x160] sm:$0xff]
  %v125 = vld [vmem:[#allocation2 + $0x168] sm:$0xff]
  %v126 = vld [vmem:[#allocation2 + $0x170] sm:$0xff]
  %v127 = vld [vmem:[#allocation2 + $0x178] sm:$0xff]
  %v128 = vld [vmem:[#allocation2 + $0x180] sm:$0xff]
  %v129 = vld [vmem:[#allocation2 + $0x188] sm:$0xff]
  %v130 = vld [vmem:[#allocation2 + $0x190] sm:$0xff]
  %v131 = vld [vmem:[#allocation2 + $0x198] sm:$0xff]
  %v132 = vld [vmem:[#allocation2 + $0x1a0] sm:$0xff]
  %v133 = vld [vmem:[#allocation2 + $0x1a8] sm:$0xff]
  %v134 = vld [vmem:[#allocation2 + $0x1b0] sm:$0xff]
  %v135 = vld [vmem:[#allocation2 + $0x1b8] sm:$0xff]
  %v136 = vld [vmem:[#allocation2 + $0x1c0] sm:$0xff]
  %v137 = vld [vmem:[#allocation2 + $0x1c8] sm:$0xff]
  %v138 = vld [vmem:[#allocation2 + $0x1d0] sm:$0xff]
  %v139 = vld [vmem:[#allocation2 + $0x1d8] sm:$0xff]
  %v140 = vld [vmem:[#allocation2 + $0x1e0] sm:$0xff]
  %v141 = vld [vmem:[#allocation2 + $0x1e8] sm:$0xff]
  %v142 = vld [vmem:[#allocation2 + $0x1f0] sm:$0xff]
  %v143 = vld [vmem:[#allocation2 + $0x1f8] sm:$0xff]
  %v144 = vld [vmem:[%s0] sm:$0xf]
  %v145 = vld [vmem:[%s0 + $0x4] sm:$0xf]
  %v146 = vld [vmem:[%s0 + $0x8] sm:$0xf]
  %v147 = vld [vmem:[%s0 + $0xc] sm:$0xf]
  %v148 = vld [vmem:[%s0 + $0x10] sm:$0xf]
  %v149 = vld [vmem:[%s0 + $0x14] sm:$0xf]
  %v150 = vld [vmem:[%s0 + $0x18] sm:$0xf]
  %v151 = vld [vmem:[%s0 + $0x1c] sm:$0xf]
  %v152 = vld [vmem:[%s0 + $0x20] sm:$0xf]
  %v153 = vld [vmem:[%s0 + $0x24] sm:$0xf]
  %v154 = vld [vmem:[%s0 + $0x28] sm:$0xf]
  %v155 = vld [vmem:[%s0 + $0x2c] sm:$0xf]
  %v156 = vld [vmem:[%s0 + $0x30] sm:$0xf]
  %v157 = vld [vmem:[%s0 + $0x34] sm:$0xf]
  %v158 = vld [vmem:[%s0 + $0x38] sm:$0xf]
  %v159 = vld [vmem:[%s0 + $0x3c] sm:$0xf]
  %v160 = vld [vmem:[%s1] sm:$0xff]
  %v161 = vld [vmem:[%s1 + $0x8] sm:$0xff]
  %v162 = vld [vmem:[%s1 + $0x10] sm:$0xff]
  %v163 = vld [vmem:[%s1 + $0x18] sm:$0xff]
  %v164 = vld [vmem:[%s1 + $0x20] sm:$0xff]
  %v165 = vld [vmem:[%s1 + $0x28] sm:$0xff]
  %v166 = vld [vmem:[%s1 + $0x30] sm:$0xff]
  %v167 = vld [vmem:[%s1 + $0x38] sm:$0xff]
  %v168 = vld [vmem:[%s1 + $0x40] sm:$0xff]
  %v169 = vld [vmem:[%s1 + $0x48] sm:$0xff]
  %v170 = vld [vmem:[%s1 + $0x50] sm:$0xff]
  %v171 = vld [vmem:[%s1 + $0x58] sm:$0xff]
  %v172 = vld [vmem:[%s1 + $0x60] sm:$0xff]
  %v173 = vld [vmem:[%s1 + $0x68] sm:$0xff]
  %v174 = vld [vmem:[%s1 + $0x70] sm:$0xff]
  %v175 = vld [vmem:[%s1 + $0x78] sm:$0xff]
  %v192 = vunpack.c.l.b16 %v144
  %v193 = vunpack.c.l.b16 %v145
  %v194 = vunpack.c.l.b16 %v146
  %v195 = vunpack.c.l.b16 %v147
  %v196 = vunpack.c.l.b16 %v148
  %v197 = vunpack.c.l.b16 %v149
  %v198 = vunpack.c.l.b16 %v150
  %v199 = vunpack.c.l.b16 %v151
  %v200 = vunpack.c.l.b16 %v152
  %v201 = vunpack.c.l.b16 %v153
  %v202 = vunpack.c.l.b16 %v154
  %v203 = vunpack.c.l.b16 %v155
  %v204 = vunpack.c.l.b16 %v156
  %v205 = vunpack.c.l.b16 %v157
  %v206 = vunpack.c.l.b16 %v158
  %v207 = vunpack.c.l.b16 %v159
  %v208 = vpack.c.b16 %v193, %v192
  %v209 = vpack.c.b16 %v195, %v194
  %v210 = vpack.c.b16 %v197, %v196
  %v211 = vpack.c.b16 %v199, %v198
  %v212 = vpack.c.b16 %v201, %v200
  %v213 = vpack.c.b16 %v203, %v202
  %v214 = vpack.c.b16 %v205, %v204
  %v215 = vpack.c.b16 %v207, %v206
  %v232 = vunpack.c.l.b16 %v160
  %v233 = vunpack.c.h.b16 %v160
  %v234 = vunpack.c.l.b16 %v161
  %v235 = vunpack.c.h.b16 %v161
  %v236 = vunpack.c.l.b16 %v162
  %v237 = vunpack.c.h.b16 %v162
  %v238 = vunpack.c.l.b16 %v163
  %v239 = vunpack.c.h.b16 %v163
  %v240 = vunpack.c.l.b16 %v164
  %v241 = vunpack.c.h.b16 %v164
  %v242 = vunpack.c.l.b16 %v165
  %v243 = vunpack.c.h.b16 %v165
  %v244 = vunpack.c.l.b16 %v166
  %v245 = vunpack.c.h.b16 %v166
  %v246 = vunpack.c.l.b16 %v167
  %v247 = vunpack.c.h.b16 %v167
  %v248 = vunpack.c.l.b16 %v168
  %v249 = vunpack.c.h.b16 %v168
  %v250 = vunpack.c.l.b16 %v169
  %v251 = vunpack.c.h.b16 %v169
  %v252 = vunpack.c.l.b16 %v170
  %v253 = vunpack.c.h.b16 %v170
  %v254 = vunpack.c.l.b16 %v171
  %v255 = vunpack.c.h.b16 %v171
  %v256 = vunpack.c.l.b16 %v172
  %v257 = vunpack.c.h.b16 %v172
  %v258 = vunpack.c.l.b16 %v173
  %v259 = vunpack.c.h.b16 %v173
  %v260 = vunpack.c.l.b16 %v174
  %v261 = vunpack.c.h.b16 %v174
  %v262 = vunpack.c.l.b16 %v175
  %v263 = vunpack.c.h.b16 %v175
  %v264 = vpack.c.b16 %v236, %v232
  %v265 = vpack.c.b16 %v237, %v233
  %v266 = vpack.c.b16 %v238, %v234
  %v267 = vpack.c.b16 %v239, %v235
  %v268 = vpack.c.b16 %v244, %v240
  %v269 = vpack.c.b16 %v245, %v241
  %v270 = vpack.c.b16 %v246, %v242
  %v271 = vpack.c.b16 %v247, %v243
  %v272 = vpack.c.b16 %v252, %v248
  %v273 = vpack.c.b16 %v253, %v249
  %v274 = vpack.c.b16 %v254, %v250
  %v275 = vpack.c.b16 %v255, %v251
  %v276 = vpack.c.b16 %v260, %v256
  %v277 = vpack.c.b16 %v261, %v257
  %v278 = vpack.c.b16 %v262, %v258
  %v279 = vpack.c.b16 %v263, %v259
  %vm296 = vcmask 523264
  %v298 = vsel %vm296, %v208, 0
  %v301 = vsel %vm296, %v209, 0
  %v304 = vsel %vm296, %v210, 0
  %v307 = vsel %vm296, %v211, 0
  %v310 = vsel %vm296, %v212, 0
  %v313 = vsel %vm296, %v213, 0
  %v316 = vsel %vm296, %v214, 0
  %v319 = vsel %vm296, %v215, 0
  %321 = vmatprep.subr.bf16.mxu0 %v265
  %322 = vmatpush1.bf16.msra.mxu0 %v264
  %323 = vmatprep.subr.bf16.mxu0 %v269
  %324 = vmatpush1.bf16.msra.mxu0 %v268
  %325 = vmatprep.subr.bf16.mxu0 %v273
  %326 = vmatpush1.bf16.msra.mxu0 %v272
  %327 = vmatprep.subr.bf16.mxu0 %v277
  %328 = vmatpush1.bf16.msra.mxu0 %v276
  %329 = vmatprep.subr.bf16.mxu0 0
  %330 = vmatpush1.bf16.msra.mxu0 0
  %331 = vmatprep.subr.bf16.mxu0 0
  %332 = vmatpush1.bf16.msra.mxu0 0
  %333 = vmatprep.subr.bf16.mxu0 0
  %334 = vmatpush1.bf16.msra.mxu0 0
  %335 = vmatprep.subr.bf16.mxu0 0
  %336 = vmatpush1.bf16.msra.mxu0 0
  %337 = vmatprep.subr.bf16.mxu0 0
  %338 = vmatpush1.bf16.msra.mxu0 0
  %339 = vmatprep.subr.bf16.mxu0 0
  %340 = vmatpush1.bf16.msra.mxu0 0
  %341 = vmatprep.subr.bf16.mxu0 0
  %342 = vmatpush1.bf16.msra.mxu0 0
  %343 = vmatprep.subr.bf16.mxu0 0
  %344 = vmatpush1.bf16.msra.mxu0 0
  %345 = vmatprep.subr.bf16.mxu0 0
  %346 = vmatpush1.bf16.msra.mxu0 0
  %347 = vmatprep.subr.bf16.mxu0 0
  %348 = vmatpush1.bf16.msra.mxu0 0
  %349 = vmatprep.subr.bf16.mxu0 0
  %350 = vmatpush1.bf16.msra.mxu0 0
  %351 = vmatprep.subr.bf16.mxu0 0
  %352 = vmatpush1.bf16.msra.mxu0 0
  %353 = vmatprep.mubr.bf16.mxu0 0
  %354 = vmatmul.mubr.bf16.gmra.mrb[0].mxu0 %v298
  %v355 = vpop.f32.mrb[0].mxu0
  %v356 = vadd.f32 0.0, %v355
  %v357 = vpop.f32.mrb[0].mxu0
  %v358 = vadd.f32 0.0, %v357
  %v359 = vpop.f32.mrb[0].mxu0
  %v360 = vadd.f32 0.0, %v359
  %v361 = vpop.f32.mrb[0].mxu0
  %v362 = vadd.f32 0.0, %v361
  %363 = vmatprep.mubr.bf16.mxu0 0
  %364 = vmatmul.mubr.bf16.gmra.mrb[0].mxu0 %v301
  %v365 = vpop.f32.mrb[0].mxu0
  %v366 = vadd.f32 0.0, %v365
  %v367 = vpop.f32.mrb[0].mxu0
  %v368 = vadd.f32 0.0, %v367
  %v369 = vpop.f32.mrb[0].mxu0
  %v370 = vadd.f32 0.0, %v369
  %v371 = vpop.f32.mrb[0].mxu0
  %v372 = vadd.f32 0.0, %v371
  %373 = vmatprep.mubr.bf16.mxu0 0
  %374 = vmatmul.mubr.bf16.gmra.mrb[0].mxu0 %v304
  %v375 = vpop.f32.mrb[0].mxu0
  %v376 = vadd.f32 0.0, %v375
  %v377 = vpop.f32.mrb[0].mxu0
  %v378 = vadd.f32 0.0, %v377
  %v379 = vpop.f32.mrb[0].mxu0
  %v380 = vadd.f32 0.0, %v379
  %v381 = vpop.f32.mrb[0].mxu0
  %v382 = vadd.f32 0.0, %v381
  %383 = vmatprep.mubr.bf16.mxu0 0
  %384 = vmatmul.mubr.bf16.gmra.mrb[0].mxu0 %v307
  %v385 = vpop.f32.mrb[0].mxu0
  %v386 = vadd.f32 0.0, %v385
  %v387 = vpop.f32.mrb[0].mxu0
  %v388 = vadd.f32 0.0, %v387
  %v389 = vpop.f32.mrb[0].mxu0
  %v390 = vadd.f32 0.0, %v389
  %v391 = vpop.f32.mrb[0].mxu0
  %v392 = vadd.f32 0.0, %v391
  %393 = vmatprep.mubr.bf16.mxu0 0
  %394 = vmatmul.mubr.bf16.gmra.mrb[0].mxu0 %v310
  %v395 = vpop.f32.mrb[0].mxu0
  %v396 = vadd.f32 0.0, %v395
  %v397 = vpop.f32.mrb[0].mxu0
  %v398 = vadd.f32 0.0, %v397
  %v399 = vpop.f32.mrb[0].mxu0
  %v400 = vadd.f32 0.0, %v399
  %v401 = vpop.f32.mrb[0].mxu0
  %v402 = vadd.f32 0.0, %v401
  %403 = vmatprep.mubr.bf16.mxu0 0
  %404 = vmatmul.mubr.bf16.gmra.mrb[0].mxu0 %v313
  %v405 = vpop.f32.mrb[0].mxu0
  %v406 = vadd.f32 0.0, %v405
  %v407 = vpop.f32.mrb[0].mxu0
  %v408 = vadd.f32 0.0, %v407
  %v409 = vpop.f32.mrb[0].mxu0
  %v410 = vadd.f32 0.0, %v409
  %v411 = vpop.f32.mrb[0].mxu0
  %v412 = vadd.f32 0.0, %v411
  %413 = vmatprep.mubr.bf16.mxu0 0
  %414 = vmatmul.mubr.bf16.gmra.mrb[0].mxu0 %v316
  %v415 = vpop.f32.mrb[0].mxu0
  %v416 = vadd.f32 0.0, %v415
  %v417 = vpop.f32.mrb[0].mxu0
  %v418 = vadd.f32 0.0, %v417
  %v419 = vpop.f32.mrb[0].mxu0
  %v420 = vadd.f32 0.0, %v419
  %v421 = vpop.f32.mrb[0].mxu0
  %v422 = vadd.f32 0.0, %v421
  %423 = vmatprep.mubr.bf16.mxu0 0
  %424 = vmatmul.mubr.bf16.gmra.mrb[0].mxu0 %v319
  %v425 = vpop.f32.mrb[0].mxu0
  %v426 = vadd.f32 0.0, %v425
  %v427 = vpop.f32.mrb[0].mxu0
  %v428 = vadd.f32 0.0, %v427
  %v429 = vpop.f32.mrb[0].mxu0
  %v430 = vadd.f32 0.0, %v429
  %v431 = vpop.f32.mrb[0].mxu0
  %v432 = vadd.f32 0.0, %v431
  %433 = vdwg.mxu0
  %434 = vmatprep.subr.bf16.mxu0 %v267
  %435 = vmatpush1.bf16.msra.mxu0 %v266
  %436 = vmatprep.subr.bf16.mxu0 %v271
  %437 = vmatpush1.bf16.msra.mxu0 %v270
  %438 = vmatprep.subr.bf16.mxu0 %v275
  %439 = vmatpush1.bf16.msra.mxu0 %v274
  %440 = vmatprep.subr.bf16.mxu0 %v279
  %441 = vmatpush1.bf16.msra.mxu0 %v278
  %442 = vmatprep.subr.bf16.mxu0 0
  %443 = vmatpush1.bf16.msra.mxu0 0
  %444 = vmatprep.subr.bf16.mxu0 0
  %445 = vmatpush1.bf16.msra.mxu0 0
  %446 = vmatprep.subr.bf16.mxu0 0
  %447 = vmatpush1.bf16.msra.mxu0 0
  %448 = vmatprep.subr.bf16.mxu0 0
  %449 = vmatpush1.bf16.msra.mxu0 0
  %450 = vmatprep.subr.bf16.mxu0 0
  %451 = vmatpush1.bf16.msra.mxu0 0
  %452 = vmatprep.subr.bf16.mxu0 0
  %453 = vmatpush1.bf16.msra.mxu0 0
  %454 = vmatprep.subr.bf16.mxu0 0
  %455 = vmatpush1.bf16.msra.mxu0 0
  %456 = vmatprep.subr.bf16.mxu0 0
  %457 = vmatpush1.bf16.msra.mxu0 0
  %458 = vmatprep.subr.bf16.mxu0 0
  %459 = vmatpush1.bf16.msra.mxu0 0
  %460 = vmatprep.subr.bf16.mxu0 0
  %461 = vmatpush1.bf16.msra.mxu0 0
  %462 = vmatprep.subr.bf16.mxu0 0
  %463 = vmatpush1.bf16.msra.mxu0 0
  %464 = vmatprep.subr.bf16.mxu0 0
  %465 = vmatpush1.bf16.msra.mxu0 0
  %466 = vmatprep.mubr.bf16.mxu0 0
  %467 = vmatmul.mubr.bf16.gmra.mrb[0].mxu0 %v298
  %v468 = vpop.f32.mrb[0].mxu0
  %v469 = vadd.f32 0.0, %v468
  %v470 = vpop.f32.mrb[0].mxu0
  %v471 = vadd.f32 0.0, %v470
  %v472 = vpop.f32.mrb[0].mxu0
  %v473 = vadd.f32 0.0, %v472
  %v474 = vpop.f32.mrb[0].mxu0
  %v475 = vadd.f32 0.0, %v474
  %476 = vmatprep.mubr.bf16.mxu0 0
  %477 = vmatmul.mubr.bf16.gmra.mrb[0].mxu0 %v301
  %v478 = vpop.f32.mrb[0].mxu0
  %v479 = vadd.f32 0.0, %v478
  %v480 = vpop.f32.mrb[0].mxu0
  %v481 = vadd.f32 0.0, %v480
  %v482 = vpop.f32.mrb[0].mxu0
  %v483 = vadd.f32 0.0, %v482
  %v484 = vpop.f32.mrb[0].mxu0
  %v485 = vadd.f32 0.0, %v484
  %486 = vmatprep.mubr.bf16.mxu0 0
  %487 = vmatmul.mubr.bf16.gmra.mrb[0].mxu0 %v304
  %v488 = vpop.f32.mrb[0].mxu0
  %v489 = vadd.f32 0.0, %v488
  %v490 = vpop.f32.mrb[0].mxu0
  %v491 = vadd.f32 0.0, %v490
  %v492 = vpop.f32.mrb[0].mxu0
  %v493 = vadd.f32 0.0, %v492
  %v494 = vpop.f32.mrb[0].mxu0
  %v495 = vadd.f32 0.0, %v494
  %496 = vmatprep.mubr.bf16.mxu0 0
  %497 = vmatmul.mubr.bf16.gmra.mrb[0].mxu0 %v307
  %v498 = vpop.f32.mrb[0].mxu0
  %v499 = vadd.f32 0.0, %v498
  %v500 = vpop.f32.mrb[0].mxu0
  %v501 = vadd.f32 0.0, %v500
  %v502 = vpop.f32.mrb[0].mxu0
  %v503 = vadd.f32 0.0, %v502
  %v504 = vpop.f32.mrb[0].mxu0
  %v505 = vadd.f32 0.0, %v504
  %506 = vmatprep.mubr.bf16.mxu0 0
  %507 = vmatmul.mubr.bf16.gmra.mrb[0].mxu0 %v310
  %v508 = vpop.f32.mrb[0].mxu0
  %v509 = vadd.f32 0.0, %v508
  %v510 = vpop.f32.mrb[0].mxu0
  %v511 = vadd.f32 0.0, %v510
  %v512 = vpop.f32.mrb[0].mxu0
  %v513 = vadd.f32 0.0, %v512
  %v514 = vpop.f32.mrb[0].mxu0
  %v515 = vadd.f32 0.0, %v514
  %516 = vmatprep.mubr.bf16.mxu0 0
  %517 = vmatmul.mubr.bf16.gmra.mrb[0].mxu0 %v313
  %v518 = vpop.f32.mrb[0].mxu0
  %v519 = vadd.f32 0.0, %v518
  %v520 = vpop.f32.mrb[0].mxu0
  %v521 = vadd.f32 0.0, %v520
  %v522 = vpop.f32.mrb[0].mxu0
  %v523 = vadd.f32 0.0, %v522
  %v524 = vpop.f32.mrb[0].mxu0
  %v525 = vadd.f32 0.0, %v524
  %526 = vmatprep.mubr.bf16.mxu0 0
  %527 = vmatmul.mubr.bf16.gmra.mrb[0].mxu0 %v316
  %v528 = vpop.f32.mrb[0].mxu0
  %v529 = vadd.f32 0.0, %v528
  %v530 = vpop.f32.mrb[0].mxu0
  %v531 = vadd.f32 0.0, %v530
  %v532 = vpop.f32.mrb[0].mxu0
  %v533 = vadd.f32 0.0, %v532
  %v534 = vpop.f32.mrb[0].mxu0
  %v535 = vadd.f32 0.0, %v534
  %536 = vmatprep.mubr.bf16.mxu0 0
  %537 = vmatmul.mubr.bf16.gmra.mrb[0].mxu0 %v319
  %v538 = vpop.f32.mrb[0].mxu0
  %v539 = vadd.f32 0.0, %v538
  %v540 = vpop.f32.mrb[0].mxu0
  %v541 = vadd.f32 0.0, %v540
  %v542 = vpop.f32.mrb[0].mxu0
  %v543 = vadd.f32 0.0, %v542
  %v544 = vpop.f32.mrb[0].mxu0
  %v545 = vadd.f32 0.0, %v544
  %546 = vdwg.mxu0
  %v547 = vadd.f32 %v80, %v356
  %v548 = vadd.f32 %v81, %v358
  %v549 = vadd.f32 %v82, %v469
  %v550 = vadd.f32 %v83, %v471
  %v551 = vadd.f32 %v84, %v360
  %v552 = vadd.f32 %v85, %v362
  %v553 = vadd.f32 %v86, %v473
  %v554 = vadd.f32 %v87, %v475
  %v555 = vadd.f32 %v88, %v366
  %v556 = vadd.f32 %v89, %v368
  %v557 = vadd.f32 %v90, %v479
  %v558 = vadd.f32 %v91, %v481
  %v559 = vadd.f32 %v92, %v370
  %v560 = vadd.f32 %v93, %v372
  %v561 = vadd.f32 %v94, %v483
  %v562 = vadd.f32 %v95, %v485
  %v563 = vadd.f32 %v96, %v376
  %v564 = vadd.f32 %v97, %v378
  %v565 = vadd.f32 %v98, %v489
  %v566 = vadd.f32 %v99, %v491
  %v567 = vadd.f32 %v100, %v380
  %v568 = vadd.f32 %v101, %v382
  %v569 = vadd.f32 %v102, %v493
  %v570 = vadd.f32 %v103, %v495
  %v571 = vadd.f32 %v104, %v386
  %v572 = vadd.f32 %v105, %v388
  %v573 = vadd.f32 %v106, %v499
  %v574 = vadd.f32 %v107, %v501
  %v575 = vadd.f32 %v108, %v390
  %v576 = vadd.f32 %v109, %v392
  %v577 = vadd.f32 %v110, %v503
  %v578 = vadd.f32 %v111, %v505
  %v579 = vadd.f32 %v112, %v396
  %v580 = vadd.f32 %v113, %v398
  %v581 = vadd.f32 %v114, %v509
  %v582 = vadd.f32 %v115, %v511
  %v583 = vadd.f32 %v116, %v400
  %v584 = vadd.f32 %v117, %v402
  %v585 = vadd.f32 %v118, %v513
  %v586 = vadd.f32 %v119, %v515
  %v587 = vadd.f32 %v120, %v406
  %v588 = vadd.f32 %v121, %v408
  %v589 = vadd.f32 %v122, %v519
  %v590 = vadd.f32 %v123, %v521
  %v591 = vadd.f32 %v124, %v410
  %v592 = vadd.f32 %v125, %v412
  %v593 = vadd.f32 %v126, %v523
  %v594 = vadd.f32 %v127, %v525
  %v595 = vadd.f32 %v128, %v416
  %v596 = vadd.f32 %v129, %v418
  %v597 = vadd.f32 %v130, %v529
  %v598 = vadd.f32 %v131, %v531
  %v599 = vadd.f32 %v132, %v420
  %v600 = vadd.f32 %v133, %v422
  %v601 = vadd.f32 %v134, %v533
  %v602 = vadd.f32 %v135, %v535
  %v603 = vadd.f32 %v136, %v426
  %v604 = vadd.f32 %v137, %v428
  %v605 = vadd.f32 %v138, %v539
  %v606 = vadd.f32 %v139, %v541
  %v607 = vadd.f32 %v140, %v430
  %v608 = vadd.f32 %v141, %v432
  %v609 = vadd.f32 %v142, %v543
  %v610 = vadd.f32 %v143, %v545
  %611 = vst [vmem:[#allocation2] sm:$0xff] %v547
  %612 = vst [vmem:[#allocation2 + $0x8] sm:$0xff] %v548
  %613 = vst [vmem:[#allocation2 + $0x10] sm:$0xff] %v549
  %614 = vst [vmem:[#allocation2 + $0x18] sm:$0xff] %v550
  %615 = vst [vmem:[#allocation2 + $0x20] sm:$0xff] %v551
  %616 = vst [vmem:[#allocation2 + $0x28] sm:$0xff] %v552
  %617 = vst [vmem:[#allocation2 + $0x30] sm:$0xff] %v553
  %618 = vst [vmem:[#allocation2 + $0x38] sm:$0xff] %v554
  %619 = vst [vmem:[#allocation2 + $0x40] sm:$0xff] %v555
  %620 = vst [vmem:[#allocation2 + $0x48] sm:$0xff] %v556
  %621 = vst [vmem:[#allocation2 + $0x50] sm:$0xff] %v557
  %622 = vst [vmem:[#allocation2 + $0x58] sm:$0xff] %v558
  %623 = vst [vmem:[#allocation2 + $0x60] sm:$0xff] %v559
  %624 = vst [vmem:[#allocation2 + $0x68] sm:$0xff] %v560
  %625 = vst [vmem:[#allocation2 + $0x70] sm:$0xff] %v561
  %626 = vst [vmem:[#allocation2 + $0x78] sm:$0xff] %v562
  %627 = vst [vmem:[#allocation2 + $0x80] sm:$0xff] %v563
  %628 = vst [vmem:[#allocation2 + $0x88] sm:$0xff] %v564
  %629 = vst [vmem:[#allocation2 + $0x90] sm:$0xff] %v565
  %630 = vst [vmem:[#allocation2 + $0x98] sm:$0xff] %v566
  %631 = vst [vmem:[#allocation2 + $0xa0] sm:$0xff] %v567
  %632 = vst [vmem:[#allocation2 + $0xa8] sm:$0xff] %v568
  %633 = vst [vmem:[#allocation2 + $0xb0] sm:$0xff] %v569
  %634 = vst [vmem:[#allocation2 + $0xb8] sm:$0xff] %v570
  %635 = vst [vmem:[#allocation2 + $0xc0] sm:$0xff] %v571
  %636 = vst [vmem:[#allocation2 + $0xc8] sm:$0xff] %v572
  %637 = vst [vmem:[#allocation2 + $0xd0] sm:$0xff] %v573
  %638 = vst [vmem:[#allocation2 + $0xd8] sm:$0xff] %v574
  %639 = vst [vmem:[#allocation2 + $0xe0] sm:$0xff] %v575
  %640 = vst [vmem:[#allocation2 + $0xe8] sm:$0xff] %v576
  %641 = vst [vmem:[#allocation2 + $0xf0] sm:$0xff] %v577
  %642 = vst [vmem:[#allocation2 + $0xf8] sm:$0xff] %v578
  %643 = vst [vmem:[#allocation2 + $0x100] sm:$0xff] %v579
  %644 = vst [vmem:[#allocation2 + $0x108] sm:$0xff] %v580
  %645 = vst [vmem:[#allocation2 + $0x110] sm:$0xff] %v581
  %646 = vst [vmem:[#allocation2 + $0x118] sm:$0xff] %v582
  %647 = vst [vmem:[#allocation2 + $0x120] sm:$0xff] %v583
  %648 = vst [vmem:[#allocation2 + $0x128] sm:$0xff] %v584
  %649 = vst [vmem:[#allocation2 + $0x130] sm:$0xff] %v585
  %650 = vst [vmem:[#allocation2 + $0x138] sm:$0xff] %v586
  %651 = vst [vmem:[#allocation2 + $0x140] sm:$0xff] %v587
  %652 = vst [vmem:[#allocation2 + $0x148] sm:$0xff] %v588
  %653 = vst [vmem:[#allocation2 + $0x150] sm:$0xff] %v589
  %654 = vst [vmem:[#allocation2 + $0x158] sm:$0xff] %v590
  %655 = vst [vmem:[#allocation2 + $0x160] sm:$0xff] %v591
  %656 = vst [vmem:[#allocation2 + $0x168] sm:$0xff] %v592
  %657 = vst [vmem:[#allocation2 + $0x170] sm:$0xff] %v593
  %658 = vst [vmem:[#allocation2 + $0x178] sm:$0xff] %v594
  %659 = vst [vmem:[#allocation2 + $0x180] sm:$0xff] %v595
  %660 = vst [vmem:[#allocation2 + $0x188] sm:$0xff] %v596
  %661 = vst [vmem:[#allocation2 + $0x190] sm:$0xff] %v597
  %662 = vst [vmem:[#allocation2 + $0x198] sm:$0xff] %v598
  %663 = vst [vmem:[#allocation2 + $0x1a0] sm:$0xff] %v599
  %664 = vst [vmem:[#allocation2 + $0x1a8] sm:$0xff] %v600
  %665 = vst [vmem:[#allocation2 + $0x1b0] sm:$0xff] %v601
  %666 = vst [vmem:[#allocation2 + $0x1b8] sm:$0xff] %v602
  %667 = vst [vmem:[#allocation2 + $0x1c0] sm:$0xff] %v603
  %668 = vst [vmem:[#allocation2 + $0x1c8] sm:$0xff] %v604
  %669 = vst [vmem:[#allocation2 + $0x1d0] sm:$0xff] %v605
  %670 = vst [vmem:[#allocation2 + $0x1d8] sm:$0xff] %v606
  %671 = vst [vmem:[#allocation2 + $0x1e0] sm:$0xff] %v607
  %672 = vst [vmem:[#allocation2 + $0x1e8] sm:$0xff] %v608
  %673 = vst [vmem:[#allocation2 + $0x1f0] sm:$0xff] %v609
  %674 = vst [vmem:[#allocation2 + $0x1f8] sm:$0xff] %v610
  // Predicated region
  $region14: #{generator_forward.14} parent=0 // pred_check
    %p675 = pneg %p12
  $region15: #{generator_forward.14} parent=0 // pred_check_branch
    %677 = sbr.rel (%p675) target = $region17
  $region16: #{generator_forward.14} parent=0 // pred_region
    %v678 = vld [vmem:[#allocation2] sm:$0xff]
    %v679 = vld [vmem:[#allocation2 + $0x8] sm:$0xff]
    %v680 = vld [vmem:[#allocation2 + $0x10] sm:$0xff]
    %v681 = vld [vmem:[#allocation2 + $0x18] sm:$0xff]
    %v682 = vld [vmem:[#allocation2 + $0x20] sm:$0xff]
    %v683 = vld [vmem:[#allocation2 + $0x28] sm:$0xff]
    %v684 = vld [vmem:[#allocation2 + $0x30] sm:$0xff]
    %v685 = vld [vmem:[#allocation2 + $0x38] sm:$0xff]
    %v686 = vld [vmem:[#allocation2 + $0x40] sm:$0xff]
    %v687 = vld [vmem:[#allocation2 + $0x48] sm:$0xff]
    %v688 = vld [vmem:[#allocation2 + $0x50] sm:$0xff]
    %v689 = vld [vmem:[#allocation2 + $0x58] sm:$0xff]
    %v690 = vld [vmem:[#allocation2 + $0x60] sm:$0xff]
    %v691 = vld [vmem:[#allocation2 + $0x68] sm:$0xff]
    %v692 = vld [vmem:[#allocation2 + $0x70] sm:$0xff]
    %v693 = vld [vmem:[#allocation2 + $0x78] sm:$0xff]
    %v694 = vld [vmem:[#allocation2 + $0x80] sm:$0xff]
    %v695 = vld [vmem:[#allocation2 + $0x88] sm:$0xff]
    %v696 = vld [vmem:[#allocation2 + $0x90] sm:$0xff]
    %v697 = vld [vmem:[#allocation2 + $0x98] sm:$0xff]
    %v698 = vld [vmem:[#allocation2 + $0xa0] sm:$0xff]
    %v699 = vld [vmem:[#allocation2 + $0xa8] sm:$0xff]
    %v700 = vld [vmem:[#allocation2 + $0xb0] sm:$0xff]
    %v701 = vld [vmem:[#allocation2 + $0xb8] sm:$0xff]
    %v702 = vld [vmem:[#allocation2 + $0xc0] sm:$0xff]
    %v703 = vld [vmem:[#allocation2 + $0xc8] sm:$0xff]
    %v704 = vld [vmem:[#allocation2 + $0xd0] sm:$0xff]
    %v705 = vld [vmem:[#allocation2 + $0xd8] sm:$0xff]
    %v706 = vld [vmem:[#allocation2 + $0xe0] sm:$0xff]
    %v707 = vld [vmem:[#allocation2 + $0xe8] sm:$0xff]
    %v708 = vld [vmem:[#allocation2 + $0xf0] sm:$0xff]
    %v709 = vld [vmem:[#allocation2 + $0xf8] sm:$0xff]
    %v710 = vld [vmem:[#allocation2 + $0x100] sm:$0xff]
    %v711 = vld [vmem:[#allocation2 + $0x108] sm:$0xff]
    %v712 = vld [vmem:[#allocation2 + $0x110] sm:$0xff]
    %v713 = vld [vmem:[#allocation2 + $0x118] sm:$0xff]
    %v714 = vld [vmem:[#allocation2 + $0x120] sm:$0xff]
    %v715 = vld [vmem:[#allocation2 + $0x128] sm:$0xff]
    %v716 = vld [vmem:[#allocation2 + $0x130] sm:$0xff]
    %v717 = vld [vmem:[#allocation2 + $0x138] sm:$0xff]
    %v718 = vld [vmem:[#allocation2 + $0x140] sm:$0xff]
    %v719 = vld [vmem:[#allocation2 + $0x148] sm:$0xff]
    %v720 = vld [vmem:[#allocation2 + $0x150] sm:$0xff]
    %v721 = vld [vmem:[#allocation2 + $0x158] sm:$0xff]
    %v722 = vld [vmem:[#allocation2 + $0x160] sm:$0xff]
    %v723 = vld [vmem:[#allocation2 + $0x168] sm:$0xff]
    %v724 = vld [vmem:[#allocation2 + $0x170] sm:$0xff]
    %v725 = vld [vmem:[#allocation2 + $0x178] sm:$0xff]
    %v726 = vld [vmem:[#allocation2 + $0x180] sm:$0xff]
    %v727 = vld [vmem:[#allocation2 + $0x188] sm:$0xff]
    %v728 = vld [vmem:[#allocation2 + $0x190] sm:$0xff]
    %v729 = vld [vmem:[#allocation2 + $0x198] sm:$0xff]
    %v730 = vld [vmem:[#allocation2 + $0x1a0] sm:$0xff]
    %v731 = vld [vmem:[#allocation2 + $0x1a8] sm:$0xff]
    %v732 = vld [vmem:[#allocation2 + $0x1b0] sm:$0xff]
    %v733 = vld [vmem:[#allocation2 + $0x1b8] sm:$0xff]
    %v734 = vld [vmem:[#allocation2 + $0x1c0] sm:$0xff]
    %v735 = vld [vmem:[#allocation2 + $0x1c8] sm:$0xff]
    %v736 = vld [vmem:[#allocation2 + $0x1d0] sm:$0xff]
    %v737 = vld [vmem:[#allocation2 + $0x1d8] sm:$0xff]
    %v738 = vld [vmem:[#allocation2 + $0x1e0] sm:$0xff]
    %v739 = vld [vmem:[#allocation2 + $0x1e8] sm:$0xff]
    %v740 = vld [vmem:[#allocation2 + $0x1f0] sm:$0xff]
    %v741 = vld [vmem:[#allocation2 + $0x1f8] sm:$0xff]
    %742 = vst [vmem:[%s2] sm:$0xff] %v678
    %743 = vst [vmem:[%s2 + $0x8] sm:$0xff] %v679
    %744 = vst [vmem:[%s2 + $0x10] sm:$0xff] %v680
    %745 = vst [vmem:[%s2 + $0x18] sm:$0xff] %v681
    %746 = vst [vmem:[%s2 + $0x20] sm:$0xff] %v682
    %747 = vst [vmem:[%s2 + $0x28] sm:$0xff] %v683
    %748 = vst [vmem:[%s2 + $0x30] sm:$0xff] %v684
    %749 = vst [vmem:[%s2 + $0x38] sm:$0xff] %v685
    %750 = vst [vmem:[%s2 + $0x40] sm:$0xff] %v686
    %751 = vst [vmem:[%s2 + $0x48] sm:$0xff] %v687
    %752 = vst [vmem:[%s2 + $0x50] sm:$0xff] %v688
    %753 = vst [vmem:[%s2 + $0x58] sm:$0xff] %v689
    %754 = vst [vmem:[%s2 + $0x60] sm:$0xff] %v690
    %755 = vst [vmem:[%s2 + $0x68] sm:$0xff] %v691
    %756 = vst [vmem:[%s2 + $0x70] sm:$0xff] %v692
    %757 = vst [vmem:[%s2 + $0x78] sm:$0xff] %v693
    %758 = vst [vmem:[%s2 + $0x80] sm:$0xff] %v694
    %759 = vst [vmem:[%s2 + $0x88] sm:$0xff] %v695
    %760 = vst [vmem:[%s2 + $0x90] sm:$0xff] %v696
    %761 = vst [vmem:[%s2 + $0x98] sm:$0xff] %v697
    %762 = vst [vmem:[%s2 + $0xa0] sm:$0xff] %v698
    %763 = vst [vmem:[%s2 + $0xa8] sm:$0xff] %v699
    %764 = vst [vmem:[%s2 + $0xb0] sm:$0xff] %v700
    %765 = vst [vmem:[%s2 + $0xb8] sm:$0xff] %v701
    %766 = vst [vmem:[%s2 + $0xc0] sm:$0xff] %v702
    %767 = vst [vmem:[%s2 + $0xc8] sm:$0xff] %v703
    %768 = vst [vmem:[%s2 + $0xd0] sm:$0xff] %v704
    %769 = vst [vmem:[%s2 + $0xd8] sm:$0xff] %v705
    %770 = vst [vmem:[%s2 + $0xe0] sm:$0xff] %v706
    %771 = vst [vmem:[%s2 + $0xe8] sm:$0xff] %v707
    %772 = vst [vmem:[%s2 + $0xf0] sm:$0xff] %v708
    %773 = vst [vmem:[%s2 + $0xf8] sm:$0xff] %v709
    %774 = vst [vmem:[%s2 + $0x100] sm:$0xff] %v710
    %775 = vst [vmem:[%s2 + $0x108] sm:$0xff] %v711
    %776 = vst [vmem:[%s2 + $0x110] sm:$0xff] %v712
    %777 = vst [vmem:[%s2 + $0x118] sm:$0xff] %v713
    %778 = vst [vmem:[%s2 + $0x120] sm:$0xff] %v714
    %779 = vst [vmem:[%s2 + $0x128] sm:$0xff] %v715
    %780 = vst [vmem:[%s2 + $0x130] sm:$0xff] %v716
    %781 = vst [vmem:[%s2 + $0x138] sm:$0xff] %v717
    %782 = vst [vmem:[%s2 + $0x140] sm:$0xff] %v718
    %783 = vst [vmem:[%s2 + $0x148] sm:$0xff] %v719
    %784 = vst [vmem:[%s2 + $0x150] sm:$0xff] %v720
    %785 = vst [vmem:[%s2 + $0x158] sm:$0xff] %v721
    %786 = vst [vmem:[%s2 + $0x160] sm:$0xff] %v722
    %787 = vst [vmem:[%s2 + $0x168] sm:$0xff] %v723
    %788 = vst [vmem:[%s2 + $0x170] sm:$0xff] %v724
    %789 = vst [vmem:[%s2 + $0x178] sm:$0xff] %v725
    %790 = vst [vmem:[%s2 + $0x180] sm:$0xff] %v726
    %791 = vst [vmem:[%s2 + $0x188] sm:$0xff] %v727
    %792 = vst [vmem:[%s2 + $0x190] sm:$0xff] %v728
    %793 = vst [vmem:[%s2 + $0x198] sm:$0xff] %v729
    %794 = vst [vmem:[%s2 + $0x1a0] sm:$0xff] %v730
    %795 = vst [vmem:[%s2 + $0x1a8] sm:$0xff] %v731
    %796 = vst [vmem:[%s2 + $0x1b0] sm:$0xff] %v732
    %797 = vst [vmem:[%s2 + $0x1b8] sm:$0xff] %v733
    %798 = vst [vmem:[%s2 + $0x1c0] sm:$0xff] %v734
    %799 = vst [vmem:[%s2 + $0x1c8] sm:$0xff] %v735
    %800 = vst [vmem:[%s2 + $0x1d0] sm:$0xff] %v736
    %801 = vst [vmem:[%s2 + $0x1d8] sm:$0xff] %v737
    %802 = vst [vmem:[%s2 + $0x1e0] sm:$0xff] %v738
    %803 = vst [vmem:[%s2 + $0x1e8] sm:$0xff] %v739
    %804 = vst [vmem:[%s2 + $0x1f0] sm:$0xff] %v740
    %805 = vst [vmem:[%s2 + $0x1f8] sm:$0xff] %v741
  $region17: #{generator_forward.14} parent=0 // pred_fallthru
    _
  // Predicated region
  $region18: #{generator_forward.14} parent=0 // pred_check
    _
  $region19: #{generator_forward.14} parent=0 // pred_check_branch
    %807 = sbr.rel (0) target = $region21
  $region20: #{generator_forward.14} parent=0 // pred_region
    _
  $region21: #{generator_forward.14} parent=0 // pred_fallthru
    _
  // Predicated region
  $region22: #{generator_forward.14} parent=0 // pred_check
    _
  $region23: #{generator_forward.14} parent=0 // pred_check_branch
    %809 = sbr.rel (0) target = $region25
  $region24: #{generator_forward.14} parent=0 // pred_region
    _
  $region25: #{generator_forward.14} parent=0 // pred_fallthru
    _

// kernel: tile.47
$region0: #{tile.47}
  #allocation0 [shape = 's32[1]{0}', space=sflag, size = 0x4, scoped, tag = 'scoped memory for tile.47']
  %s0 = inlined_call_operand.vmem [shape: f32[32], index: 0, kind: input, shape index: {}]
  %s1 = inlined_call_operand.vmem [shape: f32[4,32], index: 1, kind: output, shape index: {}]
  // Predicated region
  $region2: #{tile.47} parent=0 // pred_check
    _
  $region3: #{tile.47} parent=0 // pred_check_branch
    %3 = sbr.rel (0) target = $region5
  $region4: #{tile.47} parent=0 // pred_region
    _
  $region5: #{tile.47} parent=0 // pred_fallthru
    _
  %v4 = vld [vmem:[%s0] ss:$0 sm:$0xff]
  %5 = vst [vmem:[%s1] sm:$0xf] %v4

// kernel: tile.48
$region0: #{tile.48}
  %s0 = inlined_call_operand.vmem [shape: f32[4,32], index: 0, kind: input, shape index: {}]
  %s1 = inlined_call_operand.vmem [shape: f32[1,128], index: 1, kind: output, shape index: {}]
  $region1: #{tile.48} parent=0
    #allocation0 [shape = 'u8[4096]{0}', space=vmem, size = 0x1000, scoped, tag = 'scoped mem for output reshape']
    #allocation1 [shape = 'u8[4096]{0}', space=vmem, size = 0x1000, scoped, tag = 'scoped mem for input reshape']
    %s3 = sshllo.u32 0, 4
    %v4 = vld [vmem:[%s0] sm:%s3]
    %5 = vst [vmem:[#allocation1] sm:%s3] %v4
    %v6 = vld [vmem:[#allocation1] sm:$0x1]
    %vm7 = vcmask 261120
    %8 = vst.msk [vmem:[#allocation0] sm:$0x1] %vm7, %v6
    %s9 = scalar_lea.vmem [#allocation1], 3
    %v10 = vld [vmem:[%s9] sm:$0x1]
    %11 = vrot.lane.b32.xlu0 %v10, 96
    %v12 = vpop.permute.xlu0 %11
    %vm13 = vcmask 1048320
    %14 = vst.msk [vmem:[#allocation0] sm:$0x1] %vm13, %v12
    %s15 = scalar_lea.vmem [#allocation1], 2
    %v16 = vld [vmem:[%s15] sm:$0x1]
    %17 = vrot.lane.b32.xlu0 %v16, 64
    %v18 = vpop.permute.xlu0 %17
    %vm19 = vcmask 785920
    %20 = vst.msk [vmem:[#allocation0] sm:$0x1] %vm19, %v18
    %s21 = scalar_lea.vmem [#allocation1], 1
    %v22 = vld [vmem:[%s21] sm:$0x1]
    %23 = vrot.lane.b32.xlu0 %v22, 32
    %v24 = vpop.permute.xlu0 %23
    %vm25 = vcmask 523520
    %26 = vst.msk [vmem:[#allocation0] sm:$0x1] %vm25, %v24
    %s28 = sshllo.u32 0, 1
    %v30 = vld [vmem:[#allocation0] sm:%s28]
    %s31 = sshllo.u32 0, 1
    %32 = vst [vmem:[%s1] sm:%s31] %v30

// kernel: generator_forward.15
$region0: #{generator_forward.15}
  #allocation0 [shape = 'u32[]', space=smem, size = 0x4, offset = 0x4, fixed_abs, tag = 'smem constant byte address 0x4 - core index']
  #allocation1 [shape = 'u32[144,128]{1,0:T(1,128)}', space=vmem, size = 0x12000, scoped, tag = 'internal scratch']
  %s0 = inlined_call_operand.vmem [shape: f32[128,128], index: 0, kind: input, shape index: {}]
  %s1 = inlined_call_operand.vmem [shape: f32[1,128], index: 1, kind: input, shape index: {}]
  %s2 = inlined_call_operand.vmem [shape: f32[1,128], index: 2, kind: input, shape index: {}]
  %s3 = inlined_call_operand.vmem [shape: bf16[128,128], index: 3, kind: output, shape index: {}]
  %s4 = sld [smem:[#allocation0]]
  $region22: #{generator_forward.15} parent=0
    _
  %s6 = ssub.s32 1, %s4
  %s7 = scalar_select 0, %s6, %s4
  // Predicated region
  $region2: #{generator_forward.15} parent=0 // pred_check
    _
  $region3: #{generator_forward.15} parent=0 // pred_check_branch
    %9 = sbr.rel (0) target = $region5
  $region4: #{generator_forward.15} parent=0 // pred_region
    _
  $region5: #{generator_forward.15} parent=0 // pred_fallthru
    _
  // Predicated region
  $region6: #{generator_forward.15} parent=0 // pred_check
    _
  $region7: #{generator_forward.15} parent=0 // pred_check_branch
    %11 = sbr.rel (0) target = $region9
  $region8: #{generator_forward.15} parent=0 // pred_region
    _
  $region9: #{generator_forward.15} parent=0 // pred_fallthru
    _
  // Predicated region
  $region10: #{generator_forward.15} parent=0 // pred_check
    _
  $region11: #{generator_forward.15} parent=0 // pred_check_branch
    %13 = sbr.rel (0) target = $region13
  $region12: #{generator_forward.15} parent=0 // pred_region
    _
  $region13: #{generator_forward.15} parent=0 // pred_fallthru
    _
  %v14 = vld [vmem:[%s0] sm:$0xff]
  %v15 = vld [vmem:[%s0 + $0x8] sm:$0xff]
  %v16 = vld [vmem:[%s0 + $0x10] sm:$0xff]
  %v17 = vld [vmem:[%s0 + $0x18] sm:$0xff]
  %v18 = vld [vmem:[%s0 + $0x20] sm:$0xff]
  %v19 = vld [vmem:[%s0 + $0x28] sm:$0xff]
  %v20 = vld [vmem:[%s0 + $0x30] sm:$0xff]
  %v21 = vld [vmem:[%s0 + $0x38] sm:$0xff]
  %v22 = vld [vmem:[%s0 + $0x40] sm:$0xff]
  %v23 = vld [vmem:[%s0 + $0x48] sm:$0xff]
  %v24 = vld [vmem:[%s0 + $0x50] sm:$0xff]
  %v25 = vld [vmem:[%s0 + $0x58] sm:$0xff]
  %v26 = vld [vmem:[%s0 + $0x60] sm:$0xff]
  %v27 = vld [vmem:[%s0 + $0x68] sm:$0xff]
  %v28 = vld [vmem:[%s0 + $0x70] sm:$0xff]
  %v29 = vld [vmem:[%s0 + $0x78] sm:$0xff]
  %v30 = vld [vmem:[%s1] sm:$0x1]
  %v32 = vlaneseq
  %v33 = vshrl.u32 %v32, 7
  %v34 = vsub.s32 0, %v33
  %v35 = vrot.slane %v30, %v34
  %v37 = vmul.f32 %v14, %v35
  %v38 = vmul.f32 %v15, %v35
  %v39 = vmul.f32 %v16, %v35
  %v40 = vmul.f32 %v17, %v35
  %v41 = vmul.f32 %v18, %v35
  %v42 = vmul.f32 %v19, %v35
  %v43 = vmul.f32 %v20, %v35
  %v44 = vmul.f32 %v21, %v35
  %v45 = vmul.f32 %v22, %v35
  %v46 = vmul.f32 %v23, %v35
  %v47 = vmul.f32 %v24, %v35
  %v48 = vmul.f32 %v25, %v35
  %v49 = vmul.f32 %v26, %v35
  %v50 = vmul.f32 %v27, %v35
  %v51 = vmul.f32 %v28, %v35
  %v52 = vmul.f32 %v29, %v35
  %v53 = vld [vmem:[%s2] sm:$0x1]
  %v55 = vlaneseq
  %v56 = vshrl.u32 %v55, 7
  %v57 = vsub.s32 0, %v56
  %v58 = vrot.slane %v53, %v57
  %v60 = vadd.f32 %v37, %v58
  %v61 = vadd.f32 %v38, %v58
  %v62 = vadd.f32 %v39, %v58
  %v63 = vadd.f32 %v40, %v58
  %v64 = vadd.f32 %v41, %v58
  %v65 = vadd.f32 %v42, %v58
  %v66 = vadd.f32 %v43, %v58
  %v67 = vadd.f32 %v44, %v58
  %v68 = vadd.f32 %v45, %v58
  %v69 = vadd.f32 %v46, %v58
  %v70 = vadd.f32 %v47, %v58
  %v71 = vadd.f32 %v48, %v58
  %v72 = vadd.f32 %v49, %v58
  %v73 = vadd.f32 %v50, %v58
  %v74 = vadd.f32 %v51, %v58
  %v75 = vadd.f32 %v52, %v58
  %v76 = vmax.f32 %v60, 0.0
  %v77 = vmax.f32 %v61, 0.0
  %v78 = vmax.f32 %v62, 0.0
  %v79 = vmax.f32 %v63, 0.0
  %v80 = vmax.f32 %v64, 0.0
  %v81 = vmax.f32 %v65, 0.0
  %v82 = vmax.f32 %v66, 0.0
  %v83 = vmax.f32 %v67, 0.0
  %v84 = vmax.f32 %v68, 0.0
  %v85 = vmax.f32 %v69, 0.0
  %v86 = vmax.f32 %v70, 0.0
  %v87 = vmax.f32 %v71, 0.0
  %v88 = vmax.f32 %v72, 0.0
  %v89 = vmax.f32 %v73, 0.0
  %v90 = vmax.f32 %v74, 0.0
  %v91 = vmax.f32 %v75, 0.0
  %v92 = vpack.c.bf16 %v77, %v76
  %v93 = vpack.c.bf16 %v79, %v78
  %v94 = vpack.c.bf16 %v81, %v80
  %v95 = vpack.c.bf16 %v83, %v82
  %v96 = vpack.c.bf16 %v85, %v84
  %v97 = vpack.c.bf16 %v87, %v86
  %v98 = vpack.c.bf16 %v89, %v88
  %v99 = vpack.c.bf16 %v91, %v90
  %v108 = vunpack.c.l.b16 %v92
  %v109 = vunpack.c.h.b16 %v92
  %v110 = vunpack.c.l.b16 %v93
  %v111 = vunpack.c.h.b16 %v93
  %v112 = vunpack.c.l.b16 %v94
  %v113 = vunpack.c.h.b16 %v94
  %v114 = vunpack.c.l.b16 %v95
  %v115 = vunpack.c.h.b16 %v95
  %v116 = vunpack.c.l.b16 %v96
  %v117 = vunpack.c.h.b16 %v96
  %v118 = vunpack.c.l.b16 %v97
  %v119 = vunpack.c.h.b16 %v97
  %v120 = vunpack.c.l.b16 %v98
  %v121 = vunpack.c.h.b16 %v98
  %v122 = vunpack.c.l.b16 %v99
  %v123 = vunpack.c.h.b16 %v99
  %v124 = vpack.c.b16 %v108, %v108
  %v125 = vpack.c.b16 %v109, %v109
  %v126 = vpack.c.b16 %v110, %v110
  %v127 = vpack.c.b16 %v111, %v111
  %v128 = vpack.c.b16 %v112, %v112
  %v129 = vpack.c.b16 %v113, %v113
  %v130 = vpack.c.b16 %v114, %v114
  %v131 = vpack.c.b16 %v115, %v115
  %v132 = vpack.c.b16 %v116, %v116
  %v133 = vpack.c.b16 %v117, %v117
  %v134 = vpack.c.b16 %v118, %v118
  %v135 = vpack.c.b16 %v119, %v119
  %v136 = vpack.c.b16 %v120, %v120
  %v137 = vpack.c.b16 %v121, %v121
  %v138 = vpack.c.b16 %v122, %v122
  %v139 = vpack.c.b16 %v123, %v123
  %156 = vst [vmem:[%s3] sm:$0xf] %v124
  %157 = vst [vmem:[%s3 + $0x4] sm:$0xf] %v125
  %158 = vst [vmem:[%s3 + $0x8] sm:$0xf] %v126
  %159 = vst [vmem:[%s3 + $0xc] sm:$0xf] %v127
  %160 = vst [vmem:[%s3 + $0x10] sm:$0xf] %v128
  %161 = vst [vmem:[%s3 + $0x14] sm:$0xf] %v129
  %162 = vst [vmem:[%s3 + $0x18] sm:$0xf] %v130
  %163 = vst [vmem:[%s3 + $0x1c] sm:$0xf] %v131
  %164 = vst [vmem:[%s3 + $0x20] sm:$0xf] %v132
  %165 = vst [vmem:[%s3 + $0x24] sm:$0xf] %v133
  %166 = vst [vmem:[%s3 + $0x28] sm:$0xf] %v134
  %167 = vst [vmem:[%s3 + $0x2c] sm:$0xf] %v135
  %168 = vst [vmem:[%s3 + $0x30] sm:$0xf] %v136
  %169 = vst [vmem:[%s3 + $0x34] sm:$0xf] %v137
  %170 = vst [vmem:[%s3 + $0x38] sm:$0xf] %v138
  %171 = vst [vmem:[%s3 + $0x3c] sm:$0xf] %v139
  // Predicated region
  $region14: #{generator_forward.15} parent=0 // pred_check
    _
  $region15: #{generator_forward.15} parent=0 // pred_check_branch
    %173 = sbr.rel (0) target = $region17
  $region16: #{generator_forward.15} parent=0 // pred_region
    _
  $region17: #{generator_forward.15} parent=0 // pred_fallthru
    _
  // Predicated region
  $region18: #{generator_forward.15} parent=0 // pred_check
    _
  $region19: #{generator_forward.15} parent=0 // pred_check_branch
    %175 = sbr.rel (0) target = $region21
  $region20: #{generator_forward.15} parent=0 // pred_region
    _
  $region21: #{generator_forward.15} parent=0 // pred_fallthru
    _

// kernel: generator_forward.16
$region0: #{generator_forward.16}
  #allocation0 [shape = 'u32[]', space=smem, size = 0x4, offset = 0x4, fixed_abs, tag = 'smem constant byte address 0x4 - core index']
  #allocation1 [shape = 'u32[144,128]{1,0:T(1,128)}', space=vmem, size = 0x12000, scoped, tag = 'internal scratch']
  #allocation2 [shape = 'f32[512,256]{1,0:T(8,128)}', space=vmem, size = 0x80000, scoped, tag = 'scratch operand']
  %s0 = inlined_call_operand.vmem [shape: bf16[512,32], index: 0, kind: input, shape index: {}]
  %s1 = inlined_call_operand.vmem [shape: bf16[32,256], index: 1, kind: input, shape index: {}]
  %s2 = inlined_call_operand.vmem [shape: f32[512,256], index: 2, kind: output, shape index: {}]
  %s3 = sld [smem:[#allocation0]]
  $region26: #{generator_forward.16} parent=0
    _
  %s5 = ssub.s32 1, %s3
  %s6 = scalar_select 0, %s5, %s3
  // Predicated region
  $region2: #{generator_forward.16} parent=0 // pred_check
    _
  $region3: #{generator_forward.16} parent=0 // pred_check_branch
    %8 = sbr.rel (0) target = $region5
  $region4: #{generator_forward.16} parent=0 // pred_region
    _
  $region5: #{generator_forward.16} parent=0 // pred_fallthru
    _
  // Predicated region
  $region6: #{generator_forward.16} parent=0 // pred_check
    _
  $region7: #{generator_forward.16} parent=0 // pred_check_branch
    %10 = sbr.rel (0) target = $region9
  $region8: #{generator_forward.16} parent=0 // pred_region
    _
  $region9: #{generator_forward.16} parent=0 // pred_fallthru
    _
  %p12 = scmp.eq.s32.totalorder 0, 0
  // Predicated region
  $region10: #{generator_forward.16} parent=0 // pred_check
    %p13 = pneg %p12
  $region11: #{generator_forward.16} parent=0 // pred_check_branch
    %15 = sbr.rel (%p13) target = $region13
  $region12: #{generator_forward.16} parent=0 // pred_region
    %16 = vst [vmem:[#allocation2] sm:$0xff] 0.0
    %17 = vst [vmem:[#allocation2 + $0x8] sm:$0xff] 0.0
    %18 = vst [vmem:[#allocation2 + $0x10] sm:$0xff] 0.0
    %19 = vst [vmem:[#allocation2 + $0x18] sm:$0xff] 0.0
    %20 = vst [vmem:[#allocation2 + $0x20] sm:$0xff] 0.0
    %21 = vst [vmem:[#allocation2 + $0x28] sm:$0xff] 0.0
    %22 = vst [vmem:[#allocation2 + $0x30] sm:$0xff] 0.0
    %23 = vst [vmem:[#allocation2 + $0x38] sm:$0xff] 0.0
    %24 = vst [vmem:[#allocation2 + $0x40] sm:$0xff] 0.0
    %25 = vst [vmem:[#allocation2 + $0x48] sm:$0xff] 0.0
    %26 = vst [vmem:[#allocation2 + $0x50] sm:$0xff] 0.0
    %27 = vst [vmem:[#allocation2 + $0x58] sm:$0xff] 0.0
    %28 = vst [vmem:[#allocation2 + $0x60] sm:$0xff] 0.0
    %29 = vst [vmem:[#allocation2 + $0x68] sm:$0xff] 0.0
    %30 = vst [vmem:[#allocation2 + $0x70] sm:$0xff] 0.0
    %31 = vst [vmem:[#allocation2 + $0x78] sm:$0xff] 0.0
    %32 = vst [vmem:[#allocation2 + $0x80] sm:$0xff] 0.0
    %33 = vst [vmem:[#allocation2 + $0x88] sm:$0xff] 0.0
    %34 = vst [vmem:[#allocation2 + $0x90] sm:$0xff] 0.0
    %35 = vst [vmem:[#allocation2 + $0x98] sm:$0xff] 0.0
    %36 = vst [vmem:[#allocation2 + $0xa0] sm:$0xff] 0.0
    %37 = vst [vmem:[#allocation2 + $0xa8] sm:$0xff] 0.0
    %38 = vst [vmem:[#allocation2 + $0xb0] sm:$0xff] 0.0
    %39 = vst [vmem:[#allocation2 + $0xb8] sm:$0xff] 0.0
    %40 = vst [vmem:[#allocation2 + $0xc0] sm:$0xff] 0.0
    %41 = vst [vmem:[#allocation2 + $0xc8] sm:$0xff] 0.0
    %42 = vst [vmem:[#allocation2 + $0xd0] sm:$0xff] 0.0
    %43 = vst [vmem:[#allocation2 + $0xd8] sm:$0xff] 0.0
    %44 = vst [vmem:[#allocation2 + $0xe0] sm:$0xff] 0.0
    %45 = vst [vmem:[#allocation2 + $0xe8] sm:$0xff] 0.0
    %46 = vst [vmem:[#allocation2 + $0xf0] sm:$0xff] 0.0
    %47 = vst [vmem:[#allocation2 + $0xf8] sm:$0xff] 0.0
    %48 = vst [vmem:[#allocation2 + $0x100] sm:$0xff] 0.0
    %49 = vst [vmem:[#allocation2 + $0x108] sm:$0xff] 0.0
    %50 = vst [vmem:[#allocation2 + $0x110] sm:$0xff] 0.0
    %51 = vst [vmem:[#allocation2 + $0x118] sm:$0xff] 0.0
    %52 = vst [vmem:[#allocation2 + $0x120] sm:$0xff] 0.0
    %53 = vst [vmem:[#allocation2 + $0x128] sm:$0xff] 0.0
    %54 = vst [vmem:[#allocation2 + $0x130] sm:$0xff] 0.0
    %55 = vst [vmem:[#allocation2 + $0x138] sm:$0xff] 0.0
    %56 = vst [vmem:[#allocation2 + $0x140] sm:$0xff] 0.0
    %57 = vst [vmem:[#allocation2 + $0x148] sm:$0xff] 0.0
    %58 = vst [vmem:[#allocation2 + $0x150] sm:$0xff] 0.0
    %59 = vst [vmem:[#allocation2 + $0x158] sm:$0xff] 0.0
    %60 = vst [vmem:[#allocation2 + $0x160] sm:$0xff] 0.0
    %61 = vst [vmem:[#allocation2 + $0x168] sm:$0xff] 0.0
    %62 = vst [vmem:[#allocation2 + $0x170] sm:$0xff] 0.0
    %63 = vst [vmem:[#allocation2 + $0x178] sm:$0xff] 0.0
    %64 = vst [vmem:[#allocation2 + $0x180] sm:$0xff] 0.0
    %65 = vst [vmem:[#allocation2 + $0x188] sm:$0xff] 0.0
    %66 = vst [vmem:[#allocation2 + $0x190] sm:$0xff] 0.0
    %67 = vst [vmem:[#allocation2 + $0x198] sm:$0xff] 0.0
    %68 = vst [vmem:[#allocation2 + $0x1a0] sm:$0xff] 0.0
    %69 = vst [vmem:[#allocation2 + $0x1a8] sm:$0xff] 0.0
    %70 = vst [vmem:[#allocation2 + $0x1b0] sm:$0xff] 0.0
    %71 = vst [vmem:[#allocation2 + $0x1b8] sm:$0xff] 0.0
    %72 = vst [vmem:[#allocation2 + $0x1c0] sm:$0xff] 0.0
    %73 = vst [vmem:[#allocation2 + $0x1c8] sm:$0xff] 0.0
    %74 = vst [vmem:[#allocation2 + $0x1d0] sm:$0xff] 0.0
    %75 = vst [vmem:[#allocation2 + $0x1d8] sm:$0xff] 0.0
    %76 = vst [vmem:[#allocation2 + $0x1e0] sm:$0xff] 0.0
    %77 = vst [vmem:[#allocation2 + $0x1e8] sm:$0xff] 0.0
    %78 = vst [vmem:[#allocation2 + $0x1f0] sm:$0xff] 0.0
    %79 = vst [vmem:[#allocation2 + $0x1f8] sm:$0xff] 0.0
    %80 = vst [vmem:[#allocation2 + $0x200] sm:$0xff] 0.0
    %81 = vst [vmem:[#allocation2 + $0x208] sm:$0xff] 0.0
    %82 = vst [vmem:[#allocation2 + $0x210] sm:$0xff] 0.0
    %83 = vst [vmem:[#allocation2 + $0x218] sm:$0xff] 0.0
    %84 = vst [vmem:[#allocation2 + $0x220] sm:$0xff] 0.0
    %85 = vst [vmem:[#allocation2 + $0x228] sm:$0xff] 0.0
    %86 = vst [vmem:[#allocation2 + $0x230] sm:$0xff] 0.0
    %87 = vst [vmem:[#allocation2 + $0x238] sm:$0xff] 0.0
    %88 = vst [vmem:[#allocation2 + $0x240] sm:$0xff] 0.0
    %89 = vst [vmem:[#allocation2 + $0x248] sm:$0xff] 0.0
    %90 = vst [vmem:[#allocation2 + $0x250] sm:$0xff] 0.0
    %91 = vst [vmem:[#allocation2 + $0x258] sm:$0xff] 0.0
    %92 = vst [vmem:[#allocation2 + $0x260] sm:$0xff] 0.0
    %93 = vst [vmem:[#allocation2 + $0x268] sm:$0xff] 0.0
    %94 = vst [vmem:[#allocation2 + $0x270] sm:$0xff] 0.0
    %95 = vst [vmem:[#allocation2 + $0x278] sm:$0xff] 0.0
    %96 = vst [vmem:[#allocation2 + $0x280] sm:$0xff] 0.0
    %97 = vst [vmem:[#allocation2 + $0x288] sm:$0xff] 0.0
    %98 = vst [vmem:[#allocation2 + $0x290] sm:$0xff] 0.0
    %99 = vst [vmem:[#allocation2 + $0x298] sm:$0xff] 0.0
    %100 = vst [vmem:[#allocation2 + $0x2a0] sm:$0xff] 0.0
    %101 = vst [vmem:[#allocation2 + $0x2a8] sm:$0xff] 0.0
    %102 = vst [vmem:[#allocation2 + $0x2b0] sm:$0xff] 0.0
    %103 = vst [vmem:[#allocation2 + $0x2b8] sm:$0xff] 0.0
    %104 = vst [vmem:[#allocation2 + $0x2c0] sm:$0xff] 0.0
    %105 = vst [vmem:[#allocation2 + $0x2c8] sm:$0xff] 0.0
    %106 = vst [vmem:[#allocation2 + $0x2d0] sm:$0xff] 0.0
    %107 = vst [vmem:[#allocation2 + $0x2d8] sm:$0xff] 0.0
    %108 = vst [vmem:[#allocation2 + $0x2e0] sm:$0xff] 0.0
    %109 = vst [vmem:[#allocation2 + $0x2e8] sm:$0xff] 0.0
    %110 = vst [vmem:[#allocation2 + $0x2f0] sm:$0xff] 0.0
    %111 = vst [vmem:[#allocation2 + $0x2f8] sm:$0xff] 0.0
    %112 = vst [vmem:[#allocation2 + $0x300] sm:$0xff] 0.0
    %113 = vst [vmem:[#allocation2 + $0x308] sm:$0xff] 0.0
    %114 = vst [vmem:[#allocation2 + $0x310] sm:$0xff] 0.0
    %115 = vst [vmem:[#allocation2 + $0x318] sm:$0xff] 0.0
    %116 = vst [vmem:[#allocation2 + $0x320] sm:$0xff] 0.0
    %117 = vst [vmem:[#allocation2 + $0x328] sm:$0xff] 0.0
    %118 = vst [vmem:[#allocation2 + $0x330] sm:$0xff] 0.0
    %119 = vst [vmem:[#allocation2 + $0x338] sm:$0xff] 0.0
    %120 = vst [vmem:[#allocation2 + $0x340] sm:$0xff] 0.0
    %121 = vst [vmem:[#allocation2 + $0x348] sm:$0xff] 0.0
    %122 = vst [vmem:[#allocation2 + $0x350] sm:$0xff] 0.0
    %123 = vst [vmem:[#allocation2 + $0x358] sm:$0xff] 0.0
    %124 = vst [vmem:[#allocation2 + $0x360] sm:$0xff] 0.0
    %125 = vst [vmem:[#allocation2 + $0x368] sm:$0xff] 0.0
    %126 = vst [vmem:[#allocation2 + $0x370] sm:$0xff] 0.0
    %127 = vst [vmem:[#allocation2 + $0x378] sm:$0xff] 0.0
    %128 = vst [vmem:[#allocation2 + $0x380] sm:$0xff] 0.0
    %129 = vst [vmem:[#allocation2 + $0x388] sm:$0xff] 0.0
    %130 = vst [vmem:[#allocation2 + $0x390] sm:$0xff] 0.0
    %131 = vst [vmem:[#allocation2 + $0x398] sm:$0xff] 0.0
    %132 = vst [vmem:[#allocation2 + $0x3a0] sm:$0xff] 0.0
    %133 = vst [vmem:[#allocation2 + $0x3a8] sm:$0xff] 0.0
    %134 = vst [vmem:[#allocation2 + $0x3b0] sm:$0xff] 0.0
    %135 = vst [vmem:[#allocation2 + $0x3b8] sm:$0xff] 0.0
    %136 = vst [vmem:[#allocation2 + $0x3c0] sm:$0xff] 0.0
    %137 = vst [vmem:[#allocation2 + $0x3c8] sm:$0xff] 0.0
    %138 = vst [vmem:[#allocation2 + $0x3d0] sm:$0xff] 0.0
    %139 = vst [vmem:[#allocation2 + $0x3d8] sm:$0xff] 0.0
    %140 = vst [vmem:[#allocation2 + $0x3e0] sm:$0xff] 0.0
    %141 = vst [vmem:[#allocation2 + $0x3e8] sm:$0xff] 0.0
    %142 = vst [vmem:[#allocation2 + $0x3f0] sm:$0xff] 0.0
    %143 = vst [vmem:[#allocation2 + $0x3f8] sm:$0xff] 0.0
  $region13: #{generator_forward.16} parent=0 // pred_fallthru
    _
  %v144 = vld [vmem:[#allocation2] sm:$0xff]
  %v145 = vld [vmem:[#allocation2 + $0x8] sm:$0xff]
  %v146 = vld [vmem:[#allocation2 + $0x10] sm:$0xff]
  %v147 = vld [vmem:[#allocation2 + $0x18] sm:$0xff]
  %v148 = vld [vmem:[#allocation2 + $0x20] sm:$0xff]
  %v149 = vld [vmem:[#allocation2 + $0x28] sm:$0xff]
  %v150 = vld [vmem:[#allocation2 + $0x30] sm:$0xff]
  %v151 = vld [vmem:[#allocation2 + $0x38] sm:$0xff]
  %v152 = vld [vmem:[#allocation2 + $0x40] sm:$0xff]
  %v153 = vld [vmem:[#allocation2 + $0x48] sm:$0xff]
  %v154 = vld [vmem:[#allocation2 + $0x50] sm:$0xff]
  %v155 = vld [vmem:[#allocation2 + $0x58] sm:$0xff]
  %v156 = vld [vmem:[#allocation2 + $0x60] sm:$0xff]
  %v157 = vld [vmem:[#allocation2 + $0x68] sm:$0xff]
  %v158 = vld [vmem:[#allocation2 + $0x70] sm:$0xff]
  %v159 = vld [vmem:[#allocation2 + $0x78] sm:$0xff]
  %v160 = vld [vmem:[#allocation2 + $0x80] sm:$0xff]
  %v161 = vld [vmem:[#allocation2 + $0x88] sm:$0xff]
  %v162 = vld [vmem:[#allocation2 + $0x90] sm:$0xff]
  %v163 = vld [vmem:[#allocation2 + $0x98] sm:$0xff]
  %v164 = vld [vmem:[#allocation2 + $0xa0] sm:$0xff]
  %v165 = vld [vmem:[#allocation2 + $0xa8] sm:$0xff]
  %v166 = vld [vmem:[#allocation2 + $0xb0] sm:$0xff]
  %v167 = vld [vmem:[#allocation2 + $0xb8] sm:$0xff]
  %v168 = vld [vmem:[#allocation2 + $0xc0] sm:$0xff]
  %v169 = vld [vmem:[#allocation2 + $0xc8] sm:$0xff]
  %v170 = vld [vmem:[#allocation2 + $0xd0] sm:$0xff]
  %v171 = vld [vmem:[#allocation2 + $0xd8] sm:$0xff]
  %v172 = vld [vmem:[#allocation2 + $0xe0] sm:$0xff]
  %v173 = vld [vmem:[#allocation2 + $0xe8] sm:$0xff]
  %v174 = vld [vmem:[#allocation2 + $0xf0] sm:$0xff]
  %v175 = vld [vmem:[#allocation2 + $0xf8] sm:$0xff]
  %v176 = vld [vmem:[#allocation2 + $0x100] sm:$0xff]
  %v177 = vld [vmem:[#allocation2 + $0x108] sm:$0xff]
  %v178 = vld [vmem:[#allocation2 + $0x110] sm:$0xff]
  %v179 = vld [vmem:[#allocation2 + $0x118] sm:$0xff]
  %v180 = vld [vmem:[#allocation2 + $0x120] sm:$0xff]
  %v181 = vld [vmem:[#allocation2 + $0x128] sm:$0xff]
  %v182 = vld [vmem:[#allocation2 + $0x130] sm:$0xff]
  %v183 = vld [vmem:[#allocation2 + $0x138] sm:$0xff]
  %v184 = vld [vmem:[#allocation2 + $0x140] sm:$0xff]
  %v185 = vld [vmem:[#allocation2 + $0x148] sm:$0xff]
  %v186 = vld [vmem:[#allocation2 + $0x150] sm:$0xff]
  %v187 = vld [vmem:[#allocation2 + $0x158] sm:$0xff]
  %v188 = vld [vmem:[#allocation2 + $0x160] sm:$0xff]
  %v189 = vld [vmem:[#allocation2 + $0x168] sm:$0xff]
  %v190 = vld [vmem:[#allocation2 + $0x170] sm:$0xff]
  %v191 = vld [vmem:[#allocation2 + $0x178] sm:$0xff]
  %v192 = vld [vmem:[#allocation2 + $0x180] sm:$0xff]
  %v193 = vld [vmem:[#allocation2 + $0x188] sm:$0xff]
  %v194 = vld [vmem:[#allocation2 + $0x190] sm:$0xff]
  %v195 = vld [vmem:[#allocation2 + $0x198] sm:$0xff]
  %v196 = vld [vmem:[#allocation2 + $0x1a0] sm:$0xff]
  %v197 = vld [vmem:[#allocation2 + $0x1a8] sm:$0xff]
  %v198 = vld [vmem:[#allocation2 + $0x1b0] sm:$0xff]
  %v199 = vld [vmem:[#allocation2 + $0x1b8] sm:$0xff]
  %v200 = vld [vmem:[#allocation2 + $0x1c0] sm:$0xff]
  %v201 = vld [vmem:[#allocation2 + $0x1c8] sm:$0xff]
  %v202 = vld [vmem:[#allocation2 + $0x1d0] sm:$0xff]
  %v203 = vld [vmem:[#allocation2 + $0x1d8] sm:$0xff]
  %v204 = vld [vmem:[#allocation2 + $0x1e0] sm:$0xff]
  %v205 = vld [vmem:[#allocation2 + $0x1e8] sm:$0xff]
  %v206 = vld [vmem:[#allocation2 + $0x1f0] sm:$0xff]
  %v207 = vld [vmem:[#allocation2 + $0x1f8] sm:$0xff]
  %v208 = vld [vmem:[#allocation2 + $0x200] sm:$0xff]
  %v209 = vld [vmem:[#allocation2 + $0x208] sm:$0xff]
  %v210 = vld [vmem:[#allocation2 + $0x210] sm:$0xff]
  %v211 = vld [vmem:[#allocation2 + $0x218] sm:$0xff]
  %v212 = vld [vmem:[#allocation2 + $0x220] sm:$0xff]
  %v213 = vld [vmem:[#allocation2 + $0x228] sm:$0xff]
  %v214 = vld [vmem:[#allocation2 + $0x230] sm:$0xff]
  %v215 = vld [vmem:[#allocation2 + $0x238] sm:$0xff]
  %v216 = vld [vmem:[#allocation2 + $0x240] sm:$0xff]
  %v217 = vld [vmem:[#allocation2 + $0x248] sm:$0xff]
  %v218 = vld [vmem:[#allocation2 + $0x250] sm:$0xff]
  %v219 = vld [vmem:[#allocation2 + $0x258] sm:$0xff]
  %v220 = vld [vmem:[#allocation2 + $0x260] sm:$0xff]
  %v221 = vld [vmem:[#allocation2 + $0x268] sm:$0xff]
  %v222 = vld [vmem:[#allocation2 + $0x270] sm:$0xff]
  %v223 = vld [vmem:[#allocation2 + $0x278] sm:$0xff]
  %v224 = vld [vmem:[#allocation2 + $0x280] sm:$0xff]
  %v225 = vld [vmem:[#allocation2 + $0x288] sm:$0xff]
  %v226 = vld [vmem:[#allocation2 + $0x290] sm:$0xff]
  %v227 = vld [vmem:[#allocation2 + $0x298] sm:$0xff]
  %v228 = vld [vmem:[#allocation2 + $0x2a0] sm:$0xff]
  %v229 = vld [vmem:[#allocation2 + $0x2a8] sm:$0xff]
  %v230 = vld [vmem:[#allocation2 + $0x2b0] sm:$0xff]
  %v231 = vld [vmem:[#allocation2 + $0x2b8] sm:$0xff]
  %v232 = vld [vmem:[#allocation2 + $0x2c0] sm:$0xff]
  %v233 = vld [vmem:[#allocation2 + $0x2c8] sm:$0xff]
  %v234 = vld [vmem:[#allocation2 + $0x2d0] sm:$0xff]
  %v235 = vld [vmem:[#allocation2 + $0x2d8] sm:$0xff]
  %v236 = vld [vmem:[#allocation2 + $0x2e0] sm:$0xff]
  %v237 = vld [vmem:[#allocation2 + $0x2e8] sm:$0xff]
  %v238 = vld [vmem:[#allocation2 + $0x2f0] sm:$0xff]
  %v239 = vld [vmem:[#allocation2 + $0x2f8] sm:$0xff]
  %v240 = vld [vmem:[#allocation2 + $0x300] sm:$0xff]
  %v241 = vld [vmem:[#allocation2 + $0x308] sm:$0xff]
  %v242 = vld [vmem:[#allocation2 + $0x310] sm:$0xff]
  %v243 = vld [vmem:[#allocation2 + $0x318] sm:$0xff]
  %v244 = vld [vmem:[#allocation2 + $0x320] sm:$0xff]
  %v245 = vld [vmem:[#allocation2 + $0x328] sm:$0xff]
  %v246 = vld [vmem:[#allocation2 + $0x330] sm:$0xff]
  %v247 = vld [vmem:[#allocation2 + $0x338] sm:$0xff]
  %v248 = vld [vmem:[#allocation2 + $0x340] sm:$0xff]
  %v249 = vld [vmem:[#allocation2 + $0x348] sm:$0xff]
  %v250 = vld [vmem:[#allocation2 + $0x350] sm:$0xff]
  %v251 = vld [vmem:[#allocation2 + $0x358] sm:$0xff]
  %v252 = vld [vmem:[#allocation2 + $0x360] sm:$0xff]
  %v253 = vld [vmem:[#allocation2 + $0x368] sm:$0xff]
  %v254 = vld [vmem:[#allocation2 + $0x370] sm:$0xff]
  %v255 = vld [vmem:[#allocation2 + $0x378] sm:$0xff]
  %v256 = vld [vmem:[#allocation2 + $0x380] sm:$0xff]
  %v257 = vld [vmem:[#allocation2 + $0x388] sm:$0xff]
  %v258 = vld [vmem:[#allocation2 + $0x390] sm:$0xff]
  %v259 = vld [vmem:[#allocation2 + $0x398] sm:$0xff]
  %v260 = vld [vmem:[#allocation2 + $0x3a0] sm:$0xff]
  %v261 = vld [vmem:[#allocation2 + $0x3a8] sm:$0xff]
  %v262 = vld [vmem:[#allocation2 + $0x3b0] sm:$0xff]
  %v263 = vld [vmem:[#allocation2 + $0x3b8] sm:$0xff]
  %v264 = vld [vmem:[#allocation2 + $0x3c0] sm:$0xff]
  %v265 = vld [vmem:[#allocation2 + $0x3c8] sm:$0xff]
  %v266 = vld [vmem:[#allocation2 + $0x3d0] sm:$0xff]
  %v267 = vld [vmem:[#allocation2 + $0x3d8] sm:$0xff]
  %v268 = vld [vmem:[#allocation2 + $0x3e0] sm:$0xff]
  %v269 = vld [vmem:[#allocation2 + $0x3e8] sm:$0xff]
  %v270 = vld [vmem:[#allocation2 + $0x3f0] sm:$0xff]
  %v271 = vld [vmem:[#allocation2 + $0x3f8] sm:$0xff]
  %v272 = vld [vmem:[%s0] sm:$0xf]
  %v273 = vld [vmem:[%s0 + $0x4] sm:$0xf]
  %v274 = vld [vmem:[%s0 + $0x8] sm:$0xf]
  %v275 = vld [vmem:[%s0 + $0xc] sm:$0xf]
  %v276 = vld [vmem:[%s0 + $0x10] sm:$0xf]
  %v277 = vld [vmem:[%s0 + $0x14] sm:$0xf]
  %v278 = vld [vmem:[%s0 + $0x18] sm:$0xf]
  %v279 = vld [vmem:[%s0 + $0x1c] sm:$0xf]
  %v280 = vld [vmem:[%s0 + $0x20] sm:$0xf]
  %v281 = vld [vmem:[%s0 + $0x24] sm:$0xf]
  %v282 = vld [vmem:[%s0 + $0x28] sm:$0xf]
  %v283 = vld [vmem:[%s0 + $0x2c] sm:$0xf]
  %v284 = vld [vmem:[%s0 + $0x30] sm:$0xf]
  %v285 = vld [vmem:[%s0 + $0x34] sm:$0xf]
  %v286 = vld [vmem:[%s0 + $0x38] sm:$0xf]
  %v287 = vld [vmem:[%s0 + $0x3c] sm:$0xf]
  %v288 = vld [vmem:[%s0 + $0x40] sm:$0xf]
  %v289 = vld [vmem:[%s0 + $0x44] sm:$0xf]
  %v290 = vld [vmem:[%s0 + $0x48] sm:$0xf]
  %v291 = vld [vmem:[%s0 + $0x4c] sm:$0xf]
  %v292 = vld [vmem:[%s0 + $0x50] sm:$0xf]
  %v293 = vld [vmem:[%s0 + $0x54] sm:$0xf]
  %v294 = vld [vmem:[%s0 + $0x58] sm:$0xf]
  %v295 = vld [vmem:[%s0 + $0x5c] sm:$0xf]
  %v296 = vld [vmem:[%s0 + $0x60] sm:$0xf]
  %v297 = vld [vmem:[%s0 + $0x64] sm:$0xf]
  %v298 = vld [vmem:[%s0 + $0x68] sm:$0xf]
  %v299 = vld [vmem:[%s0 + $0x6c] sm:$0xf]
  %v300 = vld [vmem:[%s0 + $0x70] sm:$0xf]
  %v301 = vld [vmem:[%s0 + $0x74] sm:$0xf]
  %v302 = vld [vmem:[%s0 + $0x78] sm:$0xf]
  %v303 = vld [vmem:[%s0 + $0x7c] sm:$0xf]
  %v304 = vld [vmem:[%s0 + $0x80] sm:$0xf]
  %v305 = vld [vmem:[%s0 + $0x84] sm:$0xf]
  %v306 = vld [vmem:[%s0 + $0x88] sm:$0xf]
  %v307 = vld [vmem:[%s0 + $0x8c] sm:$0xf]
  %v308 = vld [vmem:[%s0 + $0x90] sm:$0xf]
  %v309 = vld [vmem:[%s0 + $0x94] sm:$0xf]
  %v310 = vld [vmem:[%s0 + $0x98] sm:$0xf]
  %v311 = vld [vmem:[%s0 + $0x9c] sm:$0xf]
  %v312 = vld [vmem:[%s0 + $0xa0] sm:$0xf]
  %v313 = vld [vmem:[%s0 + $0xa4] sm:$0xf]
  %v314 = vld [vmem:[%s0 + $0xa8] sm:$0xf]
  %v315 = vld [vmem:[%s0 + $0xac] sm:$0xf]
  %v316 = vld [vmem:[%s0 + $0xb0] sm:$0xf]
  %v317 = vld [vmem:[%s0 + $0xb4] sm:$0xf]
  %v318 = vld [vmem:[%s0 + $0xb8] sm:$0xf]
  %v319 = vld [vmem:[%s0 + $0xbc] sm:$0xf]
  %v320 = vld [vmem:[%s0 + $0xc0] sm:$0xf]
  %v321 = vld [vmem:[%s0 + $0xc4] sm:$0xf]
  %v322 = vld [vmem:[%s0 + $0xc8] sm:$0xf]
  %v323 = vld [vmem:[%s0 + $0xcc] sm:$0xf]
  %v324 = vld [vmem:[%s0 + $0xd0] sm:$0xf]
  %v325 = vld [vmem:[%s0 + $0xd4] sm:$0xf]
  %v326 = vld [vmem:[%s0 + $0xd8] sm:$0xf]
  %v327 = vld [vmem:[%s0 + $0xdc] sm:$0xf]
  %v328 = vld [vmem:[%s0 + $0xe0] sm:$0xf]
  %v329 = vld [vmem:[%s0 + $0xe4] sm:$0xf]
  %v330 = vld [vmem:[%s0 + $0xe8] sm:$0xf]
  %v331 = vld [vmem:[%s0 + $0xec] sm:$0xf]
  %v332 = vld [vmem:[%s0 + $0xf0] sm:$0xf]
  %v333 = vld [vmem:[%s0 + $0xf4] sm:$0xf]
  %v334 = vld [vmem:[%s0 + $0xf8] sm:$0xf]
  %v335 = vld [vmem:[%s0 + $0xfc] sm:$0xf]
  %v336 = vld [vmem:[%s1] sm:$0xff]
  %v337 = vld [vmem:[%s1 + $0x8] sm:$0xff]
  %v338 = vld [vmem:[%s1 + $0x10] sm:$0xff]
  %v339 = vld [vmem:[%s1 + $0x18] sm:$0xff]
  %v404 = vunpack.c.l.b16 %v272
  %v405 = vunpack.c.l.b16 %v273
  %v406 = vunpack.c.l.b16 %v274
  %v407 = vunpack.c.l.b16 %v275
  %v408 = vunpack.c.l.b16 %v276
  %v409 = vunpack.c.l.b16 %v277
  %v410 = vunpack.c.l.b16 %v278
  %v411 = vunpack.c.l.b16 %v279
  %v412 = vunpack.c.l.b16 %v280
  %v413 = vunpack.c.l.b16 %v281
  %v414 = vunpack.c.l.b16 %v282
  %v415 = vunpack.c.l.b16 %v283
  %v416 = vunpack.c.l.b16 %v284
  %v417 = vunpack.c.l.b16 %v285
  %v418 = vunpack.c.l.b16 %v286
  %v419 = vunpack.c.l.b16 %v287
  %v420 = vunpack.c.l.b16 %v288
  %v421 = vunpack.c.l.b16 %v289
  %v422 = vunpack.c.l.b16 %v290
  %v423 = vunpack.c.l.b16 %v291
  %v424 = vunpack.c.l.b16 %v292
  %v425 = vunpack.c.l.b16 %v293
  %v426 = vunpack.c.l.b16 %v294
  %v427 = vunpack.c.l.b16 %v295
  %v428 = vunpack.c.l.b16 %v296
  %v429 = vunpack.c.l.b16 %v297
  %v430 = vunpack.c.l.b16 %v298
  %v431 = vunpack.c.l.b16 %v299
  %v432 = vunpack.c.l.b16 %v300
  %v433 = vunpack.c.l.b16 %v301
  %v434 = vunpack.c.l.b16 %v302
  %v435 = vunpack.c.l.b16 %v303
  %v436 = vunpack.c.l.b16 %v304
  %v437 = vunpack.c.l.b16 %v305
  %v438 = vunpack.c.l.b16 %v306
  %v439 = vunpack.c.l.b16 %v307
  %v440 = vunpack.c.l.b16 %v308
  %v441 = vunpack.c.l.b16 %v309
  %v442 = vunpack.c.l.b16 %v310
  %v443 = vunpack.c.l.b16 %v311
  %v444 = vunpack.c.l.b16 %v312
  %v445 = vunpack.c.l.b16 %v313
  %v446 = vunpack.c.l.b16 %v314
  %v447 = vunpack.c.l.b16 %v315
  %v448 = vunpack.c.l.b16 %v316
  %v449 = vunpack.c.l.b16 %v317
  %v450 = vunpack.c.l.b16 %v318
  %v451 = vunpack.c.l.b16 %v319
  %v452 = vunpack.c.l.b16 %v320
  %v453 = vunpack.c.l.b16 %v321
  %v454 = vunpack.c.l.b16 %v322
  %v455 = vunpack.c.l.b16 %v323
  %v456 = vunpack.c.l.b16 %v324
  %v457 = vunpack.c.l.b16 %v325
  %v458 = vunpack.c.l.b16 %v326
  %v459 = vunpack.c.l.b16 %v327
  %v460 = vunpack.c.l.b16 %v328
  %v461 = vunpack.c.l.b16 %v329
  %v462 = vunpack.c.l.b16 %v330
  %v463 = vunpack.c.l.b16 %v331
  %v464 = vunpack.c.l.b16 %v332
  %v465 = vunpack.c.l.b16 %v333
  %v466 = vunpack.c.l.b16 %v334
  %v467 = vunpack.c.l.b16 %v335
  %v468 = vpack.c.b16 %v405, %v404
  %v469 = vpack.c.b16 %v407, %v406
  %v470 = vpack.c.b16 %v409, %v408
  %v471 = vpack.c.b16 %v411, %v410
  %v472 = vpack.c.b16 %v413, %v412
  %v473 = vpack.c.b16 %v415, %v414
  %v474 = vpack.c.b16 %v417, %v416
  %v475 = vpack.c.b16 %v419, %v418
  %v476 = vpack.c.b16 %v421, %v420
  %v477 = vpack.c.b16 %v423, %v422
  %v478 = vpack.c.b16 %v425, %v424
  %v479 = vpack.c.b16 %v427, %v426
  %v480 = vpack.c.b16 %v429, %v428
  %v481 = vpack.c.b16 %v431, %v430
  %v482 = vpack.c.b16 %v433, %v432
  %v483 = vpack.c.b16 %v435, %v434
  %v484 = vpack.c.b16 %v437, %v436
  %v485 = vpack.c.b16 %v439, %v438
  %v486 = vpack.c.b16 %v441, %v440
  %v487 = vpack.c.b16 %v443, %v442
  %v488 = vpack.c.b16 %v445, %v444
  %v489 = vpack.c.b16 %v447, %v446
  %v490 = vpack.c.b16 %v449, %v448
  %v491 = vpack.c.b16 %v451, %v450
  %v492 = vpack.c.b16 %v453, %v452
  %v493 = vpack.c.b16 %v455, %v454
  %v494 = vpack.c.b16 %v457, %v456
  %v495 = vpack.c.b16 %v459, %v458
  %v496 = vpack.c.b16 %v461, %v460
  %v497 = vpack.c.b16 %v463, %v462
  %v498 = vpack.c.b16 %v465, %v464
  %v499 = vpack.c.b16 %v467, %v466
  %v504 = vunpack.c.l.b16 %v336
  %v505 = vunpack.c.h.b16 %v336
  %v506 = vunpack.c.l.b16 %v337
  %v507 = vunpack.c.h.b16 %v337
  %v508 = vunpack.c.l.b16 %v338
  %v509 = vunpack.c.h.b16 %v338
  %v510 = vunpack.c.l.b16 %v339
  %v511 = vunpack.c.h.b16 %v339
  %v512 = vpack.c.b16 %v506, %v504
  %v513 = vpack.c.b16 %v507, %v505
  %v514 = vpack.c.b16 %v510, %v508
  %v515 = vpack.c.b16 %v511, %v509
  %vm520 = vcmask 261120
  %v522 = vsel %vm520, %v468, 0
  %v525 = vsel %vm520, %v469, 0
  %v528 = vsel %vm520, %v470, 0
  %v531 = vsel %vm520, %v471, 0
  %v534 = vsel %vm520, %v472, 0
  %v537 = vsel %vm520, %v473, 0
  %v540 = vsel %vm520, %v474, 0
  %v543 = vsel %vm520, %v475, 0
  %v546 = vsel %vm520, %v476, 0
  %v549 = vsel %vm520, %v477, 0
  %v552 = vsel %vm520, %v478, 0
  %v555 = vsel %vm520, %v479, 0
  %v558 = vsel %vm520, %v480, 0
  %v561 = vsel %vm520, %v481, 0
  %v564 = vsel %vm520, %v482, 0
  %v567 = vsel %vm520, %v483, 0
  %v570 = vsel %vm520, %v484, 0
  %v573 = vsel %vm520, %v485, 0
  %v576 = vsel %vm520, %v486, 0
  %v579 = vsel %vm520, %v487, 0
  %v582 = vsel %vm520, %v488, 0
  %v585 = vsel %vm520, %v489, 0
  %v588 = vsel %vm520, %v490, 0
  %v591 = vsel %vm520, %v491, 0
  %v594 = vsel %vm520, %v492, 0
  %v597 = vsel %vm520, %v493, 0
  %v600 = vsel %vm520, %v494, 0
  %v603 = vsel %vm520, %v495, 0
  %v606 = vsel %vm520, %v496, 0
  %v609 = vsel %vm520, %v497, 0
  %v612 = vsel %vm520, %v498, 0
  %v615 = vsel %vm520, %v499, 0
  %617 = vmatprep.subr.bf16.mxu0 %v513
  %618 = vmatpush1.bf16.msra.mxu0 %v512
  %619 = vmatprep.subr.bf16.mxu0 %v515
  %620 = vmatpush1.bf16.msra.mxu0 %v514
  %621 = vmatprep.subr.bf16.mxu0 0
  %622 = vmatpush1.bf16.msra.mxu0 0
  %623 = vmatprep.subr.bf16.mxu0 0
  %624 = vmatpush1.bf16.msra.mxu0 0
  %625 = vmatprep.subr.bf16.mxu0 0
  %626 = vmatpush1.bf16.msra.mxu0 0
  %627 = vmatprep.subr.bf16.mxu0 0
  %628 = vmatpush1.bf16.msra.mxu0 0
  %629 = vmatprep.subr.bf16.mxu0 0
  %630 = vmatpush1.bf16.msra.mxu0 0
  %631 = vmatprep.subr.bf16.mxu0 0
  %632 = vmatpush1.bf16.msra.mxu0 0
  %633 = vmatprep.subr.bf16.mxu0 0
  %634 = vmatpush1.bf16.msra.mxu0 0
  %635 = vmatprep.subr.bf16.mxu0 0
  %636 = vmatpush1.bf16.msra.mxu0 0
  %637 = vmatprep.subr.bf16.mxu0 0
  %638 = vmatpush1.bf16.msra.mxu0 0
  %639 = vmatprep.subr.bf16.mxu0 0
  %640 = vmatpush1.bf16.msra.mxu0 0
  %641 = vmatprep.subr.bf16.mxu0 0
  %642 = vmatpush1.bf16.msra.mxu0 0
  %643 = vmatprep.subr.bf16.mxu0 0
  %644 = vmatpush1.bf16.msra.mxu0 0
  %645 = vmatprep.subr.bf16.mxu0 0
  %646 = vmatpush1.bf16.msra.mxu0 0
  %647 = vmatprep.subr.bf16.mxu0 0
  %648 = vmatpush1.bf16.msra.mxu0 0
  %649 = vmatprep.mubr.bf16.mxu0 0
  %650 = vmatmul.mubr.bf16.gmra.mrb[0].mxu0 %v522
  %v651 = vpop.f32.mrb[0].mxu0
  %v652 = vadd.f32 0.0, %v651
  %v653 = vpop.f32.mrb[0].mxu0
  %v654 = vadd.f32 0.0, %v653
  %v655 = vpop.f32.mrb[0].mxu0
  %v656 = vadd.f32 0.0, %v655
  %v657 = vpop.f32.mrb[0].mxu0
  %v658 = vadd.f32 0.0, %v657
  %659 = vmatprep.mubr.bf16.mxu0 0
  %660 = vmatmul.mubr.bf16.gmra.mrb[0].mxu0 %v525
  %v661 = vpop.f32.mrb[0].mxu0
  %v662 = vadd.f32 0.0, %v661
  %v663 = vpop.f32.mrb[0].mxu0
  %v664 = vadd.f32 0.0, %v663
  %v665 = vpop.f32.mrb[0].mxu0
  %v666 = vadd.f32 0.0, %v665
  %v667 = vpop.f32.mrb[0].mxu0
  %v668 = vadd.f32 0.0, %v667
  %669 = vmatprep.mubr.bf16.mxu0 0
  %670 = vmatmul.mubr.bf16.gmra.mrb[0].mxu0 %v528
  %v671 = vpop.f32.mrb[0].mxu0
  %v672 = vadd.f32 0.0, %v671
  %v673 = vpop.f32.mrb[0].mxu0
  %v674 = vadd.f32 0.0, %v673
  %v675 = vpop.f32.mrb[0].mxu0
  %v676 = vadd.f32 0.0, %v675
  %v677 = vpop.f32.mrb[0].mxu0
  %v678 = vadd.f32 0.0, %v677
  %679 = vmatprep.mubr.bf16.mxu0 0
  %680 = vmatmul.mubr.bf16.gmra.mrb[0].mxu0 %v531
  %v681 = vpop.f32.mrb[0].mxu0
  %v682 = vadd.f32 0.0, %v681
  %v683 = vpop.f32.mrb[0].mxu0
  %v684 = vadd.f32 0.0, %v683
  %v685 = vpop.f32.mrb[0].mxu0
  %v686 = vadd.f32 0.0, %v685
  %v687 = vpop.f32.mrb[0].mxu0
  %v688 = vadd.f32 0.0, %v687
  %689 = vmatprep.mubr.bf16.mxu0 0
  %690 = vmatmul.mubr.bf16.gmra.mrb[0].mxu0 %v534
  %v691 = vpop.f32.mrb[0].mxu0
  %v692 = vadd.f32 0.0, %v691
  %v693 = vpop.f32.mrb[0].mxu0
  %v694 = vadd.f32 0.0, %v693
  %v695 = vpop.f32.mrb[0].mxu0
  %v696 = vadd.f32 0.0, %v695
  %v697 = vpop.f32.mrb[0].mxu0
  %v698 = vadd.f32 0.0, %v697
  %699 = vmatprep.mubr.bf16.mxu0 0
  %700 = vmatmul.mubr.bf16.gmra.mrb[0].mxu0 %v537
  %v701 = vpop.f32.mrb[0].mxu0
  %v702 = vadd.f32 0.0, %v701
  %v703 = vpop.f32.mrb[0].mxu0
  %v704 = vadd.f32 0.0, %v703
  %v705 = vpop.f32.mrb[0].mxu0
  %v706 = vadd.f32 0.0, %v705
  %v707 = vpop.f32.mrb[0].mxu0
  %v708 = vadd.f32 0.0, %v707
  %709 = vmatprep.mubr.bf16.mxu0 0
  %710 = vmatmul.mubr.bf16.gmra.mrb[0].mxu0 %v540
  %v711 = vpop.f32.mrb[0].mxu0
  %v712 = vadd.f32 0.0, %v711
  %v713 = vpop.f32.mrb[0].mxu0
  %v714 = vadd.f32 0.0, %v713
  %v715 = vpop.f32.mrb[0].mxu0
  %v716 = vadd.f32 0.0, %v715
  %v717 = vpop.f32.mrb[0].mxu0
  %v718 = vadd.f32 0.0, %v717
  %719 = vmatprep.mubr.bf16.mxu0 0
  %720 = vmatmul.mubr.bf16.gmra.mrb[0].mxu0 %v543
  %v721 = vpop.f32.mrb[0].mxu0
  %v722 = vadd.f32 0.0, %v721
  %v723 = vpop.f32.mrb[0].mxu0
  %v724 = vadd.f32 0.0, %v723
  %v725 = vpop.f32.mrb[0].mxu0
  %v726 = vadd.f32 0.0, %v725
  %v727 = vpop.f32.mrb[0].mxu0
  %v728 = vadd.f32 0.0, %v727
  %729 = vmatprep.mubr.bf16.mxu0 0
  %730 = vmatmul.mubr.bf16.gmra.mrb[0].mxu0 %v546
  %v731 = vpop.f32.mrb[0].mxu0
  %v732 = vadd.f32 0.0, %v731
  %v733 = vpop.f32.mrb[0].mxu0
  %v734 = vadd.f32 0.0, %v733
  %v735 = vpop.f32.mrb[0].mxu0
  %v736 = vadd.f32 0.0, %v735
  %v737 = vpop.f32.mrb[0].mxu0
  %v738 = vadd.f32 0.0, %v737
  %739 = vmatprep.mubr.bf16.mxu0 0
  %740 = vmatmul.mubr.bf16.gmra.mrb[0].mxu0 %v549
  %v741 = vpop.f32.mrb[0].mxu0
  %v742 = vadd.f32 0.0, %v741
  %v743 = vpop.f32.mrb[0].mxu0
  %v744 = vadd.f32 0.0, %v743
  %v745 = vpop.f32.mrb[0].mxu0
  %v746 = vadd.f32 0.0, %v745
  %v747 = vpop.f32.mrb[0].mxu0
  %v748 = vadd.f32 0.0, %v747
  %749 = vmatprep.mubr.bf16.mxu0 0
  %750 = vmatmul.mubr.bf16.gmra.mrb[0].mxu0 %v552
  %v751 = vpop.f32.mrb[0].mxu0
  %v752 = vadd.f32 0.0, %v751
  %v753 = vpop.f32.mrb[0].mxu0
  %v754 = vadd.f32 0.0, %v753
  %v755 = vpop.f32.mrb[0].mxu0
  %v756 = vadd.f32 0.0, %v755
  %v757 = vpop.f32.mrb[0].mxu0
  %v758 = vadd.f32 0.0, %v757
  %759 = vmatprep.mubr.bf16.mxu0 0
  %760 = vmatmul.mubr.bf16.gmra.mrb[0].mxu0 %v555
  %v761 = vpop.f32.mrb[0].mxu0
  %v762 = vadd.f32 0.0, %v761
  %v763 = vpop.f32.mrb[0].mxu0
  %v764 = vadd.f32 0.0, %v763
  %v765 = vpop.f32.mrb[0].mxu0
  %v766 = vadd.f32 0.0, %v765
  %v767 = vpop.f32.mrb[0].mxu0
  %v768 = vadd.f32 0.0, %v767
  %769 = vmatprep.mubr.bf16.mxu0 0
  %770 = vmatmul.mubr.bf16.gmra.mrb[0].mxu0 %v558
  %v771 = vpop.f32.mrb[0].mxu0
  %v772 = vadd.f32 0.0, %v771
  %v773 = vpop.f32.mrb[0].mxu0
  %v774 = vadd.f32 0.0, %v773
  %v775 = vpop.f32.mrb[0].mxu0
  %v776 = vadd.f32 0.0, %v775
  %v777 = vpop.f32.mrb[0].mxu0
  %v778 = vadd.f32 0.0, %v777
  %779 = vmatprep.mubr.bf16.mxu0 0
  %780 = vmatmul.mubr.bf16.gmra.mrb[0].mxu0 %v561
  %v781 = vpop.f32.mrb[0].mxu0
  %v782 = vadd.f32 0.0, %v781
  %v783 = vpop.f32.mrb[0].mxu0
  %v784 = vadd.f32 0.0, %v783
  %v785 = vpop.f32.mrb[0].mxu0
  %v786 = vadd.f32 0.0, %v785
  %v787 = vpop.f32.mrb[0].mxu0
  %v788 = vadd.f32 0.0, %v787
  %789 = vmatprep.mubr.bf16.mxu0 0
  %790 = vmatmul.mubr.bf16.gmra.mrb[0].mxu0 %v564
  %v791 = vpop.f32.mrb[0].mxu0
  %v792 = vadd.f32 0.0, %v791
  %v793 = vpop.f32.mrb[0].mxu0
  %v794 = vadd.f32 0.0, %v793
  %v795 = vpop.f32.mrb[0].mxu0
  %v796 = vadd.f32 0.0, %v795
  %v797 = vpop.f32.mrb[0].mxu0
  %v798 = vadd.f32 0.0, %v797
  %799 = vmatprep.mubr.bf16.mxu0 0
  %800 = vmatmul.mubr.bf16.gmra.mrb[0].mxu0 %v567
  %v801 = vpop.f32.mrb[0].mxu0
  %v802 = vadd.f32 0.0, %v801
  %v803 = vpop.f32.mrb[0].mxu0
  %v804 = vadd.f32 0.0, %v803
  %v805 = vpop.f32.mrb[0].mxu0
  %v806 = vadd.f32 0.0, %v805
  %v807 = vpop.f32.mrb[0].mxu0
  %v808 = vadd.f32 0.0, %v807
  %809 = vmatprep.mubr.bf16.mxu0 0
  %810 = vmatmul.mubr.bf16.gmra.mrb[0].mxu0 %v570
  %v811 = vpop.f32.mrb[0].mxu0
  %v812 = vadd.f32 0.0, %v811
  %v813 = vpop.f32.mrb[0].mxu0
  %v814 = vadd.f32 0.0, %v813
  %v815 = vpop.f32.mrb[0].mxu0
  %v816 = vadd.f32 0.0, %v815
  %v817 = vpop.f32.mrb[0].mxu0
  %v818 = vadd.f32 0.0, %v817
  %819 = vmatprep.mubr.bf16.mxu0 0
  %820 = vmatmul.mubr.bf16.gmra.mrb[0].mxu0 %v573
  %v821 = vpop.f32.mrb[0].mxu0
  %v822 = vadd.f32 0.0, %v821
  %v823 = vpop.f32.mrb[0].mxu0
  %v824 = vadd.f32 0.0, %v823
  %v825 = vpop.f32.mrb[0].mxu0
  %v826 = vadd.f32 0.0, %v825
  %v827 = vpop.f32.mrb[0].mxu0
  %v828 = vadd.f32 0.0, %v827
  %829 = vmatprep.mubr.bf16.mxu0 0
  %830 = vmatmul.mubr.bf16.gmra.mrb[0].mxu0 %v576
  %v831 = vpop.f32.mrb[0].mxu0
  %v832 = vadd.f32 0.0, %v831
  %v833 = vpop.f32.mrb[0].mxu0
  %v834 = vadd.f32 0.0, %v833
  %v835 = vpop.f32.mrb[0].mxu0
  %v836 = vadd.f32 0.0, %v835
  %v837 = vpop.f32.mrb[0].mxu0
  %v838 = vadd.f32 0.0, %v837
  %839 = vmatprep.mubr.bf16.mxu0 0
  %840 = vmatmul.mubr.bf16.gmra.mrb[0].mxu0 %v579
  %v841 = vpop.f32.mrb[0].mxu0
  %v842 = vadd.f32 0.0, %v841
  %v843 = vpop.f32.mrb[0].mxu0
  %v844 = vadd.f32 0.0, %v843
  %v845 = vpop.f32.mrb[0].mxu0
  %v846 = vadd.f32 0.0, %v845
  %v847 = vpop.f32.mrb[0].mxu0
  %v848 = vadd.f32 0.0, %v847
  %849 = vmatprep.mubr.bf16.mxu0 0
  %850 = vmatmul.mubr.bf16.gmra.mrb[0].mxu0 %v582
  %v851 = vpop.f32.mrb[0].mxu0
  %v852 = vadd.f32 0.0, %v851
  %v853 = vpop.f32.mrb[0].mxu0
  %v854 = vadd.f32 0.0, %v853
  %v855 = vpop.f32.mrb[0].mxu0
  %v856 = vadd.f32 0.0, %v855
  %v857 = vpop.f32.mrb[0].mxu0
  %v858 = vadd.f32 0.0, %v857
  %859 = vmatprep.mubr.bf16.mxu0 0
  %860 = vmatmul.mubr.bf16.gmra.mrb[0].mxu0 %v585
  %v861 = vpop.f32.mrb[0].mxu0
  %v862 = vadd.f32 0.0, %v861
  %v863 = vpop.f32.mrb[0].mxu0
  %v864 = vadd.f32 0.0, %v863
  %v865 = vpop.f32.mrb[0].mxu0
  %v866 = vadd.f32 0.0, %v865
  %v867 = vpop.f32.mrb[0].mxu0
  %v868 = vadd.f32 0.0, %v867
  %869 = vmatprep.mubr.bf16.mxu0 0
  %870 = vmatmul.mubr.bf16.gmra.mrb[0].mxu0 %v588
  %v871 = vpop.f32.mrb[0].mxu0
  %v872 = vadd.f32 0.0, %v871
  %v873 = vpop.f32.mrb[0].mxu0
  %v874 = vadd.f32 0.0, %v873
  %v875 = vpop.f32.mrb[0].mxu0
  %v876 = vadd.f32 0.0, %v875
  %v877 = vpop.f32.mrb[0].mxu0
  %v878 = vadd.f32 0.0, %v877
  %879 = vmatprep.mubr.bf16.mxu0 0
  %880 = vmatmul.mubr.bf16.gmra.mrb[0].mxu0 %v591
  %v881 = vpop.f32.mrb[0].mxu0
  %v882 = vadd.f32 0.0, %v881
  %v883 = vpop.f32.mrb[0].mxu0
  %v884 = vadd.f32 0.0, %v883
  %v885 = vpop.f32.mrb[0].mxu0
  %v886 = vadd.f32 0.0, %v885
  %v887 = vpop.f32.mrb[0].mxu0
  %v888 = vadd.f32 0.0, %v887
  %889 = vmatprep.mubr.bf16.mxu0 0
  %890 = vmatmul.mubr.bf16.gmra.mrb[0].mxu0 %v594
  %v891 = vpop.f32.mrb[0].mxu0
  %v892 = vadd.f32 0.0, %v891
  %v893 = vpop.f32.mrb[0].mxu0
  %v894 = vadd.f32 0.0, %v893
  %v895 = vpop.f32.mrb[0].mxu0
  %v896 = vadd.f32 0.0, %v895
  %v897 = vpop.f32.mrb[0].mxu0
  %v898 = vadd.f32 0.0, %v897
  %899 = vmatprep.mubr.bf16.mxu0 0
  %900 = vmatmul.mubr.bf16.gmra.mrb[0].mxu0 %v597
  %v901 = vpop.f32.mrb[0].mxu0
  %v902 = vadd.f32 0.0, %v901
  %v903 = vpop.f32.mrb[0].mxu0
  %v904 = vadd.f32 0.0, %v903
  %v905 = vpop.f32.mrb[0].mxu0
  %v906 = vadd.f32 0.0, %v905
  %v907 = vpop.f32.mrb[0].mxu0
  %v908 = vadd.f32 0.0, %v907
  %909 = vmatprep.mubr.bf16.mxu0 0
  %910 = vmatmul.mubr.bf16.gmra.mrb[0].mxu0 %v600
  %v911 = vpop.f32.mrb[0].mxu0
  %v912 = vadd.f32 0.0, %v911
  %v913 = vpop.f32.mrb[0].mxu0
  %v914 = vadd.f32 0.0, %v913
  %v915 = vpop.f32.mrb[0].mxu0
  %v916 = vadd.f32 0.0, %v915
  %v917 = vpop.f32.mrb[0].mxu0
  %v918 = vadd.f32 0.0, %v917
  %919 = vmatprep.mubr.bf16.mxu0 0
  %920 = vmatmul.mubr.bf16.gmra.mrb[0].mxu0 %v603
  %v921 = vpop.f32.mrb[0].mxu0
  %v922 = vadd.f32 0.0, %v921
  %v923 = vpop.f32.mrb[0].mxu0
  %v924 = vadd.f32 0.0, %v923
  %v925 = vpop.f32.mrb[0].mxu0
  %v926 = vadd.f32 0.0, %v925
  %v927 = vpop.f32.mrb[0].mxu0
  %v928 = vadd.f32 0.0, %v927
  %929 = vmatprep.mubr.bf16.mxu0 0
  %930 = vmatmul.mubr.bf16.gmra.mrb[0].mxu0 %v606
  %v931 = vpop.f32.mrb[0].mxu0
  %v932 = vadd.f32 0.0, %v931
  %v933 = vpop.f32.mrb[0].mxu0
  %v934 = vadd.f32 0.0, %v933
  %v935 = vpop.f32.mrb[0].mxu0
  %v936 = vadd.f32 0.0, %v935
  %v937 = vpop.f32.mrb[0].mxu0
  %v938 = vadd.f32 0.0, %v937
  %939 = vmatprep.mubr.bf16.mxu0 0
  %940 = vmatmul.mubr.bf16.gmra.mrb[0].mxu0 %v609
  %v941 = vpop.f32.mrb[0].mxu0
  %v942 = vadd.f32 0.0, %v941
  %v943 = vpop.f32.mrb[0].mxu0
  %v944 = vadd.f32 0.0, %v943
  %v945 = vpop.f32.mrb[0].mxu0
  %v946 = vadd.f32 0.0, %v945
  %v947 = vpop.f32.mrb[0].mxu0
  %v948 = vadd.f32 0.0, %v947
  %949 = vmatprep.mubr.bf16.mxu0 0
  %950 = vmatmul.mubr.bf16.gmra.mrb[0].mxu0 %v612
  %v951 = vpop.f32.mrb[0].mxu0
  %v952 = vadd.f32 0.0, %v951
  %v953 = vpop.f32.mrb[0].mxu0
  %v954 = vadd.f32 0.0, %v953
  %v955 = vpop.f32.mrb[0].mxu0
  %v956 = vadd.f32 0.0, %v955
  %v957 = vpop.f32.mrb[0].mxu0
  %v958 = vadd.f32 0.0, %v957
  %959 = vmatprep.mubr.bf16.mxu0 0
  %960 = vmatmul.mubr.bf16.gmra.mrb[0].mxu0 %v615
  %v961 = vpop.f32.mrb[0].mxu0
  %v962 = vadd.f32 0.0, %v961
  %v963 = vpop.f32.mrb[0].mxu0
  %v964 = vadd.f32 0.0, %v963
  %v965 = vpop.f32.mrb[0].mxu0
  %v966 = vadd.f32 0.0, %v965
  %v967 = vpop.f32.mrb[0].mxu0
  %v968 = vadd.f32 0.0, %v967
  %969 = vdwg.mxu0
  %v970 = vadd.f32 %v144, %v652
  %v971 = vadd.f32 %v145, %v654
  %v972 = vadd.f32 %v146, %v656
  %v973 = vadd.f32 %v147, %v658
  %v974 = vadd.f32 %v148, %v662
  %v975 = vadd.f32 %v149, %v664
  %v976 = vadd.f32 %v150, %v666
  %v977 = vadd.f32 %v151, %v668
  %v978 = vadd.f32 %v152, %v672
  %v979 = vadd.f32 %v153, %v674
  %v980 = vadd.f32 %v154, %v676
  %v981 = vadd.f32 %v155, %v678
  %v982 = vadd.f32 %v156, %v682
  %v983 = vadd.f32 %v157, %v684
  %v984 = vadd.f32 %v158, %v686
  %v985 = vadd.f32 %v159, %v688
  %v986 = vadd.f32 %v160, %v692
  %v987 = vadd.f32 %v161, %v694
  %v988 = vadd.f32 %v162, %v696
  %v989 = vadd.f32 %v163, %v698
  %v990 = vadd.f32 %v164, %v702
  %v991 = vadd.f32 %v165, %v704
  %v992 = vadd.f32 %v166, %v706
  %v993 = vadd.f32 %v167, %v708
  %v994 = vadd.f32 %v168, %v712
  %v995 = vadd.f32 %v169, %v714
  %v996 = vadd.f32 %v170, %v716
  %v997 = vadd.f32 %v171, %v718
  %v998 = vadd.f32 %v172, %v722
  %v999 = vadd.f32 %v173, %v724
  %v1000 = vadd.f32 %v174, %v726
  %v1001 = vadd.f32 %v175, %v728
  %v1002 = vadd.f32 %v176, %v732
  %v1003 = vadd.f32 %v177, %v734
  %v1004 = vadd.f32 %v178, %v736
  %v1005 = vadd.f32 %v179, %v738
  %v1006 = vadd.f32 %v180, %v742
  %v1007 = vadd.f32 %v181, %v744
  %v1008 = vadd.f32 %v182, %v746
  %v1009 = vadd.f32 %v183, %v748
  %v1010 = vadd.f32 %v184, %v752
  %v1011 = vadd.f32 %v185, %v754
  %v1012 = vadd.f32 %v186, %v756
  %v1013 = vadd.f32 %v187, %v758
  %v1014 = vadd.f32 %v188, %v762
  %v1015 = vadd.f32 %v189, %v764
  %v1016 = vadd.f32 %v190, %v766
  %v1017 = vadd.f32 %v191, %v768
  %v1018 = vadd.f32 %v192, %v772
  %v1019 = vadd.f32 %v193, %v774
  %v1020 = vadd.f32 %v194, %v776
  %v1021 = vadd.f32 %v195, %v778
  %v1022 = vadd.f32 %v196, %v782
  %v1023 = vadd.f32 %v197, %v784
  %v1024 = vadd.f32 %v198, %v786
  %v1025 = vadd.f32 %v199, %v788
  %v1026 = vadd.f32 %v200, %v792
  %v1027 = vadd.f32 %v201, %v794
  %v1028 = vadd.f32 %v202, %v796
  %v1029 = vadd.f32 %v203, %v798
  %v1030 = vadd.f32 %v204, %v802
  %v1031 = vadd.f32 %v205, %v804
  %v1032 = vadd.f32 %v206, %v806
  %v1033 = vadd.f32 %v207, %v808
  %v1034 = vadd.f32 %v208, %v812
  %v1035 = vadd.f32 %v209, %v814
  %v1036 = vadd.f32 %v210, %v816
  %v1037 = vadd.f32 %v211, %v818
  %v1038 = vadd.f32 %v212, %v822
  %v1039 = vadd.f32 %v213, %v824
  %v1040 = vadd.f32 %v214, %v826
  %v1041 = vadd.f32 %v215, %v828
  %v1042 = vadd.f32 %v216, %v832
  %v1043 = vadd.f32 %v217, %v834
  %v1044 = vadd.f32 %v218, %v836
  %v1045 = vadd.f32 %v219, %v838
  %v1046 = vadd.f32 %v220, %v842
  %v1047 = vadd.f32 %v221, %v844
  %v1048 = vadd.f32 %v222, %v846
  %v1049 = vadd.f32 %v223, %v848
  %v1050 = vadd.f32 %v224, %v852
  %v1051 = vadd.f32 %v225, %v854
  %v1052 = vadd.f32 %v226, %v856
  %v1053 = vadd.f32 %v227, %v858
  %v1054 = vadd.f32 %v228, %v862
  %v1055 = vadd.f32 %v229, %v864
  %v1056 = vadd.f32 %v230, %v866
  %v1057 = vadd.f32 %v231, %v868
  %v1058 = vadd.f32 %v232, %v872
  %v1059 = vadd.f32 %v233, %v874
  %v1060 = vadd.f32 %v234, %v876
  %v1061 = vadd.f32 %v235, %v878
  %v1062 = vadd.f32 %v236, %v882
  %v1063 = vadd.f32 %v237, %v884
  %v1064 = vadd.f32 %v238, %v886
  %v1065 = vadd.f32 %v239, %v888
  %v1066 = vadd.f32 %v240, %v892
  %v1067 = vadd.f32 %v241, %v894
  %v1068 = vadd.f32 %v242, %v896
  %v1069 = vadd.f32 %v243, %v898
  %v1070 = vadd.f32 %v244, %v902
  %v1071 = vadd.f32 %v245, %v904
  %v1072 = vadd.f32 %v246, %v906
  %v1073 = vadd.f32 %v247, %v908
  %v1074 = vadd.f32 %v248, %v912
  %v1075 = vadd.f32 %v249, %v914
  %v1076 = vadd.f32 %v250, %v916
  %v1077 = vadd.f32 %v251, %v918
  %v1078 = vadd.f32 %v252, %v922
  %v1079 = vadd.f32 %v253, %v924
  %v1080 = vadd.f32 %v254, %v926
  %v1081 = vadd.f32 %v255, %v928
  %v1082 = vadd.f32 %v256, %v932
  %v1083 = vadd.f32 %v257, %v934
  %v1084 = vadd.f32 %v258, %v936
  %v1085 = vadd.f32 %v259, %v938
  %v1086 = vadd.f32 %v260, %v942
  %v1087 = vadd.f32 %v261, %v944
  %v1088 = vadd.f32 %v262, %v946
  %v1089 = vadd.f32 %v263, %v948
  %v1090 = vadd.f32 %v264, %v952
  %v1091 = vadd.f32 %v265, %v954
  %v1092 = vadd.f32 %v266, %v956
  %v1093 = vadd.f32 %v267, %v958
  %v1094 = vadd.f32 %v268, %v962
  %v1095 = vadd.f32 %v269, %v964
  %v1096 = vadd.f32 %v270, %v966
  %v1097 = vadd.f32 %v271, %v968
  %1098 = vst [vmem:[#allocation2] sm:$0xff] %v970
  %1099 = vst [vmem:[#allocation2 + $0x8] sm:$0xff] %v971
  %1100 = vst [vmem:[#allocation2 + $0x10] sm:$0xff] %v972
  %1101 = vst [vmem:[#allocation2 + $0x18] sm:$0xff] %v973
  %1102 = vst [vmem:[#allocation2 + $0x20] sm:$0xff] %v974
  %1103 = vst [vmem:[#allocation2 + $0x28] sm:$0xff] %v975
  %1104 = vst [vmem:[#allocation2 + $0x30] sm:$0xff] %v976
  %1105 = vst [vmem:[#allocation2 + $0x38] sm:$0xff] %v977
  %1106 = vst [vmem:[#allocation2 + $0x40] sm:$0xff] %v978
  %1107 = vst [vmem:[#allocation2 + $0x48] sm:$0xff] %v979
  %1108 = vst [vmem:[#allocation2 + $0x50] sm:$0xff] %v980
  %1109 = vst [vmem:[#allocation2 + $0x58] sm:$0xff] %v981
  %1110 = vst [vmem:[#allocation2 + $0x60] sm:$0xff] %v982
  %1111 = vst [vmem:[#allocation2 + $0x68] sm:$0xff] %v983
  %1112 = vst [vmem:[#allocation2 + $0x70] sm:$0xff] %v984
  %1113 = vst [vmem:[#allocation2 + $0x78] sm:$0xff] %v985
  %1114 = vst [vmem:[#allocation2 + $0x80] sm:$0xff] %v986
  %1115 = vst [vmem:[#allocation2 + $0x88] sm:$0xff] %v987
  %1116 = vst [vmem:[#allocation2 + $0x90] sm:$0xff] %v988
  %1117 = vst [vmem:[#allocation2 + $0x98] sm:$0xff] %v989
  %1118 = vst [vmem:[#allocation2 + $0xa0] sm:$0xff] %v990
  %1119 = vst [vmem:[#allocation2 + $0xa8] sm:$0xff] %v991
  %1120 = vst [vmem:[#allocation2 + $0xb0] sm:$0xff] %v992
  %1121 = vst [vmem:[#allocation2 + $0xb8] sm:$0xff] %v993
  %1122 = vst [vmem:[#allocation2 + $0xc0] sm:$0xff] %v994
  %1123 = vst [vmem:[#allocation2 + $0xc8] sm:$0xff] %v995
  %1124 = vst [vmem:[#allocation2 + $0xd0] sm:$0xff] %v996
  %1125 = vst [vmem:[#allocation2 + $0xd8] sm:$0xff] %v997
  %1126 = vst [vmem:[#allocation2 + $0xe0] sm:$0xff] %v998
  %1127 = vst [vmem:[#allocation2 + $0xe8] sm:$0xff] %v999
  %1128 = vst [vmem:[#allocation2 + $0xf0] sm:$0xff] %v1000
  %1129 = vst [vmem:[#allocation2 + $0xf8] sm:$0xff] %v1001
  %1130 = vst [vmem:[#allocation2 + $0x100] sm:$0xff] %v1002
  %1131 = vst [vmem:[#allocation2 + $0x108] sm:$0xff] %v1003
  %1132 = vst [vmem:[#allocation2 + $0x110] sm:$0xff] %v1004
  %1133 = vst [vmem:[#allocation2 + $0x118] sm:$0xff] %v1005
  %1134 = vst [vmem:[#allocation2 + $0x120] sm:$0xff] %v1006
  %1135 = vst [vmem:[#allocation2 + $0x128] sm:$0xff] %v1007
  %1136 = vst [vmem:[#allocation2 + $0x130] sm:$0xff] %v1008
  %1137 = vst [vmem:[#allocation2 + $0x138] sm:$0xff] %v1009
  %1138 = vst [vmem:[#allocation2 + $0x140] sm:$0xff] %v1010
  %1139 = vst [vmem:[#allocation2 + $0x148] sm:$0xff] %v1011
  %1140 = vst [vmem:[#allocation2 + $0x150] sm:$0xff] %v1012
  %1141 = vst [vmem:[#allocation2 + $0x158] sm:$0xff] %v1013
  %1142 = vst [vmem:[#allocation2 + $0x160] sm:$0xff] %v1014
  %1143 = vst [vmem:[#allocation2 + $0x168] sm:$0xff] %v1015
  %1144 = vst [vmem:[#allocation2 + $0x170] sm:$0xff] %v1016
  %1145 = vst [vmem:[#allocation2 + $0x178] sm:$0xff] %v1017
  %1146 = vst [vmem:[#allocation2 + $0x180] sm:$0xff] %v1018
  %1147 = vst [vmem:[#allocation2 + $0x188] sm:$0xff] %v1019
  %1148 = vst [vmem:[#allocation2 + $0x190] sm:$0xff] %v1020
  %1149 = vst [vmem:[#allocation2 + $0x198] sm:$0xff] %v1021
  %1150 = vst [vmem:[#allocation2 + $0x1a0] sm:$0xff] %v1022
  %1151 = vst [vmem:[#allocation2 + $0x1a8] sm:$0xff] %v1023
  %1152 = vst [vmem:[#allocation2 + $0x1b0] sm:$0xff] %v1024
  %1153 = vst [vmem:[#allocation2 + $0x1b8] sm:$0xff] %v1025
  %1154 = vst [vmem:[#allocation2 + $0x1c0] sm:$0xff] %v1026
  %1155 = vst [vmem:[#allocation2 + $0x1c8] sm:$0xff] %v1027
  %1156 = vst [vmem:[#allocation2 + $0x1d0] sm:$0xff] %v1028
  %1157 = vst [vmem:[#allocation2 + $0x1d8] sm:$0xff] %v1029
  %1158 = vst [vmem:[#allocation2 + $0x1e0] sm:$0xff] %v1030
  %1159 = vst [vmem:[#allocation2 + $0x1e8] sm:$0xff] %v1031
  %1160 = vst [vmem:[#allocation2 + $0x1f0] sm:$0xff] %v1032
  %1161 = vst [vmem:[#allocation2 + $0x1f8] sm:$0xff] %v1033
  %1162 = vst [vmem:[#allocation2 + $0x200] sm:$0xff] %v1034
  %1163 = vst [vmem:[#allocation2 + $0x208] sm:$0xff] %v1035
  %1164 = vst [vmem:[#allocation2 + $0x210] sm:$0xff] %v1036
  %1165 = vst [vmem:[#allocation2 + $0x218] sm:$0xff] %v1037
  %1166 = vst [vmem:[#allocation2 + $0x220] sm:$0xff] %v1038
  %1167 = vst [vmem:[#allocation2 + $0x228] sm:$0xff] %v1039
  %1168 = vst [vmem:[#allocation2 + $0x230] sm:$0xff] %v1040
  %1169 = vst [vmem:[#allocation2 + $0x238] sm:$0xff] %v1041
  %1170 = vst [vmem:[#allocation2 + $0x240] sm:$0xff] %v1042
  %1171 = vst [vmem:[#allocation2 + $0x248] sm:$0xff] %v1043
  %1172 = vst [vmem:[#allocation2 + $0x250] sm:$0xff] %v1044
  %1173 = vst [vmem:[#allocation2 + $0x258] sm:$0xff] %v1045
  %1174 = vst [vmem:[#allocation2 + $0x260] sm:$0xff] %v1046
  %1175 = vst [vmem:[#allocation2 + $0x268] sm:$0xff] %v1047
  %1176 = vst [vmem:[#allocation2 + $0x270] sm:$0xff] %v1048
  %1177 = vst [vmem:[#allocation2 + $0x278] sm:$0xff] %v1049
  %1178 = vst [vmem:[#allocation2 + $0x280] sm:$0xff] %v1050
  %1179 = vst [vmem:[#allocation2 + $0x288] sm:$0xff] %v1051
  %1180 = vst [vmem:[#allocation2 + $0x290] sm:$0xff] %v1052
  %1181 = vst [vmem:[#allocation2 + $0x298] sm:$0xff] %v1053
  %1182 = vst [vmem:[#allocation2 + $0x2a0] sm:$0xff] %v1054
  %1183 = vst [vmem:[#allocation2 + $0x2a8] sm:$0xff] %v1055
  %1184 = vst [vmem:[#allocation2 + $0x2b0] sm:$0xff] %v1056
  %1185 = vst [vmem:[#allocation2 + $0x2b8] sm:$0xff] %v1057
  %1186 = vst [vmem:[#allocation2 + $0x2c0] sm:$0xff] %v1058
  %1187 = vst [vmem:[#allocation2 + $0x2c8] sm:$0xff] %v1059
  %1188 = vst [vmem:[#allocation2 + $0x2d0] sm:$0xff] %v1060
  %1189 = vst [vmem:[#allocation2 + $0x2d8] sm:$0xff] %v1061
  %1190 = vst [vmem:[#allocation2 + $0x2e0] sm:$0xff] %v1062
  %1191 = vst [vmem:[#allocation2 + $0x2e8] sm:$0xff] %v1063
  %1192 = vst [vmem:[#allocation2 + $0x2f0] sm:$0xff] %v1064
  %1193 = vst [vmem:[#allocation2 + $0x2f8] sm:$0xff] %v1065
  %1194 = vst [vmem:[#allocation2 + $0x300] sm:$0xff] %v1066
  %1195 = vst [vmem:[#allocation2 + $0x308] sm:$0xff] %v1067
  %1196 = vst [vmem:[#allocation2 + $0x310] sm:$0xff] %v1068
  %1197 = vst [vmem:[#allocation2 + $0x318] sm:$0xff] %v1069
  %1198 = vst [vmem:[#allocation2 + $0x320] sm:$0xff] %v1070
  %1199 = vst [vmem:[#allocation2 + $0x328] sm:$0xff] %v1071
  %1200 = vst [vmem:[#allocation2 + $0x330] sm:$0xff] %v1072
  %1201 = vst [vmem:[#allocation2 + $0x338] sm:$0xff] %v1073
  %1202 = vst [vmem:[#allocation2 + $0x340] sm:$0xff] %v1074
  %1203 = vst [vmem:[#allocation2 + $0x348] sm:$0xff] %v1075
  %1204 = vst [vmem:[#allocation2 + $0x350] sm:$0xff] %v1076
  %1205 = vst [vmem:[#allocation2 + $0x358] sm:$0xff] %v1077
  %1206 = vst [vmem:[#allocation2 + $0x360] sm:$0xff] %v1078
  %1207 = vst [vmem:[#allocation2 + $0x368] sm:$0xff] %v1079
  %1208 = vst [vmem:[#allocation2 + $0x370] sm:$0xff] %v1080
  %1209 = vst [vmem:[#allocation2 + $0x378] sm:$0xff] %v1081
  %1210 = vst [vmem:[#allocation2 + $0x380] sm:$0xff] %v1082
  %1211 = vst [vmem:[#allocation2 + $0x388] sm:$0xff] %v1083
  %1212 = vst [vmem:[#allocation2 + $0x390] sm:$0xff] %v1084
  %1213 = vst [vmem:[#allocation2 + $0x398] sm:$0xff] %v1085
  %1214 = vst [vmem:[#allocation2 + $0x3a0] sm:$0xff] %v1086
  %1215 = vst [vmem:[#allocation2 + $0x3a8] sm:$0xff] %v1087
  %1216 = vst [vmem:[#allocation2 + $0x3b0] sm:$0xff] %v1088
  %1217 = vst [vmem:[#allocation2 + $0x3b8] sm:$0xff] %v1089
  %1218 = vst [vmem:[#allocation2 + $0x3c0] sm:$0xff] %v1090
  %1219 = vst [vmem:[#allocation2 + $0x3c8] sm:$0xff] %v1091
  %1220 = vst [vmem:[#allocation2 + $0x3d0] sm:$0xff] %v1092
  %1221 = vst [vmem:[#allocation2 + $0x3d8] sm:$0xff] %v1093
  %1222 = vst [vmem:[#allocation2 + $0x3e0] sm:$0xff] %v1094
  %1223 = vst [vmem:[#allocation2 + $0x3e8] sm:$0xff] %v1095
  %1224 = vst [vmem:[#allocation2 + $0x3f0] sm:$0xff] %v1096
  %1225 = vst [vmem:[#allocation2 + $0x3f8] sm:$0xff] %v1097
  // Predicated region
  $region14: #{generator_forward.16} parent=0 // pred_check
    %p1226 = pneg %p12
  $region15: #{generator_forward.16} parent=0 // pred_check_branch
    %1228 = sbr.rel (%p1226) target = $region17
  $region16: #{generator_forward.16} parent=0 // pred_region
    %v1229 = vld [vmem:[#allocation2] sm:$0xff]
    %v1230 = vld [vmem:[#allocation2 + $0x8] sm:$0xff]
    %v1231 = vld [vmem:[#allocation2 + $0x10] sm:$0xff]
    %v1232 = vld [vmem:[#allocation2 + $0x18] sm:$0xff]
    %v1233 = vld [vmem:[#allocation2 + $0x20] sm:$0xff]
    %v1234 = vld [vmem:[#allocation2 + $0x28] sm:$0xff]
    %v1235 = vld [vmem:[#allocation2 + $0x30] sm:$0xff]
    %v1236 = vld [vmem:[#allocation2 + $0x38] sm:$0xff]
    %v1237 = vld [vmem:[#allocation2 + $0x40] sm:$0xff]
    %v1238 = vld [vmem:[#allocation2 + $0x48] sm:$0xff]
    %v1239 = vld [vmem:[#allocation2 + $0x50] sm:$0xff]
    %v1240 = vld [vmem:[#allocation2 + $0x58] sm:$0xff]
    %v1241 = vld [vmem:[#allocation2 + $0x60] sm:$0xff]
    %v1242 = vld [vmem:[#allocation2 + $0x68] sm:$0xff]
    %v1243 = vld [vmem:[#allocation2 + $0x70] sm:$0xff]
    %v1244 = vld [vmem:[#allocation2 + $0x78] sm:$0xff]
    %v1245 = vld [vmem:[#allocation2 + $0x80] sm:$0xff]
    %v1246 = vld [vmem:[#allocation2 + $0x88] sm:$0xff]
    %v1247 = vld [vmem:[#allocation2 + $0x90] sm:$0xff]
    %v1248 = vld [vmem:[#allocation2 + $0x98] sm:$0xff]
    %v1249 = vld [vmem:[#allocation2 + $0xa0] sm:$0xff]
    %v1250 = vld [vmem:[#allocation2 + $0xa8] sm:$0xff]
    %v1251 = vld [vmem:[#allocation2 + $0xb0] sm:$0xff]
    %v1252 = vld [vmem:[#allocation2 + $0xb8] sm:$0xff]
    %v1253 = vld [vmem:[#allocation2 + $0xc0] sm:$0xff]
    %v1254 = vld [vmem:[#allocation2 + $0xc8] sm:$0xff]
    %v1255 = vld [vmem:[#allocation2 + $0xd0] sm:$0xff]
    %v1256 = vld [vmem:[#allocation2 + $0xd8] sm:$0xff]
    %v1257 = vld [vmem:[#allocation2 + $0xe0] sm:$0xff]
    %v1258 = vld [vmem:[#allocation2 + $0xe8] sm:$0xff]
    %v1259 = vld [vmem:[#allocation2 + $0xf0] sm:$0xff]
    %v1260 = vld [vmem:[#allocation2 + $0xf8] sm:$0xff]
    %v1261 = vld [vmem:[#allocation2 + $0x100] sm:$0xff]
    %v1262 = vld [vmem:[#allocation2 + $0x108] sm:$0xff]
    %v1263 = vld [vmem:[#allocation2 + $0x110] sm:$0xff]
    %v1264 = vld [vmem:[#allocation2 + $0x118] sm:$0xff]
    %v1265 = vld [vmem:[#allocation2 + $0x120] sm:$0xff]
    %v1266 = vld [vmem:[#allocation2 + $0x128] sm:$0xff]
    %v1267 = vld [vmem:[#allocation2 + $0x130] sm:$0xff]
    %v1268 = vld [vmem:[#allocation2 + $0x138] sm:$0xff]
    %v1269 = vld [vmem:[#allocation2 + $0x140] sm:$0xff]
    %v1270 = vld [vmem:[#allocation2 + $0x148] sm:$0xff]
    %v1271 = vld [vmem:[#allocation2 + $0x150] sm:$0xff]
    %v1272 = vld [vmem:[#allocation2 + $0x158] sm:$0xff]
    %v1273 = vld [vmem:[#allocation2 + $0x160] sm:$0xff]
    %v1274 = vld [vmem:[#allocation2 + $0x168] sm:$0xff]
    %v1275 = vld [vmem:[#allocation2 + $0x170] sm:$0xff]
    %v1276 = vld [vmem:[#allocation2 + $0x178] sm:$0xff]
    %v1277 = vld [vmem:[#allocation2 + $0x180] sm:$0xff]
    %v1278 = vld [vmem:[#allocation2 + $0x188] sm:$0xff]
    %v1279 = vld [vmem:[#allocation2 + $0x190] sm:$0xff]
    %v1280 = vld [vmem:[#allocation2 + $0x198] sm:$0xff]
    %v1281 = vld [vmem:[#allocation2 + $0x1a0] sm:$0xff]
    %v1282 = vld [vmem:[#allocation2 + $0x1a8] sm:$0xff]
    %v1283 = vld [vmem:[#allocation2 + $0x1b0] sm:$0xff]
    %v1284 = vld [vmem:[#allocation2 + $0x1b8] sm:$0xff]
    %v1285 = vld [vmem:[#allocation2 + $0x1c0] sm:$0xff]
    %v1286 = vld [vmem:[#allocation2 + $0x1c8] sm:$0xff]
    %v1287 = vld [vmem:[#allocation2 + $0x1d0] sm:$0xff]
    %v1288 = vld [vmem:[#allocation2 + $0x1d8] sm:$0xff]
    %v1289 = vld [vmem:[#allocation2 + $0x1e0] sm:$0xff]
    %v1290 = vld [vmem:[#allocation2 + $0x1e8] sm:$0xff]
    %v1291 = vld [vmem:[#allocation2 + $0x1f0] sm:$0xff]
    %v1292 = vld [vmem:[#allocation2 + $0x1f8] sm:$0xff]
    %v1293 = vld [vmem:[#allocation2 + $0x200] sm:$0xff]
    %v1294 = vld [vmem:[#allocation2 + $0x208] sm:$0xff]
    %v1295 = vld [vmem:[#allocation2 + $0x210] sm:$0xff]
    %v1296 = vld [vmem:[#allocation2 + $0x218] sm:$0xff]
    %v1297 = vld [vmem:[#allocation2 + $0x220] sm:$0xff]
    %v1298 = vld [vmem:[#allocation2 + $0x228] sm:$0xff]
    %v1299 = vld [vmem:[#allocation2 + $0x230] sm:$0xff]
    %v1300 = vld [vmem:[#allocation2 + $0x238] sm:$0xff]
    %v1301 = vld [vmem:[#allocation2 + $0x240] sm:$0xff]
    %v1302 = vld [vmem:[#allocation2 + $0x248] sm:$0xff]
    %v1303 = vld [vmem:[#allocation2 + $0x250] sm:$0xff]
    %v1304 = vld [vmem:[#allocation2 + $0x258] sm:$0xff]
    %v1305 = vld [vmem:[#allocation2 + $0x260] sm:$0xff]
    %v1306 = vld [vmem:[#allocation2 + $0x268] sm:$0xff]
    %v1307 = vld [vmem:[#allocation2 + $0x270] sm:$0xff]
    %v1308 = vld [vmem:[#allocation2 + $0x278] sm:$0xff]
    %v1309 = vld [vmem:[#allocation2 + $0x280] sm:$0xff]
    %v1310 = vld [vmem:[#allocation2 + $0x288] sm:$0xff]
    %v1311 = vld [vmem:[#allocation2 + $0x290] sm:$0xff]
    %v1312 = vld [vmem:[#allocation2 + $0x298] sm:$0xff]
    %v1313 = vld [vmem:[#allocation2 + $0x2a0] sm:$0xff]
    %v1314 = vld [vmem:[#allocation2 + $0x2a8] sm:$0xff]
    %v1315 = vld [vmem:[#allocation2 + $0x2b0] sm:$0xff]
    %v1316 = vld [vmem:[#allocation2 + $0x2b8] sm:$0xff]
    %v1317 = vld [vmem:[#allocation2 + $0x2c0] sm:$0xff]
    %v1318 = vld [vmem:[#allocation2 + $0x2c8] sm:$0xff]
    %v1319 = vld [vmem:[#allocation2 + $0x2d0] sm:$0xff]
    %v1320 = vld [vmem:[#allocation2 + $0x2d8] sm:$0xff]
    %v1321 = vld [vmem:[#allocation2 + $0x2e0] sm:$0xff]
    %v1322 = vld [vmem:[#allocation2 + $0x2e8] sm:$0xff]
    %v1323 = vld [vmem:[#allocation2 + $0x2f0] sm:$0xff]
    %v1324 = vld [vmem:[#allocation2 + $0x2f8] sm:$0xff]
    %v1325 = vld [vmem:[#allocation2 + $0x300] sm:$0xff]
    %v1326 = vld [vmem:[#allocation2 + $0x308] sm:$0xff]
    %v1327 = vld [vmem:[#allocation2 + $0x310] sm:$0xff]
    %v1328 = vld [vmem:[#allocation2 + $0x318] sm:$0xff]
    %v1329 = vld [vmem:[#allocation2 + $0x320] sm:$0xff]
    %v1330 = vld [vmem:[#allocation2 + $0x328] sm:$0xff]
    %v1331 = vld [vmem:[#allocation2 + $0x330] sm:$0xff]
    %v1332 = vld [vmem:[#allocation2 + $0x338] sm:$0xff]
    %v1333 = vld [vmem:[#allocation2 + $0x340] sm:$0xff]
    %v1334 = vld [vmem:[#allocation2 + $0x348] sm:$0xff]
    %v1335 = vld [vmem:[#allocation2 + $0x350] sm:$0xff]
    %v1336 = vld [vmem:[#allocation2 + $0x358] sm:$0xff]
    %v1337 = vld [vmem:[#allocation2 + $0x360] sm:$0xff]
    %v1338 = vld [vmem:[#allocation2 + $0x368] sm:$0xff]
    %v1339 = vld [vmem:[#allocation2 + $0x370] sm:$0xff]
    %v1340 = vld [vmem:[#allocation2 + $0x378] sm:$0xff]
    %v1341 = vld [vmem:[#allocation2 + $0x380] sm:$0xff]
    %v1342 = vld [vmem:[#allocation2 + $0x388] sm:$0xff]
    %v1343 = vld [vmem:[#allocation2 + $0x390] sm:$0xff]
    %v1344 = vld [vmem:[#allocation2 + $0x398] sm:$0xff]
    %v1345 = vld [vmem:[#allocation2 + $0x3a0] sm:$0xff]
    %v1346 = vld [vmem:[#allocation2 + $0x3a8] sm:$0xff]
    %v1347 = vld [vmem:[#allocation2 + $0x3b0] sm:$0xff]
    %v1348 = vld [vmem:[#allocation2 + $0x3b8] sm:$0xff]
    %v1349 = vld [vmem:[#allocation2 + $0x3c0] sm:$0xff]
    %v1350 = vld [vmem:[#allocation2 + $0x3c8] sm:$0xff]
    %v1351 = vld [vmem:[#allocation2 + $0x3d0] sm:$0xff]
    %v1352 = vld [vmem:[#allocation2 + $0x3d8] sm:$0xff]
    %v1353 = vld [vmem:[#allocation2 + $0x3e0] sm:$0xff]
    %v1354 = vld [vmem:[#allocation2 + $0x3e8] sm:$0xff]
    %v1355 = vld [vmem:[#allocation2 + $0x3f0] sm:$0xff]
    %v1356 = vld [vmem:[#allocation2 + $0x3f8] sm:$0xff]
    %1357 = vst [vmem:[%s2] sm:$0xff] %v1229
    %1358 = vst [vmem:[%s2 + $0x8] sm:$0xff] %v1230
    %1359 = vst [vmem:[%s2 + $0x10] sm:$0xff] %v1231
    %1360 = vst [vmem:[%s2 + $0x18] sm:$0xff] %v1232
    %1361 = vst [vmem:[%s2 + $0x20] sm:$0xff] %v1233
    %1362 = vst [vmem:[%s2 + $0x28] sm:$0xff] %v1234
    %1363 = vst [vmem:[%s2 + $0x30] sm:$0xff] %v1235
    %1364 = vst [vmem:[%s2 + $0x38] sm:$0xff] %v1236
    %1365 = vst [vmem:[%s2 + $0x40] sm:$0xff] %v1237
    %1366 = vst [vmem:[%s2 + $0x48] sm:$0xff] %v1238
    %1367 = vst [vmem:[%s2 + $0x50] sm:$0xff] %v1239
    %1368 = vst [vmem:[%s2 + $0x58] sm:$0xff] %v1240
    %1369 = vst [vmem:[%s2 + $0x60] sm:$0xff] %v1241
    %1370 = vst [vmem:[%s2 + $0x68] sm:$0xff] %v1242
    %1371 = vst [vmem:[%s2 + $0x70] sm:$0xff] %v1243
    %1372 = vst [vmem:[%s2 + $0x78] sm:$0xff] %v1244
    %1373 = vst [vmem:[%s2 + $0x80] sm:$0xff] %v1245
    %1374 = vst [vmem:[%s2 + $0x88] sm:$0xff] %v1246
    %1375 = vst [vmem:[%s2 + $0x90] sm:$0xff] %v1247
    %1376 = vst [vmem:[%s2 + $0x98] sm:$0xff] %v1248
    %1377 = vst [vmem:[%s2 + $0xa0] sm:$0xff] %v1249
    %1378 = vst [vmem:[%s2 + $0xa8] sm:$0xff] %v1250
    %1379 = vst [vmem:[%s2 + $0xb0] sm:$0xff] %v1251
    %1380 = vst [vmem:[%s2 + $0xb8] sm:$0xff] %v1252
    %1381 = vst [vmem:[%s2 + $0xc0] sm:$0xff] %v1253
    %1382 = vst [vmem:[%s2 + $0xc8] sm:$0xff] %v1254
    %1383 = vst [vmem:[%s2 + $0xd0] sm:$0xff] %v1255
    %1384 = vst [vmem:[%s2 + $0xd8] sm:$0xff] %v1256
    %1385 = vst [vmem:[%s2 + $0xe0] sm:$0xff] %v1257
    %1386 = vst [vmem:[%s2 + $0xe8] sm:$0xff] %v1258
    %1387 = vst [vmem:[%s2 + $0xf0] sm:$0xff] %v1259
    %1388 = vst [vmem:[%s2 + $0xf8] sm:$0xff] %v1260
    %1389 = vst [vmem:[%s2 + $0x100] sm:$0xff] %v1261
    %1390 = vst [vmem:[%s2 + $0x108] sm:$0xff] %v1262
    %1391 = vst [vmem:[%s2 + $0x110] sm:$0xff] %v1263
    %1392 = vst [vmem:[%s2 + $0x118] sm:$0xff] %v1264
    %1393 = vst [vmem:[%s2 + $0x120] sm:$0xff] %v1265
    %1394 = vst [vmem:[%s2 + $0x128] sm:$0xff] %v1266
    %1395 = vst [vmem:[%s2 + $0x130] sm:$0xff] %v1267
    %1396 = vst [vmem:[%s2 + $0x138] sm:$0xff] %v1268
    %1397 = vst [vmem:[%s2 + $0x140] sm:$0xff] %v1269
    %1398 = vst [vmem:[%s2 + $0x148] sm:$0xff] %v1270
    %1399 = vst [vmem:[%s2 + $0x150] sm:$0xff] %v1271
    %1400 = vst [vmem:[%s2 + $0x158] sm:$0xff] %v1272
    %1401 = vst [vmem:[%s2 + $0x160] sm:$0xff] %v1273
    %1402 = vst [vmem:[%s2 + $0x168] sm:$0xff] %v1274
    %1403 = vst [vmem:[%s2 + $0x170] sm:$0xff] %v1275
    %1404 = vst [vmem:[%s2 + $0x178] sm:$0xff] %v1276
    %1405 = vst [vmem:[%s2 + $0x180] sm:$0xff] %v1277
    %1406 = vst [vmem:[%s2 + $0x188] sm:$0xff] %v1278
    %1407 = vst [vmem:[%s2 + $0x190] sm:$0xff] %v1279
    %1408 = vst [vmem:[%s2 + $0x198] sm:$0xff] %v1280
    %1409 = vst [vmem:[%s2 + $0x1a0] sm:$0xff] %v1281
    %1410 = vst [vmem:[%s2 + $0x1a8] sm:$0xff] %v1282
    %1411 = vst [vmem:[%s2 + $0x1b0] sm:$0xff] %v1283
    %1412 = vst [vmem:[%s2 + $0x1b8] sm:$0xff] %v1284
    %1413 = vst [vmem:[%s2 + $0x1c0] sm:$0xff] %v1285
    %1414 = vst [vmem:[%s2 + $0x1c8] sm:$0xff] %v1286
    %1415 = vst [vmem:[%s2 + $0x1d0] sm:$0xff] %v1287
    %1416 = vst [vmem:[%s2 + $0x1d8] sm:$0xff] %v1288
    %1417 = vst [vmem:[%s2 + $0x1e0] sm:$0xff] %v1289
    %1418 = vst [vmem:[%s2 + $0x1e8] sm:$0xff] %v1290
    %1419 = vst [vmem:[%s2 + $0x1f0] sm:$0xff] %v1291
    %1420 = vst [vmem:[%s2 + $0x1f8] sm:$0xff] %v1292
    %1421 = vst [vmem:[%s2 + $0x200] sm:$0xff] %v1293
    %1422 = vst [vmem:[%s2 + $0x208] sm:$0xff] %v1294
    %1423 = vst [vmem:[%s2 + $0x210] sm:$0xff] %v1295
    %1424 = vst [vmem:[%s2 + $0x218] sm:$0xff] %v1296
    %1425 = vst [vmem:[%s2 + $0x220] sm:$0xff] %v1297
    %1426 = vst [vmem:[%s2 + $0x228] sm:$0xff] %v1298
    %1427 = vst [vmem:[%s2 + $0x230] sm:$0xff] %v1299
    %1428 = vst [vmem:[%s2 + $0x238] sm:$0xff] %v1300
    %1429 = vst [vmem:[%s2 + $0x240] sm:$0xff] %v1301
    %1430 = vst [vmem:[%s2 + $0x248] sm:$0xff] %v1302
    %1431 = vst [vmem:[%s2 + $0x250] sm:$0xff] %v1303
    %1432 = vst [vmem:[%s2 + $0x258] sm:$0xff] %v1304
    %1433 = vst [vmem:[%s2 + $0x260] sm:$0xff] %v1305
    %1434 = vst [vmem:[%s2 + $0x268] sm:$0xff] %v1306
    %1435 = vst [vmem:[%s2 + $0x270] sm:$0xff] %v1307
    %1436 = vst [vmem:[%s2 + $0x278] sm:$0xff] %v1308
    %1437 = vst [vmem:[%s2 + $0x280] sm:$0xff] %v1309
    %1438 = vst [vmem:[%s2 + $0x288] sm:$0xff] %v1310
    %1439 = vst [vmem:[%s2 + $0x290] sm:$0xff] %v1311
    %1440 = vst [vmem:[%s2 + $0x298] sm:$0xff] %v1312
    %1441 = vst [vmem:[%s2 + $0x2a0] sm:$0xff] %v1313
    %1442 = vst [vmem:[%s2 + $0x2a8] sm:$0xff] %v1314
    %1443 = vst [vmem:[%s2 + $0x2b0] sm:$0xff] %v1315
    %1444 = vst [vmem:[%s2 + $0x2b8] sm:$0xff] %v1316
    %1445 = vst [vmem:[%s2 + $0x2c0] sm:$0xff] %v1317
    %1446 = vst [vmem:[%s2 + $0x2c8] sm:$0xff] %v1318
    %1447 = vst [vmem:[%s2 + $0x2d0] sm:$0xff] %v1319
    %1448 = vst [vmem:[%s2 + $0x2d8] sm:$0xff] %v1320
    %1449 = vst [vmem:[%s2 + $0x2e0] sm:$0xff] %v1321
    %1450 = vst [vmem:[%s2 + $0x2e8] sm:$0xff] %v1322
    %1451 = vst [vmem:[%s2 + $0x2f0] sm:$0xff] %v1323
    %1452 = vst [vmem:[%s2 + $0x2f8] sm:$0xff] %v1324
    %1453 = vst [vmem:[%s2 + $0x300] sm:$0xff] %v1325
    %1454 = vst [vmem:[%s2 + $0x308] sm:$0xff] %v1326
    %1455 = vst [vmem:[%s2 + $0x310] sm:$0xff] %v1327
    %1456 = vst [vmem:[%s2 + $0x318] sm:$0xff] %v1328
    %1457 = vst [vmem:[%s2 + $0x320] sm:$0xff] %v1329
    %1458 = vst [vmem:[%s2 + $0x328] sm:$0xff] %v1330
    %1459 = vst [vmem:[%s2 + $0x330] sm:$0xff] %v1331
    %1460 = vst [vmem:[%s2 + $0x338] sm:$0xff] %v1332
    %1461 = vst [vmem:[%s2 + $0x340] sm:$0xff] %v1333
    %1462 = vst [vmem:[%s2 + $0x348] sm:$0xff] %v1334
    %1463 = vst [vmem:[%s2 + $0x350] sm:$0xff] %v1335
    %1464 = vst [vmem:[%s2 + $0x358] sm:$0xff] %v1336
    %1465 = vst [vmem:[%s2 + $0x360] sm:$0xff] %v1337
    %1466 = vst [vmem:[%s2 + $0x368] sm:$0xff] %v1338
    %1467 = vst [vmem:[%s2 + $0x370] sm:$0xff] %v1339
    %1468 = vst [vmem:[%s2 + $0x378] sm:$0xff] %v1340
    %1469 = vst [vmem:[%s2 + $0x380] sm:$0xff] %v1341
    %1470 = vst [vmem:[%s2 + $0x388] sm:$0xff] %v1342
    %1471 = vst [vmem:[%s2 + $0x390] sm:$0xff] %v1343
    %1472 = vst [vmem:[%s2 + $0x398] sm:$0xff] %v1344
    %1473 = vst [vmem:[%s2 + $0x3a0] sm:$0xff] %v1345
    %1474 = vst [vmem:[%s2 + $0x3a8] sm:$0xff] %v1346
    %1475 = vst [vmem:[%s2 + $0x3b0] sm:$0xff] %v1347
    %1476 = vst [vmem:[%s2 + $0x3b8] sm:$0xff] %v1348
    %1477 = vst [vmem:[%s2 + $0x3c0] sm:$0xff] %v1349
    %1478 = vst [vmem:[%s2 + $0x3c8] sm:$0xff] %v1350
    %1479 = vst [vmem:[%s2 + $0x3d0] sm:$0xff] %v1351
    %1480 = vst [vmem:[%s2 + $0x3d8] sm:$0xff] %v1352
    %1481 = vst [vmem:[%s2 + $0x3e0] sm:$0xff] %v1353
    %1482 = vst [vmem:[%s2 + $0x3e8] sm:$0xff] %v1354
    %1483 = vst [vmem:[%s2 + $0x3f0] sm:$0xff] %v1355
    %1484 = vst [vmem:[%s2 + $0x3f8] sm:$0xff] %v1356
  $region17: #{generator_forward.16} parent=0 // pred_fallthru
    _
  // Predicated region
  $region18: #{generator_forward.16} parent=0 // pred_check
    _
  $region19: #{generator_forward.16} parent=0 // pred_check_branch
    %1486 = sbr.rel (0) target = $region21
  $region20: #{generator_forward.16} parent=0 // pred_region
    _
  $region21: #{generator_forward.16} parent=0 // pred_fallthru
    _
  // Predicated region
  $region22: #{generator_forward.16} parent=0 // pred_check
    _
  $region23: #{generator_forward.16} parent=0 // pred_check_branch
    %1488 = sbr.rel (0) target = $region25
  $region24: #{generator_forward.16} parent=0 // pred_region
    _
  $region25: #{generator_forward.16} parent=0 // pred_fallthru
    _

// kernel: tile.57
$region0: #{tile.57}
  #allocation0 [shape = 's32[1]{0}', space=sflag, size = 0x4, scoped, tag = 'scoped memory for tile.57']
  %s0 = inlined_call_operand.vmem [shape: f32[16], index: 0, kind: input, shape index: {}]
  %s1 = inlined_call_operand.vmem [shape: f32[8,16], index: 1, kind: output, shape index: {}]
  // Predicated region
  $region2: #{tile.57} parent=0 // pred_check
    _
  $region3: #{tile.57} parent=0 // pred_check_branch
    %3 = sbr.rel (0) target = $region5
  $region4: #{tile.57} parent=0 // pred_region
    _
  $region5: #{tile.57} parent=0 // pred_fallthru
    _
  %v4 = vld [vmem:[%s0] ss:$0 sm:$0xff]
  %5 = vst [vmem:[%s1] sm:$0xff] %v4

// kernel: tile.58
$region0: #{tile.58}
  %s0 = inlined_call_operand.vmem [shape: f32[8,16], index: 0, kind: input, shape index: {}]
  %s1 = inlined_call_operand.vmem [shape: f32[1,128], index: 1, kind: output, shape index: {}]
  $region1: #{tile.58} parent=0
    #allocation0 [shape = 'u8[4096]{0}', space=vmem, size = 0x1000, scoped, tag = 'scoped mem for output reshape']
    %v2 = vld [vmem:[%s0] sm:$0x1]
    %vm3 = vcmask 130048
    %4 = vst.msk [vmem:[#allocation0] sm:$0x1] %vm3, %v2
    %s5 = scalar_lea.vmem %s0, 7
    %v6 = vld [vmem:[%s5] sm:$0x1]
    %7 = vrot.lane.b32.xlu0 %v6, 112
    %v8 = vpop.permute.xlu0 %7
    %vm9 = vcmask 1048448
    %10 = vst.msk [vmem:[#allocation0] sm:$0x1] %vm9, %v8
    %s11 = scalar_lea.vmem %s0, 6
    %v12 = vld [vmem:[%s11] sm:$0x1]
    %13 = vrot.lane.b32.xlu0 %v12, 96
    %v14 = vpop.permute.xlu0 %13
    %vm15 = vcmask 917248
    %16 = vst.msk [vmem:[#allocation0] sm:$0x1] %vm15, %v14
    %s17 = scalar_lea.vmem %s0, 5
    %v18 = vld [vmem:[%s17] sm:$0x1]
    %19 = vrot.lane.b32.xlu0 %v18, 80
    %v20 = vpop.permute.xlu0 %19
    %vm21 = vcmask 786048
    %22 = vst.msk [vmem:[#allocation0] sm:$0x1] %vm21, %v20
    %s23 = scalar_lea.vmem %s0, 4
    %v24 = vld [vmem:[%s23] sm:$0x1]
    %25 = vrot.lane.b32.xlu0 %v24, 64
    %v26 = vpop.permute.xlu0 %25
    %vm27 = vcmask 654848
    %28 = vst.msk [vmem:[#allocation0] sm:$0x1] %vm27, %v26
    %s29 = scalar_lea.vmem %s0, 3
    %v30 = vld [vmem:[%s29] sm:$0x1]
    %31 = vrot.lane.b32.xlu0 %v30, 48
    %v32 = vpop.permute.xlu0 %31
    %vm33 = vcmask 523648
    %34 = vst.msk [vmem:[#allocation0] sm:$0x1] %vm33, %v32
    %s35 = scalar_lea.vmem %s0, 2
    %v36 = vld [vmem:[%s35] sm:$0x1]
    %37 = vrot.lane.b32.xlu0 %v36, 32
    %v38 = vpop.permute.xlu0 %37
    %vm39 = vcmask 392448
    %40 = vst.msk [vmem:[#allocation0] sm:$0x1] %vm39, %v38
    %s41 = scalar_lea.vmem %s0, 1
    %v42 = vld [vmem:[%s41] sm:$0x1]
    %43 = vrot.lane.b32.xlu0 %v42, 16
    %v44 = vpop.permute.xlu0 %43
    %vm45 = vcmask 261248
    %46 = vst.msk [vmem:[#allocation0] sm:$0x1] %vm45, %v44
    %s48 = sshllo.u32 0, 1
    %v50 = vld [vmem:[#allocation0] sm:%s48]
    %s51 = sshllo.u32 0, 1
    %52 = vst [vmem:[%s1] sm:%s51] %v50

// kernel: generator_forward.17
$region0: #{generator_forward.17}
  #allocation0 [shape = 'u32[]', space=smem, size = 0x4, offset = 0x4, fixed_abs, tag = 'smem constant byte address 0x4 - core index']
  #allocation1 [shape = 'u32[144,128]{1,0:T(1,128)}', space=vmem, size = 0x12000, scoped, tag = 'internal scratch']
  %s0 = inlined_call_operand.vmem [shape: f32[256,128], index: 0, kind: input, shape index: {}]
  %s1 = inlined_call_operand.vmem [shape: f32[1,128], index: 1, kind: input, shape index: {}]
  %s2 = inlined_call_operand.vmem [shape: f32[1,128], index: 2, kind: input, shape index: {}]
  %s3 = inlined_call_operand.vmem [shape: bf16[256,128], index: 3, kind: output, shape index: {}]
  %s4 = sld [smem:[#allocation0]]
  $region22: #{generator_forward.17} parent=0
    _
  %s6 = ssub.s32 1, %s4
  %s7 = scalar_select 0, %s6, %s4
  // Predicated region
  $region2: #{generator_forward.17} parent=0 // pred_check
    _
  $region3: #{generator_forward.17} parent=0 // pred_check_branch
    %9 = sbr.rel (0) target = $region5
  $region4: #{generator_forward.17} parent=0 // pred_region
    _
  $region5: #{generator_forward.17} parent=0 // pred_fallthru
    _
  // Predicated region
  $region6: #{generator_forward.17} parent=0 // pred_check
    _
  $region7: #{generator_forward.17} parent=0 // pred_check_branch
    %11 = sbr.rel (0) target = $region9
  $region8: #{generator_forward.17} parent=0 // pred_region
    _
  $region9: #{generator_forward.17} parent=0 // pred_fallthru
    _
  // Predicated region
  $region10: #{generator_forward.17} parent=0 // pred_check
    _
  $region11: #{generator_forward.17} parent=0 // pred_check_branch
    %13 = sbr.rel (0) target = $region13
  $region12: #{generator_forward.17} parent=0 // pred_region
    _
  $region13: #{generator_forward.17} parent=0 // pred_fallthru
    _
  %v14 = vld [vmem:[%s0] sm:$0xff]
  %v15 = vld [vmem:[%s0 + $0x8] sm:$0xff]
  %v16 = vld [vmem:[%s0 + $0x10] sm:$0xff]
  %v17 = vld [vmem:[%s0 + $0x18] sm:$0xff]
  %v18 = vld [vmem:[%s0 + $0x20] sm:$0xff]
  %v19 = vld [vmem:[%s0 + $0x28] sm:$0xff]
  %v20 = vld [vmem:[%s0 + $0x30] sm:$0xff]
  %v21 = vld [vmem:[%s0 + $0x38] sm:$0xff]
  %v22 = vld [vmem:[%s0 + $0x40] sm:$0xff]
  %v23 = vld [vmem:[%s0 + $0x48] sm:$0xff]
  %v24 = vld [vmem:[%s0 + $0x50] sm:$0xff]
  %v25 = vld [vmem:[%s0 + $0x58] sm:$0xff]
  %v26 = vld [vmem:[%s0 + $0x60] sm:$0xff]
  %v27 = vld [vmem:[%s0 + $0x68] sm:$0xff]
  %v28 = vld [vmem:[%s0 + $0x70] sm:$0xff]
  %v29 = vld [vmem:[%s0 + $0x78] sm:$0xff]
  %v30 = vld [vmem:[%s0 + $0x80] sm:$0xff]
  %v31 = vld [vmem:[%s0 + $0x88] sm:$0xff]
  %v32 = vld [vmem:[%s0 + $0x90] sm:$0xff]
  %v33 = vld [vmem:[%s0 + $0x98] sm:$0xff]
  %v34 = vld [vmem:[%s0 + $0xa0] sm:$0xff]
  %v35 = vld [vmem:[%s0 + $0xa8] sm:$0xff]
  %v36 = vld [vmem:[%s0 + $0xb0] sm:$0xff]
  %v37 = vld [vmem:[%s0 + $0xb8] sm:$0xff]
  %v38 = vld [vmem:[%s0 + $0xc0] sm:$0xff]
  %v39 = vld [vmem:[%s0 + $0xc8] sm:$0xff]
  %v40 = vld [vmem:[%s0 + $0xd0] sm:$0xff]
  %v41 = vld [vmem:[%s0 + $0xd8] sm:$0xff]
  %v42 = vld [vmem:[%s0 + $0xe0] sm:$0xff]
  %v43 = vld [vmem:[%s0 + $0xe8] sm:$0xff]
  %v44 = vld [vmem:[%s0 + $0xf0] sm:$0xff]
  %v45 = vld [vmem:[%s0 + $0xf8] sm:$0xff]
  %v46 = vld [vmem:[%s1] sm:$0x1]
  %v48 = vlaneseq
  %v49 = vshrl.u32 %v48, 7
  %v50 = vsub.s32 0, %v49
  %v51 = vrot.slane %v46, %v50
  %v53 = vmul.f32 %v14, %v51
  %v54 = vmul.f32 %v15, %v51
  %v55 = vmul.f32 %v16, %v51
  %v56 = vmul.f32 %v17, %v51
  %v57 = vmul.f32 %v18, %v51
  %v58 = vmul.f32 %v19, %v51
  %v59 = vmul.f32 %v20, %v51
  %v60 = vmul.f32 %v21, %v51
  %v61 = vmul.f32 %v22, %v51
  %v62 = vmul.f32 %v23, %v51
  %v63 = vmul.f32 %v24, %v51
  %v64 = vmul.f32 %v25, %v51
  %v65 = vmul.f32 %v26, %v51
  %v66 = vmul.f32 %v27, %v51
  %v67 = vmul.f32 %v28, %v51
  %v68 = vmul.f32 %v29, %v51
  %v69 = vmul.f32 %v30, %v51
  %v70 = vmul.f32 %v31, %v51
  %v71 = vmul.f32 %v32, %v51
  %v72 = vmul.f32 %v33, %v51
  %v73 = vmul.f32 %v34, %v51
  %v74 = vmul.f32 %v35, %v51
  %v75 = vmul.f32 %v36, %v51
  %v76 = vmul.f32 %v37, %v51
  %v77 = vmul.f32 %v38, %v51
  %v78 = vmul.f32 %v39, %v51
  %v79 = vmul.f32 %v40, %v51
  %v80 = vmul.f32 %v41, %v51
  %v81 = vmul.f32 %v42, %v51
  %v82 = vmul.f32 %v43, %v51
  %v83 = vmul.f32 %v44, %v51
  %v84 = vmul.f32 %v45, %v51
  %v85 = vld [vmem:[%s2] sm:$0x1]
  %v87 = vlaneseq
  %v88 = vshrl.u32 %v87, 7
  %v89 = vsub.s32 0, %v88
  %v90 = vrot.slane %v85, %v89
  %v92 = vadd.f32 %v53, %v90
  %v93 = vadd.f32 %v54, %v90
  %v94 = vadd.f32 %v55, %v90
  %v95 = vadd.f32 %v56, %v90
  %v96 = vadd.f32 %v57, %v90
  %v97 = vadd.f32 %v58, %v90
  %v98 = vadd.f32 %v59, %v90
  %v99 = vadd.f32 %v60, %v90
  %v100 = vadd.f32 %v61, %v90
  %v101 = vadd.f32 %v62, %v90
  %v102 = vadd.f32 %v63, %v90
  %v103 = vadd.f32 %v64, %v90
  %v104 = vadd.f32 %v65, %v90
  %v105 = vadd.f32 %v66, %v90
  %v106 = vadd.f32 %v67, %v90
  %v107 = vadd.f32 %v68, %v90
  %v108 = vadd.f32 %v69, %v90
  %v109 = vadd.f32 %v70, %v90
  %v110 = vadd.f32 %v71, %v90
  %v111 = vadd.f32 %v72, %v90
  %v112 = vadd.f32 %v73, %v90
  %v113 = vadd.f32 %v74, %v90
  %v114 = vadd.f32 %v75, %v90
  %v115 = vadd.f32 %v76, %v90
  %v116 = vadd.f32 %v77, %v90
  %v117 = vadd.f32 %v78, %v90
  %v118 = vadd.f32 %v79, %v90
  %v119 = vadd.f32 %v80, %v90
  %v120 = vadd.f32 %v81, %v90
  %v121 = vadd.f32 %v82, %v90
  %v122 = vadd.f32 %v83, %v90
  %v123 = vadd.f32 %v84, %v90
  %v124 = vmax.f32 %v92, 0.0
  %v125 = vmax.f32 %v93, 0.0
  %v126 = vmax.f32 %v94, 0.0
  %v127 = vmax.f32 %v95, 0.0
  %v128 = vmax.f32 %v96, 0.0
  %v129 = vmax.f32 %v97, 0.0
  %v130 = vmax.f32 %v98, 0.0
  %v131 = vmax.f32 %v99, 0.0
  %v132 = vmax.f32 %v100, 0.0
  %v133 = vmax.f32 %v101, 0.0
  %v134 = vmax.f32 %v102, 0.0
  %v135 = vmax.f32 %v103, 0.0
  %v136 = vmax.f32 %v104, 0.0
  %v137 = vmax.f32 %v105, 0.0
  %v138 = vmax.f32 %v106, 0.0
  %v139 = vmax.f32 %v107, 0.0
  %v140 = vmax.f32 %v108, 0.0
  %v141 = vmax.f32 %v109, 0.0
  %v142 = vmax.f32 %v110, 0.0
  %v143 = vmax.f32 %v111, 0.0
  %v144 = vmax.f32 %v112, 0.0
  %v145 = vmax.f32 %v113, 0.0
  %v146 = vmax.f32 %v114, 0.0
  %v147 = vmax.f32 %v115, 0.0
  %v148 = vmax.f32 %v116, 0.0
  %v149 = vmax.f32 %v117, 0.0
  %v150 = vmax.f32 %v118, 0.0
  %v151 = vmax.f32 %v119, 0.0
  %v152 = vmax.f32 %v120, 0.0
  %v153 = vmax.f32 %v121, 0.0
  %v154 = vmax.f32 %v122, 0.0
  %v155 = vmax.f32 %v123, 0.0
  %v156 = vpack.c.bf16 %v125, %v124
  %v157 = vpack.c.bf16 %v127, %v126
  %v158 = vpack.c.bf16 %v129, %v128
  %v159 = vpack.c.bf16 %v131, %v130
  %v160 = vpack.c.bf16 %v133, %v132
  %v161 = vpack.c.bf16 %v135, %v134
  %v162 = vpack.c.bf16 %v137, %v136
  %v163 = vpack.c.bf16 %v139, %v138
  %v164 = vpack.c.bf16 %v141, %v140
  %v165 = vpack.c.bf16 %v143, %v142
  %v166 = vpack.c.bf16 %v145, %v144
  %v167 = vpack.c.bf16 %v147, %v146
  %v168 = vpack.c.bf16 %v149, %v148
  %v169 = vpack.c.bf16 %v151, %v150
  %v170 = vpack.c.bf16 %v153, %v152
  %v171 = vpack.c.bf16 %v155, %v154
  %v188 = vunpack.c.l.b16 %v156
  %v189 = vunpack.c.h.b16 %v156
  %v190 = vunpack.c.l.b16 %v157
  %v191 = vunpack.c.h.b16 %v157
  %v192 = vunpack.c.l.b16 %v158
  %v193 = vunpack.c.h.b16 %v158
  %v194 = vunpack.c.l.b16 %v159
  %v195 = vunpack.c.h.b16 %v159
  %v196 = vunpack.c.l.b16 %v160
  %v197 = vunpack.c.h.b16 %v160
  %v198 = vunpack.c.l.b16 %v161
  %v199 = vunpack.c.h.b16 %v161
  %v200 = vunpack.c.l.b16 %v162
  %v201 = vunpack.c.h.b16 %v162
  %v202 = vunpack.c.l.b16 %v163
  %v203 = vunpack.c.h.b16 %v163
  %v204 = vunpack.c.l.b16 %v164
  %v205 = vunpack.c.h.b16 %v164
  %v206 = vunpack.c.l.b16 %v165
  %v207 = vunpack.c.h.b16 %v165
  %v208 = vunpack.c.l.b16 %v166
  %v209 = vunpack.c.h.b16 %v166
  %v210 = vunpack.c.l.b16 %v167
  %v211 = vunpack.c.h.b16 %v167
  %v212 = vunpack.c.l.b16 %v168
  %v213 = vunpack.c.h.b16 %v168
  %v214 = vunpack.c.l.b16 %v169
  %v215 = vunpack.c.h.b16 %v169
  %v216 = vunpack.c.l.b16 %v170
  %v217 = vunpack.c.h.b16 %v170
  %v218 = vunpack.c.l.b16 %v171
  %v219 = vunpack.c.h.b16 %v171
  %v220 = vpack.c.b16 %v188, %v188
  %v221 = vpack.c.b16 %v189, %v189
  %v222 = vpack.c.b16 %v190, %v190
  %v223 = vpack.c.b16 %v191, %v191
  %v224 = vpack.c.b16 %v192, %v192
  %v225 = vpack.c.b16 %v193, %v193
  %v226 = vpack.c.b16 %v194, %v194
  %v227 = vpack.c.b16 %v195, %v195
  %v228 = vpack.c.b16 %v196, %v196
  %v229 = vpack.c.b16 %v197, %v197
  %v230 = vpack.c.b16 %v198, %v198
  %v231 = vpack.c.b16 %v199, %v199
  %v232 = vpack.c.b16 %v200, %v200
  %v233 = vpack.c.b16 %v201, %v201
  %v234 = vpack.c.b16 %v202, %v202
  %v235 = vpack.c.b16 %v203, %v203
  %v236 = vpack.c.b16 %v204, %v204
  %v237 = vpack.c.b16 %v205, %v205
  %v238 = vpack.c.b16 %v206, %v206
  %v239 = vpack.c.b16 %v207, %v207
  %v240 = vpack.c.b16 %v208, %v208
  %v241 = vpack.c.b16 %v209, %v209
  %v242 = vpack.c.b16 %v210, %v210
  %v243 = vpack.c.b16 %v211, %v211
  %v244 = vpack.c.b16 %v212, %v212
  %v245 = vpack.c.b16 %v213, %v213
  %v246 = vpack.c.b16 %v214, %v214
  %v247 = vpack.c.b16 %v215, %v215
  %v248 = vpack.c.b16 %v216, %v216
  %v249 = vpack.c.b16 %v217, %v217
  %v250 = vpack.c.b16 %v218, %v218
  %v251 = vpack.c.b16 %v219, %v219
  %284 = vst [vmem:[%s3] sm:$0xf] %v220
  %285 = vst [vmem:[%s3 + $0x4] sm:$0xf] %v221
  %286 = vst [vmem:[%s3 + $0x8] sm:$0xf] %v222
  %287 = vst [vmem:[%s3 + $0xc] sm:$0xf] %v223
  %288 = vst [vmem:[%s3 + $0x10] sm:$0xf] %v224
  %289 = vst [vmem:[%s3 + $0x14] sm:$0xf] %v225
  %290 = vst [vmem:[%s3 + $0x18] sm:$0xf] %v226
  %291 = vst [vmem:[%s3 + $0x1c] sm:$0xf] %v227
  %292 = vst [vmem:[%s3 + $0x20] sm:$0xf] %v228
  %293 = vst [vmem:[%s3 + $0x24] sm:$0xf] %v229
  %294 = vst [vmem:[%s3 + $0x28] sm:$0xf] %v230
  %295 = vst [vmem:[%s3 + $0x2c] sm:$0xf] %v231
  %296 = vst [vmem:[%s3 + $0x30] sm:$0xf] %v232
  %297 = vst [vmem:[%s3 + $0x34] sm:$0xf] %v233
  %298 = vst [vmem:[%s3 + $0x38] sm:$0xf] %v234
  %299 = vst [vmem:[%s3 + $0x3c] sm:$0xf] %v235
  %300 = vst [vmem:[%s3 + $0x40] sm:$0xf] %v236
  %301 = vst [vmem:[%s3 + $0x44] sm:$0xf] %v237
  %302 = vst [vmem:[%s3 + $0x48] sm:$0xf] %v238
  %303 = vst [vmem:[%s3 + $0x4c] sm:$0xf] %v239
  %304 = vst [vmem:[%s3 + $0x50] sm:$0xf] %v240
  %305 = vst [vmem:[%s3 + $0x54] sm:$0xf] %v241
  %306 = vst [vmem:[%s3 + $0x58] sm:$0xf] %v242
  %307 = vst [vmem:[%s3 + $0x5c] sm:$0xf] %v243
  %308 = vst [vmem:[%s3 + $0x60] sm:$0xf] %v244
  %309 = vst [vmem:[%s3 + $0x64] sm:$0xf] %v245
  %310 = vst [vmem:[%s3 + $0x68] sm:$0xf] %v246
  %311 = vst [vmem:[%s3 + $0x6c] sm:$0xf] %v247
  %312 = vst [vmem:[%s3 + $0x70] sm:$0xf] %v248
  %313 = vst [vmem:[%s3 + $0x74] sm:$0xf] %v249
  %314 = vst [vmem:[%s3 + $0x78] sm:$0xf] %v250
  %315 = vst [vmem:[%s3 + $0x7c] sm:$0xf] %v251
  // Predicated region
  $region14: #{generator_forward.17} parent=0 // pred_check
    _
  $region15: #{generator_forward.17} parent=0 // pred_check_branch
    %317 = sbr.rel (0) target = $region17
  $region16: #{generator_forward.17} parent=0 // pred_region
    _
  $region17: #{generator_forward.17} parent=0 // pred_fallthru
    _
  // Predicated region
  $region18: #{generator_forward.17} parent=0 // pred_check
    _
  $region19: #{generator_forward.17} parent=0 // pred_check_branch
    %319 = sbr.rel (0) target = $region21
  $region20: #{generator_forward.17} parent=0 // pred_region
    _
  $region21: #{generator_forward.17} parent=0 // pred_fallthru
    _

// kernel: generator_forward.18
$region0: #{generator_forward.18}
  #allocation0 [shape = 'u32[]', space=smem, size = 0x4, offset = 0x4, fixed_abs, tag = 'smem constant byte address 0x4 - core index']
  #allocation1 [shape = 'u32[144,128]{1,0:T(1,128)}', space=vmem, size = 0x12000, scoped, tag = 'internal scratch']
  #allocation2 [shape = 'f32[512,128]{1,0:T(8,128)}', space=vmem, size = 0x40000, scoped, tag = 'scratch operand']
  %s0 = inlined_call_operand.vmem [shape: bf16[2048,16], index: 0, kind: input, shape index: {}]
  %s1 = inlined_call_operand.vmem [shape: bf16[16,128], index: 1, kind: input, shape index: {}]
  %s2 = inlined_call_operand.vmem [shape: f32[2048,128], index: 2, kind: output, shape index: {}]
  %s3 = sld [smem:[#allocation0]]
  $region49: #{generator_forward.18} parent=0
    _
  %s5 = ssub.s32 1, %s3
  %s6 = scalar_select 0, %s5, %s3
  loop: start=0, step=1, limit=6
  $region2: #{generator_forward.18} parent=0 // loop_pre_header
    _
  $region3: #{generator_forward.18} parent=0 // loop_header
    %s8 = sphi 0, %s12
    %p9 = scmp.ge.s32.totalorder %s8, 6
    %s15 = sphi 0, %s34
    %s16 = sphi 0, %s30
    %s17 = sphi 0, %s26
    %s18 = sphi 0, %s15
    %s19 = sphi 0, %s16
    %s20 = sphi 0, %s17
    %s21 = sphi 0, %s18
    %s22 = sphi 0, %s19
    %s23 = sphi 0, %s20
    %s39 = sphi 0, %s41
    %s42 = sphi 0, %s39
    %s43 = sphi 0, %s42
    %s59 = sphi 0, %s43
    %s67 = sphi 0, %s69
    %s70 = sphi 0, %s67
    %s71 = sphi 0, %s70
    %s87 = sphi 0, %s71
    %s95 = sphi 0, %s97
    %s98 = sphi 0, %s95
    %s99 = sphi 0, %s98
    %s115 = sphi 0, %s99
  $region4: #{generator_forward.18} parent=0 // loop_header_branch
    %11 = sbr.rel (%p9) target = $region8
  $region5: #{generator_forward.18} parent=0 // loop_body
    %s13 = ssub.s32 %s8, 1
    %s14 = ssub.s32 %s8, 2
    %s24 = sadd.s32 1, %s17
    %p25 = scmp.ge.s32.totalorder %s24, 1
    %s26 = scalar_select %p25, 0, %s24
    %s27 = sadd.s32 1, %s16
    %s28 = scalar_select %p25, %s27, %s16
    %p29 = scmp.ge.s32.totalorder %s28, 1
    %s30 = scalar_select %p29, 0, %s28
    %s31 = sadd.s32 1, %s15
    %s32 = scalar_select %p29, %s31, %s15
    %p33 = scmp.ge.s32.totalorder %s32, 4
    %s34 = scalar_select %p33, 0, %s32
    %s35 = ssub.s32 %s15, %s34
    %s36 = ssub.s32 %s17, %s26
    %s37 = sor.u32 %s35, %s36
    %p38 = scmp.eq.s32.totalorder %s37, 0
    %s40 = sadd.s32 %s39, 1
    %s41 = scalar_select %p38, %s39, %s40
    %p44 = pneg %p38
    %p45 = scmp.eq.s32.totalorder %s8, 3
    %p46 = por %p44, %p45
    %p47 = scmp.ne.s32.totalorder %s39, %s42
    %p48 = scmp.eq.s32.totalorder %s8, 0
    %p49 = por %p47, %p48
    %p50 = scmp.ne.s32.totalorder %s39, %s42
    %p51 = scmp.eq.s32.totalorder %s13, 3
    %p52 = por %p50, %p51
    %p53 = scmp.ne.s32.totalorder %s42, %s43
    %p54 = scmp.eq.s32.totalorder %s13, 0
    %p55 = por %p53, %p54
    %p56 = scmp.ne.s32.totalorder %s42, %s43
    %p57 = scmp.eq.s32.totalorder %s14, 3
    %p58 = por %p56, %p57
    %p60 = scmp.ne.s32.totalorder %s43, %s59
    %p61 = scmp.eq.s32.totalorder %s14, 0
    %p62 = por %p60, %p61
    %s63 = ssub.s32 %s17, %s26
    %s64 = ssub.s32 %s16, %s30
    %s65 = sor.u32 %s63, %s64
    %p66 = scmp.eq.s32.totalorder %s65, 0
    %s68 = sadd.s32 %s67, 1
    %s69 = scalar_select %p66, %s67, %s68
    %p72 = pneg %p66
    %p73 = scmp.eq.s32.totalorder %s8, 3
    %p74 = por %p72, %p73
    %p75 = scmp.ne.s32.totalorder %s67, %s70
    %p76 = scmp.eq.s32.totalorder %s8, 0
    %p77 = por %p75, %p76
    %p78 = scmp.ne.s32.totalorder %s67, %s70
    %p79 = scmp.eq.s32.totalorder %s13, 3
    %p80 = por %p78, %p79
    %p81 = scmp.ne.s32.totalorder %s70, %s71
    %p82 = scmp.eq.s32.totalorder %s13, 0
    %p83 = por %p81, %p82
    %p84 = scmp.ne.s32.totalorder %s70, %s71
    %p85 = scmp.eq.s32.totalorder %s14, 3
    %p86 = por %p84, %p85
    %p88 = scmp.ne.s32.totalorder %s71, %s87
    %p89 = scmp.eq.s32.totalorder %s14, 0
    %p90 = por %p88, %p89
    %s91 = ssub.s32 %s15, %s34
    %s92 = ssub.s32 %s16, %s30
    %s93 = sor.u32 %s91, %s92
    %p94 = scmp.eq.s32.totalorder %s93, 0
    %s96 = sadd.s32 %s95, 1
    %s97 = scalar_select %p94, %s95, %s96
    %p100 = pneg %p94
    %p101 = scmp.eq.s32.totalorder %s8, 3
    %p102 = por %p100, %p101
    %p103 = scmp.ne.s32.totalorder %s95, %s98
    %p104 = scmp.eq.s32.totalorder %s8, 0
    %p105 = por %p103, %p104
    %p106 = scmp.ne.s32.totalorder %s95, %s98
    %p107 = scmp.eq.s32.totalorder %s13, 3
    %p108 = por %p106, %p107
    %p109 = scmp.ne.s32.totalorder %s98, %s99
    %p110 = scmp.eq.s32.totalorder %s13, 0
    %p111 = por %p109, %p110
    %p112 = scmp.ne.s32.totalorder %s98, %s99
    %p113 = scmp.eq.s32.totalorder %s14, 3
    %p114 = por %p112, %p113
    %p116 = scmp.ne.s32.totalorder %s99, %s115
    %p117 = scmp.eq.s32.totalorder %s14, 0
    %p118 = por %p116, %p117
    %p119 = scmp.le.s32.totalorder 1, %s8
    %p120 = scmp.lt.s32.totalorder %s8, 5
    %p121 = pnand %p119, %p120
    %p122 = pneg %p121
    // Predicated region
    $region9: #{generator_forward.18} parent=5 // pred_check
      _
    $region10: #{generator_forward.18} parent=5 // pred_check_branch
      %124 = sbr.rel (%p121) target = $region12
    $region11: #{generator_forward.18} parent=5 // pred_region
      %s125 = ssub.s32 %s8, 1
      // Predicated region
      $region13: #{generator_forward.18} parent=11 // pred_check
        %p126 = pneg %p83
      $region14: #{generator_forward.18} parent=11 // pred_check_branch
        %128 = sbr.rel (%p126) target = $region16
      $region15: #{generator_forward.18} parent=11 // pred_region
        %s129 = smul.u32 2, %s20
        %p130 = scmp.lt.s32.totalorder %s129, 1
        %s131 = scalar_select %p130, %s129, 1
        %p132 = scmp.lt.s32.totalorder %s19, 0
        %s133 = scalar_select %p132, %s19, 0
        %s134 = sadd.s32 %s133, %s131
        %s135 = smul.addr %s134, 4
        %s136 = scalar_lea.vmem %s1, %s135
        %s137 = smul.u32 2, %s20
      $region16: #{generator_forward.18} parent=11 // pred_fallthru
        _
    $region12: #{generator_forward.18} parent=5 // pred_fallthru
      _
    %p138 = scmp.lt.s32.totalorder %s8, 4
    // Predicated region
    $region17: #{generator_forward.18} parent=5 // pred_check
      %p139 = pneg %p138
    $region18: #{generator_forward.18} parent=5 // pred_check_branch
      %141 = sbr.rel (%p139) target = $region20
    $region19: #{generator_forward.18} parent=5 // pred_region
      // Predicated region
      $region21: #{generator_forward.18} parent=19 // pred_check
        %p142 = pneg %p49
      $region22: #{generator_forward.18} parent=19 // pred_check_branch
        %144 = sbr.rel (%p142) target = $region24
      $region23: #{generator_forward.18} parent=19 // pred_region
        %s145 = smul.u32 64, %s15
        %p146 = scmp.lt.s32.totalorder %s145, 255
        %s147 = scalar_select %p146, %s145, 255
        %p148 = scmp.lt.s32.totalorder %s17, 0
        %s149 = scalar_select %p148, %s17, 0
        %s150 = sadd.s32 %s149, %s147
        %s151 = smul.addr %s150, 4
        %s152 = scalar_lea.vmem %s0, %s151
        %s153 = smul.u32 64, %s15
      $region24: #{generator_forward.18} parent=19 // pred_fallthru
        _
    $region20: #{generator_forward.18} parent=5 // pred_fallthru
      _
    %p154 = scmp.le.s32.totalorder 1, %s8
    %p155 = scmp.lt.s32.totalorder %s8, 5
    %p156 = pnand %p154, %p155
    %p157 = pneg %p156
    // Predicated region
    $region25: #{generator_forward.18} parent=5 // pred_check
      _
    $region26: #{generator_forward.18} parent=5 // pred_check_branch
      %159 = sbr.rel (%p156) target = $region28
    $region27: #{generator_forward.18} parent=5 // pred_region
      %s160 = ssub.s32 %s8, 1
      %s161 = smul.u32 64, %s18
      %p162 = scmp.lt.s32.totalorder %s161, 255
      %s163 = scalar_select %p162, %s161, 255
      %p164 = scmp.lt.s32.totalorder %s20, 0
      %s165 = scalar_select %p164, %s20, 0
      %s166 = sadd.s32 %s165, %s163
      %s167 = smul.addr %s166, 4
      %s168 = scalar_lea.vmem %s0, %s167
      %p169 = pneg %p55
      %p170 = pneg %p52
      %s171 = smul.u32 2, %s20
      %p172 = scmp.lt.s32.totalorder %s171, 1
      %s173 = scalar_select %p172, %s171, 1
      %p174 = scmp.lt.s32.totalorder %s19, 0
      %s175 = scalar_select %p174, %s19, 0
      %s176 = sadd.s32 %s175, %s173
      %s177 = smul.addr %s176, 4
      %s178 = scalar_lea.vmem %s1, %s177
      %p179 = pneg %p83
      %p180 = pneg %p80
      %p181 = pneg %p111
      %p182 = pneg %p108
      %s183 = smul.u32 64, %s18
      %p184 = scmp.lt.s32.totalorder %s183, 255
      %s185 = scalar_select %p184, %s183, 255
      %p186 = scmp.lt.s32.totalorder %s19, 0
      %s187 = scalar_select %p186, %s19, 0
      %s188 = sadd.s32 %s187, %s185
      %s189 = smul.addr %s188, 8
      %s190 = scalar_lea.vmem %s2, %s189
      %s191 = smul.u32 64, %s18
      %p192 = scmp.lt.s32.totalorder %s191, 255
      %s193 = scalar_select %p192, %s191, 255
      %p194 = scmp.lt.s32.totalorder %s20, 0
      %s195 = scalar_select %p194, %s20, 0
      %s196 = sadd.s32 %s195, %s193
      %s197 = smul.addr %s196, 4
      %s198 = scalar_lea.vmem %s0, %s197
      %s199 = smul.u32 64, %s18
      %s200 = smul.u32 2, %s20
      %p201 = scmp.lt.s32.totalorder %s200, 1
      %s202 = scalar_select %p201, %s200, 1
      %p203 = scmp.lt.s32.totalorder %s19, 0
      %s204 = scalar_select %p203, %s19, 0
      %s205 = sadd.s32 %s204, %s202
      %s206 = smul.addr %s205, 4
      %s207 = scalar_lea.vmem %s1, %s206
      %s208 = smul.u32 2, %s20
      %s209 = smul.u32 64, %s18
      %p210 = scmp.lt.s32.totalorder %s209, 255
      %s211 = scalar_select %p210, %s209, 255
      %p212 = scmp.lt.s32.totalorder %s19, 0
      %s213 = scalar_select %p212, %s19, 0
      %s214 = sadd.s32 %s213, %s211
      %s215 = smul.addr %s214, 8
      %s216 = scalar_lea.vmem %s2, %s215
      %s217 = smul.u32 64, %s18
      %p219 = scmp.eq.s32.totalorder %s20, 0
      // Predicated region
      $region29: #{generator_forward.18} parent=27 // pred_check
        %p220 = pneg %p219
      $region30: #{generator_forward.18} parent=27 // pred_check_branch
        %222 = sbr.rel (%p220) target = $region32
      $region31: #{generator_forward.18} parent=27 // pred_region
        %223 = vst [vmem:[#allocation2] sm:$0xff] 0.0
        %224 = vst [vmem:[#allocation2 + $0x8] sm:$0xff] 0.0
        %225 = vst [vmem:[#allocation2 + $0x10] sm:$0xff] 0.0
        %226 = vst [vmem:[#allocation2 + $0x18] sm:$0xff] 0.0
        %227 = vst [vmem:[#allocation2 + $0x20] sm:$0xff] 0.0
        %228 = vst [vmem:[#allocation2 + $0x28] sm:$0xff] 0.0
        %229 = vst [vmem:[#allocation2 + $0x30] sm:$0xff] 0.0
        %230 = vst [vmem:[#allocation2 + $0x38] sm:$0xff] 0.0
        %231 = vst [vmem:[#allocation2 + $0x40] sm:$0xff] 0.0
        %232 = vst [vmem:[#allocation2 + $0x48] sm:$0xff] 0.0
        %233 = vst [vmem:[#allocation2 + $0x50] sm:$0xff] 0.0
        %234 = vst [vmem:[#allocation2 + $0x58] sm:$0xff] 0.0
        %235 = vst [vmem:[#allocation2 + $0x60] sm:$0xff] 0.0
        %236 = vst [vmem:[#allocation2 + $0x68] sm:$0xff] 0.0
        %237 = vst [vmem:[#allocation2 + $0x70] sm:$0xff] 0.0
        %238 = vst [vmem:[#allocation2 + $0x78] sm:$0xff] 0.0
        %239 = vst [vmem:[#allocation2 + $0x80] sm:$0xff] 0.0
        %240 = vst [vmem:[#allocation2 + $0x88] sm:$0xff] 0.0
        %241 = vst [vmem:[#allocation2 + $0x90] sm:$0xff] 0.0
        %242 = vst [vmem:[#allocation2 + $0x98] sm:$0xff] 0.0
        %243 = vst [vmem:[#allocation2 + $0xa0] sm:$0xff] 0.0
        %244 = vst [vmem:[#allocation2 + $0xa8] sm:$0xff] 0.0
        %245 = vst [vmem:[#allocation2 + $0xb0] sm:$0xff] 0.0
        %246 = vst [vmem:[#allocation2 + $0xb8] sm:$0xff] 0.0
        %247 = vst [vmem:[#allocation2 + $0xc0] sm:$0xff] 0.0
        %248 = vst [vmem:[#allocation2 + $0xc8] sm:$0xff] 0.0
        %249 = vst [vmem:[#allocation2 + $0xd0] sm:$0xff] 0.0
        %250 = vst [vmem:[#allocation2 + $0xd8] sm:$0xff] 0.0
        %251 = vst [vmem:[#allocation2 + $0xe0] sm:$0xff] 0.0
        %252 = vst [vmem:[#allocation2 + $0xe8] sm:$0xff] 0.0
        %253 = vst [vmem:[#allocation2 + $0xf0] sm:$0xff] 0.0
        %254 = vst [vmem:[#allocation2 + $0xf8] sm:$0xff] 0.0
        %255 = vst [vmem:[#allocation2 + $0x100] sm:$0xff] 0.0
        %256 = vst [vmem:[#allocation2 + $0x108] sm:$0xff] 0.0
        %257 = vst [vmem:[#allocation2 + $0x110] sm:$0xff] 0.0
        %258 = vst [vmem:[#allocation2 + $0x118] sm:$0xff] 0.0
        %259 = vst [vmem:[#allocation2 + $0x120] sm:$0xff] 0.0
        %260 = vst [vmem:[#allocation2 + $0x128] sm:$0xff] 0.0
        %261 = vst [vmem:[#allocation2 + $0x130] sm:$0xff] 0.0
        %262 = vst [vmem:[#allocation2 + $0x138] sm:$0xff] 0.0
        %263 = vst [vmem:[#allocation2 + $0x140] sm:$0xff] 0.0
        %264 = vst [vmem:[#allocation2 + $0x148] sm:$0xff] 0.0
        %265 = vst [vmem:[#allocation2 + $0x150] sm:$0xff] 0.0
        %266 = vst [vmem:[#allocation2 + $0x158] sm:$0xff] 0.0
        %267 = vst [vmem:[#allocation2 + $0x160] sm:$0xff] 0.0
        %268 = vst [vmem:[#allocation2 + $0x168] sm:$0xff] 0.0
        %269 = vst [vmem:[#allocation2 + $0x170] sm:$0xff] 0.0
        %270 = vst [vmem:[#allocation2 + $0x178] sm:$0xff] 0.0
        %271 = vst [vmem:[#allocation2 + $0x180] sm:$0xff] 0.0
        %272 = vst [vmem:[#allocation2 + $0x188] sm:$0xff] 0.0
        %273 = vst [vmem:[#allocation2 + $0x190] sm:$0xff] 0.0
        %274 = vst [vmem:[#allocation2 + $0x198] sm:$0xff] 0.0
        %275 = vst [vmem:[#allocation2 + $0x1a0] sm:$0xff] 0.0
        %276 = vst [vmem:[#allocation2 + $0x1a8] sm:$0xff] 0.0
        %277 = vst [vmem:[#allocation2 + $0x1b0] sm:$0xff] 0.0
        %278 = vst [vmem:[#allocation2 + $0x1b8] sm:$0xff] 0.0
        %279 = vst [vmem:[#allocation2 + $0x1c0] sm:$0xff] 0.0
        %280 = vst [vmem:[#allocation2 + $0x1c8] sm:$0xff] 0.0
        %281 = vst [vmem:[#allocation2 + $0x1d0] sm:$0xff] 0.0
        %282 = vst [vmem:[#allocation2 + $0x1d8] sm:$0xff] 0.0
        %283 = vst [vmem:[#allocation2 + $0x1e0] sm:$0xff] 0.0
        %284 = vst [vmem:[#allocation2 + $0x1e8] sm:$0xff] 0.0
        %285 = vst [vmem:[#allocation2 + $0x1f0] sm:$0xff] 0.0
        %286 = vst [vmem:[#allocation2 + $0x1f8] sm:$0xff] 0.0
      $region32: #{generator_forward.18} parent=27 // pred_fallthru
        _
      %v287 = vld [vmem:[#allocation2] sm:$0xff]
      %v288 = vld [vmem:[#allocation2 + $0x8] sm:$0xff]
      %v289 = vld [vmem:[#allocation2 + $0x10] sm:$0xff]
      %v290 = vld [vmem:[#allocation2 + $0x18] sm:$0xff]
      %v291 = vld [vmem:[#allocation2 + $0x20] sm:$0xff]
      %v292 = vld [vmem:[#allocation2 + $0x28] sm:$0xff]
      %v293 = vld [vmem:[#allocation2 + $0x30] sm:$0xff]
      %v294 = vld [vmem:[#allocation2 + $0x38] sm:$0xff]
      %v295 = vld [vmem:[#allocation2 + $0x40] sm:$0xff]
      %v296 = vld [vmem:[#allocation2 + $0x48] sm:$0xff]
      %v297 = vld [vmem:[#allocation2 + $0x50] sm:$0xff]
      %v298 = vld [vmem:[#allocation2 + $0x58] sm:$0xff]
      %v299 = vld [vmem:[#allocation2 + $0x60] sm:$0xff]
      %v300 = vld [vmem:[#allocation2 + $0x68] sm:$0xff]
      %v301 = vld [vmem:[#allocation2 + $0x70] sm:$0xff]
      %v302 = vld [vmem:[#allocation2 + $0x78] sm:$0xff]
      %v303 = vld [vmem:[#allocation2 + $0x80] sm:$0xff]
      %v304 = vld [vmem:[#allocation2 + $0x88] sm:$0xff]
      %v305 = vld [vmem:[#allocation2 + $0x90] sm:$0xff]
      %v306 = vld [vmem:[#allocation2 + $0x98] sm:$0xff]
      %v307 = vld [vmem:[#allocation2 + $0xa0] sm:$0xff]
      %v308 = vld [vmem:[#allocation2 + $0xa8] sm:$0xff]
      %v309 = vld [vmem:[#allocation2 + $0xb0] sm:$0xff]
      %v310 = vld [vmem:[#allocation2 + $0xb8] sm:$0xff]
      %v311 = vld [vmem:[#allocation2 + $0xc0] sm:$0xff]
      %v312 = vld [vmem:[#allocation2 + $0xc8] sm:$0xff]
      %v313 = vld [vmem:[#allocation2 + $0xd0] sm:$0xff]
      %v314 = vld [vmem:[#allocation2 + $0xd8] sm:$0xff]
      %v315 = vld [vmem:[#allocation2 + $0xe0] sm:$0xff]
      %v316 = vld [vmem:[#allocation2 + $0xe8] sm:$0xff]
      %v317 = vld [vmem:[#allocation2 + $0xf0] sm:$0xff]
      %v318 = vld [vmem:[#allocation2 + $0xf8] sm:$0xff]
      %v319 = vld [vmem:[#allocation2 + $0x100] sm:$0xff]
      %v320 = vld [vmem:[#allocation2 + $0x108] sm:$0xff]
      %v321 = vld [vmem:[#allocation2 + $0x110] sm:$0xff]
      %v322 = vld [vmem:[#allocation2 + $0x118] sm:$0xff]
      %v323 = vld [vmem:[#allocation2 + $0x120] sm:$0xff]
      %v324 = vld [vmem:[#allocation2 + $0x128] sm:$0xff]
      %v325 = vld [vmem:[#allocation2 + $0x130] sm:$0xff]
      %v326 = vld [vmem:[#allocation2 + $0x138] sm:$0xff]
      %v327 = vld [vmem:[#allocation2 + $0x140] sm:$0xff]
      %v328 = vld [vmem:[#allocation2 + $0x148] sm:$0xff]
      %v329 = vld [vmem:[#allocation2 + $0x150] sm:$0xff]
      %v330 = vld [vmem:[#allocation2 + $0x158] sm:$0xff]
      %v331 = vld [vmem:[#allocation2 + $0x160] sm:$0xff]
      %v332 = vld [vmem:[#allocation2 + $0x168] sm:$0xff]
      %v333 = vld [vmem:[#allocation2 + $0x170] sm:$0xff]
      %v334 = vld [vmem:[#allocation2 + $0x178] sm:$0xff]
      %v335 = vld [vmem:[#allocation2 + $0x180] sm:$0xff]
      %v336 = vld [vmem:[#allocation2 + $0x188] sm:$0xff]
      %v337 = vld [vmem:[#allocation2 + $0x190] sm:$0xff]
      %v338 = vld [vmem:[#allocation2 + $0x198] sm:$0xff]
      %v339 = vld [vmem:[#allocation2 + $0x1a0] sm:$0xff]
      %v340 = vld [vmem:[#allocation2 + $0x1a8] sm:$0xff]
      %v341 = vld [vmem:[#allocation2 + $0x1b0] sm:$0xff]
      %v342 = vld [vmem:[#allocation2 + $0x1b8] sm:$0xff]
      %v343 = vld [vmem:[#allocation2 + $0x1c0] sm:$0xff]
      %v344 = vld [vmem:[#allocation2 + $0x1c8] sm:$0xff]
      %v345 = vld [vmem:[#allocation2 + $0x1d0] sm:$0xff]
      %v346 = vld [vmem:[#allocation2 + $0x1d8] sm:$0xff]
      %v347 = vld [vmem:[#allocation2 + $0x1e0] sm:$0xff]
      %v348 = vld [vmem:[#allocation2 + $0x1e8] sm:$0xff]
      %v349 = vld [vmem:[#allocation2 + $0x1f0] sm:$0xff]
      %v350 = vld [vmem:[#allocation2 + $0x1f8] sm:$0xff]
      %v351 = vld [vmem:[%s198] sm:$0xf]
      %v352 = vld [vmem:[%s198 + $0x4] sm:$0xf]
      %v353 = vld [vmem:[%s198 + $0x8] sm:$0xf]
      %v354 = vld [vmem:[%s198 + $0xc] sm:$0xf]
      %v355 = vld [vmem:[%s198 + $0x10] sm:$0xf]
      %v356 = vld [vmem:[%s198 + $0x14] sm:$0xf]
      %v357 = vld [vmem:[%s198 + $0x18] sm:$0xf]
      %v358 = vld [vmem:[%s198 + $0x1c] sm:$0xf]
      %v359 = vld [vmem:[%s198 + $0x20] sm:$0xf]
      %v360 = vld [vmem:[%s198 + $0x24] sm:$0xf]
      %v361 = vld [vmem:[%s198 + $0x28] sm:$0xf]
      %v362 = vld [vmem:[%s198 + $0x2c] sm:$0xf]
      %v363 = vld [vmem:[%s198 + $0x30] sm:$0xf]
      %v364 = vld [vmem:[%s198 + $0x34] sm:$0xf]
      %v365 = vld [vmem:[%s198 + $0x38] sm:$0xf]
      %v366 = vld [vmem:[%s198 + $0x3c] sm:$0xf]
      %v367 = vld [vmem:[%s198 + $0x40] sm:$0xf]
      %v368 = vld [vmem:[%s198 + $0x44] sm:$0xf]
      %v369 = vld [vmem:[%s198 + $0x48] sm:$0xf]
      %v370 = vld [vmem:[%s198 + $0x4c] sm:$0xf]
      %v371 = vld [vmem:[%s198 + $0x50] sm:$0xf]
      %v372 = vld [vmem:[%s198 + $0x54] sm:$0xf]
      %v373 = vld [vmem:[%s198 + $0x58] sm:$0xf]
      %v374 = vld [vmem:[%s198 + $0x5c] sm:$0xf]
      %v375 = vld [vmem:[%s198 + $0x60] sm:$0xf]
      %v376 = vld [vmem:[%s198 + $0x64] sm:$0xf]
      %v377 = vld [vmem:[%s198 + $0x68] sm:$0xf]
      %v378 = vld [vmem:[%s198 + $0x6c] sm:$0xf]
      %v379 = vld [vmem:[%s198 + $0x70] sm:$0xf]
      %v380 = vld [vmem:[%s198 + $0x74] sm:$0xf]
      %v381 = vld [vmem:[%s198 + $0x78] sm:$0xf]
      %v382 = vld [vmem:[%s198 + $0x7c] sm:$0xf]
      %v383 = vld [vmem:[%s198 + $0x80] sm:$0xf]
      %v384 = vld [vmem:[%s198 + $0x84] sm:$0xf]
      %v385 = vld [vmem:[%s198 + $0x88] sm:$0xf]
      %v386 = vld [vmem:[%s198 + $0x8c] sm:$0xf]
      %v387 = vld [vmem:[%s198 + $0x90] sm:$0xf]
      %v388 = vld [vmem:[%s198 + $0x94] sm:$0xf]
      %v389 = vld [vmem:[%s198 + $0x98] sm:$0xf]
      %v390 = vld [vmem:[%s198 + $0x9c] sm:$0xf]
      %v391 = vld [vmem:[%s198 + $0xa0] sm:$0xf]
      %v392 = vld [vmem:[%s198 + $0xa4] sm:$0xf]
      %v393 = vld [vmem:[%s198 + $0xa8] sm:$0xf]
      %v394 = vld [vmem:[%s198 + $0xac] sm:$0xf]
      %v395 = vld [vmem:[%s198 + $0xb0] sm:$0xf]
      %v396 = vld [vmem:[%s198 + $0xb4] sm:$0xf]
      %v397 = vld [vmem:[%s198 + $0xb8] sm:$0xf]
      %v398 = vld [vmem:[%s198 + $0xbc] sm:$0xf]
      %v399 = vld [vmem:[%s198 + $0xc0] sm:$0xf]
      %v400 = vld [vmem:[%s198 + $0xc4] sm:$0xf]
      %v401 = vld [vmem:[%s198 + $0xc8] sm:$0xf]
      %v402 = vld [vmem:[%s198 + $0xcc] sm:$0xf]
      %v403 = vld [vmem:[%s198 + $0xd0] sm:$0xf]
      %v404 = vld [vmem:[%s198 + $0xd4] sm:$0xf]
      %v405 = vld [vmem:[%s198 + $0xd8] sm:$0xf]
      %v406 = vld [vmem:[%s198 + $0xdc] sm:$0xf]
      %v407 = vld [vmem:[%s198 + $0xe0] sm:$0xf]
      %v408 = vld [vmem:[%s198 + $0xe4] sm:$0xf]
      %v409 = vld [vmem:[%s198 + $0xe8] sm:$0xf]
      %v410 = vld [vmem:[%s198 + $0xec] sm:$0xf]
      %v411 = vld [vmem:[%s198 + $0xf0] sm:$0xf]
      %v412 = vld [vmem:[%s198 + $0xf4] sm:$0xf]
      %v413 = vld [vmem:[%s198 + $0xf8] sm:$0xf]
      %v414 = vld [vmem:[%s198 + $0xfc] sm:$0xf]
      %v415 = vld [vmem:[%s207] sm:$0xf]
      %v416 = vld [vmem:[%s207 + $0x4] sm:$0xf]
      %v481 = vunpack.c.l.b16 %v351
      %v482 = vunpack.c.l.b16 %v352
      %v483 = vunpack.c.l.b16 %v353
      %v484 = vunpack.c.l.b16 %v354
      %v485 = vunpack.c.l.b16 %v355
      %v486 = vunpack.c.l.b16 %v356
      %v487 = vunpack.c.l.b16 %v357
      %v488 = vunpack.c.l.b16 %v358
      %v489 = vunpack.c.l.b16 %v359
      %v490 = vunpack.c.l.b16 %v360
      %v491 = vunpack.c.l.b16 %v361
      %v492 = vunpack.c.l.b16 %v362
      %v493 = vunpack.c.l.b16 %v363
      %v494 = vunpack.c.l.b16 %v364
      %v495 = vunpack.c.l.b16 %v365
      %v496 = vunpack.c.l.b16 %v366
      %v497 = vunpack.c.l.b16 %v367
      %v498 = vunpack.c.l.b16 %v368
      %v499 = vunpack.c.l.b16 %v369
      %v500 = vunpack.c.l.b16 %v370
      %v501 = vunpack.c.l.b16 %v371
      %v502 = vunpack.c.l.b16 %v372
      %v503 = vunpack.c.l.b16 %v373
      %v504 = vunpack.c.l.b16 %v374
      %v505 = vunpack.c.l.b16 %v375
      %v506 = vunpack.c.l.b16 %v376
      %v507 = vunpack.c.l.b16 %v377
      %v508 = vunpack.c.l.b16 %v378
      %v509 = vunpack.c.l.b16 %v379
      %v510 = vunpack.c.l.b16 %v380
      %v511 = vunpack.c.l.b16 %v381
      %v512 = vunpack.c.l.b16 %v382
      %v513 = vunpack.c.l.b16 %v383
      %v514 = vunpack.c.l.b16 %v384
      %v515 = vunpack.c.l.b16 %v385
      %v516 = vunpack.c.l.b16 %v386
      %v517 = vunpack.c.l.b16 %v387
      %v518 = vunpack.c.l.b16 %v388
      %v519 = vunpack.c.l.b16 %v389
      %v520 = vunpack.c.l.b16 %v390
      %v521 = vunpack.c.l.b16 %v391
      %v522 = vunpack.c.l.b16 %v392
      %v523 = vunpack.c.l.b16 %v393
      %v524 = vunpack.c.l.b16 %v394
      %v525 = vunpack.c.l.b16 %v395
      %v526 = vunpack.c.l.b16 %v396
      %v527 = vunpack.c.l.b16 %v397
      %v528 = vunpack.c.l.b16 %v398
      %v529 = vunpack.c.l.b16 %v399
      %v530 = vunpack.c.l.b16 %v400
      %v531 = vunpack.c.l.b16 %v401
      %v532 = vunpack.c.l.b16 %v402
      %v533 = vunpack.c.l.b16 %v403
      %v534 = vunpack.c.l.b16 %v404
      %v535 = vunpack.c.l.b16 %v405
      %v536 = vunpack.c.l.b16 %v406
      %v537 = vunpack.c.l.b16 %v407
      %v538 = vunpack.c.l.b16 %v408
      %v539 = vunpack.c.l.b16 %v409
      %v540 = vunpack.c.l.b16 %v410
      %v541 = vunpack.c.l.b16 %v411
      %v542 = vunpack.c.l.b16 %v412
      %v543 = vunpack.c.l.b16 %v413
      %v544 = vunpack.c.l.b16 %v414
      %v545 = vpack.c.b16 %v482, %v481
      %v546 = vpack.c.b16 %v484, %v483
      %v547 = vpack.c.b16 %v486, %v485
      %v548 = vpack.c.b16 %v488, %v487
      %v549 = vpack.c.b16 %v490, %v489
      %v550 = vpack.c.b16 %v492, %v491
      %v551 = vpack.c.b16 %v494, %v493
      %v552 = vpack.c.b16 %v496, %v495
      %v553 = vpack.c.b16 %v498, %v497
      %v554 = vpack.c.b16 %v500, %v499
      %v555 = vpack.c.b16 %v502, %v501
      %v556 = vpack.c.b16 %v504, %v503
      %v557 = vpack.c.b16 %v506, %v505
      %v558 = vpack.c.b16 %v508, %v507
      %v559 = vpack.c.b16 %v510, %v509
      %v560 = vpack.c.b16 %v512, %v511
      %v561 = vpack.c.b16 %v514, %v513
      %v562 = vpack.c.b16 %v516, %v515
      %v563 = vpack.c.b16 %v518, %v517
      %v564 = vpack.c.b16 %v520, %v519
      %v565 = vpack.c.b16 %v522, %v521
      %v566 = vpack.c.b16 %v524, %v523
      %v567 = vpack.c.b16 %v526, %v525
      %v568 = vpack.c.b16 %v528, %v527
      %v569 = vpack.c.b16 %v530, %v529
      %v570 = vpack.c.b16 %v532, %v531
      %v571 = vpack.c.b16 %v534, %v533
      %v572 = vpack.c.b16 %v536, %v535
      %v573 = vpack.c.b16 %v538, %v537
      %v574 = vpack.c.b16 %v540, %v539
      %v575 = vpack.c.b16 %v542, %v541
      %v576 = vpack.c.b16 %v544, %v543
      %v579 = vunpack.c.l.b16 %v415
      %v580 = vunpack.c.l.b16 %v416
      %v581 = vpack.c.b16 %v580, %v579
      %vm583 = vcmask 130048
      %v585 = vsel %vm583, %v545, 0
      %v588 = vsel %vm583, %v546, 0
      %v591 = vsel %vm583, %v547, 0
      %v594 = vsel %vm583, %v548, 0
      %v597 = vsel %vm583, %v549, 0
      %v600 = vsel %vm583, %v550, 0
      %v603 = vsel %vm583, %v551, 0
      %v606 = vsel %vm583, %v552, 0
      %v609 = vsel %vm583, %v553, 0
      %v612 = vsel %vm583, %v554, 0
      %v615 = vsel %vm583, %v555, 0
      %v618 = vsel %vm583, %v556, 0
      %v621 = vsel %vm583, %v557, 0
      %v624 = vsel %vm583, %v558, 0
      %v627 = vsel %vm583, %v559, 0
      %v630 = vsel %vm583, %v560, 0
      %v633 = vsel %vm583, %v561, 0
      %v636 = vsel %vm583, %v562, 0
      %v639 = vsel %vm583, %v563, 0
      %v642 = vsel %vm583, %v564, 0
      %v645 = vsel %vm583, %v565, 0
      %v648 = vsel %vm583, %v566, 0
      %v651 = vsel %vm583, %v567, 0
      %v654 = vsel %vm583, %v568, 0
      %v657 = vsel %vm583, %v569, 0
      %v660 = vsel %vm583, %v570, 0
      %v663 = vsel %vm583, %v571, 0
      %v666 = vsel %vm583, %v572, 0
      %v669 = vsel %vm583, %v573, 0
      %v672 = vsel %vm583, %v574, 0
      %v675 = vsel %vm583, %v575, 0
      %v678 = vsel %vm583, %v576, 0
      %680 = vmatprep.subr.bf16.mxu0 0
      %681 = vmatpush1.bf16.msra.mxu0 %v581
      %682 = vmatprep.subr.bf16.mxu0 0
      %683 = vmatpush1.bf16.msra.mxu0 0
      %684 = vmatprep.subr.bf16.mxu0 0
      %685 = vmatpush1.bf16.msra.mxu0 0
      %686 = vmatprep.subr.bf16.mxu0 0
      %687 = vmatpush1.bf16.msra.mxu0 0
      %688 = vmatprep.subr.bf16.mxu0 0
      %689 = vmatpush1.bf16.msra.mxu0 0
      %690 = vmatprep.subr.bf16.mxu0 0
      %691 = vmatpush1.bf16.msra.mxu0 0
      %692 = vmatprep.subr.bf16.mxu0 0
      %693 = vmatpush1.bf16.msra.mxu0 0
      %694 = vmatprep.subr.bf16.mxu0 0
      %695 = vmatpush1.bf16.msra.mxu0 0
      %696 = vmatprep.subr.bf16.mxu0 0
      %697 = vmatpush1.bf16.msra.mxu0 0
      %698 = vmatprep.subr.bf16.mxu0 0
      %699 = vmatpush1.bf16.msra.mxu0 0
      %700 = vmatprep.subr.bf16.mxu0 0
      %701 = vmatpush1.bf16.msra.mxu0 0
      %702 = vmatprep.subr.bf16.mxu0 0
      %703 = vmatpush1.bf16.msra.mxu0 0
      %704 = vmatprep.subr.bf16.mxu0 0
      %705 = vmatpush1.bf16.msra.mxu0 0
      %706 = vmatprep.subr.bf16.mxu0 0
      %707 = vmatpush1.bf16.msra.mxu0 0
      %708 = vmatprep.subr.bf16.mxu0 0
      %709 = vmatpush1.bf16.msra.mxu0 0
      %710 = vmatprep.subr.bf16.mxu0 0
      %711 = vmatpush1.bf16.msra.mxu0 0
      %712 = vmatprep.mubr.bf16.mxu0 0
      %713 = vmatmul.mubr.bf16.gmra.mrb[0].mxu0 %v585
      %v714 = vpop.f32.mrb[0].mxu0
      %v715 = vadd.f32 0.0, %v714
      %v716 = vpop.f32.mrb[0].mxu0
      %v717 = vpop.f32.mrb[0].mxu0
      %v718 = vadd.f32 0.0, %v717
      %v719 = vpop.f32.mrb[0].mxu0
      %720 = vmatprep.mubr.bf16.mxu0 0
      %721 = vmatmul.mubr.bf16.gmra.mrb[0].mxu0 %v588
      %v722 = vpop.f32.mrb[0].mxu0
      %v723 = vadd.f32 0.0, %v722
      %v724 = vpop.f32.mrb[0].mxu0
      %v725 = vpop.f32.mrb[0].mxu0
      %v726 = vadd.f32 0.0, %v725
      %v727 = vpop.f32.mrb[0].mxu0
      %728 = vmatprep.mubr.bf16.mxu0 0
      %729 = vmatmul.mubr.bf16.gmra.mrb[0].mxu0 %v591
      %v730 = vpop.f32.mrb[0].mxu0
      %v731 = vadd.f32 0.0, %v730
      %v732 = vpop.f32.mrb[0].mxu0
      %v733 = vpop.f32.mrb[0].mxu0
      %v734 = vadd.f32 0.0, %v733
      %v735 = vpop.f32.mrb[0].mxu0
      %736 = vmatprep.mubr.bf16.mxu0 0
      %737 = vmatmul.mubr.bf16.gmra.mrb[0].mxu0 %v594
      %v738 = vpop.f32.mrb[0].mxu0
      %v739 = vadd.f32 0.0, %v738
      %v740 = vpop.f32.mrb[0].mxu0
      %v741 = vpop.f32.mrb[0].mxu0
      %v742 = vadd.f32 0.0, %v741
      %v743 = vpop.f32.mrb[0].mxu0
      %744 = vmatprep.mubr.bf16.mxu0 0
      %745 = vmatmul.mubr.bf16.gmra.mrb[0].mxu0 %v597
      %v746 = vpop.f32.mrb[0].mxu0
      %v747 = vadd.f32 0.0, %v746
      %v748 = vpop.f32.mrb[0].mxu0
      %v749 = vpop.f32.mrb[0].mxu0
      %v750 = vadd.f32 0.0, %v749
      %v751 = vpop.f32.mrb[0].mxu0
      %752 = vmatprep.mubr.bf16.mxu0 0
      %753 = vmatmul.mubr.bf16.gmra.mrb[0].mxu0 %v600
      %v754 = vpop.f32.mrb[0].mxu0
      %v755 = vadd.f32 0.0, %v754
      %v756 = vpop.f32.mrb[0].mxu0
      %v757 = vpop.f32.mrb[0].mxu0
      %v758 = vadd.f32 0.0, %v757
      %v759 = vpop.f32.mrb[0].mxu0
      %760 = vmatprep.mubr.bf16.mxu0 0
      %761 = vmatmul.mubr.bf16.gmra.mrb[0].mxu0 %v603
      %v762 = vpop.f32.mrb[0].mxu0
      %v763 = vadd.f32 0.0, %v762
      %v764 = vpop.f32.mrb[0].mxu0
      %v765 = vpop.f32.mrb[0].mxu0
      %v766 = vadd.f32 0.0, %v765
      %v767 = vpop.f32.mrb[0].mxu0
      %768 = vmatprep.mubr.bf16.mxu0 0
      %769 = vmatmul.mubr.bf16.gmra.mrb[0].mxu0 %v606
      %v770 = vpop.f32.mrb[0].mxu0
      %v771 = vadd.f32 0.0, %v770
      %v772 = vpop.f32.mrb[0].mxu0
      %v773 = vpop.f32.mrb[0].mxu0
      %v774 = vadd.f32 0.0, %v773
      %v775 = vpop.f32.mrb[0].mxu0
      %776 = vmatprep.mubr.bf16.mxu0 0
      %777 = vmatmul.mubr.bf16.gmra.mrb[0].mxu0 %v609
      %v778 = vpop.f32.mrb[0].mxu0
      %v779 = vadd.f32 0.0, %v778
      %v780 = vpop.f32.mrb[0].mxu0
      %v781 = vpop.f32.mrb[0].mxu0
      %v782 = vadd.f32 0.0, %v781
      %v783 = vpop.f32.mrb[0].mxu0
      %784 = vmatprep.mubr.bf16.mxu0 0
      %785 = vmatmul.mubr.bf16.gmra.mrb[0].mxu0 %v612
      %v786 = vpop.f32.mrb[0].mxu0
      %v787 = vadd.f32 0.0, %v786
      %v788 = vpop.f32.mrb[0].mxu0
      %v789 = vpop.f32.mrb[0].mxu0
      %v790 = vadd.f32 0.0, %v789
      %v791 = vpop.f32.mrb[0].mxu0
      %792 = vmatprep.mubr.bf16.mxu0 0
      %793 = vmatmul.mubr.bf16.gmra.mrb[0].mxu0 %v615
      %v794 = vpop.f32.mrb[0].mxu0
      %v795 = vadd.f32 0.0, %v794
      %v796 = vpop.f32.mrb[0].mxu0
      %v797 = vpop.f32.mrb[0].mxu0
      %v798 = vadd.f32 0.0, %v797
      %v799 = vpop.f32.mrb[0].mxu0
      %800 = vmatprep.mubr.bf16.mxu0 0
      %801 = vmatmul.mubr.bf16.gmra.mrb[0].mxu0 %v618
      %v802 = vpop.f32.mrb[0].mxu0
      %v803 = vadd.f32 0.0, %v802
      %v804 = vpop.f32.mrb[0].mxu0
      %v805 = vpop.f32.mrb[0].mxu0
      %v806 = vadd.f32 0.0, %v805
      %v807 = vpop.f32.mrb[0].mxu0
      %808 = vmatprep.mubr.bf16.mxu0 0
      %809 = vmatmul.mubr.bf16.gmra.mrb[0].mxu0 %v621
      %v810 = vpop.f32.mrb[0].mxu0
      %v811 = vadd.f32 0.0, %v810
      %v812 = vpop.f32.mrb[0].mxu0
      %v813 = vpop.f32.mrb[0].mxu0
      %v814 = vadd.f32 0.0, %v813
      %v815 = vpop.f32.mrb[0].mxu0
      %816 = vmatprep.mubr.bf16.mxu0 0
      %817 = vmatmul.mubr.bf16.gmra.mrb[0].mxu0 %v624
      %v818 = vpop.f32.mrb[0].mxu0
      %v819 = vadd.f32 0.0, %v818
      %v820 = vpop.f32.mrb[0].mxu0
      %v821 = vpop.f32.mrb[0].mxu0
      %v822 = vadd.f32 0.0, %v821
      %v823 = vpop.f32.mrb[0].mxu0
      %824 = vmatprep.mubr.bf16.mxu0 0
      %825 = vmatmul.mubr.bf16.gmra.mrb[0].mxu0 %v627
      %v826 = vpop.f32.mrb[0].mxu0
      %v827 = vadd.f32 0.0, %v826
      %v828 = vpop.f32.mrb[0].mxu0
      %v829 = vpop.f32.mrb[0].mxu0
      %v830 = vadd.f32 0.0, %v829
      %v831 = vpop.f32.mrb[0].mxu0
      %832 = vmatprep.mubr.bf16.mxu0 0
      %833 = vmatmul.mubr.bf16.gmra.mrb[0].mxu0 %v630
      %v834 = vpop.f32.mrb[0].mxu0
      %v835 = vadd.f32 0.0, %v834
      %v836 = vpop.f32.mrb[0].mxu0
      %v837 = vpop.f32.mrb[0].mxu0
      %v838 = vadd.f32 0.0, %v837
      %v839 = vpop.f32.mrb[0].mxu0
      %840 = vmatprep.mubr.bf16.mxu0 0
      %841 = vmatmul.mubr.bf16.gmra.mrb[0].mxu0 %v633
      %v842 = vpop.f32.mrb[0].mxu0
      %v843 = vadd.f32 0.0, %v842
      %v844 = vpop.f32.mrb[0].mxu0
      %v845 = vpop.f32.mrb[0].mxu0
      %v846 = vadd.f32 0.0, %v845
      %v847 = vpop.f32.mrb[0].mxu0
      %848 = vmatprep.mubr.bf16.mxu0 0
      %849 = vmatmul.mubr.bf16.gmra.mrb[0].mxu0 %v636
      %v850 = vpop.f32.mrb[0].mxu0
      %v851 = vadd.f32 0.0, %v850
      %v852 = vpop.f32.mrb[0].mxu0
      %v853 = vpop.f32.mrb[0].mxu0
      %v854 = vadd.f32 0.0, %v853
      %v855 = vpop.f32.mrb[0].mxu0
      %856 = vmatprep.mubr.bf16.mxu0 0
      %857 = vmatmul.mubr.bf16.gmra.mrb[0].mxu0 %v639
      %v858 = vpop.f32.mrb[0].mxu0
      %v859 = vadd.f32 0.0, %v858
      %v860 = vpop.f32.mrb[0].mxu0
      %v861 = vpop.f32.mrb[0].mxu0
      %v862 = vadd.f32 0.0, %v861
      %v863 = vpop.f32.mrb[0].mxu0
      %864 = vmatprep.mubr.bf16.mxu0 0
      %865 = vmatmul.mubr.bf16.gmra.mrb[0].mxu0 %v642
      %v866 = vpop.f32.mrb[0].mxu0
      %v867 = vadd.f32 0.0, %v866
      %v868 = vpop.f32.mrb[0].mxu0
      %v869 = vpop.f32.mrb[0].mxu0
      %v870 = vadd.f32 0.0, %v869
      %v871 = vpop.f32.mrb[0].mxu0
      %872 = vmatprep.mubr.bf16.mxu0 0
      %873 = vmatmul.mubr.bf16.gmra.mrb[0].mxu0 %v645
      %v874 = vpop.f32.mrb[0].mxu0
      %v875 = vadd.f32 0.0, %v874
      %v876 = vpop.f32.mrb[0].mxu0
      %v877 = vpop.f32.mrb[0].mxu0
      %v878 = vadd.f32 0.0, %v877
      %v879 = vpop.f32.mrb[0].mxu0
      %880 = vmatprep.mubr.bf16.mxu0 0
      %881 = vmatmul.mubr.bf16.gmra.mrb[0].mxu0 %v648
      %v882 = vpop.f32.mrb[0].mxu0
      %v883 = vadd.f32 0.0, %v882
      %v884 = vpop.f32.mrb[0].mxu0
      %v885 = vpop.f32.mrb[0].mxu0
      %v886 = vadd.f32 0.0, %v885
      %v887 = vpop.f32.mrb[0].mxu0
      %888 = vmatprep.mubr.bf16.mxu0 0
      %889 = vmatmul.mubr.bf16.gmra.mrb[0].mxu0 %v651
      %v890 = vpop.f32.mrb[0].mxu0
      %v891 = vadd.f32 0.0, %v890
      %v892 = vpop.f32.mrb[0].mxu0
      %v893 = vpop.f32.mrb[0].mxu0
      %v894 = vadd.f32 0.0, %v893
      %v895 = vpop.f32.mrb[0].mxu0
      %896 = vmatprep.mubr.bf16.mxu0 0
      %897 = vmatmul.mubr.bf16.gmra.mrb[0].mxu0 %v654
      %v898 = vpop.f32.mrb[0].mxu0
      %v899 = vadd.f32 0.0, %v898
      %v900 = vpop.f32.mrb[0].mxu0
      %v901 = vpop.f32.mrb[0].mxu0
      %v902 = vadd.f32 0.0, %v901
      %v903 = vpop.f32.mrb[0].mxu0
      %904 = vmatprep.mubr.bf16.mxu0 0
      %905 = vmatmul.mubr.bf16.gmra.mrb[0].mxu0 %v657
      %v906 = vpop.f32.mrb[0].mxu0
      %v907 = vadd.f32 0.0, %v906
      %v908 = vpop.f32.mrb[0].mxu0
      %v909 = vpop.f32.mrb[0].mxu0
      %v910 = vadd.f32 0.0, %v909
      %v911 = vpop.f32.mrb[0].mxu0
      %912 = vmatprep.mubr.bf16.mxu0 0
      %913 = vmatmul.mubr.bf16.gmra.mrb[0].mxu0 %v660
      %v914 = vpop.f32.mrb[0].mxu0
      %v915 = vadd.f32 0.0, %v914
      %v916 = vpop.f32.mrb[0].mxu0
      %v917 = vpop.f32.mrb[0].mxu0
      %v918 = vadd.f32 0.0, %v917
      %v919 = vpop.f32.mrb[0].mxu0
      %920 = vmatprep.mubr.bf16.mxu0 0
      %921 = vmatmul.mubr.bf16.gmra.mrb[0].mxu0 %v663
      %v922 = vpop.f32.mrb[0].mxu0
      %v923 = vadd.f32 0.0, %v922
      %v924 = vpop.f32.mrb[0].mxu0
      %v925 = vpop.f32.mrb[0].mxu0
      %v926 = vadd.f32 0.0, %v925
      %v927 = vpop.f32.mrb[0].mxu0
      %928 = vmatprep.mubr.bf16.mxu0 0
      %929 = vmatmul.mubr.bf16.gmra.mrb[0].mxu0 %v666
      %v930 = vpop.f32.mrb[0].mxu0
      %v931 = vadd.f32 0.0, %v930
      %v932 = vpop.f32.mrb[0].mxu0
      %v933 = vpop.f32.mrb[0].mxu0
      %v934 = vadd.f32 0.0, %v933
      %v935 = vpop.f32.mrb[0].mxu0
      %936 = vmatprep.mubr.bf16.mxu0 0
      %937 = vmatmul.mubr.bf16.gmra.mrb[0].mxu0 %v669
      %v938 = vpop.f32.mrb[0].mxu0
      %v939 = vadd.f32 0.0, %v938
      %v940 = vpop.f32.mrb[0].mxu0
      %v941 = vpop.f32.mrb[0].mxu0
      %v942 = vadd.f32 0.0, %v941
      %v943 = vpop.f32.mrb[0].mxu0
      %944 = vmatprep.mubr.bf16.mxu0 0
      %945 = vmatmul.mubr.bf16.gmra.mrb[0].mxu0 %v672
      %v946 = vpop.f32.mrb[0].mxu0
      %v947 = vadd.f32 0.0, %v946
      %v948 = vpop.f32.mrb[0].mxu0
      %v949 = vpop.f32.mrb[0].mxu0
      %v950 = vadd.f32 0.0, %v949
      %v951 = vpop.f32.mrb[0].mxu0
      %952 = vmatprep.mubr.bf16.mxu0 0
      %953 = vmatmul.mubr.bf16.gmra.mrb[0].mxu0 %v675
      %v954 = vpop.f32.mrb[0].mxu0
      %v955 = vadd.f32 0.0, %v954
      %v956 = vpop.f32.mrb[0].mxu0
      %v957 = vpop.f32.mrb[0].mxu0
      %v958 = vadd.f32 0.0, %v957
      %v959 = vpop.f32.mrb[0].mxu0
      %960 = vmatprep.mubr.bf16.mxu0 0
      %961 = vmatmul.mubr.bf16.gmra.mrb[0].mxu0 %v678
      %v962 = vpop.f32.mrb[0].mxu0
      %v963 = vadd.f32 0.0, %v962
      %v964 = vpop.f32.mrb[0].mxu0
      %v965 = vpop.f32.mrb[0].mxu0
      %v966 = vadd.f32 0.0, %v965
      %v967 = vpop.f32.mrb[0].mxu0
      %968 = vdwg.mxu0
      %v969 = vadd.f32 %v287, %v715
      %v970 = vadd.f32 %v288, %v718
      %v971 = vadd.f32 %v289, %v723
      %v972 = vadd.f32 %v290, %v726
      %v973 = vadd.f32 %v291, %v731
      %v974 = vadd.f32 %v292, %v734
      %v975 = vadd.f32 %v293, %v739
      %v976 = vadd.f32 %v294, %v742
      %v977 = vadd.f32 %v295, %v747
      %v978 = vadd.f32 %v296, %v750
      %v979 = vadd.f32 %v297, %v755
      %v980 = vadd.f32 %v298, %v758
      %v981 = vadd.f32 %v299, %v763
      %v982 = vadd.f32 %v300, %v766
      %v983 = vadd.f32 %v301, %v771
      %v984 = vadd.f32 %v302, %v774
      %v985 = vadd.f32 %v303, %v779
      %v986 = vadd.f32 %v304, %v782
      %v987 = vadd.f32 %v305, %v787
      %v988 = vadd.f32 %v306, %v790
      %v989 = vadd.f32 %v307, %v795
      %v990 = vadd.f32 %v308, %v798
      %v991 = vadd.f32 %v309, %v803
      %v992 = vadd.f32 %v310, %v806
      %v993 = vadd.f32 %v311, %v811
      %v994 = vadd.f32 %v312, %v814
      %v995 = vadd.f32 %v313, %v819
      %v996 = vadd.f32 %v314, %v822
      %v997 = vadd.f32 %v315, %v827
      %v998 = vadd.f32 %v316, %v830
      %v999 = vadd.f32 %v317, %v835
      %v1000 = vadd.f32 %v318, %v838
      %v1001 = vadd.f32 %v319, %v843
      %v1002 = vadd.f32 %v320, %v846
      %v1003 = vadd.f32 %v321, %v851
      %v1004 = vadd.f32 %v322, %v854
      %v1005 = vadd.f32 %v323, %v859
      %v1006 = vadd.f32 %v324, %v862
      %v1007 = vadd.f32 %v325, %v867
      %v1008 = vadd.f32 %v326, %v870
      %v1009 = vadd.f32 %v327, %v875
      %v1010 = vadd.f32 %v328, %v878
      %v1011 = vadd.f32 %v329, %v883
      %v1012 = vadd.f32 %v330, %v886
      %v1013 = vadd.f32 %v331, %v891
      %v1014 = vadd.f32 %v332, %v894
      %v1015 = vadd.f32 %v333, %v899
      %v1016 = vadd.f32 %v334, %v902
      %v1017 = vadd.f32 %v335, %v907
      %v1018 = vadd.f32 %v336, %v910
      %v1019 = vadd.f32 %v337, %v915
      %v1020 = vadd.f32 %v338, %v918
      %v1021 = vadd.f32 %v339, %v923
      %v1022 = vadd.f32 %v340, %v926
      %v1023 = vadd.f32 %v341, %v931
      %v1024 = vadd.f32 %v342, %v934
      %v1025 = vadd.f32 %v343, %v939
      %v1026 = vadd.f32 %v344, %v942
      %v1027 = vadd.f32 %v345, %v947
      %v1028 = vadd.f32 %v346, %v950
      %v1029 = vadd.f32 %v347, %v955
      %v1030 = vadd.f32 %v348, %v958
      %v1031 = vadd.f32 %v349, %v963
      %v1032 = vadd.f32 %v350, %v966
      %1033 = vst [vmem:[#allocation2] sm:$0xff] %v969
      %1034 = vst [vmem:[#allocation2 + $0x8] sm:$0xff] %v970
      %1035 = vst [vmem:[#allocation2 + $0x10] sm:$0xff] %v971
      %1036 = vst [vmem:[#allocation2 + $0x18] sm:$0xff] %v972
      %1037 = vst [vmem:[#allocation2 + $0x20] sm:$0xff] %v973
      %1038 = vst [vmem:[#allocation2 + $0x28] sm:$0xff] %v974
      %1039 = vst [vmem:[#allocation2 + $0x30] sm:$0xff] %v975
      %1040 = vst [vmem:[#allocation2 + $0x38] sm:$0xff] %v976
      %1041 = vst [vmem:[#allocation2 + $0x40] sm:$0xff] %v977
      %1042 = vst [vmem:[#allocation2 + $0x48] sm:$0xff] %v978
      %1043 = vst [vmem:[#allocation2 + $0x50] sm:$0xff] %v979
      %1044 = vst [vmem:[#allocation2 + $0x58] sm:$0xff] %v980
      %1045 = vst [vmem:[#allocation2 + $0x60] sm:$0xff] %v981
      %1046 = vst [vmem:[#allocation2 + $0x68] sm:$0xff] %v982
      %1047 = vst [vmem:[#allocation2 + $0x70] sm:$0xff] %v983
      %1048 = vst [vmem:[#allocation2 + $0x78] sm:$0xff] %v984
      %1049 = vst [vmem:[#allocation2 + $0x80] sm:$0xff] %v985
      %1050 = vst [vmem:[#allocation2 + $0x88] sm:$0xff] %v986
      %1051 = vst [vmem:[#allocation2 + $0x90] sm:$0xff] %v987
      %1052 = vst [vmem:[#allocation2 + $0x98] sm:$0xff] %v988
      %1053 = vst [vmem:[#allocation2 + $0xa0] sm:$0xff] %v989
      %1054 = vst [vmem:[#allocation2 + $0xa8] sm:$0xff] %v990
      %1055 = vst [vmem:[#allocation2 + $0xb0] sm:$0xff] %v991
      %1056 = vst [vmem:[#allocation2 + $0xb8] sm:$0xff] %v992
      %1057 = vst [vmem:[#allocation2 + $0xc0] sm:$0xff] %v993
      %1058 = vst [vmem:[#allocation2 + $0xc8] sm:$0xff] %v994
      %1059 = vst [vmem:[#allocation2 + $0xd0] sm:$0xff] %v995
      %1060 = vst [vmem:[#allocation2 + $0xd8] sm:$0xff] %v996
      %1061 = vst [vmem:[#allocation2 + $0xe0] sm:$0xff] %v997
      %1062 = vst [vmem:[#allocation2 + $0xe8] sm:$0xff] %v998
      %1063 = vst [vmem:[#allocation2 + $0xf0] sm:$0xff] %v999
      %1064 = vst [vmem:[#allocation2 + $0xf8] sm:$0xff] %v1000
      %1065 = vst [vmem:[#allocation2 + $0x100] sm:$0xff] %v1001
      %1066 = vst [vmem:[#allocation2 + $0x108] sm:$0xff] %v1002
      %1067 = vst [vmem:[#allocation2 + $0x110] sm:$0xff] %v1003
      %1068 = vst [vmem:[#allocation2 + $0x118] sm:$0xff] %v1004
      %1069 = vst [vmem:[#allocation2 + $0x120] sm:$0xff] %v1005
      %1070 = vst [vmem:[#allocation2 + $0x128] sm:$0xff] %v1006
      %1071 = vst [vmem:[#allocation2 + $0x130] sm:$0xff] %v1007
      %1072 = vst [vmem:[#allocation2 + $0x138] sm:$0xff] %v1008
      %1073 = vst [vmem:[#allocation2 + $0x140] sm:$0xff] %v1009
      %1074 = vst [vmem:[#allocation2 + $0x148] sm:$0xff] %v1010
      %1075 = vst [vmem:[#allocation2 + $0x150] sm:$0xff] %v1011
      %1076 = vst [vmem:[#allocation2 + $0x158] sm:$0xff] %v1012
      %1077 = vst [vmem:[#allocation2 + $0x160] sm:$0xff] %v1013
      %1078 = vst [vmem:[#allocation2 + $0x168] sm:$0xff] %v1014
      %1079 = vst [vmem:[#allocation2 + $0x170] sm:$0xff] %v1015
      %1080 = vst [vmem:[#allocation2 + $0x178] sm:$0xff] %v1016
      %1081 = vst [vmem:[#allocation2 + $0x180] sm:$0xff] %v1017
      %1082 = vst [vmem:[#allocation2 + $0x188] sm:$0xff] %v1018
      %1083 = vst [vmem:[#allocation2 + $0x190] sm:$0xff] %v1019
      %1084 = vst [vmem:[#allocation2 + $0x198] sm:$0xff] %v1020
      %1085 = vst [vmem:[#allocation2 + $0x1a0] sm:$0xff] %v1021
      %1086 = vst [vmem:[#allocation2 + $0x1a8] sm:$0xff] %v1022
      %1087 = vst [vmem:[#allocation2 + $0x1b0] sm:$0xff] %v1023
      %1088 = vst [vmem:[#allocation2 + $0x1b8] sm:$0xff] %v1024
      %1089 = vst [vmem:[#allocation2 + $0x1c0] sm:$0xff] %v1025
      %1090 = vst [vmem:[#allocation2 + $0x1c8] sm:$0xff] %v1026
      %1091 = vst [vmem:[#allocation2 + $0x1d0] sm:$0xff] %v1027
      %1092 = vst [vmem:[#allocation2 + $0x1d8] sm:$0xff] %v1028
      %1093 = vst [vmem:[#allocation2 + $0x1e0] sm:$0xff] %v1029
      %1094 = vst [vmem:[#allocation2 + $0x1e8] sm:$0xff] %v1030
      %1095 = vst [vmem:[#allocation2 + $0x1f0] sm:$0xff] %v1031
      %1096 = vst [vmem:[#allocation2 + $0x1f8] sm:$0xff] %v1032
      // Predicated region
      $region33: #{generator_forward.18} parent=27 // pred_check
        %p1097 = pneg %p219
      $region34: #{generator_forward.18} parent=27 // pred_check_branch
        %1099 = sbr.rel (%p1097) target = $region36
      $region35: #{generator_forward.18} parent=27 // pred_region
        %v1100 = vld [vmem:[#allocation2] sm:$0xff]
        %v1101 = vld [vmem:[#allocation2 + $0x8] sm:$0xff]
        %v1102 = vld [vmem:[#allocation2 + $0x10] sm:$0xff]
        %v1103 = vld [vmem:[#allocation2 + $0x18] sm:$0xff]
        %v1104 = vld [vmem:[#allocation2 + $0x20] sm:$0xff]
        %v1105 = vld [vmem:[#allocation2 + $0x28] sm:$0xff]
        %v1106 = vld [vmem:[#allocation2 + $0x30] sm:$0xff]
        %v1107 = vld [vmem:[#allocation2 + $0x38] sm:$0xff]
        %v1108 = vld [vmem:[#allocation2 + $0x40] sm:$0xff]
        %v1109 = vld [vmem:[#allocation2 + $0x48] sm:$0xff]
        %v1110 = vld [vmem:[#allocation2 + $0x50] sm:$0xff]
        %v1111 = vld [vmem:[#allocation2 + $0x58] sm:$0xff]
        %v1112 = vld [vmem:[#allocation2 + $0x60] sm:$0xff]
        %v1113 = vld [vmem:[#allocation2 + $0x68] sm:$0xff]
        %v1114 = vld [vmem:[#allocation2 + $0x70] sm:$0xff]
        %v1115 = vld [vmem:[#allocation2 + $0x78] sm:$0xff]
        %v1116 = vld [vmem:[#allocation2 + $0x80] sm:$0xff]
        %v1117 = vld [vmem:[#allocation2 + $0x88] sm:$0xff]
        %v1118 = vld [vmem:[#allocation2 + $0x90] sm:$0xff]
        %v1119 = vld [vmem:[#allocation2 + $0x98] sm:$0xff]
        %v1120 = vld [vmem:[#allocation2 + $0xa0] sm:$0xff]
        %v1121 = vld [vmem:[#allocation2 + $0xa8] sm:$0xff]
        %v1122 = vld [vmem:[#allocation2 + $0xb0] sm:$0xff]
        %v1123 = vld [vmem:[#allocation2 + $0xb8] sm:$0xff]
        %v1124 = vld [vmem:[#allocation2 + $0xc0] sm:$0xff]
        %v1125 = vld [vmem:[#allocation2 + $0xc8] sm:$0xff]
        %v1126 = vld [vmem:[#allocation2 + $0xd0] sm:$0xff]
        %v1127 = vld [vmem:[#allocation2 + $0xd8] sm:$0xff]
        %v1128 = vld [vmem:[#allocation2 + $0xe0] sm:$0xff]
        %v1129 = vld [vmem:[#allocation2 + $0xe8] sm:$0xff]
        %v1130 = vld [vmem:[#allocation2 + $0xf0] sm:$0xff]
        %v1131 = vld [vmem:[#allocation2 + $0xf8] sm:$0xff]
        %v1132 = vld [vmem:[#allocation2 + $0x100] sm:$0xff]
        %v1133 = vld [vmem:[#allocation2 + $0x108] sm:$0xff]
        %v1134 = vld [vmem:[#allocation2 + $0x110] sm:$0xff]
        %v1135 = vld [vmem:[#allocation2 + $0x118] sm:$0xff]
        %v1136 = vld [vmem:[#allocation2 + $0x120] sm:$0xff]
        %v1137 = vld [vmem:[#allocation2 + $0x128] sm:$0xff]
        %v1138 = vld [vmem:[#allocation2 + $0x130] sm:$0xff]
        %v1139 = vld [vmem:[#allocation2 + $0x138] sm:$0xff]
        %v1140 = vld [vmem:[#allocation2 + $0x140] sm:$0xff]
        %v1141 = vld [vmem:[#allocation2 + $0x148] sm:$0xff]
        %v1142 = vld [vmem:[#allocation2 + $0x150] sm:$0xff]
        %v1143 = vld [vmem:[#allocation2 + $0x158] sm:$0xff]
        %v1144 = vld [vmem:[#allocation2 + $0x160] sm:$0xff]
        %v1145 = vld [vmem:[#allocation2 + $0x168] sm:$0xff]
        %v1146 = vld [vmem:[#allocation2 + $0x170] sm:$0xff]
        %v1147 = vld [vmem:[#allocation2 + $0x178] sm:$0xff]
        %v1148 = vld [vmem:[#allocation2 + $0x180] sm:$0xff]
        %v1149 = vld [vmem:[#allocation2 + $0x188] sm:$0xff]
        %v1150 = vld [vmem:[#allocation2 + $0x190] sm:$0xff]
        %v1151 = vld [vmem:[#allocation2 + $0x198] sm:$0xff]
        %v1152 = vld [vmem:[#allocation2 + $0x1a0] sm:$0xff]
        %v1153 = vld [vmem:[#allocation2 + $0x1a8] sm:$0xff]
        %v1154 = vld [vmem:[#allocation2 + $0x1b0] sm:$0xff]
        %v1155 = vld [vmem:[#allocation2 + $0x1b8] sm:$0xff]
        %v1156 = vld [vmem:[#allocation2 + $0x1c0] sm:$0xff]
        %v1157 = vld [vmem:[#allocation2 + $0x1c8] sm:$0xff]
        %v1158 = vld [vmem:[#allocation2 + $0x1d0] sm:$0xff]
        %v1159 = vld [vmem:[#allocation2 + $0x1d8] sm:$0xff]
        %v1160 = vld [vmem:[#allocation2 + $0x1e0] sm:$0xff]
        %v1161 = vld [vmem:[#allocation2 + $0x1e8] sm:$0xff]
        %v1162 = vld [vmem:[#allocation2 + $0x1f0] sm:$0xff]
        %v1163 = vld [vmem:[#allocation2 + $0x1f8] sm:$0xff]
        %1164 = vst [vmem:[%s216] sm:$0xff] %v1100
        %1165 = vst [vmem:[%s216 + $0x8] sm:$0xff] %v1101
        %1166 = vst [vmem:[%s216 + $0x10] sm:$0xff] %v1102
        %1167 = vst [vmem:[%s216 + $0x18] sm:$0xff] %v1103
        %1168 = vst [vmem:[%s216 + $0x20] sm:$0xff] %v1104
        %1169 = vst [vmem:[%s216 + $0x28] sm:$0xff] %v1105
        %1170 = vst [vmem:[%s216 + $0x30] sm:$0xff] %v1106
        %1171 = vst [vmem:[%s216 + $0x38] sm:$0xff] %v1107
        %1172 = vst [vmem:[%s216 + $0x40] sm:$0xff] %v1108
        %1173 = vst [vmem:[%s216 + $0x48] sm:$0xff] %v1109
        %1174 = vst [vmem:[%s216 + $0x50] sm:$0xff] %v1110
        %1175 = vst [vmem:[%s216 + $0x58] sm:$0xff] %v1111
        %1176 = vst [vmem:[%s216 + $0x60] sm:$0xff] %v1112
        %1177 = vst [vmem:[%s216 + $0x68] sm:$0xff] %v1113
        %1178 = vst [vmem:[%s216 + $0x70] sm:$0xff] %v1114
        %1179 = vst [vmem:[%s216 + $0x78] sm:$0xff] %v1115
        %1180 = vst [vmem:[%s216 + $0x80] sm:$0xff] %v1116
        %1181 = vst [vmem:[%s216 + $0x88] sm:$0xff] %v1117
        %1182 = vst [vmem:[%s216 + $0x90] sm:$0xff] %v1118
        %1183 = vst [vmem:[%s216 + $0x98] sm:$0xff] %v1119
        %1184 = vst [vmem:[%s216 + $0xa0] sm:$0xff] %v1120
        %1185 = vst [vmem:[%s216 + $0xa8] sm:$0xff] %v1121
        %1186 = vst [vmem:[%s216 + $0xb0] sm:$0xff] %v1122
        %1187 = vst [vmem:[%s216 + $0xb8] sm:$0xff] %v1123
        %1188 = vst [vmem:[%s216 + $0xc0] sm:$0xff] %v1124
        %1189 = vst [vmem:[%s216 + $0xc8] sm:$0xff] %v1125
        %1190 = vst [vmem:[%s216 + $0xd0] sm:$0xff] %v1126
        %1191 = vst [vmem:[%s216 + $0xd8] sm:$0xff] %v1127
        %1192 = vst [vmem:[%s216 + $0xe0] sm:$0xff] %v1128
        %1193 = vst [vmem:[%s216 + $0xe8] sm:$0xff] %v1129
        %1194 = vst [vmem:[%s216 + $0xf0] sm:$0xff] %v1130
        %1195 = vst [vmem:[%s216 + $0xf8] sm:$0xff] %v1131
        %1196 = vst [vmem:[%s216 + $0x100] sm:$0xff] %v1132
        %1197 = vst [vmem:[%s216 + $0x108] sm:$0xff] %v1133
        %1198 = vst [vmem:[%s216 + $0x110] sm:$0xff] %v1134
        %1199 = vst [vmem:[%s216 + $0x118] sm:$0xff] %v1135
        %1200 = vst [vmem:[%s216 + $0x120] sm:$0xff] %v1136
        %1201 = vst [vmem:[%s216 + $0x128] sm:$0xff] %v1137
        %1202 = vst [vmem:[%s216 + $0x130] sm:$0xff] %v1138
        %1203 = vst [vmem:[%s216 + $0x138] sm:$0xff] %v1139
        %1204 = vst [vmem:[%s216 + $0x140] sm:$0xff] %v1140
        %1205 = vst [vmem:[%s216 + $0x148] sm:$0xff] %v1141
        %1206 = vst [vmem:[%s216 + $0x150] sm:$0xff] %v1142
        %1207 = vst [vmem:[%s216 + $0x158] sm:$0xff] %v1143
        %1208 = vst [vmem:[%s216 + $0x160] sm:$0xff] %v1144
        %1209 = vst [vmem:[%s216 + $0x168] sm:$0xff] %v1145
        %1210 = vst [vmem:[%s216 + $0x170] sm:$0xff] %v1146
        %1211 = vst [vmem:[%s216 + $0x178] sm:$0xff] %v1147
        %1212 = vst [vmem:[%s216 + $0x180] sm:$0xff] %v1148
        %1213 = vst [vmem:[%s216 + $0x188] sm:$0xff] %v1149
        %1214 = vst [vmem:[%s216 + $0x190] sm:$0xff] %v1150
        %1215 = vst [vmem:[%s216 + $0x198] sm:$0xff] %v1151
        %1216 = vst [vmem:[%s216 + $0x1a0] sm:$0xff] %v1152
        %1217 = vst [vmem:[%s216 + $0x1a8] sm:$0xff] %v1153
        %1218 = vst [vmem:[%s216 + $0x1b0] sm:$0xff] %v1154
        %1219 = vst [vmem:[%s216 + $0x1b8] sm:$0xff] %v1155
        %1220 = vst [vmem:[%s216 + $0x1c0] sm:$0xff] %v1156
        %1221 = vst [vmem:[%s216 + $0x1c8] sm:$0xff] %v1157
        %1222 = vst [vmem:[%s216 + $0x1d0] sm:$0xff] %v1158
        %1223 = vst [vmem:[%s216 + $0x1d8] sm:$0xff] %v1159
        %1224 = vst [vmem:[%s216 + $0x1e0] sm:$0xff] %v1160
        %1225 = vst [vmem:[%s216 + $0x1e8] sm:$0xff] %v1161
        %1226 = vst [vmem:[%s216 + $0x1f0] sm:$0xff] %v1162
        %1227 = vst [vmem:[%s216 + $0x1f8] sm:$0xff] %v1163
      $region36: #{generator_forward.18} parent=27 // pred_fallthru
        _
      %s1228 = smul.u32 64, %s18
      %p1229 = scmp.lt.s32.totalorder %s1228, 255
      %s1230 = scalar_select %p1229, %s1228, 255
      %p1231 = scmp.lt.s32.totalorder %s19, 0
      %s1232 = scalar_select %p1231, %s19, 0
      %s1233 = sadd.s32 %s1232, %s1230
      %s1234 = smul.addr %s1233, 8
      %s1235 = scalar_lea.vmem %s2, %s1234
      // Predicated region
      $region37: #{generator_forward.18} parent=27 // pred_check
        %p1236 = pneg %p108
      $region38: #{generator_forward.18} parent=27 // pred_check_branch
        %1238 = sbr.rel (%p1236) target = $region40
      $region39: #{generator_forward.18} parent=27 // pred_region
        %s1239 = smul.u32 64, %s18
      $region40: #{generator_forward.18} parent=27 // pred_fallthru
        _
    $region28: #{generator_forward.18} parent=5 // pred_fallthru
      _
    %p1240 = scmp.le.s32.totalorder 2, %s8
    // Predicated region
    $region41: #{generator_forward.18} parent=5 // pred_check
      %p1241 = pneg %p1240
    $region42: #{generator_forward.18} parent=5 // pred_check_branch
      %1243 = sbr.rel (%p1241) target = $region44
    $region43: #{generator_forward.18} parent=5 // pred_region
      %s1244 = ssub.s32 %s8, 2
      // Predicated region
      $region45: #{generator_forward.18} parent=43 // pred_check
        %p1245 = pneg %p114
      $region46: #{generator_forward.18} parent=43 // pred_check_branch
        %1247 = sbr.rel (%p1245) target = $region48
      $region47: #{generator_forward.18} parent=43 // pred_region
        %s1248 = smul.u32 64, %s21
        %p1249 = scmp.lt.s32.totalorder %s1248, 255
        %s1250 = scalar_select %p1249, %s1248, 255
        %p1251 = scmp.lt.s32.totalorder %s22, 0
        %s1252 = scalar_select %p1251, %s22, 0
        %s1253 = sadd.s32 %s1252, %s1250
        %s1254 = smul.addr %s1253, 8
        %s1255 = scalar_lea.vmem %s2, %s1254
      $region48: #{generator_forward.18} parent=43 // pred_fallthru
        _
    $region44: #{generator_forward.18} parent=5 // pred_fallthru
      _
  $region6: #{generator_forward.18} parent=0 // loop_footer
    %s12 = sadd.s32 1, %s8
  $region7: #{generator_forward.18} parent=0 // loop_footer_branch
    %7 = sbr.rel target = $region3
  $region8: #{generator_forward.18} parent=0 // loop_exit
    _

// kernel: tile.66
$region0: #{tile.66}
  #allocation0 [shape = 's32[1]{0}', space=sflag, size = 0x4, scoped, tag = 'scoped memory for tile.66']
  %s0 = inlined_call_operand.vmem [shape: f32[8], index: 0, kind: input, shape index: {}]
  %s1 = inlined_call_operand.vmem [shape: f32[16,8], index: 1, kind: output, shape index: {}]
  // Predicated region
  $region2: #{tile.66} parent=0 // pred_check
    _
  $region3: #{tile.66} parent=0 // pred_check_branch
    %3 = sbr.rel (0) target = $region5
  $region4: #{tile.66} parent=0 // pred_region
    _
  $region5: #{tile.66} parent=0 // pred_fallthru
    _
  %v4 = vld [vmem:[%s0] ss:$0 sm:$0xff]
  %5 = vst [vmem:[%s1] sm:$0xff] %v4
  %s6 = scalar_lea.vmem %s1, 8
  %7 = vst [vmem:[%s6] sm:$0xff] %v4

// kernel: tile.67
$region0: #{tile.67}
  %s0 = inlined_call_operand.vmem [shape: f32[16,8], index: 0, kind: input, shape index: {}]
  %s1 = inlined_call_operand.vmem [shape: f32[1,128], index: 1, kind: output, shape index: {}]
  $region1: #{tile.67} parent=0
    #allocation0 [shape = 'u8[4096]{0}', space=vmem, size = 0x1000, scoped, tag = 'scoped mem for output reshape']
    %v2 = vld [vmem:[%s0] sm:$0x1]
    %vm3 = vcmask 64512
    %4 = vst.msk [vmem:[#allocation0] sm:$0x1] %vm3, %v2
    %s5 = scalar_lea.vmem %s0, 15
    %v6 = vld [vmem:[%s5] sm:$0x1]
    %7 = vrot.lane.b32.xlu0 %v6, 120
    %v8 = vpop.permute.xlu0 %7
    %vm9 = vcmask 1048512
    %10 = vst.msk [vmem:[#allocation0] sm:$0x1] %vm9, %v8
    %s11 = scalar_lea.vmem %s0, 14
    %v12 = vld [vmem:[%s11] sm:$0x1]
    %13 = vrot.lane.b32.xlu0 %v12, 112
    %v14 = vpop.permute.xlu0 %13
    %vm15 = vcmask 982912
    %16 = vst.msk [vmem:[#allocation0] sm:$0x1] %vm15, %v14
    %s17 = scalar_lea.vmem %s0, 13
    %v18 = vld [vmem:[%s17] sm:$0x1]
    %19 = vrot.lane.b32.xlu0 %v18, 104
    %v20 = vpop.permute.xlu0 %19
    %vm21 = vcmask 917312
    %22 = vst.msk [vmem:[#allocation0] sm:$0x1] %vm21, %v20
    %s23 = scalar_lea.vmem %s0, 12
    %v24 = vld [vmem:[%s23] sm:$0x1]
    %25 = vrot.lane.b32.xlu0 %v24, 96
    %v26 = vpop.permute.xlu0 %25
    %vm27 = vcmask 851712
    %28 = vst.msk [vmem:[#allocation0] sm:$0x1] %vm27, %v26
    %s29 = scalar_lea.vmem %s0, 11
    %v30 = vld [vmem:[%s29] sm:$0x1]
    %31 = vrot.lane.b32.xlu0 %v30, 88
    %v32 = vpop.permute.xlu0 %31
    %vm33 = vcmask 786112
    %34 = vst.msk [vmem:[#allocation0] sm:$0x1] %vm33, %v32
    %s35 = scalar_lea.vmem %s0, 10
    %v36 = vld [vmem:[%s35] sm:$0x1]
    %37 = vrot.lane.b32.xlu0 %v36, 80
    %v38 = vpop.permute.xlu0 %37
    %vm39 = vcmask 720512
    %40 = vst.msk [vmem:[#allocation0] sm:$0x1] %vm39, %v38
    %s41 = scalar_lea.vmem %s0, 9
    %v42 = vld [vmem:[%s41] sm:$0x1]
    %43 = vrot.lane.b32.xlu0 %v42, 72
    %v44 = vpop.permute.xlu0 %43
    %vm45 = vcmask 654912
    %46 = vst.msk [vmem:[#allocation0] sm:$0x1] %vm45, %v44
    %s47 = scalar_lea.vmem %s0, 8
    %v48 = vld [vmem:[%s47] sm:$0x1]
    %49 = vrot.lane.b32.xlu0 %v48, 64
    %v50 = vpop.permute.xlu0 %49
    %vm51 = vcmask 589312
    %52 = vst.msk [vmem:[#allocation0] sm:$0x1] %vm51, %v50
    %s53 = scalar_lea.vmem %s0, 7
    %v54 = vld [vmem:[%s53] sm:$0x1]
    %55 = vrot.lane.b32.xlu0 %v54, 56
    %v56 = vpop.permute.xlu0 %55
    %vm57 = vcmask 523712
    %58 = vst.msk [vmem:[#allocation0] sm:$0x1] %vm57, %v56
    %s59 = scalar_lea.vmem %s0, 6
    %v60 = vld [vmem:[%s59] sm:$0x1]
    %61 = vrot.lane.b32.xlu0 %v60, 48
    %v62 = vpop.permute.xlu0 %61
    %vm63 = vcmask 458112
    %64 = vst.msk [vmem:[#allocation0] sm:$0x1] %vm63, %v62
    %s65 = scalar_lea.vmem %s0, 5
    %v66 = vld [vmem:[%s65] sm:$0x1]
    %67 = vrot.lane.b32.xlu0 %v66, 40
    %v68 = vpop.permute.xlu0 %67
    %vm69 = vcmask 392512
    %70 = vst.msk [vmem:[#allocation0] sm:$0x1] %vm69, %v68
    %s71 = scalar_lea.vmem %s0, 4
    %v72 = vld [vmem:[%s71] sm:$0x1]
    %73 = vrot.lane.b32.xlu0 %v72, 32
    %v74 = vpop.permute.xlu0 %73
    %vm75 = vcmask 326912
    %76 = vst.msk [vmem:[#allocation0] sm:$0x1] %vm75, %v74
    %s77 = scalar_lea.vmem %s0, 3
    %v78 = vld [vmem:[%s77] sm:$0x1]
    %79 = vrot.lane.b32.xlu0 %v78, 24
    %v80 = vpop.permute.xlu0 %79
    %vm81 = vcmask 261312
    %82 = vst.msk [vmem:[#allocation0] sm:$0x1] %vm81, %v80
    %s83 = scalar_lea.vmem %s0, 2
    %v84 = vld [vmem:[%s83] sm:$0x1]
    %85 = vrot.lane.b32.xlu0 %v84, 16
    %v86 = vpop.permute.xlu0 %85
    %vm87 = vcmask 195712
    %88 = vst.msk [vmem:[#allocation0] sm:$0x1] %vm87, %v86
    %s89 = scalar_lea.vmem %s0, 1
    %v90 = vld [vmem:[%s89] sm:$0x1]
    %91 = vrot.lane.b32.xlu0 %v90, 8
    %v92 = vpop.permute.xlu0 %91
    %vm93 = vcmask 130112
    %94 = vst.msk [vmem:[#allocation0] sm:$0x1] %vm93, %v92
    %s96 = sshllo.u32 0, 1
    %v98 = vld [vmem:[#allocation0] sm:%s96]
    %s99 = sshllo.u32 0, 1
    %100 = vst [vmem:[%s1] sm:%s99] %v98

// kernel: generator_forward.19
$region0: #{generator_forward.19}
  #allocation0 [shape = 'u32[]', space=smem, size = 0x4, offset = 0x4, fixed_abs, tag = 'smem constant byte address 0x4 - core index']
  #allocation1 [shape = 'u32[144,128]{1,0:T(1,128)}', space=vmem, size = 0x12000, scoped, tag = 'internal scratch']
  %s0 = inlined_call_operand.vmem [shape: f32[512,128], index: 0, kind: input, shape index: {}]
  %s1 = inlined_call_operand.vmem [shape: f32[1,128], index: 1, kind: input, shape index: {}]
  %s2 = inlined_call_operand.vmem [shape: f32[512,128], index: 2, kind: output, shape index: {}]
  %s3 = sld [smem:[#allocation0]]
  $region18: #{generator_forward.19} parent=0
    _
  %s5 = ssub.s32 1, %s3
  %s6 = scalar_select 0, %s5, %s3
  // Predicated region
  $region2: #{generator_forward.19} parent=0 // pred_check
    _
  $region3: #{generator_forward.19} parent=0 // pred_check_branch
    %8 = sbr.rel (0) target = $region5
  $region4: #{generator_forward.19} parent=0 // pred_region
    _
  $region5: #{generator_forward.19} parent=0 // pred_fallthru
    _
  // Predicated region
  $region6: #{generator_forward.19} parent=0 // pred_check
    _
  $region7: #{generator_forward.19} parent=0 // pred_check_branch
    %10 = sbr.rel (0) target = $region9
  $region8: #{generator_forward.19} parent=0 // pred_region
    _
  $region9: #{generator_forward.19} parent=0 // pred_fallthru
    _
  %v11 = vld [vmem:[%s0] sm:$0xff]
  %v12 = vld [vmem:[%s0 + $0x8] sm:$0xff]
  %v13 = vld [vmem:[%s0 + $0x10] sm:$0xff]
  %v14 = vld [vmem:[%s0 + $0x18] sm:$0xff]
  %v15 = vld [vmem:[%s0 + $0x20] sm:$0xff]
  %v16 = vld [vmem:[%s0 + $0x28] sm:$0xff]
  %v17 = vld [vmem:[%s0 + $0x30] sm:$0xff]
  %v18 = vld [vmem:[%s0 + $0x38] sm:$0xff]
  %v19 = vld [vmem:[%s0 + $0x40] sm:$0xff]
  %v20 = vld [vmem:[%s0 + $0x48] sm:$0xff]
  %v21 = vld [vmem:[%s0 + $0x50] sm:$0xff]
  %v22 = vld [vmem:[%s0 + $0x58] sm:$0xff]
  %v23 = vld [vmem:[%s0 + $0x60] sm:$0xff]
  %v24 = vld [vmem:[%s0 + $0x68] sm:$0xff]
  %v25 = vld [vmem:[%s0 + $0x70] sm:$0xff]
  %v26 = vld [vmem:[%s0 + $0x78] sm:$0xff]
  %v27 = vld [vmem:[%s0 + $0x80] sm:$0xff]
  %v28 = vld [vmem:[%s0 + $0x88] sm:$0xff]
  %v29 = vld [vmem:[%s0 + $0x90] sm:$0xff]
  %v30 = vld [vmem:[%s0 + $0x98] sm:$0xff]
  %v31 = vld [vmem:[%s0 + $0xa0] sm:$0xff]
  %v32 = vld [vmem:[%s0 + $0xa8] sm:$0xff]
  %v33 = vld [vmem:[%s0 + $0xb0] sm:$0xff]
  %v34 = vld [vmem:[%s0 + $0xb8] sm:$0xff]
  %v35 = vld [vmem:[%s0 + $0xc0] sm:$0xff]
  %v36 = vld [vmem:[%s0 + $0xc8] sm:$0xff]
  %v37 = vld [vmem:[%s0 + $0xd0] sm:$0xff]
  %v38 = vld [vmem:[%s0 + $0xd8] sm:$0xff]
  %v39 = vld [vmem:[%s0 + $0xe0] sm:$0xff]
  %v40 = vld [vmem:[%s0 + $0xe8] sm:$0xff]
  %v41 = vld [vmem:[%s0 + $0xf0] sm:$0xff]
  %v42 = vld [vmem:[%s0 + $0xf8] sm:$0xff]
  %v43 = vld [vmem:[%s0 + $0x100] sm:$0xff]
  %v44 = vld [vmem:[%s0 + $0x108] sm:$0xff]
  %v45 = vld [vmem:[%s0 + $0x110] sm:$0xff]
  %v46 = vld [vmem:[%s0 + $0x118] sm:$0xff]
  %v47 = vld [vmem:[%s0 + $0x120] sm:$0xff]
  %v48 = vld [vmem:[%s0 + $0x128] sm:$0xff]
  %v49 = vld [vmem:[%s0 + $0x130] sm:$0xff]
  %v50 = vld [vmem:[%s0 + $0x138] sm:$0xff]
  %v51 = vld [vmem:[%s0 + $0x140] sm:$0xff]
  %v52 = vld [vmem:[%s0 + $0x148] sm:$0xff]
  %v53 = vld [vmem:[%s0 + $0x150] sm:$0xff]
  %v54 = vld [vmem:[%s0 + $0x158] sm:$0xff]
  %v55 = vld [vmem:[%s0 + $0x160] sm:$0xff]
  %v56 = vld [vmem:[%s0 + $0x168] sm:$0xff]
  %v57 = vld [vmem:[%s0 + $0x170] sm:$0xff]
  %v58 = vld [vmem:[%s0 + $0x178] sm:$0xff]
  %v59 = vld [vmem:[%s0 + $0x180] sm:$0xff]
  %v60 = vld [vmem:[%s0 + $0x188] sm:$0xff]
  %v61 = vld [vmem:[%s0 + $0x190] sm:$0xff]
  %v62 = vld [vmem:[%s0 + $0x198] sm:$0xff]
  %v63 = vld [vmem:[%s0 + $0x1a0] sm:$0xff]
  %v64 = vld [vmem:[%s0 + $0x1a8] sm:$0xff]
  %v65 = vld [vmem:[%s0 + $0x1b0] sm:$0xff]
  %v66 = vld [vmem:[%s0 + $0x1b8] sm:$0xff]
  %v67 = vld [vmem:[%s0 + $0x1c0] sm:$0xff]
  %v68 = vld [vmem:[%s0 + $0x1c8] sm:$0xff]
  %v69 = vld [vmem:[%s0 + $0x1d0] sm:$0xff]
  %v70 = vld [vmem:[%s0 + $0x1d8] sm:$0xff]
  %v71 = vld [vmem:[%s0 + $0x1e0] sm:$0xff]
  %v72 = vld [vmem:[%s0 + $0x1e8] sm:$0xff]
  %v73 = vld [vmem:[%s0 + $0x1f0] sm:$0xff]
  %v74 = vld [vmem:[%s0 + $0x1f8] sm:$0xff]
  %v75 = vld [vmem:[%s1] sm:$0x1]
  %v77 = vlaneseq
  %v78 = vshrl.u32 %v77, 7
  %v79 = vsub.s32 0, %v78
  %v80 = vrot.slane %v75, %v79
  %v82 = vadd.f32 %v11, %v80
  %v83 = vadd.f32 %v12, %v80
  %v84 = vadd.f32 %v13, %v80
  %v85 = vadd.f32 %v14, %v80
  %v86 = vadd.f32 %v15, %v80
  %v87 = vadd.f32 %v16, %v80
  %v88 = vadd.f32 %v17, %v80
  %v89 = vadd.f32 %v18, %v80
  %v90 = vadd.f32 %v19, %v80
  %v91 = vadd.f32 %v20, %v80
  %v92 = vadd.f32 %v21, %v80
  %v93 = vadd.f32 %v22, %v80
  %v94 = vadd.f32 %v23, %v80
  %v95 = vadd.f32 %v24, %v80
  %v96 = vadd.f32 %v25, %v80
  %v97 = vadd.f32 %v26, %v80
  %v98 = vadd.f32 %v27, %v80
  %v99 = vadd.f32 %v28, %v80
  %v100 = vadd.f32 %v29, %v80
  %v101 = vadd.f32 %v30, %v80
  %v102 = vadd.f32 %v31, %v80
  %v103 = vadd.f32 %v32, %v80
  %v104 = vadd.f32 %v33, %v80
  %v105 = vadd.f32 %v34, %v80
  %v106 = vadd.f32 %v35, %v80
  %v107 = vadd.f32 %v36, %v80
  %v108 = vadd.f32 %v37, %v80
  %v109 = vadd.f32 %v38, %v80
  %v110 = vadd.f32 %v39, %v80
  %v111 = vadd.f32 %v40, %v80
  %v112 = vadd.f32 %v41, %v80
  %v113 = vadd.f32 %v42, %v80
  %v114 = vadd.f32 %v43, %v80
  %v115 = vadd.f32 %v44, %v80
  %v116 = vadd.f32 %v45, %v80
  %v117 = vadd.f32 %v46, %v80
  %v118 = vadd.f32 %v47, %v80
  %v119 = vadd.f32 %v48, %v80
  %v120 = vadd.f32 %v49, %v80
  %v121 = vadd.f32 %v50, %v80
  %v122 = vadd.f32 %v51, %v80
  %v123 = vadd.f32 %v52, %v80
  %v124 = vadd.f32 %v53, %v80
  %v125 = vadd.f32 %v54, %v80
  %v126 = vadd.f32 %v55, %v80
  %v127 = vadd.f32 %v56, %v80
  %v128 = vadd.f32 %v57, %v80
  %v129 = vadd.f32 %v58, %v80
  %v130 = vadd.f32 %v59, %v80
  %v131 = vadd.f32 %v60, %v80
  %v132 = vadd.f32 %v61, %v80
  %v133 = vadd.f32 %v62, %v80
  %v134 = vadd.f32 %v63, %v80
  %v135 = vadd.f32 %v64, %v80
  %v136 = vadd.f32 %v65, %v80
  %v137 = vadd.f32 %v66, %v80
  %v138 = vadd.f32 %v67, %v80
  %v139 = vadd.f32 %v68, %v80
  %v140 = vadd.f32 %v69, %v80
  %v141 = vadd.f32 %v70, %v80
  %v142 = vadd.f32 %v71, %v80
  %v143 = vadd.f32 %v72, %v80
  %v144 = vadd.f32 %v73, %v80
  %v145 = vadd.f32 %v74, %v80
  %v146 = vtanh.pop %v82
  %v147 = vtanh.pop %v83
  %v148 = vtanh.pop %v84
  %v149 = vtanh.pop %v85
  %v150 = vtanh.pop %v86
  %v151 = vtanh.pop %v87
  %v152 = vtanh.pop %v88
  %v153 = vtanh.pop %v89
  %v154 = vtanh.pop %v90
  %v155 = vtanh.pop %v91
  %v156 = vtanh.pop %v92
  %v157 = vtanh.pop %v93
  %v158 = vtanh.pop %v94
  %v159 = vtanh.pop %v95
  %v160 = vtanh.pop %v96
  %v161 = vtanh.pop %v97
  %v162 = vtanh.pop %v98
  %v163 = vtanh.pop %v99
  %v164 = vtanh.pop %v100
  %v165 = vtanh.pop %v101
  %v166 = vtanh.pop %v102
  %v167 = vtanh.pop %v103
  %v168 = vtanh.pop %v104
  %v169 = vtanh.pop %v105
  %v170 = vtanh.pop %v106
  %v171 = vtanh.pop %v107
  %v172 = vtanh.pop %v108
  %v173 = vtanh.pop %v109
  %v174 = vtanh.pop %v110
  %v175 = vtanh.pop %v111
  %v176 = vtanh.pop %v112
  %v177 = vtanh.pop %v113
  %v178 = vtanh.pop %v114
  %v179 = vtanh.pop %v115
  %v180 = vtanh.pop %v116
  %v181 = vtanh.pop %v117
  %v182 = vtanh.pop %v118
  %v183 = vtanh.pop %v119
  %v184 = vtanh.pop %v120
  %v185 = vtanh.pop %v121
  %v186 = vtanh.pop %v122
  %v187 = vtanh.pop %v123
  %v188 = vtanh.pop %v124
  %v189 = vtanh.pop %v125
  %v190 = vtanh.pop %v126
  %v191 = vtanh.pop %v127
  %v192 = vtanh.pop %v128
  %v193 = vtanh.pop %v129
  %v194 = vtanh.pop %v130
  %v195 = vtanh.pop %v131
  %v196 = vtanh.pop %v132
  %v197 = vtanh.pop %v133
  %v198 = vtanh.pop %v134
  %v199 = vtanh.pop %v135
  %v200 = vtanh.pop %v136
  %v201 = vtanh.pop %v137
  %v202 = vtanh.pop %v138
  %v203 = vtanh.pop %v139
  %v204 = vtanh.pop %v140
  %v205 = vtanh.pop %v141
  %v206 = vtanh.pop %v142
  %v207 = vtanh.pop %v143
  %v208 = vtanh.pop %v144
  %v209 = vtanh.pop %v145
  %210 = vst [vmem:[%s2] sm:$0xff] %v146
  %211 = vst [vmem:[%s2 + $0x8] sm:$0xff] %v147
  %212 = vst [vmem:[%s2 + $0x10] sm:$0xff] %v148
  %213 = vst [vmem:[%s2 + $0x18] sm:$0xff] %v149
  %214 = vst [vmem:[%s2 + $0x20] sm:$0xff] %v150
  %215 = vst [vmem:[%s2 + $0x28] sm:$0xff] %v151
  %216 = vst [vmem:[%s2 + $0x30] sm:$0xff] %v152
  %217 = vst [vmem:[%s2 + $0x38] sm:$0xff] %v153
  %218 = vst [vmem:[%s2 + $0x40] sm:$0xff] %v154
  %219 = vst [vmem:[%s2 + $0x48] sm:$0xff] %v155
  %220 = vst [vmem:[%s2 + $0x50] sm:$0xff] %v156
  %221 = vst [vmem:[%s2 + $0x58] sm:$0xff] %v157
  %222 = vst [vmem:[%s2 + $0x60] sm:$0xff] %v158
  %223 = vst [vmem:[%s2 + $0x68] sm:$0xff] %v159
  %224 = vst [vmem:[%s2 + $0x70] sm:$0xff] %v160
  %225 = vst [vmem:[%s2 + $0x78] sm:$0xff] %v161
  %226 = vst [vmem:[%s2 + $0x80] sm:$0xff] %v162
  %227 = vst [vmem:[%s2 + $0x88] sm:$0xff] %v163
  %228 = vst [vmem:[%s2 + $0x90] sm:$0xff] %v164
  %229 = vst [vmem:[%s2 + $0x98] sm:$0xff] %v165
  %230 = vst [vmem:[%s2 + $0xa0] sm:$0xff] %v166
  %231 = vst [vmem:[%s2 + $0xa8] sm:$0xff] %v167
  %232 = vst [vmem:[%s2 + $0xb0] sm:$0xff] %v168
  %233 = vst [vmem:[%s2 + $0xb8] sm:$0xff] %v169
  %234 = vst [vmem:[%s2 + $0xc0] sm:$0xff] %v170
  %235 = vst [vmem:[%s2 + $0xc8] sm:$0xff] %v171
  %236 = vst [vmem:[%s2 + $0xd0] sm:$0xff] %v172
  %237 = vst [vmem:[%s2 + $0xd8] sm:$0xff] %v173
  %238 = vst [vmem:[%s2 + $0xe0] sm:$0xff] %v174
  %239 = vst [vmem:[%s2 + $0xe8] sm:$0xff] %v175
  %240 = vst [vmem:[%s2 + $0xf0] sm:$0xff] %v176
  %241 = vst [vmem:[%s2 + $0xf8] sm:$0xff] %v177
  %242 = vst [vmem:[%s2 + $0x100] sm:$0xff] %v178
  %243 = vst [vmem:[%s2 + $0x108] sm:$0xff] %v179
  %244 = vst [vmem:[%s2 + $0x110] sm:$0xff] %v180
  %245 = vst [vmem:[%s2 + $0x118] sm:$0xff] %v181
  %246 = vst [vmem:[%s2 + $0x120] sm:$0xff] %v182
  %247 = vst [vmem:[%s2 + $0x128] sm:$0xff] %v183
  %248 = vst [vmem:[%s2 + $0x130] sm:$0xff] %v184
  %249 = vst [vmem:[%s2 + $0x138] sm:$0xff] %v185
  %250 = vst [vmem:[%s2 + $0x140] sm:$0xff] %v186
  %251 = vst [vmem:[%s2 + $0x148] sm:$0xff] %v187
  %252 = vst [vmem:[%s2 + $0x150] sm:$0xff] %v188
  %253 = vst [vmem:[%s2 + $0x158] sm:$0xff] %v189
  %254 = vst [vmem:[%s2 + $0x160] sm:$0xff] %v190
  %255 = vst [vmem:[%s2 + $0x168] sm:$0xff] %v191
  %256 = vst [vmem:[%s2 + $0x170] sm:$0xff] %v192
  %257 = vst [vmem:[%s2 + $0x178] sm:$0xff] %v193
  %258 = vst [vmem:[%s2 + $0x180] sm:$0xff] %v194
  %259 = vst [vmem:[%s2 + $0x188] sm:$0xff] %v195
  %260 = vst [vmem:[%s2 + $0x190] sm:$0xff] %v196
  %261 = vst [vmem:[%s2 + $0x198] sm:$0xff] %v197
  %262 = vst [vmem:[%s2 + $0x1a0] sm:$0xff] %v198
  %263 = vst [vmem:[%s2 + $0x1a8] sm:$0xff] %v199
  %264 = vst [vmem:[%s2 + $0x1b0] sm:$0xff] %v200
  %265 = vst [vmem:[%s2 + $0x1b8] sm:$0xff] %v201
  %266 = vst [vmem:[%s2 + $0x1c0] sm:$0xff] %v202
  %267 = vst [vmem:[%s2 + $0x1c8] sm:$0xff] %v203
  %268 = vst [vmem:[%s2 + $0x1d0] sm:$0xff] %v204
  %269 = vst [vmem:[%s2 + $0x1d8] sm:$0xff] %v205
  %270 = vst [vmem:[%s2 + $0x1e0] sm:$0xff] %v206
  %271 = vst [vmem:[%s2 + $0x1e8] sm:$0xff] %v207
  %272 = vst [vmem:[%s2 + $0x1f0] sm:$0xff] %v208
  %273 = vst [vmem:[%s2 + $0x1f8] sm:$0xff] %v209
  // Predicated region
  $region10: #{generator_forward.19} parent=0 // pred_check
    _
  $region11: #{generator_forward.19} parent=0 // pred_check_branch
    %275 = sbr.rel (0) target = $region13
  $region12: #{generator_forward.19} parent=0 // pred_region
    _
  $region13: #{generator_forward.19} parent=0 // pred_fallthru
    _
  // Predicated region
  $region14: #{generator_forward.19} parent=0 // pred_check
    _
  $region15: #{generator_forward.19} parent=0 // pred_check_branch
    %277 = sbr.rel (0) target = $region17
  $region16: #{generator_forward.19} parent=0 // pred_region
    _
  $region17: #{generator_forward.19} parent=0 // pred_fallthru
    _

</llo_original>
